<compile_context>
chip_gen: v6e
topology: v6e:2x2x1
jax: 0.10.0
libtpu: 0.0.40
codegen_flags: <defaults>
</compile_context>

<pallas_src>
import functools
import numpy as np
import jax
import jax.numpy as jnp
from jax.experimental import pallas as pl
from jax.experimental.pallas import tpu as pltpu


# ----------------------------------------------------------------------------
# config (plays the role of `args`)
# ----------------------------------------------------------------------------
class Args:
    hidden_dim = 32        # BERT hidden size, and graph-encoder FFN d_ff
    bert_out_dim = 32      # graph-encoder model dim
    dep_dim = 16
    dep_size = 10
    num_layer = 2          # graph encoder layers
    num_class = 3
    heads = 4              # graph attention heads
    bert_layers = 2
    bert_heads = 4
    bert_intermediate = 64
    vocab_size = 60
    type_vocab_size = 2
    max_position = 32
    model = "rgat"
    output_merge = "gate"
    direct = False
    loop = True


# ----------------------------------------------------------------------------
# small helpers usable inside kernels
# ----------------------------------------------------------------------------
def _ln(x, g, b):
    mu = jnp.mean(x, axis=-1, keepdims=True)
    var = jnp.mean((x - mu) ** 2, axis=-1, keepdims=True)
    return (x - mu) * jax.lax.rsqrt(var + 1e-12) * g + b


def _dot(a, b):
    return jnp.dot(a, b, preferred_element_type=jnp.float32)


def _dot_t(a, b):
    """a @ b.T without an explicit transpose (contract last dims)."""
    return jax.lax.dot_general(a, b, (((1,), (1,)), ((), ())),
                               preferred_element_type=jnp.float32)


def _softmax_rows(s):
    s = s - jnp.max(s, axis=-1, keepdims=True)
    e = jnp.exp(s)
    return e * pl.reciprocal(jnp.sum(e, axis=-1, keepdims=True), approx=True)


def _w(shape):
    """BlockSpec for a weight/bias replicated across the batch grid."""
    return pl.BlockSpec(shape, lambda *_: (0,) * len(shape))


# ----------------------------------------------------------------------------
# Pallas kernels
# ----------------------------------------------------------------------------
def _emb_ln_kernel(x_ref, g_ref, b_ref, o_ref):
    o_ref[0] = _ln(x_ref[0], g_ref[...], b_ref[...])


def emb_layer_norm(x, g, b):
    B, S, H = x.shape
    xs = pl.BlockSpec((1, S, H), lambda i: (i, 0, 0))
    return pl.pallas_call(
        _emb_ln_kernel,
        out_shape=jax.ShapeDtypeStruct((B, S, H), jnp.float32),
        grid=(B,),
        in_specs=[xs, _w((1, H)), _w((1, H))],
        out_specs=xs,
        compiler_params=pltpu.CompilerParams(dimension_semantics=("parallel",)),
    )(x, g, b)


def _bert_layer_kernel(x_ref, wqkv_ref, bqkv_ref, wo_ref, bo_ref,
                       ln1g_ref, ln1b_ref, wi_ref, bi_ref, wo2_ref, bo2_ref,
                       ln2g_ref, ln2b_ref, o_ref, *, nh, dh, scale):
    x = x_ref[0]                                      # [S, H]
    S, H = x.shape
    qkv = _dot(x, wqkv_ref[...]) + bqkv_ref[...]      # [S, 3H]  lane-dense
    wo = wo_ref[...]
    attn = jnp.zeros((S, H), dtype=jnp.float32)
    for h in range(nh):
        q = qkv[:, h * dh:(h + 1) * dh]
        k = qkv[:, H + h * dh:H + (h + 1) * dh]
        v = qkv[:, 2 * H + h * dh:2 * H + (h + 1) * dh]
        s = _dot_t(q, k) * scale                      # [S, S]
        p = _softmax_rows(s)
        ctx = _dot(p, v)                              # [S, dh]
        attn = attn + _dot(ctx, wo[h * dh:(h + 1) * dh, :])
    attn = attn + bo_ref[...]
    x1 = _ln(x + attn, ln1g_ref[...], ln1b_ref[...])
    hmid = jax.nn.gelu(_dot(x1, wi_ref[...]) + bi_ref[...], approximate=True)
    ffn = _dot(hmid, wo2_ref[...]) + bo2_ref[...]
    o_ref[0] = _ln(x1 + ffn, ln2g_ref[...], ln2b_ref[...])


def bert_layer(x, lp, nh):
    B, S, H = x.shape
    dh = H // nh
    scale = 1.0 / float(np.sqrt(dh))
    I = lp["wi"].shape[1]
    xs = pl.BlockSpec((1, S, H), lambda b: (b, 0, 0))
    return pl.pallas_call(
        functools.partial(_bert_layer_kernel, nh=nh, dh=dh, scale=scale),
        out_shape=jax.ShapeDtypeStruct((B, S, H), jnp.float32),
        grid=(B,),
        in_specs=[xs,
                  _w((H, 3 * H)), _w((1, 3 * H)),
                  _w((H, H)), _w((1, H)),
                  _w((1, H)), _w((1, H)),
                  _w((H, I)), _w((1, I)),
                  _w((I, H)), _w((1, H)),
                  _w((1, H)), _w((1, H))],
        out_specs=xs,
        compiler_params=pltpu.CompilerParams(dimension_semantics=("parallel",)),
    )(x, lp["wqkv"], lp["bqkv"], lp["wo"], lp["bo"],
      lp["ln1_g"], lp["ln1_b"], lp["wi"], lp["bi"], lp["wo2"], lp["bo2"],
      lp["ln2_g"], lp["ln2_b"])


def _bridge_kernel(x_ref, dw_ref, db_ref, pw_ref, pb_ref, bo_ref, po_ref, *,
                   maxlen):
    x = x_ref[0]                                      # [S_bert, H]
    bo_ref[0] = _dot(x[:maxlen, :], dw_ref[...]) + db_ref[...]
    cls = x[0:1, :]
    po_ref[0] = jnp.tanh(_dot(cls, pw_ref[...]) + pb_ref[...])


def bert_bridge(bert_full, p, maxlen):
    """Fused: bert_out = dense(bert_full[:, :maxlen]); pooled = tanh pooler."""
    B, Sb, H = bert_full.shape
    D = p["dense_w"].shape[1]
    return pl.pallas_call(
        functools.partial(_bridge_kernel, maxlen=maxlen),
        out_shape=(jax.ShapeDtypeStruct((B, maxlen, D), jnp.float32),
                   jax.ShapeDtypeStruct((B, 1, H), jnp.float32)),
        grid=(B,),
        in_specs=[pl.BlockSpec((1, Sb, H), lambda b: (b, 0, 0)),
                  _w((H, D)), _w((1, D)), _w((H, H)), _w((1, H))],
        out_specs=(pl.BlockSpec((1, maxlen, D), lambda b: (b, 0, 0)),
                   pl.BlockSpec((1, 1, H), lambda b: (b, 0, 0))),
        compiler_params=pltpu.CompilerParams(dimension_semantics=("parallel",)),
    )(bert_full, p["dense_w"], p["dense_b"], p["pool_w"], p["pool_b"])


def _rgat_layer_kernel(x_ref, bias_ref, dep_ref, wqkv_ref, bqkv_ref,
                       wsk_ref, bsk_ref, wsv_ref, bsv_ref, wo_ref, bo_ref,
                       ln1g_ref, ln1b_ref, w1_ref, b1_ref, w2_ref, b2_ref,
                       ln2g_ref, ln2b_ref, o_ref, *, nh, dh, scale):
    x = x_ref[0]                                      # [S, D]
    S, D = x.shape
    dep = dep_ref[0]                                  # [S, S, E]
    bias = bias_ref[0]                                # [S, S] additive mask
    qkv = _dot(x, wqkv_ref[...]) + bqkv_ref[...]      # [S, 3D]
    wo = wo_ref[...]
    wsk = wsk_ref[...]                                # [E, dh]
    bsk = bsk_ref[...]                                # [1, dh]
    wsv = wsv_ref[...]                                # [E, dh]
    bsv = bsv_ref[...]                                # [1, dh]
    attn = jnp.zeros((S, D), dtype=jnp.float32)
    for h in range(nh):
        q = qkv[:, h * dh:(h + 1) * dh]
        k = qkv[:, D + h * dh:D + (h + 1) * dh]
        v = qkv[:, 2 * D + h * dh:2 * D + (h + 1) * dh]
        s = _dot_t(q, k)                              # [S, S]
        # relation-aware score term: q . (dep @ Wsk + bsk)  without building sk
        q_rel = _dot_t(q, wsk)                        # [S, E]
        s_rel = jnp.sum(q_rel[:, None, :] * dep, axis=-1)     # [S, S]
        q_b = jnp.sum(q * bsk, axis=-1, keepdims=True)        # [S, 1]
        s = (s + s_rel + q_b) * scale + bias
        p = _softmax_rows(s)
        ctx = _dot(p, v)                              # [S, dh]
        # relation-aware value term: p . (dep @ Wsv + bsv)  without building sv
        pv = jnp.sum(p[:, :, None] * dep, axis=1)     # [S, E]
        ctx = ctx + _dot(pv, wsv) + bsv
        attn = attn + _dot(ctx, wo[h * dh:(h + 1) * dh, :])
    attn = attn + bo_ref[...]
    x1 = _ln(x + attn, ln1g_ref[...], ln1b_ref[...])
    hmid = jnp.maximum(_dot(x1, w1_ref[...]) + b1_ref[...], 0.0)
    ffn = _dot(hmid, w2_ref[...]) + b2_ref[...]
    o_ref[0] = _ln(x1 + ffn, ln2g_ref[...], ln2b_ref[...])


def rgat_layer(x, attn_bias, dep_embs, lp, nh):
    B, S, D = x.shape
    dh = D // nh
    E = dep_embs.shape[-1]
    F = lp["w1"].shape[1]
    scale = 1.0 / float(np.sqrt(dh))
    xs = pl.BlockSpec((1, S, D), lambda b: (b, 0, 0))
    return pl.pallas_call(
        functools.partial(_rgat_layer_kernel, nh=nh, dh=dh, scale=scale),
        out_shape=jax.ShapeDtypeStruct((B, S, D), jnp.float32),
        grid=(B,),
        in_specs=[xs,
                  pl.BlockSpec((1, S, S), lambda b: (b, 0, 0)),
                  pl.BlockSpec((1, S, S, E), lambda b: (b, 0, 0, 0)),
                  _w((D, 3 * D)), _w((1, 3 * D)),
                  _w((E, dh)), _w((1, dh)),
                  _w((E, dh)), _w((1, dh)),
                  _w((D, D)), _w((1, D)),
                  _w((1, D)), _w((1, D)),
                  _w((D, F)), _w((1, F)),
                  _w((F, D)), _w((1, D)),
                  _w((1, D)), _w((1, D))],
        out_specs=xs,
        compiler_params=pltpu.CompilerParams(dimension_semantics=("parallel",)),
    )(x, attn_bias, dep_embs,
      lp["wqkv"], lp["bqkv"], lp["wsk"], lp["bsk"], lp["wsv"], lp["bsv"],
      lp["wo"], lp["bo"], lp["ln1_g"], lp["ln1_b"],
      lp["w1"], lp["b1"], lp["w2"], lp["b2"], lp["ln2_g"], lp["ln2_b"])


def _epilogue_kernel(g_ref, b_ref, m_ref, pooled_ref, wg_ref, wb_ref, gb_ref,
                     cwm_ref, cwp_ref, cb_ref, logits_ref, cat_ref):
    xg = g_ref[0]                                     # [S, D]
    xb = b_ref[0]                                     # [S, D]
    m = m_ref[0]                                      # [S, 1]
    wn = jnp.sum(m, axis=0, keepdims=True)            # [1, 1]
    inv = 1.0 / wn
    gp = jnp.sum(xg * m, axis=0, keepdims=True) * inv  # [1, D]
    bp = jnp.sum(xb * m, axis=0, keepdims=True) * inv  # [1, D]
    z = _dot(gp, wg_ref[...]) + _dot(bp, wb_ref[...]) + gb_ref[...]
    gate = jax.nn.sigmoid(z)
    merged = gate * gp + (1.0 - gate) * bp             # [1, D]
    pooled = pooled_ref[0]                             # [1, H]
    logits = _dot(merged, cwm_ref[...]) + _dot(pooled, cwp_ref[...]) + cb_ref[...]
    logits_ref[0] = logits
    cat_ref[0] = jnp.concatenate([merged, pooled], axis=-1)


def absa_epilogue(graph_out, bert_out, a_mask3, pooled3, p, args):
    """Fused aspect pooling + gate merge + concat + classifier."""
    B, S, D = graph_out.shape
    H = pooled3.shape[-1]
    C = args.num_class
    wg, wb = p["gate_w"][:D, :], p["gate_w"][D:, :]
    cwm, cwp = p["cls_w"][:D, :], p["cls_w"][D:, :]
    xs = pl.BlockSpec((1, S, D), lambda b: (b, 0, 0))
    return pl.pallas_call(
        _epilogue_kernel,
        out_shape=(jax.ShapeDtypeStruct((B, 1, C), jnp.float32),
                   jax.ShapeDtypeStruct((B, 1, D + H), jnp.float32)),
        grid=(B,),
        in_specs=[xs, xs,
                  pl.BlockSpec((1, S, 1), lambda b: (b, 0, 0)),
                  pl.BlockSpec((1, 1, H), lambda b: (b, 0, 0)),
                  _w((D, D)), _w((D, D)), _w((1, D)),
                  _w((D, C)), _w((H, C)), _w((1, C))],
        out_specs=(pl.BlockSpec((1, 1, C), lambda b: (b, 0, 0)),
                   pl.BlockSpec((1, 1, D + H), lambda b: (b, 0, 0))),
        compiler_params=pltpu.CompilerParams(dimension_semantics=("parallel",)),
    )(graph_out, bert_out, a_mask3, pooled3, wg, wb, p["gate_b"],
      cwm, cwp, p["cls_b"])


# ----------------------------------------------------------------------------
# full forward (glue in plain JAX, hot paths in the fused kernels above)
# ----------------------------------------------------------------------------
def rgat_absa_forward(p, args, adj, label_all, l, a_mask,
                      bert_sequence, bert_segments_ids, maxlen):
    # ---- BERT encoder ----
    bert_sequence = bert_sequence[:, :bert_segments_ids.shape[1]]
    B, Sb = bert_sequence.shape
    pos_ids = jnp.arange(Sb)
    x = (p["word_emb"][bert_sequence]
         + p["pos_emb"][pos_ids][None, :, :]
         + p["type_emb"][bert_segments_ids]).astype(jnp.float32)
    x = emb_layer_norm(x, p["emb_ln_g"], p["emb_ln_b"])
    for lp in p["bert_layers"]:
        x = bert_layer(x, lp, args.bert_heads)

    # ---- DoubleEncoder bridge: slice to maxlen, dense, tanh pooler ----
    bert_out, pooled3 = bert_bridge(x, p, maxlen)     # [B,maxlen,D], [B,1,H]

    # mask = adj.eq(0); key_padding_mask = sequence_mask(lengths)
    kpm = jnp.arange(maxlen)[None, :] >= l[:, None]   # [B, maxlen]
    masked = jnp.logical_or(adj == 0, kpm[:, None, :])
    attn_bias = jnp.where(masked, -1e9, 0.0).astype(jnp.float32)
    dep_embs = p["dep_emb"][label_all]                # [B,S,S,dep_dim]

    # ---- RGAT graph encoder ----
    g = bert_out
    for lp in p["graph_layers"]:
        g = rgat_layer(g, attn_bias, dep_embs, lp, args.heads)

    # ---- ABSAEncoder pooling + gate merge + RGATABSA classifier ----
    a_mask3 = a_mask.reshape(B, maxlen, 1).astype(jnp.float32)
    logits3, cat3 = absa_epilogue(g, bert_out, a_mask3, pooled3, p, args)
    return logits3[:, 0, :], cat3[:, 0, :]


# ----------------------------------------------------------------------------
# deterministic parameter init (synthetic, not a checkpoint)
# ----------------------------------------------------------------------------
def init_params(key, args):
    keys = iter(jax.random.split(key, 512))
    nk = lambda: next(keys)
    w = lambda shape: 0.02 * jax.random.normal(nk(), shape, dtype=jnp.float32)
    H, D = args.hidden_dim, args.bert_out_dim
    dh = D // args.heads
    I = args.bert_intermediate

    p = {}
    # BERT
    p["word_emb"] = w((args.vocab_size, H))
    p["pos_emb"] = w((args.max_position, H))
    p["type_emb"] = w((args.type_vocab_size, H))
    p["emb_ln_g"], p["emb_ln_b"] = jnp.ones((1, H)), jnp.zeros((1, H))
    p["bert_layers"] = []
    for _ in range(args.bert_layers):
        p["bert_layers"].append(dict(
            wqkv=jnp.concatenate([w((H, H)), w((H, H)), w((H, H))], axis=1),
            bqkv=jnp.zeros((1, 3 * H)),
            wo=w((H, H)), bo=jnp.zeros((1, H)),
            ln1_g=jnp.ones((1, H)), ln1_b=jnp.zeros((1, H)),
            wi=w((H, I)), bi=jnp.zeros((1, I)),
            wo2=w((I, H)), bo2=jnp.zeros((1, H)),
            ln2_g=jnp.ones((1, H)), ln2_b=jnp.zeros((1, H)),
        ))
    p["pool_w"], p["pool_b"] = w((H, H)), jnp.zeros((1, H))

    # DoubleEncoder dense + dep embedding (padding_idx=0 -> zero row)
    p["dense_w"], p["dense_b"] = w((H, D)), jnp.zeros((1, D))
    dep = w((args.dep_size, args.dep_dim))
    p["dep_emb"] = dep.at[0].set(0.0)

    # Graph (RGAT) encoder layers
    p["graph_layers"] = []
    for _ in range(args.num_layer):
        p["graph_layers"].append(dict(
            wqkv=jnp.concatenate([w((D, D)), w((D, D)), w((D, D))], axis=1),
            bqkv=jnp.zeros((1, 3 * D)),
            wsk=w((args.dep_dim, dh)), bsk=jnp.zeros((1, dh)),
            wsv=w((args.dep_dim, dh)), bsv=jnp.zeros((1, dh)),
            wo=w((D, D)), bo=jnp.zeros((1, D)),
            ln1_g=jnp.ones((1, D)), ln1_b=jnp.zeros((1, D)),
            w1=w((D, args.hidden_dim)), b1=jnp.zeros((1, args.hidden_dim)),
            w2=w((args.hidden_dim, D)), b2=jnp.zeros((1, D)),
            ln2_g=jnp.ones((1, D)), ln2_b=jnp.zeros((1, D)),
        ))

    # ABSAEncoder gate + RGATABSA classifier
    p["gate_w"], p["gate_b"] = w((2 * D, D)), jnp.zeros((1, D))
    in_dim = args.hidden_dim + args.bert_out_dim
    p["cls_w"], p["cls_b"] = w((in_dim, args.num_class)), jnp.zeros((1, args.num_class))
    return p


# ----------------------------------------------------------------------------
# host-side preprocessing (numpy glue mirroring ABSAEncoder's head_to_adj loop)
# ----------------------------------------------------------------------------
# TODO(synk): original head_to_adj not in reference snippet; standard
#             dependency-head -> adjacency/label construction used here.
def head_to_adj(maxlen, head, tok, deprel, length, a_mask,
                directed=False, self_loop=True):
    adj = np.zeros((maxlen, maxlen), dtype=np.float32)
    label = np.zeros((maxlen, maxlen), dtype=np.int64)
    for i in range(length):
        h = int(head[i])
        if h > 0:
            adj[i, h - 1] = 1.0
            label[i, h - 1] = int(deprel[i])
            if not directed:
                adj[h - 1, i] = 1.0
                label[h - 1, i] = int(deprel[i])
        if self_loop:
            adj[i, i] = 1.0
    return adj, label


# ----------------------------------------------------------------------------
# main
# ----------------------------------------------------------------------------
if __name__ == "__main__":
    args = Args()
    params = init_params(jax.random.PRNGKey(0), args)

    B = 2
    maxlen_tok = 8
    l_np = np.array([8, 6], dtype=np.int32)
    S_bert = 12

    rng = np.random.RandomState(0)
    tok = rng.randint(1, args.vocab_size, size=(B, maxlen_tok))
    head = np.zeros((B, maxlen_tok), dtype=np.int64)
    for b in range(B):
        for i in range(1, int(l_np[b])):
            head[b, i] = i                      # chain dependency tree
    deprel = rng.randint(1, args.dep_size, size=(B, maxlen_tok))
    for b in range(B):
        deprel[b, int(l_np[b]):] = 0
    a_mask = np.zeros((B, maxlen_tok), dtype=np.float32)
    a_mask[0, 2:4] = 1.0                        # aspect tokens sample 0
    a_mask[1, 1] = 1.0                          # aspect token sample 1
    bert_sequence = rng.randint(3, args.vocab_size, size=(B, 16))
    bert_sequence[:, 0] = 2                     # CLS-like token
    bert_segments_ids = np.zeros((B, S_bert), dtype=np.int32)
    bert_segments_ids[:, 9:] = 1

    # adjacency / relation-label matrices (host preprocessing, as in PyTorch)
    maxlen = int(l_np.max())
    adj_lst, label_lst = [], []
    for idx in range(B):
        adj_i, label_i = head_to_adj(maxlen, head[idx], tok[idx], deprel[idx],
                                     int(l_np[idx]), a_mask[idx],
                                     directed=args.direct, self_loop=args.loop)
        adj_lst.append(adj_i[None])
        label_lst.append(label_i[None])
    adj = jnp.asarray(np.concatenate(adj_lst, axis=0))
    label_all = jnp.asarray(np.concatenate(label_lst, axis=0).astype(np.int32))

    forward = jax.jit(rgat_absa_forward, static_argnums=(1, 8))
    logits, cat_outputs = forward(
        params, args,
        adj,
        label_all,
        jnp.asarray(l_np),
        jnp.asarray(a_mask[:, :maxlen]),
        jnp.asarray(bert_sequence.astype(np.int32)),
        jnp.asarray(bert_segments_ids),
        maxlen,
    )
    jax.block_until_ready((logits, cat_outputs))
    assert logits.shape == (B, args.num_class)
    assert cat_outputs.shape == (B, args.hidden_dim + args.bert_out_dim)
    print("KERNEL_OK")
</pallas_src>

<mosaic_0001>
module attributes {stable_mosaic.version = 11 : i64} {
  func.func @_emb_ln_kernel(%arg0: i32, %arg1: memref<1x12x32xf32, #tpu.memory_space<vmem>>, %arg2: memref<1x32xf32, #tpu.memory_space<vmem>>, %arg3: memref<1x32xf32, #tpu.memory_space<vmem>>, %arg4: memref<1x12x32xf32, #tpu.memory_space<vmem>>) attributes {dimension_semantics = [#tpu.dimension_semantics<parallel>], iteration_bounds = array<i64: 2>, scalar_prefetch = 0 : i64, scratch_operands = 0 : i64, tpu.core_type = #tpu.core_type<tc>, window_params = [{transform_indices = @transform_0, window_bounds = array<i64: 1, 12, 32>}, {pipeline_mode = #tpu.pipeline_mode<synchronous>, transform_indices = @transform_1, window_bounds = array<i64: 1, 32>}, {pipeline_mode = #tpu.pipeline_mode<synchronous>, transform_indices = @transform_2, window_bounds = array<i64: 1, 32>}, {transform_indices = @transform_3, window_bounds = array<i64: 1, 12, 32>}]} {
    %c0 = arith.constant 0 : index
    %c0_0 = arith.constant 0 : index
    %c0_1 = arith.constant 0 : index
    %0 = vector.load %arg1[%c0, %c0_0, %c0_1] : memref<1x12x32xf32, #tpu.memory_space<vmem>>, vector<1x12x32xf32>
    %1 = vector.shape_cast %0 : vector<1x12x32xf32> to vector<12x32xf32>
    %c0_2 = arith.constant 0 : index
    %c0_3 = arith.constant 0 : index
    %2 = vector.load %arg2[%c0_2, %c0_3] : memref<1x32xf32, #tpu.memory_space<vmem>>, vector<1x32xf32>
    %c0_4 = arith.constant 0 : index
    %c0_5 = arith.constant 0 : index
    %3 = vector.load %arg3[%c0_4, %c0_5] : memref<1x32xf32, #tpu.memory_space<vmem>>, vector<1x32xf32>
    %cst = arith.constant dense<0.000000e+00> : vector<12xf32>
    %4 = vector.multi_reduction <add>, %1, %cst [1] : vector<12x32xf32> to vector<12xf32>
    %5 = vector.shape_cast %4 : vector<12xf32> to vector<12x1xf32>
    %cst_6 = arith.constant 3.200000e+01 : f32
    %6 = vector.broadcast %cst_6 : f32 to vector<12x1xf32>
    %7 = arith.divf %5, %6 : vector<12x1xf32>
    %8 = vector.broadcast %7 : vector<12x1xf32> to vector<12x32xf32>
    %9 = arith.subf %1, %8 : vector<12x32xf32>
    %10 = arith.mulf %9, %9 : vector<12x32xf32>
    %cst_7 = arith.constant dense<0.000000e+00> : vector<12xf32>
    %11 = vector.multi_reduction <add>, %10, %cst_7 [1] : vector<12x32xf32> to vector<12xf32>
    %12 = vector.shape_cast %11 : vector<12xf32> to vector<12x1xf32>
    %cst_8 = arith.constant 3.200000e+01 : f32
    %13 = vector.broadcast %cst_8 : f32 to vector<12x1xf32>
    %14 = arith.divf %12, %13 : vector<12x1xf32>
    %15 = vector.broadcast %7 : vector<12x1xf32> to vector<12x32xf32>
    %16 = arith.subf %1, %15 : vector<12x32xf32>
    %cst_9 = arith.constant 9.99999996E-13 : f32
    %17 = vector.broadcast %cst_9 : f32 to vector<12x1xf32>
    %18 = arith.addf %14, %17 : vector<12x1xf32>
    %19 = math.rsqrt %18 : vector<12x1xf32>
    %20 = vector.broadcast %19 : vector<12x1xf32> to vector<12x32xf32>
    %21 = arith.mulf %16, %20 : vector<12x32xf32>
    %22 = vector.broadcast %2 : vector<1x32xf32> to vector<12x32xf32>
    %23 = arith.mulf %21, %22 : vector<12x32xf32>
    %24 = vector.broadcast %3 : vector<1x32xf32> to vector<12x32xf32>
    %25 = arith.addf %23, %24 : vector<12x32xf32>
    %c0_10 = arith.constant 0 : index
    %c0_11 = arith.constant 0 : index
    %c0_12 = arith.constant 0 : index
    %26 = vector.load %arg4[%c0_10, %c0_11, %c0_12] : memref<1x12x32xf32, #tpu.memory_space<vmem>>, vector<1x12x32xf32>
    %27 = vector.shape_cast %26 : vector<1x12x32xf32> to vector<12x32xf32>
    %28 = vector.shape_cast %25 : vector<12x32xf32> to vector<1x12x32xf32>
    tpu.vector_store %arg4[%c0_10, %c0_11, %c0_12], %28 {strides = array<i32>} : memref<1x12x32xf32, #tpu.memory_space<vmem>>, vector<1x12x32xf32>,
    return
  }
  func.func @transform_0(%arg0: i32) -> (i32, i32, i32) {
    %c0_i32 = arith.constant 0 : i32
    %c0_i32_0 = arith.constant 0 : i32
    %c0_i32_1 = arith.constant 0 : i32
    return %arg0, %c0_i32, %c0_i32_0 : i32, i32, i32
  }
  func.func @transform_1(%arg0: i32) -> (i32, i32) {
    %c0_i32 = arith.constant 0 : i32
    %c0_i32_0 = arith.constant 0 : i32
    %c0_i32_1 = arith.constant 0 : i32
    return %c0_i32, %c0_i32_0 : i32, i32
  }
  func.func @transform_2(%arg0: i32) -> (i32, i32) {
    %c0_i32 = arith.constant 0 : i32
    %c0_i32_0 = arith.constant 0 : i32
    %c0_i32_1 = arith.constant 0 : i32
    return %c0_i32, %c0_i32_0 : i32, i32
  }
  func.func @transform_3(%arg0: i32) -> (i32, i32, i32) {
    %c0_i32 = arith.constant 0 : i32
    %c0_i32_0 = arith.constant 0 : i32
    %c0_i32_1 = arith.constant 0 : i32
    return %arg0, %c0_i32, %c0_i32_0 : i32, i32, i32
  }
}

module attributes {stable_mosaic.version = 11 : i64} {
  func.func @_bert_layer_kernel(%arg0: i32, %arg1: memref<1x12x32xf32, #tpu.memory_space<vmem>>, %arg2: memref<32x96xf32, #tpu.memory_space<vmem>>, %arg3: memref<1x96xf32, #tpu.memory_space<vmem>>, %arg4: memref<32x32xf32, #tpu.memory_space<vmem>>, %arg5: memref<1x32xf32, #tpu.memory_space<vmem>>, %arg6: memref<1x32xf32, #tpu.memory_space<vmem>>, %arg7: memref<1x32xf32, #tpu.memory_space<vmem>>, %arg8: memref<32x64xf32, #tpu.memory_space<vmem>>, %arg9: memref<1x64xf32, #tpu.memory_space<vmem>>, %arg10: memref<64x32xf32, #tpu.memory_space<vmem>>, %arg11: memref<1x32xf32, #tpu.memory_space<vmem>>, %arg12: memref<1x32xf32, #tpu.memory_space<vmem>>, %arg13: memref<1x32xf32, #tpu.memory_space<vmem>>, %arg14: memref<1x12x32xf32, #tpu.memory_space<vmem>>) attributes {dimension_semantics = [#tpu.dimension_semantics<parallel>], iteration_bounds = array<i64: 2>, scalar_prefetch = 0 : i64, scratch_operands = 0 : i64, tpu.core_type = #tpu.core_type<tc>, window_params = [{transform_indices = @transform_0, window_bounds = array<i64: 1, 12, 32>}, {pipeline_mode = #tpu.pipeline_mode<synchronous>, transform_indices = @transform_1, window_bounds = array<i64: 32, 96>}, {pipeline_mode = #tpu.pipeline_mode<synchronous>, transform_indices = @transform_2, window_bounds = array<i64: 1, 96>}, {pipeline_mode = #tpu.pipeline_mode<synchronous>, transform_indices = @transform_3, window_bounds = array<i64: 32, 32>}, {pipeline_mode = #tpu.pipeline_mode<synchronous>, transform_indices = @transform_4, window_bounds = array<i64: 1, 32>}, {pipeline_mode = #tpu.pipeline_mode<synchronous>, transform_indices = @transform_5, window_bounds = array<i64: 1, 32>}, {pipeline_mode = #tpu.pipeline_mode<synchronous>, transform_indices = @transform_6, window_bounds = array<i64: 1, 32>}, {pipeline_mode = #tpu.pipeline_mode<synchronous>, transform_indices = @transform_7, window_bounds = array<i64: 32, 64>}, {pipeline_mode = #tpu.pipeline_mode<synchronous>, transform_indices = @transform_8, window_bounds = array<i64: 1, 64>}, {pipeline_mode = #tpu.pipeline_mode<synchronous>, transform_indices = @transform_9, window_bounds = array<i64: 64, 32>}, {pipeline_mode = #tpu.pipeline_mode<synchronous>, transform_indices = @transform_10, window_bounds = array<i64: 1, 32>}, {pipeline_mode = #tpu.pipeline_mode<synchronous>, transform_indices = @transform_11, window_bounds = array<i64: 1, 32>}, {pipeline_mode = #tpu.pipeline_mode<synchronous>, transform_indices = @transform_12, window_bounds = array<i64: 1, 32>}, {transform_indices = @transform_13, window_bounds = array<i64: 1, 12, 32>}]} {
    %c0 = arith.constant 0 : index
    %c0_0 = arith.constant 0 : index
    %c0_1 = arith.constant 0 : index
    %0 = vector.load %arg1[%c0, %c0_0, %c0_1] : memref<1x12x32xf32, #tpu.memory_space<vmem>>, vector<1x12x32xf32>
    %1 = vector.shape_cast %0 : vector<1x12x32xf32> to vector<12x32xf32>
    %c0_2 = arith.constant 0 : index
    %c0_3 = arith.constant 0 : index
    %2 = vector.load %arg2[%c0_2, %c0_3] : memref<32x96xf32, #tpu.memory_space<vmem>>, vector<32x96xf32>
    %cst = arith.constant dense<0.000000e+00> : vector<12x96xf32>
    %3 = tpu.matmul %1, %2, %cst {dimension_numbers = #tpu.dot_dimension_numbers<[1], [0], [0], [1], [0, 0, 1, 1], [], []>} : vector<12x32xf32>, vector<32x96xf32>, vector<12x96xf32> -> vector<12x96xf32>
    %c0_4 = arith.constant 0 : index
    %c0_5 = arith.constant 0 : index
    %4 = vector.load %arg3[%c0_4, %c0_5] : memref<1x96xf32, #tpu.memory_space<vmem>>, vector<1x96xf32>
    %5 = vector.broadcast %4 : vector<1x96xf32> to vector<12x96xf32>
    %6 = arith.addf %3, %5 : vector<12x96xf32>
    %c0_6 = arith.constant 0 : index
    %c0_7 = arith.constant 0 : index
    %7 = vector.load %arg4[%c0_6, %c0_7] : memref<32x32xf32, #tpu.memory_space<vmem>>, vector<32x32xf32>
    %cst_8 = arith.constant 0.000000e+00 : f32
    %8 = vector.broadcast %cst_8 : f32 to vector<12x32xf32>
    %9 = vector.extract_strided_slice %6 {offsets = [0, 0], sizes = [12, 8], strides = [1, 1]} : vector<12x96xf32> to vector<12x8xf32>
    %10 = vector.extract_strided_slice %6 {offsets = [0, 32], sizes = [12, 8], strides = [1, 1]} : vector<12x96xf32> to vector<12x8xf32>
    %11 = vector.extract_strided_slice %6 {offsets = [0, 64], sizes = [12, 8], strides = [1, 1]} : vector<12x96xf32> to vector<12x8xf32>
    %cst_9 = arith.constant dense<0.000000e+00> : vector<12x12xf32>
    %12 = tpu.matmul %9, %10, %cst_9 {dimension_numbers = #tpu.dot_dimension_numbers<[1], [1], [0], [0], [0, 0, 1, 0], [], []>} : vector<12x8xf32>, vector<12x8xf32>, vector<12x12xf32> -> vector<12x12xf32>
    %cst_10 = arith.constant 0.353553385 : f32
    %13 = vector.broadcast %cst_10 : f32 to vector<12x12xf32>
    %14 = arith.mulf %12, %13 : vector<12x12xf32>
    %cst_11 = arith.constant dense<0xFF800000> : vector<12xf32>
    %15 = vector.multi_reduction <maximumf>, %14, %cst_11 [1] : vector<12x12xf32> to vector<12xf32>
    %16 = vector.shape_cast %15 : vector<12xf32> to vector<12x1xf32>
    %17 = vector.broadcast %16 : vector<12x1xf32> to vector<12x12xf32>
    %18 = arith.subf %14, %17 : vector<12x12xf32>
    %19 = math.exp %18 : vector<12x12xf32>
    %cst_12 = arith.constant dense<0.000000e+00> : vector<12xf32>
    %20 = vector.multi_reduction <add>, %19, %cst_12 [1] : vector<12x12xf32> to vector<12xf32>
    %21 = vector.shape_cast %20 : vector<12xf32> to vector<12x1xf32>
    %22 = tpu.reciprocal %21 {approx = true} : vector<12x1xf32> -> vector<12x1xf32>
    %23 = vector.broadcast %22 : vector<12x1xf32> to vector<12x12xf32>
    %24 = arith.mulf %19, %23 : vector<12x12xf32>
    %cst_13 = arith.constant dense<0.000000e+00> : vector<12x8xf32>
    %25 = tpu.matmul %24, %11, %cst_13 {dimension_numbers = #tpu.dot_dimension_numbers<[1], [0], [0], [1], [0, 0, 1, 1], [], []>} : vector<12x12xf32>, vector<12x8xf32>, vector<12x8xf32> -> vector<12x8xf32>
    %26 = vector.extract_strided_slice %7 {offsets = [0, 0], sizes = [8, 32], strides = [1, 1]} : vector<32x32xf32> to vector<8x32xf32>
    %cst_14 = arith.constant dense<0.000000e+00> : vector<12x32xf32>
    %27 = tpu.matmul %25, %26, %cst_14 {dimension_numbers = #tpu.dot_dimension_numbers<[1], [0], [0], [1], [0, 0, 1, 1], [], []>} : vector<12x8xf32>, vector<8x32xf32>, vector<12x32xf32> -> vector<12x32xf32>
    %28 = arith.addf %8, %27 : vector<12x32xf32>
    %29 = vector.extract_strided_slice %6 {offsets = [0, 8], sizes = [12, 8], strides = [1, 1]} : vector<12x96xf32> to vector<12x8xf32>
    %30 = vector.extract_strided_slice %6 {offsets = [0, 40], sizes = [12, 8], strides = [1, 1]} : vector<12x96xf32> to vector<12x8xf32>
    %31 = vector.extract_strided_slice %6 {offsets = [0, 72], sizes = [12, 8], strides = [1, 1]} : vector<12x96xf32> to vector<12x8xf32>
    %cst_15 = arith.constant dense<0.000000e+00> : vector<12x12xf32>
    %32 = tpu.matmul %29, %30, %cst_15 {dimension_numbers = #tpu.dot_dimension_numbers<[1], [1], [0], [0], [0, 0, 1, 0], [], []>} : vector<12x8xf32>, vector<12x8xf32>, vector<12x12xf32> -> vector<12x12xf32>
    %cst_16 = arith.constant 0.353553385 : f32
    %33 = vector.broadcast %cst_16 : f32 to vector<12x12xf32>
    %34 = arith.mulf %32, %33 : vector<12x12xf32>
    %cst_17 = arith.constant dense<0xFF800000> : vector<12xf32>
    %35 = vector.multi_reduction <maximumf>, %34, %cst_17 [1] : vector<12x12xf32> to vector<12xf32>
    %36 = vector.shape_cast %35 : vector<12xf32> to vector<12x1xf32>
    %37 = vector.broadcast %36 : vector<12x1xf32> to vector<12x12xf32>
    %38 = arith.subf %34, %37 : vector<12x12xf32>
    %39 = math.exp %38 : vector<12x12xf32>
    %cst_18 = arith.constant dense<0.000000e+00> : vector<12xf32>
    %40 = vector.multi_reduction <add>, %39, %cst_18 [1] : vector<12x12xf32> to vector<12xf32>
    %41 = vector.shape_cast %40 : vector<12xf32> to vector<12x1xf32>
    %42 = tpu.reciprocal %41 {approx = true} : vector<12x1xf32> -> vector<12x1xf32>
    %43 = vector.broadcast %42 : vector<12x1xf32> to vector<12x12xf32>
    %44 = arith.mulf %39, %43 : vector<12x12xf32>
    %cst_19 = arith.constant dense<0.000000e+00> : vector<12x8xf32>
    %45 = tpu.matmul %44, %31, %cst_19 {dimension_numbers = #tpu.dot_dimension_numbers<[1], [0], [0], [1], [0, 0, 1, 1], [], []>} : vector<12x12xf32>, vector<12x8xf32>, vector<12x8xf32> -> vector<12x8xf32>
    %46 = vector.extract_strided_slice %7 {offsets = [8, 0], sizes = [8, 32], strides = [1, 1]} : vector<32x32xf32> to vector<8x32xf32>
    %cst_20 = arith.constant dense<0.000000e+00> : vector<12x32xf32>
    %47 = tpu.matmul %45, %46, %cst_20 {dimension_numbers = #tpu.dot_dimension_numbers<[1], [0], [0], [1], [0, 0, 1, 1], [], []>} : vector<12x8xf32>, vector<8x32xf32>, vector<12x32xf32> -> vector<12x32xf32>
    %48 = arith.addf %28, %47 : vector<12x32xf32>
    %49 = vector.extract_strided_slice %6 {offsets = [0, 16], sizes = [12, 8], strides = [1, 1]} : vector<12x96xf32> to vector<12x8xf32>
    %50 = vector.extract_strided_slice %6 {offsets = [0, 48], sizes = [12, 8], strides = [1, 1]} : vector<12x96xf32> to vector<12x8xf32>
    %51 = vector.extract_strided_slice %6 {offsets = [0, 80], sizes = [12, 8], strides = [1, 1]} : vector<12x96xf32> to vector<12x8xf32>
    %cst_21 = arith.constant dense<0.000000e+00> : vector<12x12xf32>
    %52 = tpu.matmul %49, %50, %cst_21 {dimension_numbers = #tpu.dot_dimension_numbers<[1], [1], [0], [0], [0, 0, 1, 0], [], []>} : vector<12x8xf32>, vector<12x8xf32>, vector<12x12xf32> -> vector<12x12xf32>
    %cst_22 = arith.constant 0.353553385 : f32
    %53 = vector.broadcast %cst_22 : f32 to vector<12x12xf32>
    %54 = arith.mulf %52, %53 : vector<12x12xf32>
    %cst_23 = arith.constant dense<0xFF800000> : vector<12xf32>
    %55 = vector.multi_reduction <maximumf>, %54, %cst_23 [1] : vector<12x12xf32> to vector<12xf32>
    %56 = vector.shape_cast %55 : vector<12xf32> to vector<12x1xf32>
    %57 = vector.broadcast %56 : vector<12x1xf32> to vector<12x12xf32>
    %58 = arith.subf %54, %57 : vector<12x12xf32>
    %59 = math.exp %58 : vector<12x12xf32>
    %cst_24 = arith.constant dense<0.000000e+00> : vector<12xf32>
    %60 = vector.multi_reduction <add>, %59, %cst_24 [1] : vector<12x12xf32> to vector<12xf32>
    %61 = vector.shape_cast %60 : vector<12xf32> to vector<12x1xf32>
    %62 = tpu.reciprocal %61 {approx = true} : vector<12x1xf32> -> vector<12x1xf32>
    %63 = vector.broadcast %62 : vector<12x1xf32> to vector<12x12xf32>
    %64 = arith.mulf %59, %63 : vector<12x12xf32>
    %cst_25 = arith.constant dense<0.000000e+00> : vector<12x8xf32>
    %65 = tpu.matmul %64, %51, %cst_25 {dimension_numbers = #tpu.dot_dimension_numbers<[1], [0], [0], [1], [0, 0, 1, 1], [], []>} : vector<12x12xf32>, vector<12x8xf32>, vector<12x8xf32> -> vector<12x8xf32>
    %66 = vector.extract_strided_slice %7 {offsets = [16, 0], sizes = [8, 32], strides = [1, 1]} : vector<32x32xf32> to vector<8x32xf32>
    %cst_26 = arith.constant dense<0.000000e+00> : vector<12x32xf32>
    %67 = tpu.matmul %65, %66, %cst_26 {dimension_numbers = #tpu.dot_dimension_numbers<[1], [0], [0], [1], [0, 0, 1, 1], [], []>} : vector<12x8xf32>, vector<8x32xf32>, vector<12x32xf32> -> vector<12x32xf32>
    %68 = arith.addf %48, %67 : vector<12x32xf32>
    %69 = vector.extract_strided_slice %6 {offsets = [0, 24], sizes = [12, 8], strides = [1, 1]} : vector<12x96xf32> to vector<12x8xf32>
    %70 = vector.extract_strided_slice %6 {offsets = [0, 56], sizes = [12, 8], strides = [1, 1]} : vector<12x96xf32> to vector<12x8xf32>
    %71 = vector.extract_strided_slice %6 {offsets = [0, 88], sizes = [12, 8], strides = [1, 1]} : vector<12x96xf32> to vector<12x8xf32>
    %cst_27 = arith.constant dense<0.000000e+00> : vector<12x12xf32>
    %72 = tpu.matmul %69, %70, %cst_27 {dimension_numbers = #tpu.dot_dimension_numbers<[1], [1], [0], [0], [0, 0, 1, 0], [], []>} : vector<12x8xf32>, vector<12x8xf32>, vector<12x12xf32> -> vector<12x12xf32>
    %cst_28 = arith.constant 0.353553385 : f32
    %73 = vector.broadcast %cst_28 : f32 to vector<12x12xf32>
    %74 = arith.mulf %72, %73 : vector<12x12xf32>
    %cst_29 = arith.constant dense<0xFF800000> : vector<12xf32>
    %75 = vector.multi_reduction <maximumf>, %74, %cst_29 [1] : vector<12x12xf32> to vector<12xf32>
    %76 = vector.shape_cast %75 : vector<12xf32> to vector<12x1xf32>
    %77 = vector.broadcast %76 : vector<12x1xf32> to vector<12x12xf32>
    %78 = arith.subf %74, %77 : vector<12x12xf32>
    %79 = math.exp %78 : vector<12x12xf32>
    %cst_30 = arith.constant dense<0.000000e+00> : vector<12xf32>
    %80 = vector.multi_reduction <add>, %79, %cst_30 [1] : vector<12x12xf32> to vector<12xf32>
    %81 = vector.shape_cast %80 : vector<12xf32> to vector<12x1xf32>
    %82 = tpu.reciprocal %81 {approx = true} : vector<12x1xf32> -> vector<12x1xf32>
    %83 = vector.broadcast %82 : vector<12x1xf32> to vector<12x12xf32>
    %84 = arith.mulf %79, %83 : vector<12x12xf32>
    %cst_31 = arith.constant dense<0.000000e+00> : vector<12x8xf32>
    %85 = tpu.matmul %84, %71, %cst_31 {dimension_numbers = #tpu.dot_dimension_numbers<[1], [0], [0], [1], [0, 0, 1, 1], [], []>} : vector<12x12xf32>, vector<12x8xf32>, vector<12x8xf32> -> vector<12x8xf32>
    %86 = vector.extract_strided_slice %7 {offsets = [24, 0], sizes = [8, 32], strides = [1, 1]} : vector<32x32xf32> to vector<8x32xf32>
    %cst_32 = arith.constant dense<0.000000e+00> : vector<12x32xf32>
    %87 = tpu.matmul %85, %86, %cst_32 {dimension_numbers = #tpu.dot_dimension_numbers<[1], [0], [0], [1], [0, 0, 1, 1], [], []>} : vector<12x8xf32>, vector<8x32xf32>, vector<12x32xf32> -> vector<12x32xf32>
    %88 = arith.addf %68, %87 : vector<12x32xf32>
    %c0_33 = arith.constant 0 : index
    %c0_34 = arith.constant 0 : index
    %89 = vector.load %arg5[%c0_33, %c0_34] : memref<1x32xf32, #tpu.memory_space<vmem>>, vector<1x32xf32>
    %90 = vector.broadcast %89 : vector<1x32xf32> to vector<12x32xf32>
    %91 = arith.addf %88, %90 : vector<12x32xf32>
    %92 = arith.addf %1, %91 : vector<12x32xf32>
    %c0_35 = arith.constant 0 : index
    %c0_36 = arith.constant 0 : index
    %93 = vector.load %arg6[%c0_35, %c0_36] : memref<1x32xf32, #tpu.memory_space<vmem>>, vector<1x32xf32>
    %c0_37 = arith.constant 0 : index
    %c0_38 = arith.constant 0 : index
    %94 = vector.load %arg7[%c0_37, %c0_38] : memref<1x32xf32, #tpu.memory_space<vmem>>, vector<1x32xf32>
    %cst_39 = arith.constant dense<0.000000e+00> : vector<12xf32>
    %95 = vector.multi_reduction <add>, %92, %cst_39 [1] : vector<12x32xf32> to vector<12xf32>
    %96 = vector.shape_cast %95 : vector<12xf32> to vector<12x1xf32>
    %cst_40 = arith.constant 3.200000e+01 : f32
    %97 = vector.broadcast %cst_40 : f32 to vector<12x1xf32>
    %98 = arith.divf %96, %97 : vector<12x1xf32>
    %99 = vector.broadcast %98 : vector<12x1xf32> to vector<12x32xf32>
    %100 = arith.subf %92, %99 : vector<12x32xf32>
    %101 = arith.mulf %100, %100 : vector<12x32xf32>
    %cst_41 = arith.constant dense<0.000000e+00> : vector<12xf32>
    %102 = vector.multi_reduction <add>, %101, %cst_41 [1] : vector<12x32xf32> to vector<12xf32>
    %103 = vector.shape_cast %102 : vector<12xf32> to vector<12x1xf32>
    %cst_42 = arith.constant 3.200000e+01 : f32
    %104 = vector.broadcast %cst_42 : f32 to vector<12x1xf32>
    %105 = arith.divf %103, %104 : vector<12x1xf32>
    %106 = vector.broadcast %98 : vector<12x1xf32> to vector<12x32xf32>
    %107 = arith.subf %92, %106 : vector<12x32xf32>
    %cst_43 = arith.constant 9.99999996E-13 : f32
    %108 = vector.broadcast %cst_43 : f32 to vector<12x1xf32>
    %109 = arith.addf %105, %108 : vector<12x1xf32>
    %110 = math.rsqrt %109 : vector<12x1xf32>
    %111 = vector.broadcast %110 : vector<12x1xf32> to vector<12x32xf32>
    %112 = arith.mulf %107, %111 : vector<12x32xf32>
    %113 = vector.broadcast %93 : vector<1x32xf32> to vector<12x32xf32>
    %114 = arith.mulf %112, %113 : vector<12x32xf32>
    %115 = vector.broadcast %94 : vector<1x32xf32> to vector<12x32xf32>
    %116 = arith.addf %114, %115 : vector<12x32xf32>
    %c0_44 = arith.constant 0 : index
    %c0_45 = arith.constant 0 : index
    %117 = vector.load %arg8[%c0_44, %c0_45] : memref<32x64xf32, #tpu.memory_space<vmem>>, vector<32x64xf32>
    %cst_46 = arith.constant dense<0.000000e+00> : vector<12x64xf32>
    %118 = tpu.matmul %116, %117, %cst_46 {dimension_numbers = #tpu.dot_dimension_numbers<[1], [0], [0], [1], [0, 0, 1, 1], [], []>} : vector<12x32xf32>, vector<32x64xf32>, vector<12x64xf32> -> vector<12x64xf32>
    %c0_47 = arith.constant 0 : index
    %c0_48 = arith.constant 0 : index
    %119 = vector.load %arg9[%c0_47, %c0_48] : memref<1x64xf32, #tpu.memory_space<vmem>>, vector<1x64xf32>
    %120 = vector.broadcast %119 : vector<1x64xf32> to vector<12x64xf32>
    %121 = arith.addf %118, %120 : vector<12x64xf32>
    %122 = arith.mulf %121, %121 : vector<12x64xf32>
    %123 = arith.mulf %121, %122 : vector<12x64xf32>
    %cst_49 = arith.constant 4.471500e-02 : f32
    %124 = vector.broadcast %cst_49 : f32 to vector<12x64xf32>
    %125 = arith.mulf %124, %123 : vector<12x64xf32>
    %126 = arith.addf %121, %125 : vector<12x64xf32>
    %cst_50 = arith.constant 0.797884583 : f32
    %127 = vector.broadcast %cst_50 : f32 to vector<12x64xf32>
    %128 = arith.mulf %127, %126 : vector<12x64xf32>
    %129 = math.tanh %128 : vector<12x64xf32>
    %cst_51 = arith.constant 1.000000e+00 : f32
    %130 = vector.broadcast %cst_51 : f32 to vector<12x64xf32>
    %131 = arith.addf %130, %129 : vector<12x64xf32>
    %cst_52 = arith.constant 5.000000e-01 : f32
    %132 = vector.broadcast %cst_52 : f32 to vector<12x64xf32>
    %133 = arith.mulf %132, %131 : vector<12x64xf32>
    %134 = arith.mulf %121, %133 : vector<12x64xf32>
    %c0_53 = arith.constant 0 : index
    %c0_54 = arith.constant 0 : index
    %135 = vector.load %arg10[%c0_53, %c0_54] : memref<64x32xf32, #tpu.memory_space<vmem>>, vector<64x32xf32>
    %cst_55 = arith.constant dense<0.000000e+00> : vector<12x32xf32>
    %136 = tpu.matmul %134, %135, %cst_55 {dimension_numbers = #tpu.dot_dimension_numbers<[1], [0], [0], [1], [0, 0, 1, 1], [], []>} : vector<12x64xf32>, vector<64x32xf32>, vector<12x32xf32> -> vector<12x32xf32>
    %c0_56 = arith.constant 0 : index
    %c0_57 = arith.constant 0 : index
    %137 = vector.load %arg11[%c0_56, %c0_57] : memref<1x32xf32, #tpu.memory_space<vmem>>, vector<1x32xf32>
    %138 = vector.broadcast %137 : vector<1x32xf32> to vector<12x32xf32>
    %139 = arith.addf %136, %138 : vector<12x32xf32>
    %140 = arith.addf %116, %139 : vector<12x32xf32>
    %c0_58 = arith.constant 0 : index
    %c0_59 = arith.constant 0 : index
    %141 = vector.load %arg12[%c0_58, %c0_59] : memref<1x32xf32, #tpu.memory_space<vmem>>, vector<1x32xf32>
    %c0_60 = arith.constant 0 : index
    %c0_61 = arith.constant 0 : index
    %142 = vector.load %arg13[%c0_60, %c0_61] : memref<1x32xf32, #tpu.memory_space<vmem>>, vector<1x32xf32>
    %cst_62 = arith.constant dense<0.000000e+00> : vector<12xf32>
    %143 = vector.multi_reduction <add>, %140, %cst_62 [1] : vector<12x32xf32> to vector<12xf32>
    %144 = vector.shape_cast %143 : vector<12xf32> to vector<12x1xf32>
    %cst_63 = arith.constant 3.200000e+01 : f32
    %145 = vector.broadcast %cst_63 : f32 to vector<12x1xf32>
    %146 = arith.divf %144, %145 : vector<12x1xf32>
    %147 = vector.broadcast %146 : vector<12x1xf32> to vector<12x32xf32>
    %148 = arith.subf %140, %147 : vector<12x32xf32>
    %149 = arith.mulf %148, %148 : vector<12x32xf32>
    %cst_64 = arith.constant dense<0.000000e+00> : vector<12xf32>
    %150 = vector.multi_reduction <add>, %149, %cst_64 [1] : vector<12x32xf32> to vector<12xf32>
    %151 = vector.shape_cast %150 : vector<12xf32> to vector<12x1xf32>
    %cst_65 = arith.constant 3.200000e+01 : f32
    %152 = vector.broadcast %cst_65 : f32 to vector<12x1xf32>
    %153 = arith.divf %151, %152 : vector<12x1xf32>
    %154 = vector.broadcast %146 : vector<12x1xf32> to vector<12x32xf32>
    %155 = arith.subf %140, %154 : vector<12x32xf32>
    %cst_66 = arith.constant 9.99999996E-13 : f32
    %156 = vector.broadcast %cst_66 : f32 to vector<12x1xf32>
    %157 = arith.addf %153, %156 : vector<12x1xf32>
    %158 = math.rsqrt %157 : vector<12x1xf32>
    %159 = vector.broadcast %158 : vector<12x1xf32> to vector<12x32xf32>
    %160 = arith.mulf %155, %159 : vector<12x32xf32>
    %161 = vector.broadcast %141 : vector<1x32xf32> to vector<12x32xf32>
    %162 = arith.mulf %160, %161 : vector<12x32xf32>
    %163 = vector.broadcast %142 : vector<1x32xf32> to vector<12x32xf32>
    %164 = arith.addf %162, %163 : vector<12x32xf32>
    %c0_67 = arith.constant 0 : index
    %c0_68 = arith.constant 0 : index
    %c0_69 = arith.constant 0 : index
    %165 = vector.load %arg14[%c0_67, %c0_68, %c0_69] : memref<1x12x32xf32, #tpu.memory_space<vmem>>, vector<1x12x32xf32>
    %166 = vector.shape_cast %165 : vector<1x12x32xf32> to vector<12x32xf32>
    %167 = vector.shape_cast %164 : vector<12x32xf32> to vector<1x12x32xf32>
    tpu.vector_store %arg14[%c0_67, %c0_68, %c0_69], %167 {strides = array<i32>} : memref<1x12x32xf32, #tpu.memory_space<vmem>>, vector<1x12x32xf32>,
    return
  }
  func.func @transform_0(%arg0: i32) -> (i32, i32, i32) {
    %c0_i32 = arith.constant 0 : i32
    %c0_i32_0 = arith.constant 0 : i32
    %c0_i32_1 = arith.constant 0 : i32
    return %arg0, %c0_i32, %c0_i32_0 : i32, i32, i32
  }
  func.func @transform_1(%arg0: i32) -> (i32, i32) {
    %c0_i32 = arith.constant 0 : i32
    %c0_i32_0 = arith.constant 0 : i32
    %c0_i32_1 = arith.constant 0 : i32
    return %c0_i32, %c0_i32_0 : i32, i32
  }
  func.func @transform_2(%arg0: i32) -> (i32, i32) {
    %c0_i32 = arith.constant 0 : i32
    %c0_i32_0 = arith.constant 0 : i32
    %c0_i32_1 = arith.constant 0 : i32
    return %c0_i32, %c0_i32_0 : i32, i32
  }
  func.func @transform_3(%arg0: i32) -> (i32, i32) {
    %c0_i32 = arith.constant 0 : i32
    %c0_i32_0 = arith.constant 0 : i32
    %c0_i32_1 = arith.constant 0 : i32
    return %c0_i32, %c0_i32_0 : i32, i32
  }
  func.func @transform_4(%arg0: i32) -> (i32, i32) {
    %c0_i32 = arith.constant 0 : i32
    %c0_i32_0 = arith.constant 0 : i32
    %c0_i32_1 = arith.constant 0 : i32
    return %c0_i32, %c0_i32_0 : i32, i32
  }
  func.func @transform_5(%arg0: i32) -> (i32, i32) {
    %c0_i32 = arith.constant 0 : i32
    %c0_i32_0 = arith.constant 0 : i32
    %c0_i32_1 = arith.constant 0 : i32
    return %c0_i32, %c0_i32_0 : i32, i32
  }
  func.func @transform_6(%arg0: i32) -> (i32, i32) {
    %c0_i32 = arith.constant 0 : i32
    %c0_i32_0 = arith.constant 0 : i32
    %c0_i32_1 = arith.constant 0 : i32
    return %c0_i32, %c0_i32_0 : i32, i32
  }
  func.func @transform_7(%arg0: i32) -> (i32, i32) {
    %c0_i32 = arith.constant 0 : i32
    %c0_i32_0 = arith.constant 0 : i32
    %c0_i32_1 = arith.constant 0 : i32
    return %c0_i32, %c0_i32_0 : i32, i32
  }
  func.func @transform_8(%arg0: i32) -> (i32, i32) {
    %c0_i32 = arith.constant 0 : i32
    %c0_i32_0 = arith.constant 0 : i32
    %c0_i32_1 = arith.constant 0 : i32
    return %c0_i32, %c0_i32_0 : i32, i32
  }
  func.func @transform_9(%arg0: i32) -> (i32, i32) {
    %c0_i32 = arith.constant 0 : i32
    %c0_i32_0 = arith.constant 0 : i32
    %c0_i32_1 = arith.constant 0 : i32
    return %c0_i32, %c0_i32_0 : i32, i32
  }
  func.func @transform_10(%arg0: i32) -> (i32, i32) {
    %c0_i32 = arith.constant 0 : i32
    %c0_i32_0 = arith.constant 0 : i32
    %c0_i32_1 = arith.constant 0 : i32
    return %c0_i32, %c0_i32_0 : i32, i32
  }
  func.func @transform_11(%arg0: i32) -> (i32, i32) {
    %c0_i32 = arith.constant 0 : i32
    %c0_i32_0 = arith.constant 0 : i32
    %c0_i32_1 = arith.constant 0 : i32
    return %c0_i32, %c0_i32_0 : i32, i32
  }
  func.func @transform_12(%arg0: i32) -> (i32, i32) {
    %c0_i32 = arith.constant 0 : i32
    %c0_i32_0 = arith.constant 0 : i32
    %c0_i32_1 = arith.constant 0 : i32
    return %c0_i32, %c0_i32_0 : i32, i32
  }
  func.func @transform_13(%arg0: i32) -> (i32, i32, i32) {
    %c0_i32 = arith.constant 0 : i32
    %c0_i32_0 = arith.constant 0 : i32
    %c0_i32_1 = arith.constant 0 : i32
    return %arg0, %c0_i32, %c0_i32_0 : i32, i32, i32
  }
}

module attributes {stable_mosaic.version = 11 : i64} {
  func.func @_bridge_kernel(%arg0: i32, %arg1: memref<1x12x32xf32, #tpu.memory_space<vmem>>, %arg2: memref<32x32xf32, #tpu.memory_space<vmem>>, %arg3: memref<1x32xf32, #tpu.memory_space<vmem>>, %arg4: memref<32x32xf32, #tpu.memory_space<vmem>>, %arg5: memref<1x32xf32, #tpu.memory_space<vmem>>, %arg6: memref<1x8x32xf32, #tpu.memory_space<vmem>>, %arg7: memref<1x1x32xf32, #tpu.memory_space<vmem>>) attributes {dimension_semantics = [#tpu.dimension_semantics<parallel>], iteration_bounds = array<i64: 2>, scalar_prefetch = 0 : i64, scratch_operands = 0 : i64, tpu.core_type = #tpu.core_type<tc>, window_params = [{transform_indices = @transform_0, window_bounds = array<i64: 1, 12, 32>}, {pipeline_mode = #tpu.pipeline_mode<synchronous>, transform_indices = @transform_1, window_bounds = array<i64: 32, 32>}, {pipeline_mode = #tpu.pipeline_mode<synchronous>, transform_indices = @transform_2, window_bounds = array<i64: 1, 32>}, {pipeline_mode = #tpu.pipeline_mode<synchronous>, transform_indices = @transform_3, window_bounds = array<i64: 32, 32>}, {pipeline_mode = #tpu.pipeline_mode<synchronous>, transform_indices = @transform_4, window_bounds = array<i64: 1, 32>}, {transform_indices = @transform_5, window_bounds = array<i64: 1, 8, 32>}, {transform_indices = @transform_6, window_bounds = array<i64: 1, 1, 32>}]} {
    %c0 = arith.constant 0 : index
    %c0_0 = arith.constant 0 : index
    %c0_1 = arith.constant 0 : index
    %0 = vector.load %arg1[%c0, %c0_0, %c0_1] : memref<1x12x32xf32, #tpu.memory_space<vmem>>, vector<1x12x32xf32>
    %1 = vector.shape_cast %0 : vector<1x12x32xf32> to vector<12x32xf32>
    %2 = vector.extract_strided_slice %1 {offsets = [0, 0], sizes = [8, 32], strides = [1, 1]} : vector<12x32xf32> to vector<8x32xf32>
    %c0_2 = arith.constant 0 : index
    %c0_3 = arith.constant 0 : index
    %3 = vector.load %arg2[%c0_2, %c0_3] : memref<32x32xf32, #tpu.memory_space<vmem>>, vector<32x32xf32>
    %cst = arith.constant dense<0.000000e+00> : vector<8x32xf32>
    %4 = tpu.matmul %2, %3, %cst {dimension_numbers = #tpu.dot_dimension_numbers<[1], [0], [0], [1], [0, 0, 1, 1], [], []>} : vector<8x32xf32>, vector<32x32xf32>, vector<8x32xf32> -> vector<8x32xf32>
    %c0_4 = arith.constant 0 : index
    %c0_5 = arith.constant 0 : index
    %5 = vector.load %arg3[%c0_4, %c0_5] : memref<1x32xf32, #tpu.memory_space<vmem>>, vector<1x32xf32>
    %6 = vector.broadcast %5 : vector<1x32xf32> to vector<8x32xf32>
    %7 = arith.addf %4, %6 : vector<8x32xf32>
    %c0_6 = arith.constant 0 : index
    %c0_7 = arith.constant 0 : index
    %c0_8 = arith.constant 0 : index
    %8 = vector.load %arg6[%c0_6, %c0_7, %c0_8] : memref<1x8x32xf32, #tpu.memory_space<vmem>>, vector<1x8x32xf32>
    %9 = vector.shape_cast %8 : vector<1x8x32xf32> to vector<8x32xf32>
    %10 = vector.shape_cast %7 : vector<8x32xf32> to vector<1x8x32xf32>
    tpu.vector_store %arg6[%c0_6, %c0_7, %c0_8], %10 {strides = array<i32>} : memref<1x8x32xf32, #tpu.memory_space<vmem>>, vector<1x8x32xf32>,
    %11 = vector.extract_strided_slice %1 {offsets = [0, 0], sizes = [1, 32], strides = [1, 1]} : vector<12x32xf32> to vector<1x32xf32>
    %c0_9 = arith.constant 0 : index
    %c0_10 = arith.constant 0 : index
    %12 = vector.load %arg4[%c0_9, %c0_10] : memref<32x32xf32, #tpu.memory_space<vmem>>, vector<32x32xf32>
    %cst_11 = arith.constant dense<0.000000e+00> : vector<1x32xf32>
    %13 = tpu.matmul %11, %12, %cst_11 {dimension_numbers = #tpu.dot_dimension_numbers<[1], [0], [0], [1], [0, 0, 1, 1], [], []>} : vector<1x32xf32>, vector<32x32xf32>, vector<1x32xf32> -> vector<1x32xf32>
    %c0_12 = arith.constant 0 : index
    %c0_13 = arith.constant 0 : index
    %14 = vector.load %arg5[%c0_12, %c0_13] : memref<1x32xf32, #tpu.memory_space<vmem>>, vector<1x32xf32>
    %15 = arith.addf %13, %14 : vector<1x32xf32>
    %16 = math.tanh %15 : vector<1x32xf32>
    %c0_14 = arith.constant 0 : index
    %c0_15 = arith.constant 0 : index
    %c0_16 = arith.constant 0 : index
    %17 = vector.load %arg7[%c0_14, %c0_15, %c0_16] : memref<1x1x32xf32, #tpu.memory_space<vmem>>, vector<1x1x32xf32>
    %18 = vector.shape_cast %17 : vector<1x1x32xf32> to vector<1x32xf32>
    %19 = vector.shape_cast %16 : vector<1x32xf32> to vector<1x1x32xf32>
    tpu.vector_store %arg7[%c0_14, %c0_15, %c0_16], %19 {strides = array<i32>} : memref<1x1x32xf32, #tpu.memory_space<vmem>>, vector<1x1x32xf32>,
    return
  }
  func.func @transform_0(%arg0: i32) -> (i32, i32, i32) {
    %c0_i32 = arith.constant 0 : i32
    %c0_i32_0 = arith.constant 0 : i32
    %c0_i32_1 = arith.constant 0 : i32
    return %arg0, %c0_i32, %c0_i32_0 : i32, i32, i32
  }
  func.func @transform_1(%arg0: i32) -> (i32, i32) {
    %c0_i32 = arith.constant 0 : i32
    %c0_i32_0 = arith.constant 0 : i32
    %c0_i32_1 = arith.constant 0 : i32
    return %c0_i32, %c0_i32_0 : i32, i32
  }
  func.func @transform_2(%arg0: i32) -> (i32, i32) {
    %c0_i32 = arith.constant 0 : i32
    %c0_i32_0 = arith.constant 0 : i32
    %c0_i32_1 = arith.constant 0 : i32
    return %c0_i32, %c0_i32_0 : i32, i32
  }
  func.func @transform_3(%arg0: i32) -> (i32, i32) {
    %c0_i32 = arith.constant 0 : i32
    %c0_i32_0 = arith.constant 0 : i32
    %c0_i32_1 = arith.constant 0 : i32
    return %c0_i32, %c0_i32_0 : i32, i32
  }
  func.func @transform_4(%arg0: i32) -> (i32, i32) {
    %c0_i32 = arith.constant 0 : i32
    %c0_i32_0 = arith.constant 0 : i32
    %c0_i32_1 = arith.constant 0 : i32
    return %c0_i32, %c0_i32_0 : i32, i32
  }
  func.func @transform_5(%arg0: i32) -> (i32, i32, i32) {
    %c0_i32 = arith.constant 0 : i32
    %c0_i32_0 = arith.constant 0 : i32
    %c0_i32_1 = arith.constant 0 : i32
    return %arg0, %c0_i32, %c0_i32_0 : i32, i32, i32
  }
  func.func @transform_6(%arg0: i32) -> (i32, i32, i32) {
    %c0_i32 = arith.constant 0 : i32
    %c0_i32_0 = arith.constant 0 : i32
    %c0_i32_1 = arith.constant 0 : i32
    return %arg0, %c0_i32, %c0_i32_0 : i32, i32, i32
  }
}

module attributes {stable_mosaic.version = 11 : i64} {
  func.func @_rgat_layer_kernel(%arg0: i32, %arg1: memref<1x8x32xf32, #tpu.memory_space<vmem>>, %arg2: memref<1x8x8xf32, #tpu.memory_space<vmem>>, %arg3: memref<1x8x8x16xf32, #tpu.memory_space<vmem>>, %arg4: memref<32x96xf32, #tpu.memory_space<vmem>>, %arg5: memref<1x96xf32, #tpu.memory_space<vmem>>, %arg6: memref<16x8xf32, #tpu.memory_space<vmem>>, %arg7: memref<1x8xf32, #tpu.memory_space<vmem>>, %arg8: memref<16x8xf32, #tpu.memory_space<vmem>>, %arg9: memref<1x8xf32, #tpu.memory_space<vmem>>, %arg10: memref<32x32xf32, #tpu.memory_space<vmem>>, %arg11: memref<1x32xf32, #tpu.memory_space<vmem>>, %arg12: memref<1x32xf32, #tpu.memory_space<vmem>>, %arg13: memref<1x32xf32, #tpu.memory_space<vmem>>, %arg14: memref<32x32xf32, #tpu.memory_space<vmem>>, %arg15: memref<1x32xf32, #tpu.memory_space<vmem>>, %arg16: memref<32x32xf32, #tpu.memory_space<vmem>>, %arg17: memref<1x32xf32, #tpu.memory_space<vmem>>, %arg18: memref<1x32xf32, #tpu.memory_space<vmem>>, %arg19: memref<1x32xf32, #tpu.memory_space<vmem>>, %arg20: memref<1x8x32xf32, #tpu.memory_space<vmem>>) attributes {dimension_semantics = [#tpu.dimension_semantics<parallel>], iteration_bounds = array<i64: 2>, scalar_prefetch = 0 : i64, scratch_operands = 0 : i64, tpu.core_type = #tpu.core_type<tc>, window_params = [{transform_indices = @transform_0, window_bounds = array<i64: 1, 8, 32>}, {transform_indices = @transform_1, window_bounds = array<i64: 1, 8, 8>}, {transform_indices = @transform_2, window_bounds = array<i64: 1, 8, 8, 16>}, {pipeline_mode = #tpu.pipeline_mode<synchronous>, transform_indices = @transform_3, window_bounds = array<i64: 32, 96>}, {pipeline_mode = #tpu.pipeline_mode<synchronous>, transform_indices = @transform_4, window_bounds = array<i64: 1, 96>}, {pipeline_mode = #tpu.pipeline_mode<synchronous>, transform_indices = @transform_5, window_bounds = array<i64: 16, 8>}, {pipeline_mode = #tpu.pipeline_mode<synchronous>, transform_indices = @transform_6, window_bounds = array<i64: 1, 8>}, {pipeline_mode = #tpu.pipeline_mode<synchronous>, transform_indices = @transform_7, window_bounds = array<i64: 16, 8>}, {pipeline_mode = #tpu.pipeline_mode<synchronous>, transform_indices = @transform_8, window_bounds = array<i64: 1, 8>}, {pipeline_mode = #tpu.pipeline_mode<synchronous>, transform_indices = @transform_9, window_bounds = array<i64: 32, 32>}, {pipeline_mode = #tpu.pipeline_mode<synchronous>, transform_indices = @transform_10, window_bounds = array<i64: 1, 32>}, {pipeline_mode = #tpu.pipeline_mode<synchronous>, transform_indices = @transform_11, window_bounds = array<i64: 1, 32>}, {pipeline_mode = #tpu.pipeline_mode<synchronous>, transform_indices = @transform_12, window_bounds = array<i64: 1, 32>}, {pipeline_mode = #tpu.pipeline_mode<synchronous>, transform_indices = @transform_13, window_bounds = array<i64: 32, 32>}, {pipeline_mode = #tpu.pipeline_mode<synchronous>, transform_indices = @transform_14, window_bounds = array<i64: 1, 32>}, {pipeline_mode = #tpu.pipeline_mode<synchronous>, transform_indices = @transform_15, window_bounds = array<i64: 32, 32>}, {pipeline_mode = #tpu.pipeline_mode<synchronous>, transform_indices = @transform_16, window_bounds = array<i64: 1, 32>}, {pipeline_mode = #tpu.pipeline_mode<synchronous>, transform_indices = @transform_17, window_bounds = array<i64: 1, 32>}, {pipeline_mode = #tpu.pipeline_mode<synchronous>, transform_indices = @transform_18, window_bounds = array<i64: 1, 32>}, {transform_indices = @transform_19, window_bounds = array<i64: 1, 8, 32>}]} {
    %c0 = arith.constant 0 : index
    %c0_0 = arith.constant 0 : index
    %c0_1 = arith.constant 0 : index
    %0 = vector.load %arg1[%c0, %c0_0, %c0_1] : memref<1x8x32xf32, #tpu.memory_space<vmem>>, vector<1x8x32xf32>
    %1 = vector.shape_cast %0 : vector<1x8x32xf32> to vector<8x32xf32>
    %c0_2 = arith.constant 0 : index
    %c0_3 = arith.constant 0 : index
    %c0_4 = arith.constant 0 : index
    %c0_5 = arith.constant 0 : index
    %2 = vector.load %arg3[%c0_2, %c0_3, %c0_4, %c0_5] : memref<1x8x8x16xf32, #tpu.memory_space<vmem>>, vector<1x8x8x16xf32>
    %3 = vector.shape_cast %2 : vector<1x8x8x16xf32> to vector<8x8x16xf32>
    %c0_6 = arith.constant 0 : index
    %c0_7 = arith.constant 0 : index
    %c0_8 = arith.constant 0 : index
    %4 = vector.load %arg2[%c0_6, %c0_7, %c0_8] : memref<1x8x8xf32, #tpu.memory_space<vmem>>, vector<1x8x8xf32>
    %5 = vector.shape_cast %4 : vector<1x8x8xf32> to vector<8x8xf32>
    %c0_9 = arith.constant 0 : index
    %c0_10 = arith.constant 0 : index
    %6 = vector.load %arg4[%c0_9, %c0_10] : memref<32x96xf32, #tpu.memory_space<vmem>>, vector<32x96xf32>
    %cst = arith.constant dense<0.000000e+00> : vector<8x96xf32>
    %7 = tpu.matmul %1, %6, %cst {dimension_numbers = #tpu.dot_dimension_numbers<[1], [0], [0], [1], [0, 0, 1, 1], [], []>} : vector<8x32xf32>, vector<32x96xf32>, vector<8x96xf32> -> vector<8x96xf32>
    %c0_11 = arith.constant 0 : index
    %c0_12 = arith.constant 0 : index
    %8 = vector.load %arg5[%c0_11, %c0_12] : memref<1x96xf32, #tpu.memory_space<vmem>>, vector<1x96xf32>
    %9 = vector.broadcast %8 : vector<1x96xf32> to vector<8x96xf32>
    %10 = arith.addf %7, %9 : vector<8x96xf32>
    %c0_13 = arith.constant 0 : index
    %c0_14 = arith.constant 0 : index
    %11 = vector.load %arg10[%c0_13, %c0_14] : memref<32x32xf32, #tpu.memory_space<vmem>>, vector<32x32xf32>
    %c0_15 = arith.constant 0 : index
    %c0_16 = arith.constant 0 : index
    %12 = vector.load %arg6[%c0_15, %c0_16] : memref<16x8xf32, #tpu.memory_space<vmem>>, vector<16x8xf32>
    %c0_17 = arith.constant 0 : index
    %c0_18 = arith.constant 0 : index
    %13 = vector.load %arg7[%c0_17, %c0_18] : memref<1x8xf32, #tpu.memory_space<vmem>>, vector<1x8xf32>
    %c0_19 = arith.constant 0 : index
    %c0_20 = arith.constant 0 : index
    %14 = vector.load %arg8[%c0_19, %c0_20] : memref<16x8xf32, #tpu.memory_space<vmem>>, vector<16x8xf32>
    %c0_21 = arith.constant 0 : index
    %c0_22 = arith.constant 0 : index
    %15 = vector.load %arg9[%c0_21, %c0_22] : memref<1x8xf32, #tpu.memory_space<vmem>>, vector<1x8xf32>
    %cst_23 = arith.constant 0.000000e+00 : f32
    %16 = vector.broadcast %cst_23 : f32 to vector<8x32xf32>
    %17 = vector.extract_strided_slice %10 {offsets = [0, 0], sizes = [8, 8], strides = [1, 1]} : vector<8x96xf32> to vector<8x8xf32>
    %18 = vector.extract_strided_slice %10 {offsets = [0, 32], sizes = [8, 8], strides = [1, 1]} : vector<8x96xf32> to vector<8x8xf32>
    %19 = vector.extract_strided_slice %10 {offsets = [0, 64], sizes = [8, 8], strides = [1, 1]} : vector<8x96xf32> to vector<8x8xf32>
    %cst_24 = arith.constant dense<0.000000e+00> : vector<8x8xf32>
    %20 = tpu.matmul %17, %18, %cst_24 {dimension_numbers = #tpu.dot_dimension_numbers<[1], [1], [0], [0], [0, 0, 1, 0], [], []>} : vector<8x8xf32>, vector<8x8xf32>, vector<8x8xf32> -> vector<8x8xf32>
    %cst_25 = arith.constant dense<0.000000e+00> : vector<8x16xf32>
    %21 = tpu.matmul %17, %12, %cst_25 {dimension_numbers = #tpu.dot_dimension_numbers<[1], [1], [0], [0], [0, 0, 1, 0], [], []>} : vector<8x8xf32>, vector<16x8xf32>, vector<8x16xf32> -> vector<8x16xf32>
    %22 = vector.shape_cast %21 : vector<8x16xf32> to vector<8x1x16xf32>
    %23 = vector.broadcast %22 : vector<8x1x16xf32> to vector<8x8x16xf32>
    %24 = arith.mulf %23, %3 : vector<8x8x16xf32>
    %cst_26 = arith.constant dense<0.000000e+00> : vector<8x8xf32>
    %25 = vector.multi_reduction <add>, %24, %cst_26 [2] : vector<8x8x16xf32> to vector<8x8xf32>
    %26 = vector.broadcast %13 : vector<1x8xf32> to vector<8x8xf32>
    %27 = arith.mulf %17, %26 : vector<8x8xf32>
    %cst_27 = arith.constant dense<0.000000e+00> : vector<8xf32>
    %28 = vector.multi_reduction <add>, %27, %cst_27 [1] : vector<8x8xf32> to vector<8xf32>
    %29 = vector.shape_cast %28 : vector<8xf32> to vector<8x1xf32>
    %30 = arith.addf %20, %25 : vector<8x8xf32>
    %31 = vector.broadcast %29 : vector<8x1xf32> to vector<8x8xf32>
    %32 = arith.addf %30, %31 : vector<8x8xf32>
    %cst_28 = arith.constant 0.353553385 : f32
    %33 = vector.broadcast %cst_28 : f32 to vector<8x8xf32>
    %34 = arith.mulf %32, %33 : vector<8x8xf32>
    %35 = arith.addf %34, %5 : vector<8x8xf32>
    %cst_29 = arith.constant dense<0xFF800000> : vector<8xf32>
    %36 = vector.multi_reduction <maximumf>, %35, %cst_29 [1] : vector<8x8xf32> to vector<8xf32>
    %37 = vector.shape_cast %36 : vector<8xf32> to vector<8x1xf32>
    %38 = vector.broadcast %37 : vector<8x1xf32> to vector<8x8xf32>
    %39 = arith.subf %35, %38 : vector<8x8xf32>
    %40 = math.exp %39 : vector<8x8xf32>
    %cst_30 = arith.constant dense<0.000000e+00> : vector<8xf32>
    %41 = vector.multi_reduction <add>, %40, %cst_30 [1] : vector<8x8xf32> to vector<8xf32>
    %42 = vector.shape_cast %41 : vector<8xf32> to vector<8x1xf32>
    %43 = tpu.reciprocal %42 {approx = true} : vector<8x1xf32> -> vector<8x1xf32>
    %44 = vector.broadcast %43 : vector<8x1xf32> to vector<8x8xf32>
    %45 = arith.mulf %40, %44 : vector<8x8xf32>
    %cst_31 = arith.constant dense<0.000000e+00> : vector<8x8xf32>
    %46 = tpu.matmul %45, %19, %cst_31 {dimension_numbers = #tpu.dot_dimension_numbers<[1], [0], [0], [1], [0, 0, 1, 1], [], []>} : vector<8x8xf32>, vector<8x8xf32>, vector<8x8xf32> -> vector<8x8xf32>
    %47 = vector.shape_cast %45 : vector<8x8xf32> to vector<8x8x1xf32>
    %48 = vector.broadcast %47 : vector<8x8x1xf32> to vector<8x8x16xf32>
    %49 = arith.mulf %48, %3 : vector<8x8x16xf32>
    %cst_32 = arith.constant dense<0.000000e+00> : vector<8x16xf32>
    %50 = vector.multi_reduction <add>, %49, %cst_32 [1] : vector<8x8x16xf32> to vector<8x16xf32>
    %cst_33 = arith.constant dense<0.000000e+00> : vector<8x8xf32>
    %51 = tpu.matmul %50, %14, %cst_33 {dimension_numbers = #tpu.dot_dimension_numbers<[1], [0], [0], [1], [0, 0, 1, 1], [], []>} : vector<8x16xf32>, vector<16x8xf32>, vector<8x8xf32> -> vector<8x8xf32>
    %52 = arith.addf %46, %51 : vector<8x8xf32>
    %53 = vector.broadcast %15 : vector<1x8xf32> to vector<8x8xf32>
    %54 = arith.addf %52, %53 : vector<8x8xf32>
    %55 = vector.extract_strided_slice %11 {offsets = [0, 0], sizes = [8, 32], strides = [1, 1]} : vector<32x32xf32> to vector<8x32xf32>
    %cst_34 = arith.constant dense<0.000000e+00> : vector<8x32xf32>
    %56 = tpu.matmul %54, %55, %cst_34 {dimension_numbers = #tpu.dot_dimension_numbers<[1], [0], [0], [1], [0, 0, 1, 1], [], []>} : vector<8x8xf32>, vector<8x32xf32>, vector<8x32xf32> -> vector<8x32xf32>
    %57 = arith.addf %16, %56 : vector<8x32xf32>
    %58 = vector.extract_strided_slice %10 {offsets = [0, 8], sizes = [8, 8], strides = [1, 1]} : vector<8x96xf32> to vector<8x8xf32>
    %59 = vector.extract_strided_slice %10 {offsets = [0, 40], sizes = [8, 8], strides = [1, 1]} : vector<8x96xf32> to vector<8x8xf32>
    %60 = vector.extract_strided_slice %10 {offsets = [0, 72], sizes = [8, 8], strides = [1, 1]} : vector<8x96xf32> to vector<8x8xf32>
    %cst_35 = arith.constant dense<0.000000e+00> : vector<8x8xf32>
    %61 = tpu.matmul %58, %59, %cst_35 {dimension_numbers = #tpu.dot_dimension_numbers<[1], [1], [0], [0], [0, 0, 1, 0], [], []>} : vector<8x8xf32>, vector<8x8xf32>, vector<8x8xf32> -> vector<8x8xf32>
    %cst_36 = arith.constant dense<0.000000e+00> : vector<8x16xf32>
    %62 = tpu.matmul %58, %12, %cst_36 {dimension_numbers = #tpu.dot_dimension_numbers<[1], [1], [0], [0], [0, 0, 1, 0], [], []>} : vector<8x8xf32>, vector<16x8xf32>, vector<8x16xf32> -> vector<8x16xf32>
    %63 = vector.shape_cast %62 : vector<8x16xf32> to vector<8x1x16xf32>
    %64 = vector.broadcast %63 : vector<8x1x16xf32> to vector<8x8x16xf32>
    %65 = arith.mulf %64, %3 : vector<8x8x16xf32>
    %cst_37 = arith.constant dense<0.000000e+00> : vector<8x8xf32>
    %66 = vector.multi_reduction <add>, %65, %cst_37 [2] : vector<8x8x16xf32> to vector<8x8xf32>
    %67 = vector.broadcast %13 : vector<1x8xf32> to vector<8x8xf32>
    %68 = arith.mulf %58, %67 : vector<8x8xf32>
    %cst_38 = arith.constant dense<0.000000e+00> : vector<8xf32>
    %69 = vector.multi_reduction <add>, %68, %cst_38 [1] : vector<8x8xf32> to vector<8xf32>
    %70 = vector.shape_cast %69 : vector<8xf32> to vector<8x1xf32>
    %71 = arith.addf %61, %66 : vector<8x8xf32>
    %72 = vector.broadcast %70 : vector<8x1xf32> to vector<8x8xf32>
    %73 = arith.addf %71, %72 : vector<8x8xf32>
    %cst_39 = arith.constant 0.353553385 : f32
    %74 = vector.broadcast %cst_39 : f32 to vector<8x8xf32>
    %75 = arith.mulf %73, %74 : vector<8x8xf32>
    %76 = arith.addf %75, %5 : vector<8x8xf32>
    %cst_40 = arith.constant dense<0xFF800000> : vector<8xf32>
    %77 = vector.multi_reduction <maximumf>, %76, %cst_40 [1] : vector<8x8xf32> to vector<8xf32>
    %78 = vector.shape_cast %77 : vector<8xf32> to vector<8x1xf32>
    %79 = vector.broadcast %78 : vector<8x1xf32> to vector<8x8xf32>
    %80 = arith.subf %76, %79 : vector<8x8xf32>
    %81 = math.exp %80 : vector<8x8xf32>
    %cst_41 = arith.constant dense<0.000000e+00> : vector<8xf32>
    %82 = vector.multi_reduction <add>, %81, %cst_41 [1] : vector<8x8xf32> to vector<8xf32>
    %83 = vector.shape_cast %82 : vector<8xf32> to vector<8x1xf32>
    %84 = tpu.reciprocal %83 {approx = true} : vector<8x1xf32> -> vector<8x1xf32>
    %85 = vector.broadcast %84 : vector<8x1xf32> to vector<8x8xf32>
    %86 = arith.mulf %81, %85 : vector<8x8xf32>
    %cst_42 = arith.constant dense<0.000000e+00> : vector<8x8xf32>
    %87 = tpu.matmul %86, %60, %cst_42 {dimension_numbers = #tpu.dot_dimension_numbers<[1], [0], [0], [1], [0, 0, 1, 1], [], []>} : vector<8x8xf32>, vector<8x8xf32>, vector<8x8xf32> -> vector<8x8xf32>
    %88 = vector.shape_cast %86 : vector<8x8xf32> to vector<8x8x1xf32>
    %89 = vector.broadcast %88 : vector<8x8x1xf32> to vector<8x8x16xf32>
    %90 = arith.mulf %89, %3 : vector<8x8x16xf32>
    %cst_43 = arith.constant dense<0.000000e+00> : vector<8x16xf32>
    %91 = vector.multi_reduction <add>, %90, %cst_43 [1] : vector<8x8x16xf32> to vector<8x16xf32>
    %cst_44 = arith.constant dense<0.000000e+00> : vector<8x8xf32>
    %92 = tpu.matmul %91, %14, %cst_44 {dimension_numbers = #tpu.dot_dimension_numbers<[1], [0], [0], [1], [0, 0, 1, 1], [], []>} : vector<8x16xf32>, vector<16x8xf32>, vector<8x8xf32> -> vector<8x8xf32>
    %93 = arith.addf %87, %92 : vector<8x8xf32>
    %94 = vector.broadcast %15 : vector<1x8xf32> to vector<8x8xf32>
    %95 = arith.addf %93, %94 : vector<8x8xf32>
    %96 = vector.extract_strided_slice %11 {offsets = [8, 0], sizes = [8, 32], strides = [1, 1]} : vector<32x32xf32> to vector<8x32xf32>
    %cst_45 = arith.constant dense<0.000000e+00> : vector<8x32xf32>
    %97 = tpu.matmul %95, %96, %cst_45 {dimension_numbers = #tpu.dot_dimension_numbers<[1], [0], [0], [1], [0, 0, 1, 1], [], []>} : vector<8x8xf32>, vector<8x32xf32>, vector<8x32xf32> -> vector<8x32xf32>
    %98 = arith.addf %57, %97 : vector<8x32xf32>
    %99 = vector.extract_strided_slice %10 {offsets = [0, 16], sizes = [8, 8], strides = [1, 1]} : vector<8x96xf32> to vector<8x8xf32>
    %100 = vector.extract_strided_slice %10 {offsets = [0, 48], sizes = [8, 8], strides = [1, 1]} : vector<8x96xf32> to vector<8x8xf32>
    %101 = vector.extract_strided_slice %10 {offsets = [0, 80], sizes = [8, 8], strides = [1, 1]} : vector<8x96xf32> to vector<8x8xf32>
    %cst_46 = arith.constant dense<0.000000e+00> : vector<8x8xf32>
    %102 = tpu.matmul %99, %100, %cst_46 {dimension_numbers = #tpu.dot_dimension_numbers<[1], [1], [0], [0], [0, 0, 1, 0], [], []>} : vector<8x8xf32>, vector<8x8xf32>, vector<8x8xf32> -> vector<8x8xf32>
    %cst_47 = arith.constant dense<0.000000e+00> : vector<8x16xf32>
    %103 = tpu.matmul %99, %12, %cst_47 {dimension_numbers = #tpu.dot_dimension_numbers<[1], [1], [0], [0], [0, 0, 1, 0], [], []>} : vector<8x8xf32>, vector<16x8xf32>, vector<8x16xf32> -> vector<8x16xf32>
    %104 = vector.shape_cast %103 : vector<8x16xf32> to vector<8x1x16xf32>
    %105 = vector.broadcast %104 : vector<8x1x16xf32> to vector<8x8x16xf32>
    %106 = arith.mulf %105, %3 : vector<8x8x16xf32>
    %cst_48 = arith.constant dense<0.000000e+00> : vector<8x8xf32>
    %107 = vector.multi_reduction <add>, %106, %cst_48 [2] : vector<8x8x16xf32> to vector<8x8xf32>
    %108 = vector.broadcast %13 : vector<1x8xf32> to vector<8x8xf32>
    %109 = arith.mulf %99, %108 : vector<8x8xf32>
    %cst_49 = arith.constant dense<0.000000e+00> : vector<8xf32>
    %110 = vector.multi_reduction <add>, %109, %cst_49 [1] : vector<8x8xf32> to vector<8xf32>
    %111 = vector.shape_cast %110 : vector<8xf32> to vector<8x1xf32>
    %112 = arith.addf %102, %107 : vector<8x8xf32>
    %113 = vector.broadcast %111 : vector<8x1xf32> to vector<8x8xf32>
    %114 = arith.addf %112, %113 : vector<8x8xf32>
    %cst_50 = arith.constant 0.353553385 : f32
    %115 = vector.broadcast %cst_50 : f32 to vector<8x8xf32>
    %116 = arith.mulf %114, %115 : vector<8x8xf32>
    %117 = arith.addf %116, %5 : vector<8x8xf32>
    %cst_51 = arith.constant dense<0xFF800000> : vector<8xf32>
    %118 = vector.multi_reduction <maximumf>, %117, %cst_51 [1] : vector<8x8xf32> to vector<8xf32>
    %119 = vector.shape_cast %118 : vector<8xf32> to vector<8x1xf32>
    %120 = vector.broadcast %119 : vector<8x1xf32> to vector<8x8xf32>
    %121 = arith.subf %117, %120 : vector<8x8xf32>
    %122 = math.exp %121 : vector<8x8xf32>
    %cst_52 = arith.constant dense<0.000000e+00> : vector<8xf32>
    %123 = vector.multi_reduction <add>, %122, %cst_52 [1] : vector<8x8xf32> to vector<8xf32>
    %124 = vector.shape_cast %123 : vector<8xf32> to vector<8x1xf32>
    %125 = tpu.reciprocal %124 {approx = true} : vector<8x1xf32> -> vector<8x1xf32>
    %126 = vector.broadcast %125 : vector<8x1xf32> to vector<8x8xf32>
    %127 = arith.mulf %122, %126 : vector<8x8xf32>
    %cst_53 = arith.constant dense<0.000000e+00> : vector<8x8xf32>
    %128 = tpu.matmul %127, %101, %cst_53 {dimension_numbers = #tpu.dot_dimension_numbers<[1], [0], [0], [1], [0, 0, 1, 1], [], []>} : vector<8x8xf32>, vector<8x8xf32>, vector<8x8xf32> -> vector<8x8xf32>
    %129 = vector.shape_cast %127 : vector<8x8xf32> to vector<8x8x1xf32>
    %130 = vector.broadcast %129 : vector<8x8x1xf32> to vector<8x8x16xf32>
    %131 = arith.mulf %130, %3 : vector<8x8x16xf32>
    %cst_54 = arith.constant dense<0.000000e+00> : vector<8x16xf32>
    %132 = vector.multi_reduction <add>, %131, %cst_54 [1] : vector<8x8x16xf32> to vector<8x16xf32>
    %cst_55 = arith.constant dense<0.000000e+00> : vector<8x8xf32>
    %133 = tpu.matmul %132, %14, %cst_55 {dimension_numbers = #tpu.dot_dimension_numbers<[1], [0], [0], [1], [0, 0, 1, 1], [], []>} : vector<8x16xf32>, vector<16x8xf32>, vector<8x8xf32> -> vector<8x8xf32>
    %134 = arith.addf %128, %133 : vector<8x8xf32>
    %135 = vector.broadcast %15 : vector<1x8xf32> to vector<8x8xf32>
    %136 = arith.addf %134, %135 : vector<8x8xf32>
    %137 = vector.extract_strided_slice %11 {offsets = [16, 0], sizes = [8, 32], strides = [1, 1]} : vector<32x32xf32> to vector<8x32xf32>
    %cst_56 = arith.constant dense<0.000000e+00> : vector<8x32xf32>
    %138 = tpu.matmul %136, %137, %cst_56 {dimension_numbers = #tpu.dot_dimension_numbers<[1], [0], [0], [1], [0, 0, 1, 1], [], []>} : vector<8x8xf32>, vector<8x32xf32>, vector<8x32xf32> -> vector<8x32xf32>
    %139 = arith.addf %98, %138 : vector<8x32xf32>
    %140 = vector.extract_strided_slice %10 {offsets = [0, 24], sizes = [8, 8], strides = [1, 1]} : vector<8x96xf32> to vector<8x8xf32>
    %141 = vector.extract_strided_slice %10 {offsets = [0, 56], sizes = [8, 8], strides = [1, 1]} : vector<8x96xf32> to vector<8x8xf32>
    %142 = vector.extract_strided_slice %10 {offsets = [0, 88], sizes = [8, 8], strides = [1, 1]} : vector<8x96xf32> to vector<8x8xf32>
    %cst_57 = arith.constant dense<0.000000e+00> : vector<8x8xf32>
    %143 = tpu.matmul %140, %141, %cst_57 {dimension_numbers = #tpu.dot_dimension_numbers<[1], [1], [0], [0], [0, 0, 1, 0], [], []>} : vector<8x8xf32>, vector<8x8xf32>, vector<8x8xf32> -> vector<8x8xf32>
    %cst_58 = arith.constant dense<0.000000e+00> : vector<8x16xf32>
    %144 = tpu.matmul %140, %12, %cst_58 {dimension_numbers = #tpu.dot_dimension_numbers<[1], [1], [0], [0], [0, 0, 1, 0], [], []>} : vector<8x8xf32>, vector<16x8xf32>, vector<8x16xf32> -> vector<8x16xf32>
    %145 = vector.shape_cast %144 : vector<8x16xf32> to vector<8x1x16xf32>
    %146 = vector.broadcast %145 : vector<8x1x16xf32> to vector<8x8x16xf32>
    %147 = arith.mulf %146, %3 : vector<8x8x16xf32>
    %cst_59 = arith.constant dense<0.000000e+00> : vector<8x8xf32>
    %148 = vector.multi_reduction <add>, %147, %cst_59 [2] : vector<8x8x16xf32> to vector<8x8xf32>
    %149 = vector.broadcast %13 : vector<1x8xf32> to vector<8x8xf32>
    %150 = arith.mulf %140, %149 : vector<8x8xf32>
    %cst_60 = arith.constant dense<0.000000e+00> : vector<8xf32>
    %151 = vector.multi_reduction <add>, %150, %cst_60 [1] : vector<8x8xf32> to vector<8xf32>
    %152 = vector.shape_cast %151 : vector<8xf32> to vector<8x1xf32>
    %153 = arith.addf %143, %148 : vector<8x8xf32>
    %154 = vector.broadcast %152 : vector<8x1xf32> to vector<8x8xf32>
    %155 = arith.addf %153, %154 : vector<8x8xf32>
    %cst_61 = arith.constant 0.353553385 : f32
    %156 = vector.broadcast %cst_61 : f32 to vector<8x8xf32>
    %157 = arith.mulf %155, %156 : vector<8x8xf32>
    %158 = arith.addf %157, %5 : vector<8x8xf32>
    %cst_62 = arith.constant dense<0xFF800000> : vector<8xf32>
    %159 = vector.multi_reduction <maximumf>, %158, %cst_62 [1] : vector<8x8xf32> to vector<8xf32>
    %160 = vector.shape_cast %159 : vector<8xf32> to vector<8x1xf32>
    %161 = vector.broadcast %160 : vector<8x1xf32> to vector<8x8xf32>
    %162 = arith.subf %158, %161 : vector<8x8xf32>
    %163 = math.exp %162 : vector<8x8xf32>
    %cst_63 = arith.constant dense<0.000000e+00> : vector<8xf32>
    %164 = vector.multi_reduction <add>, %163, %cst_63 [1] : vector<8x8xf32> to vector<8xf32>
    %165 = vector.shape_cast %164 : vector<8xf32> to vector<8x1xf32>
    %166 = tpu.reciprocal %165 {approx = true} : vector<8x1xf32> -> vector<8x1xf32>
    %167 = vector.broadcast %166 : vector<8x1xf32> to vector<8x8xf32>
    %168 = arith.mulf %163, %167 : vector<8x8xf32>
    %cst_64 = arith.constant dense<0.000000e+00> : vector<8x8xf32>
    %169 = tpu.matmul %168, %142, %cst_64 {dimension_numbers = #tpu.dot_dimension_numbers<[1], [0], [0], [1], [0, 0, 1, 1], [], []>} : vector<8x8xf32>, vector<8x8xf32>, vector<8x8xf32> -> vector<8x8xf32>
    %170 = vector.shape_cast %168 : vector<8x8xf32> to vector<8x8x1xf32>
    %171 = vector.broadcast %170 : vector<8x8x1xf32> to vector<8x8x16xf32>
    %172 = arith.mulf %171, %3 : vector<8x8x16xf32>
    %cst_65 = arith.constant dense<0.000000e+00> : vector<8x16xf32>
    %173 = vector.multi_reduction <add>, %172, %cst_65 [1] : vector<8x8x16xf32> to vector<8x16xf32>
    %cst_66 = arith.constant dense<0.000000e+00> : vector<8x8xf32>
    %174 = tpu.matmul %173, %14, %cst_66 {dimension_numbers = #tpu.dot_dimension_numbers<[1], [0], [0], [1], [0, 0, 1, 1], [], []>} : vector<8x16xf32>, vector<16x8xf32>, vector<8x8xf32> -> vector<8x8xf32>
    %175 = arith.addf %169, %174 : vector<8x8xf32>
    %176 = vector.broadcast %15 : vector<1x8xf32> to vector<8x8xf32>
    %177 = arith.addf %175, %176 : vector<8x8xf32>
    %178 = vector.extract_strided_slice %11 {offsets = [24, 0], sizes = [8, 32], strides = [1, 1]} : vector<32x32xf32> to vector<8x32xf32>
    %cst_67 = arith.constant dense<0.000000e+00> : vector<8x32xf32>
    %179 = tpu.matmul %177, %178, %cst_67 {dimension_numbers = #tpu.dot_dimension_numbers<[1], [0], [0], [1], [0, 0, 1, 1], [], []>} : vector<8x8xf32>, vector<8x32xf32>, vector<8x32xf32> -> vector<8x32xf32>
    %180 = arith.addf %139, %179 : vector<8x32xf32>
    %c0_68 = arith.constant 0 : index
    %c0_69 = arith.constant 0 : index
    %181 = vector.load %arg11[%c0_68, %c0_69] : memref<1x32xf32, #tpu.memory_space<vmem>>, vector<1x32xf32>
    %182 = vector.broadcast %181 : vector<1x32xf32> to vector<8x32xf32>
    %183 = arith.addf %180, %182 : vector<8x32xf32>
    %184 = arith.addf %1, %183 : vector<8x32xf32>
    %c0_70 = arith.constant 0 : index
    %c0_71 = arith.constant 0 : index
    %185 = vector.load %arg12[%c0_70, %c0_71] : memref<1x32xf32, #tpu.memory_space<vmem>>, vector<1x32xf32>
    %c0_72 = arith.constant 0 : index
    %c0_73 = arith.constant 0 : index
    %186 = vector.load %arg13[%c0_72, %c0_73] : memref<1x32xf32, #tpu.memory_space<vmem>>, vector<1x32xf32>
    %cst_74 = arith.constant dense<0.000000e+00> : vector<8xf32>
    %187 = vector.multi_reduction <add>, %184, %cst_74 [1] : vector<8x32xf32> to vector<8xf32>
    %188 = vector.shape_cast %187 : vector<8xf32> to vector<8x1xf32>
    %cst_75 = arith.constant 3.200000e+01 : f32
    %189 = vector.broadcast %cst_75 : f32 to vector<8x1xf32>
    %190 = arith.divf %188, %189 : vector<8x1xf32>
    %191 = vector.broadcast %190 : vector<8x1xf32> to vector<8x32xf32>
    %192 = arith.subf %184, %191 : vector<8x32xf32>
    %193 = arith.mulf %192, %192 : vector<8x32xf32>
    %cst_76 = arith.constant dense<0.000000e+00> : vector<8xf32>
    %194 = vector.multi_reduction <add>, %193, %cst_76 [1] : vector<8x32xf32> to vector<8xf32>
    %195 = vector.shape_cast %194 : vector<8xf32> to vector<8x1xf32>
    %cst_77 = arith.constant 3.200000e+01 : f32
    %196 = vector.broadcast %cst_77 : f32 to vector<8x1xf32>
    %197 = arith.divf %195, %196 : vector<8x1xf32>
    %198 = vector.broadcast %190 : vector<8x1xf32> to vector<8x32xf32>
    %199 = arith.subf %184, %198 : vector<8x32xf32>
    %cst_78 = arith.constant 9.99999996E-13 : f32
    %200 = vector.broadcast %cst_78 : f32 to vector<8x1xf32>
    %201 = arith.addf %197, %200 : vector<8x1xf32>
    %202 = math.rsqrt %201 : vector<8x1xf32>
    %203 = vector.broadcast %202 : vector<8x1xf32> to vector<8x32xf32>
    %204 = arith.mulf %199, %203 : vector<8x32xf32>
    %205 = vector.broadcast %185 : vector<1x32xf32> to vector<8x32xf32>
    %206 = arith.mulf %204, %205 : vector<8x32xf32>
    %207 = vector.broadcast %186 : vector<1x32xf32> to vector<8x32xf32>
    %208 = arith.addf %206, %207 : vector<8x32xf32>
    %c0_79 = arith.constant 0 : index
    %c0_80 = arith.constant 0 : index
    %209 = vector.load %arg14[%c0_79, %c0_80] : memref<32x32xf32, #tpu.memory_space<vmem>>, vector<32x32xf32>
    %cst_81 = arith.constant dense<0.000000e+00> : vector<8x32xf32>
    %210 = tpu.matmul %208, %209, %cst_81 {dimension_numbers = #tpu.dot_dimension_numbers<[1], [0], [0], [1], [0, 0, 1, 1], [], []>} : vector<8x32xf32>, vector<32x32xf32>, vector<8x32xf32> -> vector<8x32xf32>
    %c0_82 = arith.constant 0 : index
    %c0_83 = arith.constant 0 : index
    %211 = vector.load %arg15[%c0_82, %c0_83] : memref<1x32xf32, #tpu.memory_space<vmem>>, vector<1x32xf32>
    %212 = vector.broadcast %211 : vector<1x32xf32> to vector<8x32xf32>
    %213 = arith.addf %210, %212 : vector<8x32xf32>
    %cst_84 = arith.constant 0.000000e+00 : f32
    %214 = vector.broadcast %cst_84 : f32 to vector<8x32xf32>
    %215 = arith.maximumf %213, %214 : vector<8x32xf32>
    %c0_85 = arith.constant 0 : index
    %c0_86 = arith.constant 0 : index
    %216 = vector.load %arg16[%c0_85, %c0_86] : memref<32x32xf32, #tpu.memory_space<vmem>>, vector<32x32xf32>
    %cst_87 = arith.constant dense<0.000000e+00> : vector<8x32xf32>
    %217 = tpu.matmul %215, %216, %cst_87 {dimension_numbers = #tpu.dot_dimension_numbers<[1], [0], [0], [1], [0, 0, 1, 1], [], []>} : vector<8x32xf32>, vector<32x32xf32>, vector<8x32xf32> -> vector<8x32xf32>
    %c0_88 = arith.constant 0 : index
    %c0_89 = arith.constant 0 : index
    %218 = vector.load %arg17[%c0_88, %c0_89] : memref<1x32xf32, #tpu.memory_space<vmem>>, vector<1x32xf32>
    %219 = vector.broadcast %218 : vector<1x32xf32> to vector<8x32xf32>
    %220 = arith.addf %217, %219 : vector<8x32xf32>
    %221 = arith.addf %208, %220 : vector<8x32xf32>
    %c0_90 = arith.constant 0 : index
    %c0_91 = arith.constant 0 : index
    %222 = vector.load %arg18[%c0_90, %c0_91] : memref<1x32xf32, #tpu.memory_space<vmem>>, vector<1x32xf32>
    %c0_92 = arith.constant 0 : index
    %c0_93 = arith.constant 0 : index
    %223 = vector.load %arg19[%c0_92, %c0_93] : memref<1x32xf32, #tpu.memory_space<vmem>>, vector<1x32xf32>
    %cst_94 = arith.constant dense<0.000000e+00> : vector<8xf32>
    %224 = vector.multi_reduction <add>, %221, %cst_94 [1] : vector<8x32xf32> to vector<8xf32>
    %225 = vector.shape_cast %224 : vector<8xf32> to vector<8x1xf32>
    %cst_95 = arith.constant 3.200000e+01 : f32
    %226 = vector.broadcast %cst_95 : f32 to vector<8x1xf32>
    %227 = arith.divf %225, %226 : vector<8x1xf32>
    %228 = vector.broadcast %227 : vector<8x1xf32> to vector<8x32xf32>
    %229 = arith.subf %221, %228 : vector<8x32xf32>
    %230 = arith.mulf %229, %229 : vector<8x32xf32>
    %cst_96 = arith.constant dense<0.000000e+00> : vector<8xf32>
    %231 = vector.multi_reduction <add>, %230, %cst_96 [1] : vector<8x32xf32> to vector<8xf32>
    %232 = vector.shape_cast %231 : vector<8xf32> to vector<8x1xf32>
    %cst_97 = arith.constant 3.200000e+01 : f32
    %233 = vector.broadcast %cst_97 : f32 to vector<8x1xf32>
    %234 = arith.divf %232, %233 : vector<8x1xf32>
    %235 = vector.broadcast %227 : vector<8x1xf32> to vector<8x32xf32>
    %236 = arith.subf %221, %235 : vector<8x32xf32>
    %cst_98 = arith.constant 9.99999996E-13 : f32
    %237 = vector.broadcast %cst_98 : f32 to vector<8x1xf32>
    %238 = arith.addf %234, %237 : vector<8x1xf32>
    %239 = math.rsqrt %238 : vector<8x1xf32>
    %240 = vector.broadcast %239 : vector<8x1xf32> to vector<8x32xf32>
    %241 = arith.mulf %236, %240 : vector<8x32xf32>
    %242 = vector.broadcast %222 : vector<1x32xf32> to vector<8x32xf32>
    %243 = arith.mulf %241, %242 : vector<8x32xf32>
    %244 = vector.broadcast %223 : vector<1x32xf32> to vector<8x32xf32>
    %245 = arith.addf %243, %244 : vector<8x32xf32>
    %c0_99 = arith.constant 0 : index
    %c0_100 = arith.constant 0 : index
    %c0_101 = arith.constant 0 : index
    %246 = vector.load %arg20[%c0_99, %c0_100, %c0_101] : memref<1x8x32xf32, #tpu.memory_space<vmem>>, vector<1x8x32xf32>
    %247 = vector.shape_cast %246 : vector<1x8x32xf32> to vector<8x32xf32>
    %248 = vector.shape_cast %245 : vector<8x32xf32> to vector<1x8x32xf32>
    tpu.vector_store %arg20[%c0_99, %c0_100, %c0_101], %248 {strides = array<i32>} : memref<1x8x32xf32, #tpu.memory_space<vmem>>, vector<1x8x32xf32>,
    return
  }
  func.func @transform_0(%arg0: i32) -> (i32, i32, i32) {
    %c0_i32 = arith.constant 0 : i32
    %c0_i32_0 = arith.constant 0 : i32
    %c0_i32_1 = arith.constant 0 : i32
    return %arg0, %c0_i32, %c0_i32_0 : i32, i32, i32
  }
  func.func @transform_1(%arg0: i32) -> (i32, i32, i32) {
    %c0_i32 = arith.constant 0 : i32
    %c0_i32_0 = arith.constant 0 : i32
    %c0_i32_1 = arith.constant 0 : i32
    return %arg0, %c0_i32, %c0_i32_0 : i32, i32, i32
  }
  func.func @transform_2(%arg0: i32) -> (i32, i32, i32, i32) {
    %c0_i32 = arith.constant 0 : i32
    %c0_i32_0 = arith.constant 0 : i32
    %c0_i32_1 = arith.constant 0 : i32
    %c0_i32_2 = arith.constant 0 : i32
    return %arg0, %c0_i32, %c0_i32_0, %c0_i32_1 : i32, i32, i32, i32
  }
  func.func @transform_3(%arg0: i32) -> (i32, i32) {
    %c0_i32 = arith.constant 0 : i32
    %c0_i32_0 = arith.constant 0 : i32
    %c0_i32_1 = arith.constant 0 : i32
    return %c0_i32, %c0_i32_0 : i32, i32
  }
  func.func @transform_4(%arg0: i32) -> (i32, i32) {
    %c0_i32 = arith.constant 0 : i32
    %c0_i32_0 = arith.constant 0 : i32
    %c0_i32_1 = arith.constant 0 : i32
    return %c0_i32, %c0_i32_0 : i32, i32
  }
  func.func @transform_5(%arg0: i32) -> (i32, i32) {
    %c0_i32 = arith.constant 0 : i32
    %c0_i32_0 = arith.constant 0 : i32
    %c0_i32_1 = arith.constant 0 : i32
    return %c0_i32, %c0_i32_0 : i32, i32
  }
  func.func @transform_6(%arg0: i32) -> (i32, i32) {
    %c0_i32 = arith.constant 0 : i32
    %c0_i32_0 = arith.constant 0 : i32
    %c0_i32_1 = arith.constant 0 : i32
    return %c0_i32, %c0_i32_0 : i32, i32
  }
  func.func @transform_7(%arg0: i32) -> (i32, i32) {
    %c0_i32 = arith.constant 0 : i32
    %c0_i32_0 = arith.constant 0 : i32
    %c0_i32_1 = arith.constant 0 : i32
    return %c0_i32, %c0_i32_0 : i32, i32
  }
  func.func @transform_8(%arg0: i32) -> (i32, i32) {
    %c0_i32 = arith.constant 0 : i32
    %c0_i32_0 = arith.constant 0 : i32
    %c0_i32_1 = arith.constant 0 : i32
    return %c0_i32, %c0_i32_0 : i32, i32
  }
  func.func @transform_9(%arg0: i32) -> (i32, i32) {
    %c0_i32 = arith.constant 0 : i32
    %c0_i32_0 = arith.constant 0 : i32
    %c0_i32_1 = arith.constant 0 : i32
    return %c0_i32, %c0_i32_0 : i32, i32
  }
  func.func @transform_10(%arg0: i32) -> (i32, i32) {
    %c0_i32 = arith.constant 0 : i32
    %c0_i32_0 = arith.constant 0 : i32
    %c0_i32_1 = arith.constant 0 : i32
    return %c0_i32, %c0_i32_0 : i32, i32
  }
  func.func @transform_11(%arg0: i32) -> (i32, i32) {
    %c0_i32 = arith.constant 0 : i32
    %c0_i32_0 = arith.constant 0 : i32
    %c0_i32_1 = arith.constant 0 : i32
    return %c0_i32, %c0_i32_0 : i32, i32
  }
  func.func @transform_12(%arg0: i32) -> (i32, i32) {
    %c0_i32 = arith.constant 0 : i32
    %c0_i32_0 = arith.constant 0 : i32
    %c0_i32_1 = arith.constant 0 : i32
    return %c0_i32, %c0_i32_0 : i32, i32
  }
  func.func @transform_13(%arg0: i32) -> (i32, i32) {
    %c0_i32 = arith.constant 0 : i32
    %c0_i32_0 = arith.constant 0 : i32
    %c0_i32_1 = arith.constant 0 : i32
    return %c0_i32, %c0_i32_0 : i32, i32
  }
  func.func @transform_14(%arg0: i32) -> (i32, i32) {
    %c0_i32 = arith.constant 0 : i32
    %c0_i32_0 = arith.constant 0 : i32
    %c0_i32_1 = arith.constant 0 : i32
    return %c0_i32, %c0_i32_0 : i32, i32
  }
  func.func @transform_15(%arg0: i32) -> (i32, i32) {
    %c0_i32 = arith.constant 0 : i32
    %c0_i32_0 = arith.constant 0 : i32
    %c0_i32_1 = arith.constant 0 : i32
    return %c0_i32, %c0_i32_0 : i32, i32
  }
  func.func @transform_16(%arg0: i32) -> (i32, i32) {
    %c0_i32 = arith.constant 0 : i32
    %c0_i32_0 = arith.constant 0 : i32
    %c0_i32_1 = arith.constant 0 : i32
    return %c0_i32, %c0_i32_0 : i32, i32
  }
  func.func @transform_17(%arg0: i32) -> (i32, i32) {
    %c0_i32 = arith.constant 0 : i32
    %c0_i32_0 = arith.constant 0 : i32
    %c0_i32_1 = arith.constant 0 : i32
    return %c0_i32, %c0_i32_0 : i32, i32
  }
  func.func @transform_18(%arg0: i32) -> (i32, i32) {
    %c0_i32 = arith.constant 0 : i32
    %c0_i32_0 = arith.constant 0 : i32
    %c0_i32_1 = arith.constant 0 : i32
    return %c0_i32, %c0_i32_0 : i32, i32
  }
  func.func @transform_19(%arg0: i32) -> (i32, i32, i32) {
    %c0_i32 = arith.constant 0 : i32
    %c0_i32_0 = arith.constant 0 : i32
    %c0_i32_1 = arith.constant 0 : i32
    return %arg0, %c0_i32, %c0_i32_0 : i32, i32, i32
  }
}

module attributes {stable_mosaic.version = 11 : i64} {
  func.func @_epilogue_kernel(%arg0: i32, %arg1: memref<1x8x32xf32, #tpu.memory_space<vmem>>, %arg2: memref<1x8x32xf32, #tpu.memory_space<vmem>>, %arg3: memref<1x8x1xf32, #tpu.memory_space<vmem>>, %arg4: memref<1x1x32xf32, #tpu.memory_space<vmem>>, %arg5: memref<32x32xf32, #tpu.memory_space<vmem>>, %arg6: memref<32x32xf32, #tpu.memory_space<vmem>>, %arg7: memref<1x32xf32, #tpu.memory_space<vmem>>, %arg8: memref<32x3xf32, #tpu.memory_space<vmem>>, %arg9: memref<32x3xf32, #tpu.memory_space<vmem>>, %arg10: memref<1x3xf32, #tpu.memory_space<vmem>>, %arg11: memref<1x1x3xf32, #tpu.memory_space<vmem>>, %arg12: memref<1x1x64xf32, #tpu.memory_space<vmem>>) attributes {dimension_semantics = [#tpu.dimension_semantics<parallel>], iteration_bounds = array<i64: 2>, scalar_prefetch = 0 : i64, scratch_operands = 0 : i64, tpu.core_type = #tpu.core_type<tc>, window_params = [{transform_indices = @transform_0, window_bounds = array<i64: 1, 8, 32>}, {transform_indices = @transform_1, window_bounds = array<i64: 1, 8, 32>}, {transform_indices = @transform_2, window_bounds = array<i64: 1, 8, 1>}, {transform_indices = @transform_3, window_bounds = array<i64: 1, 1, 32>}, {pipeline_mode = #tpu.pipeline_mode<synchronous>, transform_indices = @transform_4, window_bounds = array<i64: 32, 32>}, {pipeline_mode = #tpu.pipeline_mode<synchronous>, transform_indices = @transform_5, window_bounds = array<i64: 32, 32>}, {pipeline_mode = #tpu.pipeline_mode<synchronous>, transform_indices = @transform_6, window_bounds = array<i64: 1, 32>}, {pipeline_mode = #tpu.pipeline_mode<synchronous>, transform_indices = @transform_7, window_bounds = array<i64: 32, 3>}, {pipeline_mode = #tpu.pipeline_mode<synchronous>, transform_indices = @transform_8, window_bounds = array<i64: 32, 3>}, {pipeline_mode = #tpu.pipeline_mode<synchronous>, transform_indices = @transform_9, window_bounds = array<i64: 1, 3>}, {transform_indices = @transform_10, window_bounds = array<i64: 1, 1, 3>}, {transform_indices = @transform_11, window_bounds = array<i64: 1, 1, 64>}]} {
    %c0 = arith.constant 0 : index
    %c0_0 = arith.constant 0 : index
    %c0_1 = arith.constant 0 : index
    %0 = vector.load %arg1[%c0, %c0_0, %c0_1] : memref<1x8x32xf32, #tpu.memory_space<vmem>>, vector<1x8x32xf32>
    %1 = vector.shape_cast %0 : vector<1x8x32xf32> to vector<8x32xf32>
    %c0_2 = arith.constant 0 : index
    %c0_3 = arith.constant 0 : index
    %c0_4 = arith.constant 0 : index
    %2 = vector.load %arg2[%c0_2, %c0_3, %c0_4] : memref<1x8x32xf32, #tpu.memory_space<vmem>>, vector<1x8x32xf32>
    %3 = vector.shape_cast %2 : vector<1x8x32xf32> to vector<8x32xf32>
    %c0_5 = arith.constant 0 : index
    %c0_6 = arith.constant 0 : index
    %c0_7 = arith.constant 0 : index
    %4 = vector.load %arg3[%c0_5, %c0_6, %c0_7] : memref<1x8x1xf32, #tpu.memory_space<vmem>>, vector<1x8x1xf32>
    %5 = vector.shape_cast %4 : vector<1x8x1xf32> to vector<8x1xf32>
    %cst = arith.constant dense<0.000000e+00> : vector<1xf32>
    %6 = vector.multi_reduction <add>, %5, %cst [0] : vector<8x1xf32> to vector<1xf32>
    %7 = vector.shape_cast %6 : vector<1xf32> to vector<1x1xf32>
    %cst_8 = arith.constant 1.000000e+00 : f32
    %8 = vector.broadcast %cst_8 : f32 to vector<1x1xf32>
    %9 = arith.divf %8, %7 : vector<1x1xf32>
    %10 = vector.broadcast %5 : vector<8x1xf32> to vector<8x32xf32>
    %11 = arith.mulf %1, %10 : vector<8x32xf32>
    %cst_9 = arith.constant dense<0.000000e+00> : vector<32xf32>
    %12 = vector.multi_reduction <add>, %11, %cst_9 [0] : vector<8x32xf32> to vector<32xf32>
    %13 = vector.shape_cast %12 : vector<32xf32> to vector<1x32xf32>
    %14 = vector.broadcast %9 : vector<1x1xf32> to vector<1x32xf32>
    %15 = arith.mulf %13, %14 : vector<1x32xf32>
    %16 = vector.broadcast %5 : vector<8x1xf32> to vector<8x32xf32>
    %17 = arith.mulf %3, %16 : vector<8x32xf32>
    %cst_10 = arith.constant dense<0.000000e+00> : vector<32xf32>
    %18 = vector.multi_reduction <add>, %17, %cst_10 [0] : vector<8x32xf32> to vector<32xf32>
    %19 = vector.shape_cast %18 : vector<32xf32> to vector<1x32xf32>
    %20 = vector.broadcast %9 : vector<1x1xf32> to vector<1x32xf32>
    %21 = arith.mulf %19, %20 : vector<1x32xf32>
    %c0_11 = arith.constant 0 : index
    %c0_12 = arith.constant 0 : index
    %22 = vector.load %arg5[%c0_11, %c0_12] : memref<32x32xf32, #tpu.memory_space<vmem>>, vector<32x32xf32>
    %cst_13 = arith.constant dense<0.000000e+00> : vector<1x32xf32>
    %23 = tpu.matmul %15, %22, %cst_13 {dimension_numbers = #tpu.dot_dimension_numbers<[1], [0], [0], [1], [0, 0, 1, 1], [], []>} : vector<1x32xf32>, vector<32x32xf32>, vector<1x32xf32> -> vector<1x32xf32>
    %c0_14 = arith.constant 0 : index
    %c0_15 = arith.constant 0 : index
    %24 = vector.load %arg6[%c0_14, %c0_15] : memref<32x32xf32, #tpu.memory_space<vmem>>, vector<32x32xf32>
    %cst_16 = arith.constant dense<0.000000e+00> : vector<1x32xf32>
    %25 = tpu.matmul %21, %24, %cst_16 {dimension_numbers = #tpu.dot_dimension_numbers<[1], [0], [0], [1], [0, 0, 1, 1], [], []>} : vector<1x32xf32>, vector<32x32xf32>, vector<1x32xf32> -> vector<1x32xf32>
    %26 = arith.addf %23, %25 : vector<1x32xf32>
    %c0_17 = arith.constant 0 : index
    %c0_18 = arith.constant 0 : index
    %27 = vector.load %arg7[%c0_17, %c0_18] : memref<1x32xf32, #tpu.memory_space<vmem>>, vector<1x32xf32>
    %28 = arith.addf %26, %27 : vector<1x32xf32>
    %29 = arith.negf %28 : vector<1x32xf32>
    %30 = math.exp %29 : vector<1x32xf32>
    %cst_19 = arith.constant 1.000000e+00 : f32
    %31 = vector.broadcast %cst_19 : f32 to vector<1x32xf32>
    %32 = arith.addf %31, %30 : vector<1x32xf32>
    %33 = arith.divf %31, %32 : vector<1x32xf32>
    %34 = arith.mulf %33, %15 : vector<1x32xf32>
    %cst_20 = arith.constant 1.000000e+00 : f32
    %35 = vector.broadcast %cst_20 : f32 to vector<1x32xf32>
    %36 = arith.subf %35, %33 : vector<1x32xf32>
    %37 = arith.mulf %36, %21 : vector<1x32xf32>
    %38 = arith.addf %34, %37 : vector<1x32xf32>
    %c0_21 = arith.constant 0 : index
    %c0_22 = arith.constant 0 : index
    %c0_23 = arith.constant 0 : index
    %39 = vector.load %arg4[%c0_21, %c0_22, %c0_23] : memref<1x1x32xf32, #tpu.memory_space<vmem>>, vector<1x1x32xf32>
    %40 = vector.shape_cast %39 : vector<1x1x32xf32> to vector<1x32xf32>
    %c0_24 = arith.constant 0 : index
    %c0_25 = arith.constant 0 : index
    %41 = vector.load %arg8[%c0_24, %c0_25] : memref<32x3xf32, #tpu.memory_space<vmem>>, vector<32x3xf32>
    %cst_26 = arith.constant dense<0.000000e+00> : vector<1x3xf32>
    %42 = tpu.matmul %38, %41, %cst_26 {dimension_numbers = #tpu.dot_dimension_numbers<[1], [0], [0], [1], [0, 0, 1, 1], [], []>} : vector<1x32xf32>, vector<32x3xf32>, vector<1x3xf32> -> vector<1x3xf32>
    %c0_27 = arith.constant 0 : index
    %c0_28 = arith.constant 0 : index
    %43 = vector.load %arg9[%c0_27, %c0_28] : memref<32x3xf32, #tpu.memory_space<vmem>>, vector<32x3xf32>
    %cst_29 = arith.constant dense<0.000000e+00> : vector<1x3xf32>
    %44 = tpu.matmul %40, %43, %cst_29 {dimension_numbers = #tpu.dot_dimension_numbers<[1], [0], [0], [1], [0, 0, 1, 1], [], []>} : vector<1x32xf32>, vector<32x3xf32>, vector<1x3xf32> -> vector<1x3xf32>
    %45 = arith.addf %42, %44 : vector<1x3xf32>
    %c0_30 = arith.constant 0 : index
    %c0_31 = arith.constant 0 : index
    %46 = vector.load %arg10[%c0_30, %c0_31] : memref<1x3xf32, #tpu.memory_space<vmem>>, vector<1x3xf32>
    %47 = arith.addf %45, %46 : vector<1x3xf32>
    %c0_32 = arith.constant 0 : index
    %c0_33 = arith.constant 0 : index
    %c0_34 = arith.constant 0 : index
    %48 = vector.load %arg11[%c0_32, %c0_33, %c0_34] : memref<1x1x3xf32, #tpu.memory_space<vmem>>, vector<1x1x3xf32>
    %49 = vector.shape_cast %48 : vector<1x1x3xf32> to vector<1x3xf32>
    %50 = vector.shape_cast %47 : vector<1x3xf32> to vector<1x1x3xf32>
    tpu.vector_store %arg11[%c0_32, %c0_33, %c0_34], %50 {strides = array<i32>} : memref<1x1x3xf32, #tpu.memory_space<vmem>>, vector<1x1x3xf32>,
    %51 = tpu.concatenate %38, %40 in 1 : vector<1x32xf32>, vector<1x32xf32> -> vector<1x64xf32>
    %c0_35 = arith.constant 0 : index
    %c0_36 = arith.constant 0 : index
    %c0_37 = arith.constant 0 : index
    %52 = vector.load %arg12[%c0_35, %c0_36, %c0_37] : memref<1x1x64xf32, #tpu.memory_space<vmem>>, vector<1x1x64xf32>
    %53 = vector.shape_cast %52 : vector<1x1x64xf32> to vector<1x64xf32>
    %54 = vector.shape_cast %51 : vector<1x64xf32> to vector<1x1x64xf32>
    tpu.vector_store %arg12[%c0_35, %c0_36, %c0_37], %54 {strides = array<i32>} : memref<1x1x64xf32, #tpu.memory_space<vmem>>, vector<1x1x64xf32>,
    return
  }
  func.func @transform_0(%arg0: i32) -> (i32, i32, i32) {
    %c0_i32 = arith.constant 0 : i32
    %c0_i32_0 = arith.constant 0 : i32
    %c0_i32_1 = arith.constant 0 : i32
    return %arg0, %c0_i32, %c0_i32_0 : i32, i32, i32
  }
  func.func @transform_1(%arg0: i32) -> (i32, i32, i32) {
    %c0_i32 = arith.constant 0 : i32
    %c0_i32_0 = arith.constant 0 : i32
    %c0_i32_1 = arith.constant 0 : i32
    return %arg0, %c0_i32, %c0_i32_0 : i32, i32, i32
  }
  func.func @transform_2(%arg0: i32) -> (i32, i32, i32) {
    %c0_i32 = arith.constant 0 : i32
    %c0_i32_0 = arith.constant 0 : i32
    %c0_i32_1 = arith.constant 0 : i32
    return %arg0, %c0_i32, %c0_i32_0 : i32, i32, i32
  }
  func.func @transform_3(%arg0: i32) -> (i32, i32, i32) {
    %c0_i32 = arith.constant 0 : i32
    %c0_i32_0 = arith.constant 0 : i32
    %c0_i32_1 = arith.constant 0 : i32
    return %arg0, %c0_i32, %c0_i32_0 : i32, i32, i32
  }
  func.func @transform_4(%arg0: i32) -> (i32, i32) {
    %c0_i32 = arith.constant 0 : i32
    %c0_i32_0 = arith.constant 0 : i32
    %c0_i32_1 = arith.constant 0 : i32
    return %c0_i32, %c0_i32_0 : i32, i32
  }
  func.func @transform_5(%arg0: i32) -> (i32, i32) {
    %c0_i32 = arith.constant 0 : i32
    %c0_i32_0 = arith.constant 0 : i32
    %c0_i32_1 = arith.constant 0 : i32
    return %c0_i32, %c0_i32_0 : i32, i32
  }
  func.func @transform_6(%arg0: i32) -> (i32, i32) {
    %c0_i32 = arith.constant 0 : i32
    %c0_i32_0 = arith.constant 0 : i32
    %c0_i32_1 = arith.constant 0 : i32
    return %c0_i32, %c0_i32_0 : i32, i32
  }
  func.func @transform_7(%arg0: i32) -> (i32, i32) {
    %c0_i32 = arith.constant 0 : i32
    %c0_i32_0 = arith.constant 0 : i32
    %c0_i32_1 = arith.constant 0 : i32
    return %c0_i32, %c0_i32_0 : i32, i32
  }
  func.func @transform_8(%arg0: i32) -> (i32, i32) {
    %c0_i32 = arith.constant 0 : i32
    %c0_i32_0 = arith.constant 0 : i32
    %c0_i32_1 = arith.constant 0 : i32
    return %c0_i32, %c0_i32_0 : i32, i32
  }
  func.func @transform_9(%arg0: i32) -> (i32, i32) {
    %c0_i32 = arith.constant 0 : i32
    %c0_i32_0 = arith.constant 0 : i32
    %c0_i32_1 = arith.constant 0 : i32
    return %c0_i32, %c0_i32_0 : i32, i32
  }
  func.func @transform_10(%arg0: i32) -> (i32, i32, i32) {
    %c0_i32 = arith.constant 0 : i32
    %c0_i32_0 = arith.constant 0 : i32
    %c0_i32_1 = arith.constant 0 : i32
    return %arg0, %c0_i32, %c0_i32_0 : i32, i32, i32
  }
  func.func @transform_11(%arg0: i32) -> (i32, i32, i32) {
    %c0_i32 = arith.constant 0 : i32
    %c0_i32_0 = arith.constant 0 : i32
    %c0_i32_1 = arith.constant 0 : i32
    return %arg0, %c0_i32, %c0_i32_0 : i32, i32, i32
  }
}

</mosaic_0001>

<llo_original>
// kernel: rgat_absa_forward.7
$region0: #{rgat_absa_forward.7}
  #allocation0 [shape = 'u32[]', space=smem, size = 0x4, offset = 0x4, fixed_abs, tag = 'smem constant byte address 0x4 - core index']
  #allocation1 [shape = 'u32[144,128]{1,0:T(1,128)}', space=vmem, size = 0x12000, scoped, tag = 'internal scratch']
  %s0 = inlined_call_operand.vmem [shape: f32[2,12,32], index: 0, kind: input, shape index: {}]
  %s1 = inlined_call_operand.vmem [shape: f32[1,32], index: 1, kind: input, shape index: {}]
  %s2 = inlined_call_operand.vmem [shape: f32[1,32], index: 2, kind: input, shape index: {}]
  %s3 = inlined_call_operand.vmem [shape: f32[2,12,32], index: 3, kind: output, shape index: {}]
  %s4 = sld [smem:[#allocation0]]
  $region45: #{rgat_absa_forward.7} parent=0
    _
  %s6 = ssub.s32 1, %s4
  %s7 = scalar_select 0, %s6, %s4
  loop: start=0, step=1, limit=4
  $region2: #{rgat_absa_forward.7} parent=0 // loop_pre_header
    _
  $region3: #{rgat_absa_forward.7} parent=0 // loop_header
    %s9 = sphi 0, %s13
    %p10 = scmp.ge.s32.totalorder %s9, 4
    %s19 = sphi 0, %s21
    %s22 = sphi 0, %s19
    %s23 = sphi 0, %s22
    %s39 = sphi 0, %s23
    %s43 = sphi 0, %s43
    %s45 = sphi 0, %s43
    %s46 = sphi 0, %s45
    %s60 = sphi 0, %s46
    %s64 = sphi 0, %s64
    %s66 = sphi 0, %s64
    %s67 = sphi 0, %s66
    %s81 = sphi 0, %s67
    %s87 = sphi 0, %s89
    %s90 = sphi 0, %s87
    %s91 = sphi 0, %s90
    %s107 = sphi 0, %s91
  $region4: #{rgat_absa_forward.7} parent=0 // loop_header_branch
    %12 = sbr.rel (%p10) target = $region8
  $region5: #{rgat_absa_forward.7} parent=0 // loop_body
    %s14 = ssub.s32 %s9, 1
    %s15 = ssub.s32 %s9, 2
    %s16 = sadd.s32 %s9, 1
    %s17 = ssub.s32 %s9, %s16
    %p18 = scmp.eq.s32.totalorder %s17, 0
    %s20 = sadd.s32 %s19, 1
    %s21 = scalar_select %p18, %s19, %s20
    %p24 = pneg %p18
    %p25 = scmp.eq.s32.totalorder %s9, 1
    %p26 = por %p24, %p25
    %p27 = scmp.ne.s32.totalorder %s19, %s22
    %p28 = scmp.eq.s32.totalorder %s9, 0
    %p29 = por %p27, %p28
    %p30 = scmp.ne.s32.totalorder %s19, %s22
    %p31 = scmp.eq.s32.totalorder %s14, 1
    %p32 = por %p30, %p31
    %p33 = scmp.ne.s32.totalorder %s22, %s23
    %p34 = scmp.eq.s32.totalorder %s14, 0
    %p35 = por %p33, %p34
    %p36 = scmp.ne.s32.totalorder %s22, %s23
    %p37 = scmp.eq.s32.totalorder %s15, 1
    %p38 = por %p36, %p37
    %p40 = scmp.ne.s32.totalorder %s23, %s39
    %p41 = scmp.eq.s32.totalorder %s15, 0
    %p42 = por %p40, %p41
    %s44 = sadd.s32 %s43, 1
    %p47 = scmp.eq.s32.totalorder %s9, 1
    %p48 = scmp.ne.s32.totalorder %s43, %s45
    %p49 = scmp.eq.s32.totalorder %s9, 0
    %p50 = por %p48, %p49
    %p51 = scmp.ne.s32.totalorder %s43, %s45
    %p52 = scmp.eq.s32.totalorder %s14, 1
    %p53 = por %p51, %p52
    %p54 = scmp.ne.s32.totalorder %s45, %s46
    %p55 = scmp.eq.s32.totalorder %s14, 0
    %p56 = por %p54, %p55
    %p57 = scmp.ne.s32.totalorder %s45, %s46
    %p58 = scmp.eq.s32.totalorder %s15, 1
    %p59 = por %p57, %p58
    %p61 = scmp.ne.s32.totalorder %s46, %s60
    %p62 = scmp.eq.s32.totalorder %s15, 0
    %p63 = por %p61, %p62
    %s65 = sadd.s32 %s64, 1
    %p68 = scmp.eq.s32.totalorder %s9, 1
    %p69 = scmp.ne.s32.totalorder %s64, %s66
    %p70 = scmp.eq.s32.totalorder %s9, 0
    %p71 = por %p69, %p70
    %p72 = scmp.ne.s32.totalorder %s64, %s66
    %p73 = scmp.eq.s32.totalorder %s14, 1
    %p74 = por %p72, %p73
    %p75 = scmp.ne.s32.totalorder %s66, %s67
    %p76 = scmp.eq.s32.totalorder %s14, 0
    %p77 = por %p75, %p76
    %p78 = scmp.ne.s32.totalorder %s66, %s67
    %p79 = scmp.eq.s32.totalorder %s15, 1
    %p80 = por %p78, %p79
    %p82 = scmp.ne.s32.totalorder %s67, %s81
    %p83 = scmp.eq.s32.totalorder %s15, 0
    %p84 = por %p82, %p83
    %s85 = ssub.s32 %s9, %s16
    %p86 = scmp.eq.s32.totalorder %s85, 0
    %s88 = sadd.s32 %s87, 1
    %s89 = scalar_select %p86, %s87, %s88
    %p92 = pneg %p86
    %p93 = scmp.eq.s32.totalorder %s9, 1
    %p94 = por %p92, %p93
    %p95 = scmp.ne.s32.totalorder %s87, %s90
    %p96 = scmp.eq.s32.totalorder %s9, 0
    %p97 = por %p95, %p96
    %p98 = scmp.ne.s32.totalorder %s87, %s90
    %p99 = scmp.eq.s32.totalorder %s14, 1
    %p100 = por %p98, %p99
    %p101 = scmp.ne.s32.totalorder %s90, %s91
    %p102 = scmp.eq.s32.totalorder %s14, 0
    %p103 = por %p101, %p102
    %p104 = scmp.ne.s32.totalorder %s90, %s91
    %p105 = scmp.eq.s32.totalorder %s15, 1
    %p106 = por %p104, %p105
    %p108 = scmp.ne.s32.totalorder %s91, %s107
    %p109 = scmp.eq.s32.totalorder %s15, 0
    %p110 = por %p108, %p109
    %p111 = scmp.le.s32.totalorder 1, %s9
    %p112 = scmp.lt.s32.totalorder %s9, 3
    %p113 = pnand %p111, %p112
    %p114 = pneg %p113
    // Predicated region
    $region9: #{rgat_absa_forward.7} parent=5 // pred_check
      _
    $region10: #{rgat_absa_forward.7} parent=5 // pred_check_branch
      %116 = sbr.rel (%p113) target = $region12
    $region11: #{rgat_absa_forward.7} parent=5 // pred_region
      %s117 = ssub.s32 %s9, 1
      // Predicated region
      $region13: #{rgat_absa_forward.7} parent=11 // pred_check
        %p118 = pneg %p56
      $region14: #{rgat_absa_forward.7} parent=11 // pred_check_branch
        %120 = sbr.rel (%p118) target = $region16
      $region15: #{rgat_absa_forward.7} parent=11 // pred_region
        _
      $region16: #{rgat_absa_forward.7} parent=11 // pred_fallthru
        _
      // Predicated region
      $region17: #{rgat_absa_forward.7} parent=11 // pred_check
        %p121 = pneg %p77
      $region18: #{rgat_absa_forward.7} parent=11 // pred_check_branch
        %123 = sbr.rel (%p121) target = $region20
      $region19: #{rgat_absa_forward.7} parent=11 // pred_region
        _
      $region20: #{rgat_absa_forward.7} parent=11 // pred_fallthru
        _
    $region12: #{rgat_absa_forward.7} parent=5 // pred_fallthru
      _
    %p124 = scmp.lt.s32.totalorder %s9, 2
    // Predicated region
    $region21: #{rgat_absa_forward.7} parent=5 // pred_check
      %p125 = pneg %p124
    $region22: #{rgat_absa_forward.7} parent=5 // pred_check_branch
      %127 = sbr.rel (%p125) target = $region24
    $region23: #{rgat_absa_forward.7} parent=5 // pred_region
      // Predicated region
      $region25: #{rgat_absa_forward.7} parent=23 // pred_check
        %p128 = pneg %p29
      $region26: #{rgat_absa_forward.7} parent=23 // pred_check_branch
        %130 = sbr.rel (%p128) target = $region28
      $region27: #{rgat_absa_forward.7} parent=23 // pred_region
        %p131 = scmp.lt.s32.totalorder %s9, 1
        %s132 = scalar_select %p131, %s9, 1
        %s133 = smul.addr %s132, 2
        %s134 = smul.addr %s133, 8
        %s135 = scalar_lea.vmem %s0, %s134
      $region28: #{rgat_absa_forward.7} parent=23 // pred_fallthru
        _
    $region24: #{rgat_absa_forward.7} parent=5 // pred_fallthru
      _
    %p136 = scmp.le.s32.totalorder 1, %s9
    %p137 = scmp.lt.s32.totalorder %s9, 3
    %p138 = pnand %p136, %p137
    %p139 = pneg %p138
    // Predicated region
    $region29: #{rgat_absa_forward.7} parent=5 // pred_check
      _
    $region30: #{rgat_absa_forward.7} parent=5 // pred_check_branch
      %141 = sbr.rel (%p138) target = $region32
    $region31: #{rgat_absa_forward.7} parent=5 // pred_region
      %s142 = ssub.s32 %s9, 1
      %p143 = scmp.lt.s32.totalorder %s14, 1
      %s144 = scalar_select %p143, %s14, 1
      %s145 = smul.addr %s144, 2
      %s146 = smul.addr %s145, 8
      %s147 = scalar_lea.vmem %s0, %s146
      %p148 = pneg %p35
      %p149 = pneg %p32
      %p150 = pneg %p56
      %p151 = pneg %p53
      %p152 = pneg %p77
      %p153 = pneg %p74
      %p154 = pneg %p103
      %p155 = pneg %p100
      %p156 = scmp.lt.s32.totalorder %s14, 1
      %s157 = scalar_select %p156, %s14, 1
      %s158 = smul.addr %s157, 2
      %s159 = smul.addr %s158, 8
      %s160 = scalar_lea.vmem %s3, %s159
      %p161 = scmp.lt.s32.totalorder %s14, 1
      %s162 = scalar_select %p161, %s14, 1
      %s163 = smul.addr %s162, 2
      %s164 = smul.addr %s163, 8
      %s165 = scalar_lea.vmem %s0, %s164
      %p166 = scmp.lt.s32.totalorder %s14, 1
      %s167 = scalar_select %p166, %s14, 1
      %s168 = smul.addr %s167, 2
      %s169 = smul.addr %s168, 8
      %s170 = scalar_lea.vmem %s3, %s169
      %v171 = vld [vmem:[%s165] sm:$0xff]
      %v172 = vld [vmem:[%s165 + $0x8] sm:$0xf]
      %v173 = vld [vmem:[%s1] sm:$0x1]
      %v174 = vld [vmem:[%s2] sm:$0x1]
      %vm175 = vcmask 261120
      %v176 = vsel %vm175, %v171, 0.0
      %177 = vadd.xlane.f32.xlu0 %v176
      %v178 = vpop.xlane.xlu0 %177
      %vm179 = vcmask 257024
      %v180 = vsel %vm179, %v172, 0.0
      %181 = vadd.xlane.f32.xlu0 %v180
      %v182 = vpop.xlane.xlu0 %181
      %v183 = vrcp.pop 32.0
      %v184 = vmul.f32 %v178, %v183
      %v185 = vmul.f32 %v182, %v183
      %v186 = vsub.f32 %v171, %v184
      %v187 = vsub.f32 %v172, %v185
      %v188 = vmul.f32 %v186, %v186
      %v189 = vmul.f32 %v187, %v187
      %v190 = vsel %vm175, %v188, 0.0
      %191 = vadd.xlane.f32.xlu0 %v190
      %v192 = vpop.xlane.xlu0 %191
      %v193 = vsel %vm179, %v189, 0.0
      %194 = vadd.xlane.f32.xlu0 %v193
      %v195 = vpop.xlane.xlu0 %194
      %v196 = vmul.f32 %v192, %v183
      %v197 = vmul.f32 %v195, %v183
      %v198 = vadd.f32 %v196, 1e-12
      %v199 = vadd.f32 %v197, 1e-12
      %v200 = vrsqrt.pop %v198
      %v201 = vrsqrt.pop %v199
      %v202 = vmul.f32 %v186, %v200
      %v203 = vmul.f32 %v187, %v201
      %v205 = vlaneseq
      %v206 = vshrl.u32 %v205, 7
      %v207 = vsub.s32 0, %v206
      %v208 = vrot.slane %v173, %v207
      %v210 = vmul.f32 %v202, %v208
      %v211 = vmul.f32 %v203, %v208
      %v213 = vlaneseq
      %v214 = vshrl.u32 %v213, 7
      %v215 = vsub.s32 0, %v214
      %v216 = vrot.slane %v174, %v215
      %v218 = vadd.f32 %v210, %v216
      %v219 = vadd.f32 %v211, %v216
      %220 = vst.msk [vmem:[%s170] sm:$0xff] %vm175, %v218
      %221 = vst.msk [vmem:[%s170 + $0x8] sm:$0xf] %vm179, %v219
      %p222 = scmp.lt.s32.totalorder %s14, 1
      %s223 = scalar_select %p222, %s14, 1
      %s224 = smul.addr %s223, 2
      %s225 = smul.addr %s224, 8
      %s226 = scalar_lea.vmem %s3, %s225
      // Predicated region
      $region33: #{rgat_absa_forward.7} parent=31 // pred_check
        %p227 = pneg %p100
      $region34: #{rgat_absa_forward.7} parent=31 // pred_check_branch
        %229 = sbr.rel (%p227) target = $region36
      $region35: #{rgat_absa_forward.7} parent=31 // pred_region
        _
      $region36: #{rgat_absa_forward.7} parent=31 // pred_fallthru
        _
    $region32: #{rgat_absa_forward.7} parent=5 // pred_fallthru
      _
    %p230 = scmp.le.s32.totalorder 2, %s9
    // Predicated region
    $region37: #{rgat_absa_forward.7} parent=5 // pred_check
      %p231 = pneg %p230
    $region38: #{rgat_absa_forward.7} parent=5 // pred_check_branch
      %233 = sbr.rel (%p231) target = $region40
    $region39: #{rgat_absa_forward.7} parent=5 // pred_region
      %s234 = ssub.s32 %s9, 2
      // Predicated region
      $region41: #{rgat_absa_forward.7} parent=39 // pred_check
        %p235 = pneg %p106
      $region42: #{rgat_absa_forward.7} parent=39 // pred_check_branch
        %237 = sbr.rel (%p235) target = $region44
      $region43: #{rgat_absa_forward.7} parent=39 // pred_region
        %p238 = scmp.lt.s32.totalorder %s15, 1
        %s239 = scalar_select %p238, %s15, 1
        %s240 = smul.addr %s239, 2
        %s241 = smul.addr %s240, 8
        %s242 = scalar_lea.vmem %s3, %s241
      $region44: #{rgat_absa_forward.7} parent=39 // pred_fallthru
        _
    $region40: #{rgat_absa_forward.7} parent=5 // pred_fallthru
      _
  $region6: #{rgat_absa_forward.7} parent=0 // loop_footer
    %s13 = sadd.s32 1, %s9
  $region7: #{rgat_absa_forward.7} parent=0 // loop_footer_branch
    %8 = sbr.rel target = $region3
  $region8: #{rgat_absa_forward.7} parent=0 // loop_exit
    _

// kernel: rgat_absa_forward.10
$region0: #{rgat_absa_forward.10}
  #allocation0 [shape = 'u32[]', space=smem, size = 0x4, offset = 0x4, fixed_abs, tag = 'smem constant byte address 0x4 - core index']
  #allocation1 [shape = 'u32[144,128]{1,0:T(1,128)}', space=vmem, size = 0x12000, scoped, tag = 'internal scratch']
  %s0 = inlined_call_operand.vmem [shape: f32[2,12,32], index: 0, kind: input, shape index: {}]
  %s1 = inlined_call_operand.vmem [shape: f32[32,32], index: 1, kind: input, shape index: {}]
  %s2 = inlined_call_operand.vmem [shape: f32[1,32], index: 2, kind: input, shape index: {}]
  %s3 = inlined_call_operand.vmem [shape: f32[32,32], index: 3, kind: input, shape index: {}]
  %s4 = inlined_call_operand.vmem [shape: f32[1,32], index: 4, kind: input, shape index: {}]
  %s5 = inlined_call_operand.vmem [shape: f32[2,8,32], index: 5, kind: output, shape index: {0}]
  %s6 = inlined_call_operand.vmem [shape: f32[2,1,32], index: 6, kind: output, shape index: {1}]
  %7 = xla_tuple %s5, %s6
  %s8 = sld [smem:[#allocation0]]
  $region61: #{rgat_absa_forward.10} parent=0
    _
  %s10 = ssub.s32 1, %s8
  %s11 = scalar_select 0, %s10, %s8
  loop: start=0, step=1, limit=4
  $region2: #{rgat_absa_forward.10} parent=0 // loop_pre_header
    _
  $region3: #{rgat_absa_forward.10} parent=0 // loop_header
    %s13 = sphi 0, %s17
    %p14 = scmp.ge.s32.totalorder %s13, 4
    %s23 = sphi 0, %s25
    %s26 = sphi 0, %s23
    %s27 = sphi 0, %s26
    %s43 = sphi 0, %s27
    %s47 = sphi 0, %s47
    %s49 = sphi 0, %s47
    %s50 = sphi 0, %s49
    %s64 = sphi 0, %s50
    %s68 = sphi 0, %s68
    %s70 = sphi 0, %s68
    %s71 = sphi 0, %s70
    %s85 = sphi 0, %s71
    %s89 = sphi 0, %s89
    %s91 = sphi 0, %s89
    %s92 = sphi 0, %s91
    %s106 = sphi 0, %s92
    %s110 = sphi 0, %s110
    %s112 = sphi 0, %s110
    %s113 = sphi 0, %s112
    %s127 = sphi 0, %s113
    %s133 = sphi 0, %s135
    %s136 = sphi 0, %s133
    %s137 = sphi 0, %s136
    %s153 = sphi 0, %s137
    %s159 = sphi 0, %s161
    %s162 = sphi 0, %s159
    %s163 = sphi 0, %s162
    %s179 = sphi 0, %s163
  $region4: #{rgat_absa_forward.10} parent=0 // loop_header_branch
    %16 = sbr.rel (%p14) target = $region8
  $region5: #{rgat_absa_forward.10} parent=0 // loop_body
    %s18 = ssub.s32 %s13, 1
    %s19 = ssub.s32 %s13, 2
    %s20 = sadd.s32 %s13, 1
    %s21 = ssub.s32 %s13, %s20
    %p22 = scmp.eq.s32.totalorder %s21, 0
    %s24 = sadd.s32 %s23, 1
    %s25 = scalar_select %p22, %s23, %s24
    %p28 = pneg %p22
    %p29 = scmp.eq.s32.totalorder %s13, 1
    %p30 = por %p28, %p29
    %p31 = scmp.ne.s32.totalorder %s23, %s26
    %p32 = scmp.eq.s32.totalorder %s13, 0
    %p33 = por %p31, %p32
    %p34 = scmp.ne.s32.totalorder %s23, %s26
    %p35 = scmp.eq.s32.totalorder %s18, 1
    %p36 = por %p34, %p35
    %p37 = scmp.ne.s32.totalorder %s26, %s27
    %p38 = scmp.eq.s32.totalorder %s18, 0
    %p39 = por %p37, %p38
    %p40 = scmp.ne.s32.totalorder %s26, %s27
    %p41 = scmp.eq.s32.totalorder %s19, 1
    %p42 = por %p40, %p41
    %p44 = scmp.ne.s32.totalorder %s27, %s43
    %p45 = scmp.eq.s32.totalorder %s19, 0
    %p46 = por %p44, %p45
    %s48 = sadd.s32 %s47, 1
    %p51 = scmp.eq.s32.totalorder %s13, 1
    %p52 = scmp.ne.s32.totalorder %s47, %s49
    %p53 = scmp.eq.s32.totalorder %s13, 0
    %p54 = por %p52, %p53
    %p55 = scmp.ne.s32.totalorder %s47, %s49
    %p56 = scmp.eq.s32.totalorder %s18, 1
    %p57 = por %p55, %p56
    %p58 = scmp.ne.s32.totalorder %s49, %s50
    %p59 = scmp.eq.s32.totalorder %s18, 0
    %p60 = por %p58, %p59
    %p61 = scmp.ne.s32.totalorder %s49, %s50
    %p62 = scmp.eq.s32.totalorder %s19, 1
    %p63 = por %p61, %p62
    %p65 = scmp.ne.s32.totalorder %s50, %s64
    %p66 = scmp.eq.s32.totalorder %s19, 0
    %p67 = por %p65, %p66
    %s69 = sadd.s32 %s68, 1
    %p72 = scmp.eq.s32.totalorder %s13, 1
    %p73 = scmp.ne.s32.totalorder %s68, %s70
    %p74 = scmp.eq.s32.totalorder %s13, 0
    %p75 = por %p73, %p74
    %p76 = scmp.ne.s32.totalorder %s68, %s70
    %p77 = scmp.eq.s32.totalorder %s18, 1
    %p78 = por %p76, %p77
    %p79 = scmp.ne.s32.totalorder %s70, %s71
    %p80 = scmp.eq.s32.totalorder %s18, 0
    %p81 = por %p79, %p80
    %p82 = scmp.ne.s32.totalorder %s70, %s71
    %p83 = scmp.eq.s32.totalorder %s19, 1
    %p84 = por %p82, %p83
    %p86 = scmp.ne.s32.totalorder %s71, %s85
    %p87 = scmp.eq.s32.totalorder %s19, 0
    %p88 = por %p86, %p87
    %s90 = sadd.s32 %s89, 1
    %p93 = scmp.eq.s32.totalorder %s13, 1
    %p94 = scmp.ne.s32.totalorder %s89, %s91
    %p95 = scmp.eq.s32.totalorder %s13, 0
    %p96 = por %p94, %p95
    %p97 = scmp.ne.s32.totalorder %s89, %s91
    %p98 = scmp.eq.s32.totalorder %s18, 1
    %p99 = por %p97, %p98
    %p100 = scmp.ne.s32.totalorder %s91, %s92
    %p101 = scmp.eq.s32.totalorder %s18, 0
    %p102 = por %p100, %p101
    %p103 = scmp.ne.s32.totalorder %s91, %s92
    %p104 = scmp.eq.s32.totalorder %s19, 1
    %p105 = por %p103, %p104
    %p107 = scmp.ne.s32.totalorder %s92, %s106
    %p108 = scmp.eq.s32.totalorder %s19, 0
    %p109 = por %p107, %p108
    %s111 = sadd.s32 %s110, 1
    %p114 = scmp.eq.s32.totalorder %s13, 1
    %p115 = scmp.ne.s32.totalorder %s110, %s112
    %p116 = scmp.eq.s32.totalorder %s13, 0
    %p117 = por %p115, %p116
    %p118 = scmp.ne.s32.totalorder %s110, %s112
    %p119 = scmp.eq.s32.totalorder %s18, 1
    %p120 = por %p118, %p119
    %p121 = scmp.ne.s32.totalorder %s112, %s113
    %p122 = scmp.eq.s32.totalorder %s18, 0
    %p123 = por %p121, %p122
    %p124 = scmp.ne.s32.totalorder %s112, %s113
    %p125 = scmp.eq.s32.totalorder %s19, 1
    %p126 = por %p124, %p125
    %p128 = scmp.ne.s32.totalorder %s113, %s127
    %p129 = scmp.eq.s32.totalorder %s19, 0
    %p130 = por %p128, %p129
    %s131 = ssub.s32 %s13, %s20
    %p132 = scmp.eq.s32.totalorder %s131, 0
    %s134 = sadd.s32 %s133, 1
    %s135 = scalar_select %p132, %s133, %s134
    %p138 = pneg %p132
    %p139 = scmp.eq.s32.totalorder %s13, 1
    %p140 = por %p138, %p139
    %p141 = scmp.ne.s32.totalorder %s133, %s136
    %p142 = scmp.eq.s32.totalorder %s13, 0
    %p143 = por %p141, %p142
    %p144 = scmp.ne.s32.totalorder %s133, %s136
    %p145 = scmp.eq.s32.totalorder %s18, 1
    %p146 = por %p144, %p145
    %p147 = scmp.ne.s32.totalorder %s136, %s137
    %p148 = scmp.eq.s32.totalorder %s18, 0
    %p149 = por %p147, %p148
    %p150 = scmp.ne.s32.totalorder %s136, %s137
    %p151 = scmp.eq.s32.totalorder %s19, 1
    %p152 = por %p150, %p151
    %p154 = scmp.ne.s32.totalorder %s137, %s153
    %p155 = scmp.eq.s32.totalorder %s19, 0
    %p156 = por %p154, %p155
    %s157 = ssub.s32 %s13, %s20
    %p158 = scmp.eq.s32.totalorder %s157, 0
    %s160 = sadd.s32 %s159, 1
    %s161 = scalar_select %p158, %s159, %s160
    %p164 = pneg %p158
    %p165 = scmp.eq.s32.totalorder %s13, 1
    %p166 = por %p164, %p165
    %p167 = scmp.ne.s32.totalorder %s159, %s162
    %p168 = scmp.eq.s32.totalorder %s13, 0
    %p169 = por %p167, %p168
    %p170 = scmp.ne.s32.totalorder %s159, %s162
    %p171 = scmp.eq.s32.totalorder %s18, 1
    %p172 = por %p170, %p171
    %p173 = scmp.ne.s32.totalorder %s162, %s163
    %p174 = scmp.eq.s32.totalorder %s18, 0
    %p175 = por %p173, %p174
    %p176 = scmp.ne.s32.totalorder %s162, %s163
    %p177 = scmp.eq.s32.totalorder %s19, 1
    %p178 = por %p176, %p177
    %p180 = scmp.ne.s32.totalorder %s163, %s179
    %p181 = scmp.eq.s32.totalorder %s19, 0
    %p182 = por %p180, %p181
    %p183 = scmp.le.s32.totalorder 1, %s13
    %p184 = scmp.lt.s32.totalorder %s13, 3
    %p185 = pnand %p183, %p184
    %p186 = pneg %p185
    // Predicated region
    $region9: #{rgat_absa_forward.10} parent=5 // pred_check
      _
    $region10: #{rgat_absa_forward.10} parent=5 // pred_check_branch
      %188 = sbr.rel (%p185) target = $region12
    $region11: #{rgat_absa_forward.10} parent=5 // pred_region
      %s189 = ssub.s32 %s13, 1
      // Predicated region
      $region13: #{rgat_absa_forward.10} parent=11 // pred_check
        %p190 = pneg %p60
      $region14: #{rgat_absa_forward.10} parent=11 // pred_check_branch
        %192 = sbr.rel (%p190) target = $region16
      $region15: #{rgat_absa_forward.10} parent=11 // pred_region
        _
      $region16: #{rgat_absa_forward.10} parent=11 // pred_fallthru
        _
      // Predicated region
      $region17: #{rgat_absa_forward.10} parent=11 // pred_check
        %p193 = pneg %p81
      $region18: #{rgat_absa_forward.10} parent=11 // pred_check_branch
        %195 = sbr.rel (%p193) target = $region20
      $region19: #{rgat_absa_forward.10} parent=11 // pred_region
        _
      $region20: #{rgat_absa_forward.10} parent=11 // pred_fallthru
        _
      // Predicated region
      $region21: #{rgat_absa_forward.10} parent=11 // pred_check
        %p196 = pneg %p102
      $region22: #{rgat_absa_forward.10} parent=11 // pred_check_branch
        %198 = sbr.rel (%p196) target = $region24
      $region23: #{rgat_absa_forward.10} parent=11 // pred_region
        _
      $region24: #{rgat_absa_forward.10} parent=11 // pred_fallthru
        _
      // Predicated region
      $region25: #{rgat_absa_forward.10} parent=11 // pred_check
        %p199 = pneg %p123
      $region26: #{rgat_absa_forward.10} parent=11 // pred_check_branch
        %201 = sbr.rel (%p199) target = $region28
      $region27: #{rgat_absa_forward.10} parent=11 // pred_region
        _
      $region28: #{rgat_absa_forward.10} parent=11 // pred_fallthru
        _
    $region12: #{rgat_absa_forward.10} parent=5 // pred_fallthru
      _
    %p202 = scmp.lt.s32.totalorder %s13, 2
    // Predicated region
    $region29: #{rgat_absa_forward.10} parent=5 // pred_check
      %p203 = pneg %p202
    $region30: #{rgat_absa_forward.10} parent=5 // pred_check_branch
      %205 = sbr.rel (%p203) target = $region32
    $region31: #{rgat_absa_forward.10} parent=5 // pred_region
      // Predicated region
      $region33: #{rgat_absa_forward.10} parent=31 // pred_check
        %p206 = pneg %p33
      $region34: #{rgat_absa_forward.10} parent=31 // pred_check_branch
        %208 = sbr.rel (%p206) target = $region36
      $region35: #{rgat_absa_forward.10} parent=31 // pred_region
        %p209 = scmp.lt.s32.totalorder %s13, 1
        %s210 = scalar_select %p209, %s13, 1
        %s211 = smul.addr %s210, 2
        %s212 = smul.addr %s211, 8
        %s213 = scalar_lea.vmem %s0, %s212
      $region36: #{rgat_absa_forward.10} parent=31 // pred_fallthru
        _
    $region32: #{rgat_absa_forward.10} parent=5 // pred_fallthru
      _
    %p214 = scmp.le.s32.totalorder 1, %s13
    %p215 = scmp.lt.s32.totalorder %s13, 3
    %p216 = pnand %p214, %p215
    %p217 = pneg %p216
    // Predicated region
    $region37: #{rgat_absa_forward.10} parent=5 // pred_check
      _
    $region38: #{rgat_absa_forward.10} parent=5 // pred_check_branch
      %219 = sbr.rel (%p216) target = $region40
    $region39: #{rgat_absa_forward.10} parent=5 // pred_region
      %s220 = ssub.s32 %s13, 1
      %p221 = scmp.lt.s32.totalorder %s18, 1
      %s222 = scalar_select %p221, %s18, 1
      %s223 = smul.addr %s222, 2
      %s224 = smul.addr %s223, 8
      %s225 = scalar_lea.vmem %s0, %s224
      %p226 = pneg %p39
      %p227 = pneg %p36
      %p228 = pneg %p60
      %p229 = pneg %p57
      %p230 = pneg %p81
      %p231 = pneg %p78
      %p232 = pneg %p102
      %p233 = pneg %p99
      %p234 = pneg %p123
      %p235 = pneg %p120
      %p236 = pneg %p149
      %p237 = pneg %p146
      %p238 = scmp.lt.s32.totalorder %s18, 1
      %s239 = scalar_select %p238, %s18, 1
      %s240 = smul.addr %s239, 8
      %s241 = scalar_lea.vmem %s5, %s240
      %p242 = pneg %p175
      %p243 = pneg %p172
      %p244 = scmp.lt.s32.totalorder %s18, 1
      %s245 = scalar_select %p244, %s18, 1
      %s246 = scalar_lea.vmem %s6, %s245
      %p247 = scmp.lt.s32.totalorder %s18, 1
      %s248 = scalar_select %p247, %s18, 1
      %s249 = smul.addr %s248, 2
      %s250 = smul.addr %s249, 8
      %s251 = scalar_lea.vmem %s0, %s250
      %p252 = scmp.lt.s32.totalorder %s18, 1
      %s253 = scalar_select %p252, %s18, 1
      %s254 = smul.addr %s253, 8
      %s255 = scalar_lea.vmem %s5, %s254
      %p256 = scmp.lt.s32.totalorder %s18, 1
      %s257 = scalar_select %p256, %s18, 1
      %s258 = scalar_lea.vmem %s6, %s257
      %v259 = vld [vmem:[%s251] sm:$0xff]
      %v260 = vld [vmem:[%s1] sm:$0xff]
      %v261 = vld [vmem:[%s1 + $0x8] sm:$0xff]
      %v262 = vld [vmem:[%s1 + $0x10] sm:$0xff]
      %v263 = vld [vmem:[%s1 + $0x18] sm:$0xff]
      %v264 = vld [vmem:[%s2] sm:$0x1]
      %v266 = vlaneseq
      %v267 = vshrl.u32 %v266, 7
      %v268 = vsub.s32 0, %v267
      %v269 = vrot.slane %v264, %v268
      %vm271 = vcmask 261120
      %v273 = vsel %vm271, %v259, 0
      %275 = vmatprep.subr.mxu0 0.0
      %276 = vmatpush1.msra.mxu0 0.0
      %277 = vmatprep.subr.mxu0 0.0
      %278 = vmatpush1.msra.mxu0 0.0
      %279 = vmatprep.subr.mxu0 0.0
      %280 = vmatpush1.msra.mxu0 0.0
      %281 = vmatprep.subr.mxu0 0.0
      %282 = vmatpush1.msra.mxu0 0.0
      %283 = vmatprep.subr.mxu0 0.0
      %284 = vmatpush1.msra.mxu0 0.0
      %285 = vmatprep.subr.mxu0 0.0
      %286 = vmatpush1.msra.mxu0 0.0
      %287 = vmatprep.subr.mxu0 0.0
      %288 = vmatpush1.msra.mxu0 0.0
      %289 = vmatprep.subr.mxu0 0.0
      %290 = vmatpush1.msra.mxu0 0.0
      %291 = vmatprep.subr.mxu0 0.0
      %292 = vmatpush1.msra.mxu0 0.0
      %293 = vmatprep.subr.mxu0 0.0
      %294 = vmatpush1.msra.mxu0 0.0
      %295 = vmatprep.subr.mxu0 0.0
      %296 = vmatpush1.msra.mxu0 0.0
      %297 = vmatprep.subr.mxu0 0.0
      %298 = vmatpush1.msra.mxu0 0.0
      %299 = vmatprep.subr.mxu0 0.0
      %300 = vmatpush1.msra.mxu0 %v263
      %301 = vmatprep.subr.mxu0 0.0
      %302 = vmatpush1.msra.mxu0 %v262
      %303 = vmatprep.subr.mxu0 0.0
      %304 = vmatpush1.msra.mxu0 %v261
      %305 = vmatprep.subr.mxu0 0.0
      %306 = vmatpush1.msra.mxu0 %v260
      %307 = vmatprep.subr.mxu0 0.0
      %308 = vmatpush2.msra.mxu0 0.0
      %309 = vmatprep.subr.mxu0 0.0
      %310 = vmatpush2.msra.mxu0 0.0
      %311 = vmatprep.subr.mxu0 0.0
      %312 = vmatpush2.msra.mxu0 0.0
      %313 = vmatprep.subr.mxu0 0.0
      %314 = vmatpush2.msra.mxu0 0.0
      %315 = vmatprep.subr.mxu0 0.0
      %316 = vmatpush2.msra.mxu0 0.0
      %317 = vmatprep.subr.mxu0 0.0
      %318 = vmatpush2.msra.mxu0 0.0
      %319 = vmatprep.subr.mxu0 0.0
      %320 = vmatpush2.msra.mxu0 0.0
      %321 = vmatprep.subr.mxu0 0.0
      %322 = vmatpush2.msra.mxu0 0.0
      %323 = vmatprep.subr.mxu0 0.0
      %324 = vmatpush2.msra.mxu0 0.0
      %325 = vmatprep.subr.mxu0 0.0
      %326 = vmatpush2.msra.mxu0 0.0
      %327 = vmatprep.subr.mxu0 0.0
      %328 = vmatpush2.msra.mxu0 0.0
      %329 = vmatprep.subr.mxu0 0.0
      %330 = vmatpush2.msra.mxu0 0.0
      %331 = vmatprep.subr.mxu0 0.0
      %332 = vmatpush2.msra.mxu0 0.0
      %333 = vmatprep.subr.mxu0 0.0
      %334 = vmatpush2.msra.mxu0 0.0
      %335 = vmatprep.subr.mxu0 0.0
      %336 = vmatpush2.msra.mxu0 0.0
      %337 = vmatprep.subr.mxu0 0.0
      %338 = vmatpush2.msra.mxu0 0.0
      %339 = vmatprep.mubr.f32.mxu0 0.0
      %340 = vmatmul.mubr.f32.gmra.mxu0 %v273
      %v341 = vpop.f32.mrf.mxu0
      %v342 = vadd.f32 %v269, %v341
      %v343 = vpop.f32.mrf.mxu0
      %344 = vdwg.mxu0
      %345 = vst.msk [vmem:[%s255] sm:$0xff] %vm271, %v342
      %v346 = vld [vmem:[%s3] sm:$0xff]
      %v347 = vld [vmem:[%s3 + $0x8] sm:$0xff]
      %v348 = vld [vmem:[%s3 + $0x10] sm:$0xff]
      %v349 = vld [vmem:[%s3 + $0x18] sm:$0xff]
      %v350 = vld [vmem:[%s4] sm:$0x1]
      %351 = vmatprep.subr.mxu0 0.0
      %352 = vmatpush1.msra.mxu0 0.0
      %353 = vmatprep.subr.mxu0 0.0
      %354 = vmatpush1.msra.mxu0 0.0
      %355 = vmatprep.subr.mxu0 0.0
      %356 = vmatpush1.msra.mxu0 0.0
      %357 = vmatprep.subr.mxu0 0.0
      %358 = vmatpush1.msra.mxu0 0.0
      %359 = vmatprep.subr.mxu0 0.0
      %360 = vmatpush1.msra.mxu0 0.0
      %361 = vmatprep.subr.mxu0 0.0
      %362 = vmatpush1.msra.mxu0 0.0
      %363 = vmatprep.subr.mxu0 0.0
      %364 = vmatpush1.msra.mxu0 0.0
      %365 = vmatprep.subr.mxu0 0.0
      %366 = vmatpush1.msra.mxu0 0.0
      %367 = vmatprep.subr.mxu0 0.0
      %368 = vmatpush1.msra.mxu0 0.0
      %369 = vmatprep.subr.mxu0 0.0
      %370 = vmatpush1.msra.mxu0 0.0
      %371 = vmatprep.subr.mxu0 0.0
      %372 = vmatpush1.msra.mxu0 0.0
      %373 = vmatprep.subr.mxu0 0.0
      %374 = vmatpush1.msra.mxu0 0.0
      %375 = vmatprep.subr.mxu0 0.0
      %376 = vmatpush1.msra.mxu0 %v349
      %377 = vmatprep.subr.mxu0 0.0
      %378 = vmatpush1.msra.mxu0 %v348
      %379 = vmatprep.subr.mxu0 0.0
      %380 = vmatpush1.msra.mxu0 %v347
      %381 = vmatprep.subr.mxu0 0.0
      %382 = vmatpush1.msra.mxu0 %v346
      %383 = vmatprep.subr.mxu0 0.0
      %384 = vmatpush2.msra.mxu0 0.0
      %385 = vmatprep.subr.mxu0 0.0
      %386 = vmatpush2.msra.mxu0 0.0
      %387 = vmatprep.subr.mxu0 0.0
      %388 = vmatpush2.msra.mxu0 0.0
      %389 = vmatprep.subr.mxu0 0.0
      %390 = vmatpush2.msra.mxu0 0.0
      %391 = vmatprep.subr.mxu0 0.0
      %392 = vmatpush2.msra.mxu0 0.0
      %393 = vmatprep.subr.mxu0 0.0
      %394 = vmatpush2.msra.mxu0 0.0
      %395 = vmatprep.subr.mxu0 0.0
      %396 = vmatpush2.msra.mxu0 0.0
      %397 = vmatprep.subr.mxu0 0.0
      %398 = vmatpush2.msra.mxu0 0.0
      %399 = vmatprep.subr.mxu0 0.0
      %400 = vmatpush2.msra.mxu0 0.0
      %401 = vmatprep.subr.mxu0 0.0
      %402 = vmatpush2.msra.mxu0 0.0
      %403 = vmatprep.subr.mxu0 0.0
      %404 = vmatpush2.msra.mxu0 0.0
      %405 = vmatprep.subr.mxu0 0.0
      %406 = vmatpush2.msra.mxu0 0.0
      %407 = vmatprep.subr.mxu0 0.0
      %408 = vmatpush2.msra.mxu0 0.0
      %409 = vmatprep.subr.mxu0 0.0
      %410 = vmatpush2.msra.mxu0 0.0
      %411 = vmatprep.subr.mxu0 0.0
      %412 = vmatpush2.msra.mxu0 0.0
      %413 = vmatprep.subr.mxu0 0.0
      %414 = vmatpush2.msra.mxu0 0.0
      %415 = vmatprep.mubr.f32.mxu0 0.0
      %416 = vmatmul.mubr.f32.gmra.mxu0 %v273
      %v417 = vpop.f32.mrf.mxu0
      %v418 = vadd.f32 %v350, %v417
      %v419 = vpop.f32.mrf.mxu0
      %420 = vdwg.mxu0
      %v421 = vtanh.pop %v418
      %vm422 = vcmask 253952
      %423 = vst.msk [vmem:[%s258] sm:$0x1] %vm422, %v421
      %p424 = scmp.lt.s32.totalorder %s18, 1
      %s425 = scalar_select %p424, %s18, 1
      %s426 = smul.addr %s425, 8
      %s427 = scalar_lea.vmem %s5, %s426
      %p428 = scmp.lt.s32.totalorder %s18, 1
      %s429 = scalar_select %p428, %s18, 1
      %s430 = scalar_lea.vmem %s6, %s429
      // Predicated region
      $region41: #{rgat_absa_forward.10} parent=39 // pred_check
        %p431 = pneg %p146
      $region42: #{rgat_absa_forward.10} parent=39 // pred_check_branch
        %433 = sbr.rel (%p431) target = $region44
      $region43: #{rgat_absa_forward.10} parent=39 // pred_region
        _
      $region44: #{rgat_absa_forward.10} parent=39 // pred_fallthru
        _
      // Predicated region
      $region45: #{rgat_absa_forward.10} parent=39 // pred_check
        %p434 = pneg %p172
      $region46: #{rgat_absa_forward.10} parent=39 // pred_check_branch
        %436 = sbr.rel (%p434) target = $region48
      $region47: #{rgat_absa_forward.10} parent=39 // pred_region
        _
      $region48: #{rgat_absa_forward.10} parent=39 // pred_fallthru
        _
    $region40: #{rgat_absa_forward.10} parent=5 // pred_fallthru
      _
    %p437 = scmp.le.s32.totalorder 2, %s13
    // Predicated region
    $region49: #{rgat_absa_forward.10} parent=5 // pred_check
      %p438 = pneg %p437
    $region50: #{rgat_absa_forward.10} parent=5 // pred_check_branch
      %440 = sbr.rel (%p438) target = $region52
    $region51: #{rgat_absa_forward.10} parent=5 // pred_region
      %s441 = ssub.s32 %s13, 2
      // Predicated region
      $region53: #{rgat_absa_forward.10} parent=51 // pred_check
        %p442 = pneg %p152
      $region54: #{rgat_absa_forward.10} parent=51 // pred_check_branch
        %444 = sbr.rel (%p442) target = $region56
      $region55: #{rgat_absa_forward.10} parent=51 // pred_region
        %p445 = scmp.lt.s32.totalorder %s19, 1
        %s446 = scalar_select %p445, %s19, 1
        %s447 = smul.addr %s446, 8
        %s448 = scalar_lea.vmem %s5, %s447
      $region56: #{rgat_absa_forward.10} parent=51 // pred_fallthru
        _
      // Predicated region
      $region57: #{rgat_absa_forward.10} parent=51 // pred_check
        %p449 = pneg %p178
      $region58: #{rgat_absa_forward.10} parent=51 // pred_check_branch
        %451 = sbr.rel (%p449) target = $region60
      $region59: #{rgat_absa_forward.10} parent=51 // pred_region
        %p452 = scmp.lt.s32.totalorder %s19, 1
        %s453 = scalar_select %p452, %s19, 1
        %s454 = scalar_lea.vmem %s6, %s453
      $region60: #{rgat_absa_forward.10} parent=51 // pred_fallthru
        _
    $region52: #{rgat_absa_forward.10} parent=5 // pred_fallthru
      _
  $region6: #{rgat_absa_forward.10} parent=0 // loop_footer
    %s17 = sadd.s32 1, %s13
  $region7: #{rgat_absa_forward.10} parent=0 // loop_footer_branch
    %12 = sbr.rel target = $region3
  $region8: #{rgat_absa_forward.10} parent=0 // loop_exit
    _

// kernel: rgat_absa_forward.8
$region0: #{rgat_absa_forward.8}
  #allocation0 [shape = 'u32[]', space=smem, size = 0x4, offset = 0x4, fixed_abs, tag = 'smem constant byte address 0x4 - core index']
  #allocation1 [shape = 'u32[144,128]{1,0:T(1,128)}', space=vmem, size = 0x12000, scoped, tag = 'internal scratch']
  %s0 = inlined_call_operand.vmem [shape: f32[2,12,32], index: 0, kind: input, shape index: {}]
  %s1 = inlined_call_operand.vmem [shape: f32[32,96], index: 1, kind: input, shape index: {}]
  %s2 = inlined_call_operand.vmem [shape: f32[1,96], index: 2, kind: input, shape index: {}]
  %s3 = inlined_call_operand.vmem [shape: f32[32,32], index: 3, kind: input, shape index: {}]
  %s4 = inlined_call_operand.vmem [shape: f32[1,32], index: 4, kind: input, shape index: {}]
  %s5 = inlined_call_operand.vmem [shape: f32[1,32], index: 5, kind: input, shape index: {}]
  %s6 = inlined_call_operand.vmem [shape: f32[1,32], index: 6, kind: input, shape index: {}]
  %s7 = inlined_call_operand.vmem [shape: f32[32,64], index: 7, kind: input, shape index: {}]
  %s8 = inlined_call_operand.vmem [shape: f32[1,64], index: 8, kind: input, shape index: {}]
  %s9 = inlined_call_operand.vmem [shape: f32[64,32], index: 9, kind: input, shape index: {}]
  %s10 = inlined_call_operand.vmem [shape: f32[1,32], index: 10, kind: input, shape index: {}]
  %s11 = inlined_call_operand.vmem [shape: f32[1,32], index: 11, kind: input, shape index: {}]
  %s12 = inlined_call_operand.vmem [shape: f32[1,32], index: 12, kind: input, shape index: {}]
  %s13 = inlined_call_operand.vmem [shape: f32[2,12,32], index: 13, kind: output, shape index: {}]
  %s14 = sld [smem:[#allocation0]]
  $region85: #{rgat_absa_forward.8} parent=0
    _
  %s16 = ssub.s32 1, %s14
  %s17 = scalar_select 0, %s16, %s14
  loop: start=0, step=1, limit=4
  $region2: #{rgat_absa_forward.8} parent=0 // loop_pre_header
    _
  $region3: #{rgat_absa_forward.8} parent=0 // loop_header
    %s19 = sphi 0, %s23
    %p20 = scmp.ge.s32.totalorder %s19, 4
    %s29 = sphi 0, %s31
    %s32 = sphi 0, %s29
    %s33 = sphi 0, %s32
    %s49 = sphi 0, %s33
    %s53 = sphi 0, %s53
    %s55 = sphi 0, %s53
    %s56 = sphi 0, %s55
    %s70 = sphi 0, %s56
    %s74 = sphi 0, %s74
    %s76 = sphi 0, %s74
    %s77 = sphi 0, %s76
    %s91 = sphi 0, %s77
    %s95 = sphi 0, %s95
    %s97 = sphi 0, %s95
    %s98 = sphi 0, %s97
    %s112 = sphi 0, %s98
    %s116 = sphi 0, %s116
    %s118 = sphi 0, %s116
    %s119 = sphi 0, %s118
    %s133 = sphi 0, %s119
    %s137 = sphi 0, %s137
    %s139 = sphi 0, %s137
    %s140 = sphi 0, %s139
    %s154 = sphi 0, %s140
    %s158 = sphi 0, %s158
    %s160 = sphi 0, %s158
    %s161 = sphi 0, %s160
    %s175 = sphi 0, %s161
    %s179 = sphi 0, %s179
    %s181 = sphi 0, %s179
    %s182 = sphi 0, %s181
    %s196 = sphi 0, %s182
    %s200 = sphi 0, %s200
    %s202 = sphi 0, %s200
    %s203 = sphi 0, %s202
    %s217 = sphi 0, %s203
    %s221 = sphi 0, %s221
    %s223 = sphi 0, %s221
    %s224 = sphi 0, %s223
    %s238 = sphi 0, %s224
    %s242 = sphi 0, %s242
    %s244 = sphi 0, %s242
    %s245 = sphi 0, %s244
    %s259 = sphi 0, %s245
    %s263 = sphi 0, %s263
    %s265 = sphi 0, %s263
    %s266 = sphi 0, %s265
    %s280 = sphi 0, %s266
    %s284 = sphi 0, %s284
    %s286 = sphi 0, %s284
    %s287 = sphi 0, %s286
    %s301 = sphi 0, %s287
    %s307 = sphi 0, %s309
    %s310 = sphi 0, %s307
    %s311 = sphi 0, %s310
    %s327 = sphi 0, %s311
  $region4: #{rgat_absa_forward.8} parent=0 // loop_header_branch
    %22 = sbr.rel (%p20) target = $region8
  $region5: #{rgat_absa_forward.8} parent=0 // loop_body
    %s24 = ssub.s32 %s19, 1
    %s25 = ssub.s32 %s19, 2
    %s26 = sadd.s32 %s19, 1
    %s27 = ssub.s32 %s19, %s26
    %p28 = scmp.eq.s32.totalorder %s27, 0
    %s30 = sadd.s32 %s29, 1
    %s31 = scalar_select %p28, %s29, %s30
    %p34 = pneg %p28
    %p35 = scmp.eq.s32.totalorder %s19, 1
    %p36 = por %p34, %p35
    %p37 = scmp.ne.s32.totalorder %s29, %s32
    %p38 = scmp.eq.s32.totalorder %s19, 0
    %p39 = por %p37, %p38
    %p40 = scmp.ne.s32.totalorder %s29, %s32
    %p41 = scmp.eq.s32.totalorder %s24, 1
    %p42 = por %p40, %p41
    %p43 = scmp.ne.s32.totalorder %s32, %s33
    %p44 = scmp.eq.s32.totalorder %s24, 0
    %p45 = por %p43, %p44
    %p46 = scmp.ne.s32.totalorder %s32, %s33
    %p47 = scmp.eq.s32.totalorder %s25, 1
    %p48 = por %p46, %p47
    %p50 = scmp.ne.s32.totalorder %s33, %s49
    %p51 = scmp.eq.s32.totalorder %s25, 0
    %p52 = por %p50, %p51
    %s54 = sadd.s32 %s53, 1
    %p57 = scmp.eq.s32.totalorder %s19, 1
    %p58 = scmp.ne.s32.totalorder %s53, %s55
    %p59 = scmp.eq.s32.totalorder %s19, 0
    %p60 = por %p58, %p59
    %p61 = scmp.ne.s32.totalorder %s53, %s55
    %p62 = scmp.eq.s32.totalorder %s24, 1
    %p63 = por %p61, %p62
    %p64 = scmp.ne.s32.totalorder %s55, %s56
    %p65 = scmp.eq.s32.totalorder %s24, 0
    %p66 = por %p64, %p65
    %p67 = scmp.ne.s32.totalorder %s55, %s56
    %p68 = scmp.eq.s32.totalorder %s25, 1
    %p69 = por %p67, %p68
    %p71 = scmp.ne.s32.totalorder %s56, %s70
    %p72 = scmp.eq.s32.totalorder %s25, 0
    %p73 = por %p71, %p72
    %s75 = sadd.s32 %s74, 1
    %p78 = scmp.eq.s32.totalorder %s19, 1
    %p79 = scmp.ne.s32.totalorder %s74, %s76
    %p80 = scmp.eq.s32.totalorder %s19, 0
    %p81 = por %p79, %p80
    %p82 = scmp.ne.s32.totalorder %s74, %s76
    %p83 = scmp.eq.s32.totalorder %s24, 1
    %p84 = por %p82, %p83
    %p85 = scmp.ne.s32.totalorder %s76, %s77
    %p86 = scmp.eq.s32.totalorder %s24, 0
    %p87 = por %p85, %p86
    %p88 = scmp.ne.s32.totalorder %s76, %s77
    %p89 = scmp.eq.s32.totalorder %s25, 1
    %p90 = por %p88, %p89
    %p92 = scmp.ne.s32.totalorder %s77, %s91
    %p93 = scmp.eq.s32.totalorder %s25, 0
    %p94 = por %p92, %p93
    %s96 = sadd.s32 %s95, 1
    %p99 = scmp.eq.s32.totalorder %s19, 1
    %p100 = scmp.ne.s32.totalorder %s95, %s97
    %p101 = scmp.eq.s32.totalorder %s19, 0
    %p102 = por %p100, %p101
    %p103 = scmp.ne.s32.totalorder %s95, %s97
    %p104 = scmp.eq.s32.totalorder %s24, 1
    %p105 = por %p103, %p104
    %p106 = scmp.ne.s32.totalorder %s97, %s98
    %p107 = scmp.eq.s32.totalorder %s24, 0
    %p108 = por %p106, %p107
    %p109 = scmp.ne.s32.totalorder %s97, %s98
    %p110 = scmp.eq.s32.totalorder %s25, 1
    %p111 = por %p109, %p110
    %p113 = scmp.ne.s32.totalorder %s98, %s112
    %p114 = scmp.eq.s32.totalorder %s25, 0
    %p115 = por %p113, %p114
    %s117 = sadd.s32 %s116, 1
    %p120 = scmp.eq.s32.totalorder %s19, 1
    %p121 = scmp.ne.s32.totalorder %s116, %s118
    %p122 = scmp.eq.s32.totalorder %s19, 0
    %p123 = por %p121, %p122
    %p124 = scmp.ne.s32.totalorder %s116, %s118
    %p125 = scmp.eq.s32.totalorder %s24, 1
    %p126 = por %p124, %p125
    %p127 = scmp.ne.s32.totalorder %s118, %s119
    %p128 = scmp.eq.s32.totalorder %s24, 0
    %p129 = por %p127, %p128
    %p130 = scmp.ne.s32.totalorder %s118, %s119
    %p131 = scmp.eq.s32.totalorder %s25, 1
    %p132 = por %p130, %p131
    %p134 = scmp.ne.s32.totalorder %s119, %s133
    %p135 = scmp.eq.s32.totalorder %s25, 0
    %p136 = por %p134, %p135
    %s138 = sadd.s32 %s137, 1
    %p141 = scmp.eq.s32.totalorder %s19, 1
    %p142 = scmp.ne.s32.totalorder %s137, %s139
    %p143 = scmp.eq.s32.totalorder %s19, 0
    %p144 = por %p142, %p143
    %p145 = scmp.ne.s32.totalorder %s137, %s139
    %p146 = scmp.eq.s32.totalorder %s24, 1
    %p147 = por %p145, %p146
    %p148 = scmp.ne.s32.totalorder %s139, %s140
    %p149 = scmp.eq.s32.totalorder %s24, 0
    %p150 = por %p148, %p149
    %p151 = scmp.ne.s32.totalorder %s139, %s140
    %p152 = scmp.eq.s32.totalorder %s25, 1
    %p153 = por %p151, %p152
    %p155 = scmp.ne.s32.totalorder %s140, %s154
    %p156 = scmp.eq.s32.totalorder %s25, 0
    %p157 = por %p155, %p156
    %s159 = sadd.s32 %s158, 1
    %p162 = scmp.eq.s32.totalorder %s19, 1
    %p163 = scmp.ne.s32.totalorder %s158, %s160
    %p164 = scmp.eq.s32.totalorder %s19, 0
    %p165 = por %p163, %p164
    %p166 = scmp.ne.s32.totalorder %s158, %s160
    %p167 = scmp.eq.s32.totalorder %s24, 1
    %p168 = por %p166, %p167
    %p169 = scmp.ne.s32.totalorder %s160, %s161
    %p170 = scmp.eq.s32.totalorder %s24, 0
    %p171 = por %p169, %p170
    %p172 = scmp.ne.s32.totalorder %s160, %s161
    %p173 = scmp.eq.s32.totalorder %s25, 1
    %p174 = por %p172, %p173
    %p176 = scmp.ne.s32.totalorder %s161, %s175
    %p177 = scmp.eq.s32.totalorder %s25, 0
    %p178 = por %p176, %p177
    %s180 = sadd.s32 %s179, 1
    %p183 = scmp.eq.s32.totalorder %s19, 1
    %p184 = scmp.ne.s32.totalorder %s179, %s181
    %p185 = scmp.eq.s32.totalorder %s19, 0
    %p186 = por %p184, %p185
    %p187 = scmp.ne.s32.totalorder %s179, %s181
    %p188 = scmp.eq.s32.totalorder %s24, 1
    %p189 = por %p187, %p188
    %p190 = scmp.ne.s32.totalorder %s181, %s182
    %p191 = scmp.eq.s32.totalorder %s24, 0
    %p192 = por %p190, %p191
    %p193 = scmp.ne.s32.totalorder %s181, %s182
    %p194 = scmp.eq.s32.totalorder %s25, 1
    %p195 = por %p193, %p194
    %p197 = scmp.ne.s32.totalorder %s182, %s196
    %p198 = scmp.eq.s32.totalorder %s25, 0
    %p199 = por %p197, %p198
    %s201 = sadd.s32 %s200, 1
    %p204 = scmp.eq.s32.totalorder %s19, 1
    %p205 = scmp.ne.s32.totalorder %s200, %s202
    %p206 = scmp.eq.s32.totalorder %s19, 0
    %p207 = por %p205, %p206
    %p208 = scmp.ne.s32.totalorder %s200, %s202
    %p209 = scmp.eq.s32.totalorder %s24, 1
    %p210 = por %p208, %p209
    %p211 = scmp.ne.s32.totalorder %s202, %s203
    %p212 = scmp.eq.s32.totalorder %s24, 0
    %p213 = por %p211, %p212
    %p214 = scmp.ne.s32.totalorder %s202, %s203
    %p215 = scmp.eq.s32.totalorder %s25, 1
    %p216 = por %p214, %p215
    %p218 = scmp.ne.s32.totalorder %s203, %s217
    %p219 = scmp.eq.s32.totalorder %s25, 0
    %p220 = por %p218, %p219
    %s222 = sadd.s32 %s221, 1
    %p225 = scmp.eq.s32.totalorder %s19, 1
    %p226 = scmp.ne.s32.totalorder %s221, %s223
    %p227 = scmp.eq.s32.totalorder %s19, 0
    %p228 = por %p226, %p227
    %p229 = scmp.ne.s32.totalorder %s221, %s223
    %p230 = scmp.eq.s32.totalorder %s24, 1
    %p231 = por %p229, %p230
    %p232 = scmp.ne.s32.totalorder %s223, %s224
    %p233 = scmp.eq.s32.totalorder %s24, 0
    %p234 = por %p232, %p233
    %p235 = scmp.ne.s32.totalorder %s223, %s224
    %p236 = scmp.eq.s32.totalorder %s25, 1
    %p237 = por %p235, %p236
    %p239 = scmp.ne.s32.totalorder %s224, %s238
    %p240 = scmp.eq.s32.totalorder %s25, 0
    %p241 = por %p239, %p240
    %s243 = sadd.s32 %s242, 1
    %p246 = scmp.eq.s32.totalorder %s19, 1
    %p247 = scmp.ne.s32.totalorder %s242, %s244
    %p248 = scmp.eq.s32.totalorder %s19, 0
    %p249 = por %p247, %p248
    %p250 = scmp.ne.s32.totalorder %s242, %s244
    %p251 = scmp.eq.s32.totalorder %s24, 1
    %p252 = por %p250, %p251
    %p253 = scmp.ne.s32.totalorder %s244, %s245
    %p254 = scmp.eq.s32.totalorder %s24, 0
    %p255 = por %p253, %p254
    %p256 = scmp.ne.s32.totalorder %s244, %s245
    %p257 = scmp.eq.s32.totalorder %s25, 1
    %p258 = por %p256, %p257
    %p260 = scmp.ne.s32.totalorder %s245, %s259
    %p261 = scmp.eq.s32.totalorder %s25, 0
    %p262 = por %p260, %p261
    %s264 = sadd.s32 %s263, 1
    %p267 = scmp.eq.s32.totalorder %s19, 1
    %p268 = scmp.ne.s32.totalorder %s263, %s265
    %p269 = scmp.eq.s32.totalorder %s19, 0
    %p270 = por %p268, %p269
    %p271 = scmp.ne.s32.totalorder %s263, %s265
    %p272 = scmp.eq.s32.totalorder %s24, 1
    %p273 = por %p271, %p272
    %p274 = scmp.ne.s32.totalorder %s265, %s266
    %p275 = scmp.eq.s32.totalorder %s24, 0
    %p276 = por %p274, %p275
    %p277 = scmp.ne.s32.totalorder %s265, %s266
    %p278 = scmp.eq.s32.totalorder %s25, 1
    %p279 = por %p277, %p278
    %p281 = scmp.ne.s32.totalorder %s266, %s280
    %p282 = scmp.eq.s32.totalorder %s25, 0
    %p283 = por %p281, %p282
    %s285 = sadd.s32 %s284, 1
    %p288 = scmp.eq.s32.totalorder %s19, 1
    %p289 = scmp.ne.s32.totalorder %s284, %s286
    %p290 = scmp.eq.s32.totalorder %s19, 0
    %p291 = por %p289, %p290
    %p292 = scmp.ne.s32.totalorder %s284, %s286
    %p293 = scmp.eq.s32.totalorder %s24, 1
    %p294 = por %p292, %p293
    %p295 = scmp.ne.s32.totalorder %s286, %s287
    %p296 = scmp.eq.s32.totalorder %s24, 0
    %p297 = por %p295, %p296
    %p298 = scmp.ne.s32.totalorder %s286, %s287
    %p299 = scmp.eq.s32.totalorder %s25, 1
    %p300 = por %p298, %p299
    %p302 = scmp.ne.s32.totalorder %s287, %s301
    %p303 = scmp.eq.s32.totalorder %s25, 0
    %p304 = por %p302, %p303
    %s305 = ssub.s32 %s19, %s26
    %p306 = scmp.eq.s32.totalorder %s305, 0
    %s308 = sadd.s32 %s307, 1
    %s309 = scalar_select %p306, %s307, %s308
    %p312 = pneg %p306
    %p313 = scmp.eq.s32.totalorder %s19, 1
    %p314 = por %p312, %p313
    %p315 = scmp.ne.s32.totalorder %s307, %s310
    %p316 = scmp.eq.s32.totalorder %s19, 0
    %p317 = por %p315, %p316
    %p318 = scmp.ne.s32.totalorder %s307, %s310
    %p319 = scmp.eq.s32.totalorder %s24, 1
    %p320 = por %p318, %p319
    %p321 = scmp.ne.s32.totalorder %s310, %s311
    %p322 = scmp.eq.s32.totalorder %s24, 0
    %p323 = por %p321, %p322
    %p324 = scmp.ne.s32.totalorder %s310, %s311
    %p325 = scmp.eq.s32.totalorder %s25, 1
    %p326 = por %p324, %p325
    %p328 = scmp.ne.s32.totalorder %s311, %s327
    %p329 = scmp.eq.s32.totalorder %s25, 0
    %p330 = por %p328, %p329
    %p331 = scmp.le.s32.totalorder 1, %s19
    %p332 = scmp.lt.s32.totalorder %s19, 3
    %p333 = pnand %p331, %p332
    %p334 = pneg %p333
    // Predicated region
    $region9: #{rgat_absa_forward.8} parent=5 // pred_check
      _
    $region10: #{rgat_absa_forward.8} parent=5 // pred_check_branch
      %336 = sbr.rel (%p333) target = $region12
    $region11: #{rgat_absa_forward.8} parent=5 // pred_region
      %s337 = ssub.s32 %s19, 1
      // Predicated region
      $region13: #{rgat_absa_forward.8} parent=11 // pred_check
        %p338 = pneg %p66
      $region14: #{rgat_absa_forward.8} parent=11 // pred_check_branch
        %340 = sbr.rel (%p338) target = $region16
      $region15: #{rgat_absa_forward.8} parent=11 // pred_region
        _
      $region16: #{rgat_absa_forward.8} parent=11 // pred_fallthru
        _
      // Predicated region
      $region17: #{rgat_absa_forward.8} parent=11 // pred_check
        %p341 = pneg %p87
      $region18: #{rgat_absa_forward.8} parent=11 // pred_check_branch
        %343 = sbr.rel (%p341) target = $region20
      $region19: #{rgat_absa_forward.8} parent=11 // pred_region
        _
      $region20: #{rgat_absa_forward.8} parent=11 // pred_fallthru
        _
      // Predicated region
      $region21: #{rgat_absa_forward.8} parent=11 // pred_check
        %p344 = pneg %p108
      $region22: #{rgat_absa_forward.8} parent=11 // pred_check_branch
        %346 = sbr.rel (%p344) target = $region24
      $region23: #{rgat_absa_forward.8} parent=11 // pred_region
        _
      $region24: #{rgat_absa_forward.8} parent=11 // pred_fallthru
        _
      // Predicated region
      $region25: #{rgat_absa_forward.8} parent=11 // pred_check
        %p347 = pneg %p129
      $region26: #{rgat_absa_forward.8} parent=11 // pred_check_branch
        %349 = sbr.rel (%p347) target = $region28
      $region27: #{rgat_absa_forward.8} parent=11 // pred_region
        _
      $region28: #{rgat_absa_forward.8} parent=11 // pred_fallthru
        _
      // Predicated region
      $region29: #{rgat_absa_forward.8} parent=11 // pred_check
        %p350 = pneg %p150
      $region30: #{rgat_absa_forward.8} parent=11 // pred_check_branch
        %352 = sbr.rel (%p350) target = $region32
      $region31: #{rgat_absa_forward.8} parent=11 // pred_region
        _
      $region32: #{rgat_absa_forward.8} parent=11 // pred_fallthru
        _
      // Predicated region
      $region33: #{rgat_absa_forward.8} parent=11 // pred_check
        %p353 = pneg %p171
      $region34: #{rgat_absa_forward.8} parent=11 // pred_check_branch
        %355 = sbr.rel (%p353) target = $region36
      $region35: #{rgat_absa_forward.8} parent=11 // pred_region
        _
      $region36: #{rgat_absa_forward.8} parent=11 // pred_fallthru
        _
      // Predicated region
      $region37: #{rgat_absa_forward.8} parent=11 // pred_check
        %p356 = pneg %p192
      $region38: #{rgat_absa_forward.8} parent=11 // pred_check_branch
        %358 = sbr.rel (%p356) target = $region40
      $region39: #{rgat_absa_forward.8} parent=11 // pred_region
        _
      $region40: #{rgat_absa_forward.8} parent=11 // pred_fallthru
        _
      // Predicated region
      $region41: #{rgat_absa_forward.8} parent=11 // pred_check
        %p359 = pneg %p213
      $region42: #{rgat_absa_forward.8} parent=11 // pred_check_branch
        %361 = sbr.rel (%p359) target = $region44
      $region43: #{rgat_absa_forward.8} parent=11 // pred_region
        _
      $region44: #{rgat_absa_forward.8} parent=11 // pred_fallthru
        _
      // Predicated region
      $region45: #{rgat_absa_forward.8} parent=11 // pred_check
        %p362 = pneg %p234
      $region46: #{rgat_absa_forward.8} parent=11 // pred_check_branch
        %364 = sbr.rel (%p362) target = $region48
      $region47: #{rgat_absa_forward.8} parent=11 // pred_region
        _
      $region48: #{rgat_absa_forward.8} parent=11 // pred_fallthru
        _
      // Predicated region
      $region49: #{rgat_absa_forward.8} parent=11 // pred_check
        %p365 = pneg %p255
      $region50: #{rgat_absa_forward.8} parent=11 // pred_check_branch
        %367 = sbr.rel (%p365) target = $region52
      $region51: #{rgat_absa_forward.8} parent=11 // pred_region
        _
      $region52: #{rgat_absa_forward.8} parent=11 // pred_fallthru
        _
      // Predicated region
      $region53: #{rgat_absa_forward.8} parent=11 // pred_check
        %p368 = pneg %p276
      $region54: #{rgat_absa_forward.8} parent=11 // pred_check_branch
        %370 = sbr.rel (%p368) target = $region56
      $region55: #{rgat_absa_forward.8} parent=11 // pred_region
        _
      $region56: #{rgat_absa_forward.8} parent=11 // pred_fallthru
        _
      // Predicated region
      $region57: #{rgat_absa_forward.8} parent=11 // pred_check
        %p371 = pneg %p297
      $region58: #{rgat_absa_forward.8} parent=11 // pred_check_branch
        %373 = sbr.rel (%p371) target = $region60
      $region59: #{rgat_absa_forward.8} parent=11 // pred_region
        _
      $region60: #{rgat_absa_forward.8} parent=11 // pred_fallthru
        _
    $region12: #{rgat_absa_forward.8} parent=5 // pred_fallthru
      _
    %p374 = scmp.lt.s32.totalorder %s19, 2
    // Predicated region
    $region61: #{rgat_absa_forward.8} parent=5 // pred_check
      %p375 = pneg %p374
    $region62: #{rgat_absa_forward.8} parent=5 // pred_check_branch
      %377 = sbr.rel (%p375) target = $region64
    $region63: #{rgat_absa_forward.8} parent=5 // pred_region
      // Predicated region
      $region65: #{rgat_absa_forward.8} parent=63 // pred_check
        %p378 = pneg %p39
      $region66: #{rgat_absa_forward.8} parent=63 // pred_check_branch
        %380 = sbr.rel (%p378) target = $region68
      $region67: #{rgat_absa_forward.8} parent=63 // pred_region
        %p381 = scmp.lt.s32.totalorder %s19, 1
        %s382 = scalar_select %p381, %s19, 1
        %s383 = smul.addr %s382, 2
        %s384 = smul.addr %s383, 8
        %s385 = scalar_lea.vmem %s0, %s384
      $region68: #{rgat_absa_forward.8} parent=63 // pred_fallthru
        _
    $region64: #{rgat_absa_forward.8} parent=5 // pred_fallthru
      _
    %p386 = scmp.le.s32.totalorder 1, %s19
    %p387 = scmp.lt.s32.totalorder %s19, 3
    %p388 = pnand %p386, %p387
    %p389 = pneg %p388
    // Predicated region
    $region69: #{rgat_absa_forward.8} parent=5 // pred_check
      _
    $region70: #{rgat_absa_forward.8} parent=5 // pred_check_branch
      %391 = sbr.rel (%p388) target = $region72
    $region71: #{rgat_absa_forward.8} parent=5 // pred_region
      %s392 = ssub.s32 %s19, 1
      %p393 = scmp.lt.s32.totalorder %s24, 1
      %s394 = scalar_select %p393, %s24, 1
      %s395 = smul.addr %s394, 2
      %s396 = smul.addr %s395, 8
      %s397 = scalar_lea.vmem %s0, %s396
      %p398 = pneg %p45
      %p399 = pneg %p42
      %p400 = pneg %p66
      %p401 = pneg %p63
      %p402 = pneg %p87
      %p403 = pneg %p84
      %p404 = pneg %p108
      %p405 = pneg %p105
      %p406 = pneg %p129
      %p407 = pneg %p126
      %p408 = pneg %p150
      %p409 = pneg %p147
      %p410 = pneg %p171
      %p411 = pneg %p168
      %p412 = pneg %p192
      %p413 = pneg %p189
      %p414 = pneg %p213
      %p415 = pneg %p210
      %p416 = pneg %p234
      %p417 = pneg %p231
      %p418 = pneg %p255
      %p419 = pneg %p252
      %p420 = pneg %p276
      %p421 = pneg %p273
      %p422 = pneg %p297
      %p423 = pneg %p294
      %p424 = pneg %p323
      %p425 = pneg %p320
      %p426 = scmp.lt.s32.totalorder %s24, 1
      %s427 = scalar_select %p426, %s24, 1
      %s428 = smul.addr %s427, 2
      %s429 = smul.addr %s428, 8
      %s430 = scalar_lea.vmem %s13, %s429
      %p431 = scmp.lt.s32.totalorder %s24, 1
      %s432 = scalar_select %p431, %s24, 1
      %s433 = smul.addr %s432, 2
      %s434 = smul.addr %s433, 8
      %s435 = scalar_lea.vmem %s0, %s434
      %p436 = scmp.lt.s32.totalorder %s24, 1
      %s437 = scalar_select %p436, %s24, 1
      %s438 = smul.addr %s437, 2
      %s439 = smul.addr %s438, 8
      %s440 = scalar_lea.vmem %s13, %s439
      %v441 = vld [vmem:[%s435] sm:$0xff]
      %v442 = vld [vmem:[%s435 + $0x8] sm:$0xf]
      %v443 = vld [vmem:[%s1] sm:$0xff]
      %v444 = vld [vmem:[%s1 + $0x8] sm:$0xff]
      %v445 = vld [vmem:[%s1 + $0x10] sm:$0xff]
      %v446 = vld [vmem:[%s1 + $0x18] sm:$0xff]
      %v447 = vld [vmem:[%s2] sm:$0x1]
      %v449 = vlaneseq
      %v450 = vshrl.u32 %v449, 7
      %v451 = vsub.s32 0, %v450
      %v452 = vrot.slane %v447, %v451
      %vm454 = vcmask 261120
      %v456 = vsel %vm454, %v441, 0
      %v459 = vsel %vm454, %v442, 0
      %461 = vmatprep.subr.mxu0 0.0
      %462 = vmatpush1.msra.mxu0 0.0
      %463 = vmatprep.subr.mxu0 0.0
      %464 = vmatpush1.msra.mxu0 0.0
      %465 = vmatprep.subr.mxu0 0.0
      %466 = vmatpush1.msra.mxu0 0.0
      %467 = vmatprep.subr.mxu0 0.0
      %468 = vmatpush1.msra.mxu0 0.0
      %469 = vmatprep.subr.mxu0 0.0
      %470 = vmatpush1.msra.mxu0 0.0
      %471 = vmatprep.subr.mxu0 0.0
      %472 = vmatpush1.msra.mxu0 0.0
      %473 = vmatprep.subr.mxu0 0.0
      %474 = vmatpush1.msra.mxu0 0.0
      %475 = vmatprep.subr.mxu0 0.0
      %476 = vmatpush1.msra.mxu0 0.0
      %477 = vmatprep.subr.mxu0 0.0
      %478 = vmatpush1.msra.mxu0 0.0
      %479 = vmatprep.subr.mxu0 0.0
      %480 = vmatpush1.msra.mxu0 0.0
      %481 = vmatprep.subr.mxu0 0.0
      %482 = vmatpush1.msra.mxu0 0.0
      %483 = vmatprep.subr.mxu0 0.0
      %484 = vmatpush1.msra.mxu0 0.0
      %485 = vmatprep.subr.mxu0 0.0
      %486 = vmatpush1.msra.mxu0 %v446
      %487 = vmatprep.subr.mxu0 0.0
      %488 = vmatpush1.msra.mxu0 %v445
      %489 = vmatprep.subr.mxu0 0.0
      %490 = vmatpush1.msra.mxu0 %v444
      %491 = vmatprep.subr.mxu0 0.0
      %492 = vmatpush1.msra.mxu0 %v443
      %493 = vmatprep.subr.mxu0 0.0
      %494 = vmatpush2.msra.mxu0 0.0
      %495 = vmatprep.subr.mxu0 0.0
      %496 = vmatpush2.msra.mxu0 0.0
      %497 = vmatprep.subr.mxu0 0.0
      %498 = vmatpush2.msra.mxu0 0.0
      %499 = vmatprep.subr.mxu0 0.0
      %500 = vmatpush2.msra.mxu0 0.0
      %501 = vmatprep.subr.mxu0 0.0
      %502 = vmatpush2.msra.mxu0 0.0
      %503 = vmatprep.subr.mxu0 0.0
      %504 = vmatpush2.msra.mxu0 0.0
      %505 = vmatprep.subr.mxu0 0.0
      %506 = vmatpush2.msra.mxu0 0.0
      %507 = vmatprep.subr.mxu0 0.0
      %508 = vmatpush2.msra.mxu0 0.0
      %509 = vmatprep.subr.mxu0 0.0
      %510 = vmatpush2.msra.mxu0 0.0
      %511 = vmatprep.subr.mxu0 0.0
      %512 = vmatpush2.msra.mxu0 0.0
      %513 = vmatprep.subr.mxu0 0.0
      %514 = vmatpush2.msra.mxu0 0.0
      %515 = vmatprep.subr.mxu0 0.0
      %516 = vmatpush2.msra.mxu0 0.0
      %517 = vmatprep.subr.mxu0 0.0
      %518 = vmatpush2.msra.mxu0 0.0
      %519 = vmatprep.subr.mxu0 0.0
      %520 = vmatpush2.msra.mxu0 0.0
      %521 = vmatprep.subr.mxu0 0.0
      %522 = vmatpush2.msra.mxu0 0.0
      %523 = vmatprep.subr.mxu0 0.0
      %524 = vmatpush2.msra.mxu0 0.0
      %525 = vmatprep.mubr.f32.mxu0 0.0
      %526 = vmatmul.mubr.f32.gmra.mxu0 %v456
      %v527 = vpop.f32.mrf.mxu0
      %v528 = vadd.f32 %v452, %v527
      %v529 = vpop.f32.mrf.mxu0
      %530 = vmatprep.mubr.f32.mxu0 0.0
      %531 = vmatmul.mubr.f32.gmra.mxu0 %v459
      %v532 = vpop.f32.mrf.mxu0
      %v533 = vadd.f32 %v452, %v532
      %v534 = vpop.f32.mrf.mxu0
      %535 = vdwg.mxu0
      %v536 = vld [vmem:[%s3] sm:$0xff]
      %v537 = vld [vmem:[%s3 + $0x8] sm:$0xff]
      %v538 = vld [vmem:[%s3 + $0x10] sm:$0xff]
      %v539 = vld [vmem:[%s3 + $0x18] sm:$0xff]
      %542 = vrot.lane.b32.xlu0 %v528, 96
      %v543 = vpop.permute.xlu0 %542
      %544 = vrot.lane.b32.xlu0 %v533, 96
      %v545 = vpop.permute.xlu0 %544
      %vm546 = vcmask 64512
      %v547 = vsel %vm546, %v528, 0
      %v549 = vsel %vm546, %v533, 0
      %v551 = vsel %vm546, %v543, 0
      %v553 = vsel %vm546, %v545, 0
      %555 = vmatprep.subr.mxu0 0.0
      %556 = vmatpush1.xpose.msra.mxu0 0.0
      %557 = vmatprep.subr.mxu0 0.0
      %558 = vmatpush1.xpose.msra.mxu0 0.0
      %559 = vmatprep.subr.mxu0 0.0
      %560 = vmatpush1.xpose.msra.mxu0 0.0
      %561 = vmatprep.subr.mxu0 0.0
      %562 = vmatpush1.xpose.msra.mxu0 0.0
      %563 = vmatprep.subr.mxu0 0.0
      %564 = vmatpush1.xpose.msra.mxu0 0.0
      %565 = vmatprep.subr.mxu0 0.0
      %566 = vmatpush1.xpose.msra.mxu0 0.0
      %567 = vmatprep.subr.mxu0 0.0
      %568 = vmatpush1.xpose.msra.mxu0 0.0
      %569 = vmatprep.subr.mxu0 0.0
      %570 = vmatpush1.xpose.msra.mxu0 0.0
      %571 = vmatprep.subr.mxu0 0.0
      %572 = vmatpush1.xpose.msra.mxu0 0.0
      %573 = vmatprep.subr.mxu0 0.0
      %574 = vmatpush1.xpose.msra.mxu0 0.0
      %575 = vmatprep.subr.mxu0 0.0
      %576 = vmatpush1.xpose.msra.mxu0 0.0
      %577 = vmatprep.subr.mxu0 0.0
      %578 = vmatpush1.xpose.msra.mxu0 0.0
      %579 = vmatprep.subr.mxu0 0.0
      %580 = vmatpush1.xpose.msra.mxu0 0.0
      %581 = vmatprep.subr.mxu0 0.0
      %582 = vmatpush1.xpose.msra.mxu0 0.0
      %583 = vmatprep.subr.mxu0 0.0
      %584 = vmatpush1.xpose.msra.mxu0 %v553
      %585 = vmatprep.subr.mxu0 0.0
      %586 = vmatpush1.xpose.msra.mxu0 %v551
      %587 = vmatprep.subr.mxu0 0.0
      %588 = vmatpush2.xpose.msra.mxu0 0.0
      %589 = vmatprep.subr.mxu0 0.0
      %590 = vmatpush2.xpose.msra.mxu0 0.0
      %591 = vmatprep.subr.mxu0 0.0
      %592 = vmatpush2.xpose.msra.mxu0 0.0
      %593 = vmatprep.subr.mxu0 0.0
      %594 = vmatpush2.xpose.msra.mxu0 0.0
      %595 = vmatprep.subr.mxu0 0.0
      %596 = vmatpush2.xpose.msra.mxu0 0.0
      %597 = vmatprep.subr.mxu0 0.0
      %598 = vmatpush2.xpose.msra.mxu0 0.0
      %599 = vmatprep.subr.mxu0 0.0
      %600 = vmatpush2.xpose.msra.mxu0 0.0
      %601 = vmatprep.subr.mxu0 0.0
      %602 = vmatpush2.xpose.msra.mxu0 0.0
      %603 = vmatprep.subr.mxu0 0.0
      %604 = vmatpush2.xpose.msra.mxu0 0.0
      %605 = vmatprep.subr.mxu0 0.0
      %606 = vmatpush2.xpose.msra.mxu0 0.0
      %607 = vmatprep.subr.mxu0 0.0
      %608 = vmatpush2.xpose.msra.mxu0 0.0
      %609 = vmatprep.subr.mxu0 0.0
      %610 = vmatpush2.xpose.msra.mxu0 0.0
      %611 = vmatprep.subr.mxu0 0.0
      %612 = vmatpush2.xpose.msra.mxu0 0.0
      %613 = vmatprep.subr.mxu0 0.0
      %614 = vmatpush2.xpose.msra.mxu0 0.0
      %615 = vmatprep.subr.mxu0 0.0
      %616 = vmatpush2.xpose.msra.mxu0 0.0
      %617 = vmatprep.subr.mxu0 0.0
      %618 = vmatpush2.xpose.msra.mxu0 0.0
      %619 = vmatprep.mubr.f32.mxu0 0.0
      %620 = vmatmul.mubr.f32.gmra.mxu0 %v547
      %v621 = vpop.f32.mrf.mxu0
      %v622 = vadd.f32 0.0, %v621
      %v623 = vpop.f32.mrf.mxu0
      %624 = vmatprep.mubr.f32.mxu0 0.0
      %625 = vmatmul.mubr.f32.gmra.mxu0 %v549
      %v626 = vpop.f32.mrf.mxu0
      %v627 = vadd.f32 0.0, %v626
      %v628 = vpop.f32.mrf.mxu0
      %629 = vdwg.mxu0
      %v630 = vmul.f32 %v622, 0.35355338
      %v631 = vmul.f32 %v627, 0.35355338
      %vm632 = vcmask 97280
      %v633 = vsel %vm632, %v630, -inf
      %634 = vmax.xlane.f32.xlu0 %v633
      %v635 = vpop.xlane.xlu0 %634
      %vm636 = vcmask 93184
      %v637 = vsel %vm636, %v631, -inf
      %638 = vmax.xlane.f32.xlu0 %v637
      %v639 = vpop.xlane.xlu0 %638
      %v640 = vsub.f32 %v630, %v635
      %v641 = vsub.f32 %v631, %v639
      %v642 = vmul.f32 %v640, 1.442695
      %v643 = vpow.pop %v642
      %v644 = vmul.f32 %v641, 1.442695
      %v645 = vpow.pop %v644
      %v646 = vsel %vm632, %v643, 0.0
      %647 = vadd.xlane.f32.xlu0 %v646
      %v648 = vpop.xlane.xlu0 %647
      %v649 = vsel %vm636, %v645, 0.0
      %650 = vadd.xlane.f32.xlu0 %v649
      %v651 = vpop.xlane.xlu0 %650
      %v652 = vrcp.pop %v648
      %v653 = vrcp.pop %v651
      %v654 = vmul.f32 %v643, %v652
      %v655 = vmul.f32 %v645, %v653
      %656 = vrot.lane.b32.xlu0 %v528, 64
      %v657 = vpop.permute.xlu0 %656
      %658 = vrot.lane.b32.xlu0 %v533, 64
      %v659 = vpop.permute.xlu0 %658
      %v662 = vsel %vm632, %v654, 0
      %v665 = vsel %vm632, %v655, 0
      %vm667 = vcmask 1043456
      %v668 = vsel %vm667, %v659, 0
      %670 = vmatprep.subr.mxu0 0.0
      %671 = vmatpush1.msra.mxu0 0.0
      %672 = vmatprep.subr.mxu0 0.0
      %673 = vmatpush1.msra.mxu0 0.0
      %674 = vmatprep.subr.mxu0 0.0
      %675 = vmatpush1.msra.mxu0 0.0
      %676 = vmatprep.subr.mxu0 0.0
      %677 = vmatpush1.msra.mxu0 0.0
      %678 = vmatprep.subr.mxu0 0.0
      %679 = vmatpush1.msra.mxu0 0.0
      %680 = vmatprep.subr.mxu0 0.0
      %681 = vmatpush1.msra.mxu0 0.0
      %682 = vmatprep.subr.mxu0 0.0
      %683 = vmatpush1.msra.mxu0 0.0
      %684 = vmatprep.subr.mxu0 0.0
      %685 = vmatpush1.msra.mxu0 0.0
      %686 = vmatprep.subr.mxu0 0.0
      %687 = vmatpush1.msra.mxu0 0.0
      %688 = vmatprep.subr.mxu0 0.0
      %689 = vmatpush1.msra.mxu0 0.0
      %690 = vmatprep.subr.mxu0 0.0
      %691 = vmatpush1.msra.mxu0 0.0
      %692 = vmatprep.subr.mxu0 0.0
      %693 = vmatpush1.msra.mxu0 0.0
      %694 = vmatprep.subr.mxu0 0.0
      %695 = vmatpush1.msra.mxu0 0.0
      %696 = vmatprep.subr.mxu0 0.0
      %697 = vmatpush1.msra.mxu0 0.0
      %698 = vmatprep.subr.mxu0 0.0
      %699 = vmatpush1.msra.mxu0 %v668
      %700 = vmatprep.subr.mxu0 0.0
      %701 = vmatpush1.msra.mxu0 %v657
      %702 = vmatprep.subr.mxu0 0.0
      %703 = vmatpush2.msra.mxu0 0.0
      %704 = vmatprep.subr.mxu0 0.0
      %705 = vmatpush2.msra.mxu0 0.0
      %706 = vmatprep.subr.mxu0 0.0
      %707 = vmatpush2.msra.mxu0 0.0
      %708 = vmatprep.subr.mxu0 0.0
      %709 = vmatpush2.msra.mxu0 0.0
      %710 = vmatprep.subr.mxu0 0.0
      %711 = vmatpush2.msra.mxu0 0.0
      %712 = vmatprep.subr.mxu0 0.0
      %713 = vmatpush2.msra.mxu0 0.0
      %714 = vmatprep.subr.mxu0 0.0
      %715 = vmatpush2.msra.mxu0 0.0
      %716 = vmatprep.subr.mxu0 0.0
      %717 = vmatpush2.msra.mxu0 0.0
      %718 = vmatprep.subr.mxu0 0.0
      %719 = vmatpush2.msra.mxu0 0.0
      %720 = vmatprep.subr.mxu0 0.0
      %721 = vmatpush2.msra.mxu0 0.0
      %722 = vmatprep.subr.mxu0 0.0
      %723 = vmatpush2.msra.mxu0 0.0
      %724 = vmatprep.subr.mxu0 0.0
      %725 = vmatpush2.msra.mxu0 0.0
      %726 = vmatprep.subr.mxu0 0.0
      %727 = vmatpush2.msra.mxu0 0.0
      %728 = vmatprep.subr.mxu0 0.0
      %729 = vmatpush2.msra.mxu0 0.0
      %730 = vmatprep.subr.mxu0 0.0
      %731 = vmatpush2.msra.mxu0 0.0
      %732 = vmatprep.subr.mxu0 0.0
      %733 = vmatpush2.msra.mxu0 0.0
      %734 = vmatprep.mubr.f32.mxu0 0.0
      %735 = vmatmul.mubr.f32.gmra.mxu0 %v662
      %v736 = vpop.f32.mrf.mxu0
      %v737 = vadd.f32 0.0, %v736
      %v738 = vpop.f32.mrf.mxu0
      %739 = vmatprep.mubr.f32.mxu0 0.0
      %740 = vmatmul.mubr.f32.gmra.mxu0 %v665
      %v741 = vpop.f32.mrf.mxu0
      %v742 = vadd.f32 0.0, %v741
      %v743 = vpop.f32.mrf.mxu0
      %744 = vdwg.mxu0
      %745 = vrot.lane.b32.xlu0 %v528, 120
      %v746 = vpop.permute.xlu0 %745
      %747 = vrot.lane.b32.xlu0 %v533, 120
      %v748 = vpop.permute.xlu0 %747
      %749 = vrot.lane.b32.xlu0 %v528, 88
      %v750 = vpop.permute.xlu0 %749
      %751 = vrot.lane.b32.xlu0 %v533, 88
      %v752 = vpop.permute.xlu0 %751
      %v753 = vsel %vm546, %v746, 0
      %v755 = vsel %vm546, %v748, 0
      %v757 = vsel %vm546, %v750, 0
      %v759 = vsel %vm546, %v752, 0
      %761 = vmatprep.subr.mxu0 0.0
      %762 = vmatpush1.xpose.msra.mxu0 0.0
      %763 = vmatprep.subr.mxu0 0.0
      %764 = vmatpush1.xpose.msra.mxu0 0.0
      %765 = vmatprep.subr.mxu0 0.0
      %766 = vmatpush1.xpose.msra.mxu0 0.0
      %767 = vmatprep.subr.mxu0 0.0
      %768 = vmatpush1.xpose.msra.mxu0 0.0
      %769 = vmatprep.subr.mxu0 0.0
      %770 = vmatpush1.xpose.msra.mxu0 0.0
      %771 = vmatprep.subr.mxu0 0.0
      %772 = vmatpush1.xpose.msra.mxu0 0.0
      %773 = vmatprep.subr.mxu0 0.0
      %774 = vmatpush1.xpose.msra.mxu0 0.0
      %775 = vmatprep.subr.mxu0 0.0
      %776 = vmatpush1.xpose.msra.mxu0 0.0
      %777 = vmatprep.subr.mxu0 0.0
      %778 = vmatpush1.xpose.msra.mxu0 0.0
      %779 = vmatprep.subr.mxu0 0.0
      %780 = vmatpush1.xpose.msra.mxu0 0.0
      %781 = vmatprep.subr.mxu0 0.0
      %782 = vmatpush1.xpose.msra.mxu0 0.0
      %783 = vmatprep.subr.mxu0 0.0
      %784 = vmatpush1.xpose.msra.mxu0 0.0
      %785 = vmatprep.subr.mxu0 0.0
      %786 = vmatpush1.xpose.msra.mxu0 0.0
      %787 = vmatprep.subr.mxu0 0.0
      %788 = vmatpush1.xpose.msra.mxu0 0.0
      %789 = vmatprep.subr.mxu0 0.0
      %790 = vmatpush1.xpose.msra.mxu0 %v759
      %791 = vmatprep.subr.mxu0 0.0
      %792 = vmatpush1.xpose.msra.mxu0 %v757
      %793 = vmatprep.subr.mxu0 0.0
      %794 = vmatpush2.xpose.msra.mxu0 0.0
      %795 = vmatprep.subr.mxu0 0.0
      %796 = vmatpush2.xpose.msra.mxu0 0.0
      %797 = vmatprep.subr.mxu0 0.0
      %798 = vmatpush2.xpose.msra.mxu0 0.0
      %799 = vmatprep.subr.mxu0 0.0
      %800 = vmatpush2.xpose.msra.mxu0 0.0
      %801 = vmatprep.subr.mxu0 0.0
      %802 = vmatpush2.xpose.msra.mxu0 0.0
      %803 = vmatprep.subr.mxu0 0.0
      %804 = vmatpush2.xpose.msra.mxu0 0.0
      %805 = vmatprep.subr.mxu0 0.0
      %806 = vmatpush2.xpose.msra.mxu0 0.0
      %807 = vmatprep.subr.mxu0 0.0
      %808 = vmatpush2.xpose.msra.mxu0 0.0
      %809 = vmatprep.subr.mxu0 0.0
      %810 = vmatpush2.xpose.msra.mxu0 0.0
      %811 = vmatprep.subr.mxu0 0.0
      %812 = vmatpush2.xpose.msra.mxu0 0.0
      %813 = vmatprep.subr.mxu0 0.0
      %814 = vmatpush2.xpose.msra.mxu0 0.0
      %815 = vmatprep.subr.mxu0 0.0
      %816 = vmatpush2.xpose.msra.mxu0 0.0
      %817 = vmatprep.subr.mxu0 0.0
      %818 = vmatpush2.xpose.msra.mxu0 0.0
      %819 = vmatprep.subr.mxu0 0.0
      %820 = vmatpush2.xpose.msra.mxu0 0.0
      %821 = vmatprep.subr.mxu0 0.0
      %822 = vmatpush2.xpose.msra.mxu0 0.0
      %823 = vmatprep.subr.mxu0 0.0
      %824 = vmatpush2.xpose.msra.mxu0 0.0
      %825 = vmatprep.mubr.f32.mxu0 0.0
      %826 = vmatmul.mubr.f32.gmra.mxu0 %v753
      %v827 = vpop.f32.mrf.mxu0
      %v828 = vadd.f32 0.0, %v827
      %v829 = vpop.f32.mrf.mxu0
      %830 = vmatprep.mubr.f32.mxu0 0.0
      %831 = vmatmul.mubr.f32.gmra.mxu0 %v755
      %v832 = vpop.f32.mrf.mxu0
      %v833 = vadd.f32 0.0, %v832
      %v834 = vpop.f32.mrf.mxu0
      %835 = vdwg.mxu0
      %v836 = vmul.f32 %v828, 0.35355338
      %v837 = vmul.f32 %v833, 0.35355338
      %v838 = vsel %vm632, %v836, -inf
      %839 = vmax.xlane.f32.xlu0 %v838
      %v840 = vpop.xlane.xlu0 %839
      %v841 = vsel %vm636, %v837, -inf
      %842 = vmax.xlane.f32.xlu0 %v841
      %v843 = vpop.xlane.xlu0 %842
      %v844 = vsub.f32 %v836, %v840
      %v845 = vsub.f32 %v837, %v843
      %v846 = vmul.f32 %v844, 1.442695
      %v847 = vpow.pop %v846
      %v848 = vmul.f32 %v845, 1.442695
      %v849 = vpow.pop %v848
      %v850 = vsel %vm632, %v847, 0.0
      %851 = vadd.xlane.f32.xlu0 %v850
      %v852 = vpop.xlane.xlu0 %851
      %v853 = vsel %vm636, %v849, 0.0
      %854 = vadd.xlane.f32.xlu0 %v853
      %v855 = vpop.xlane.xlu0 %854
      %v856 = vrcp.pop %v852
      %v857 = vrcp.pop %v855
      %v858 = vmul.f32 %v847, %v856
      %v859 = vmul.f32 %v849, %v857
      %860 = vrot.lane.b32.xlu0 %v528, 56
      %v861 = vpop.permute.xlu0 %860
      %862 = vrot.lane.b32.xlu0 %v533, 56
      %v863 = vpop.permute.xlu0 %862
      %v866 = vsel %vm632, %v858, 0
      %v869 = vsel %vm632, %v859, 0
      %v871 = vsel %vm667, %v863, 0
      %873 = vmatprep.subr.mxu0 0.0
      %874 = vmatpush1.msra.mxu0 0.0
      %875 = vmatprep.subr.mxu0 0.0
      %876 = vmatpush1.msra.mxu0 0.0
      %877 = vmatprep.subr.mxu0 0.0
      %878 = vmatpush1.msra.mxu0 0.0
      %879 = vmatprep.subr.mxu0 0.0
      %880 = vmatpush1.msra.mxu0 0.0
      %881 = vmatprep.subr.mxu0 0.0
      %882 = vmatpush1.msra.mxu0 0.0
      %883 = vmatprep.subr.mxu0 0.0
      %884 = vmatpush1.msra.mxu0 0.0
      %885 = vmatprep.subr.mxu0 0.0
      %886 = vmatpush1.msra.mxu0 0.0
      %887 = vmatprep.subr.mxu0 0.0
      %888 = vmatpush1.msra.mxu0 0.0
      %889 = vmatprep.subr.mxu0 0.0
      %890 = vmatpush1.msra.mxu0 0.0
      %891 = vmatprep.subr.mxu0 0.0
      %892 = vmatpush1.msra.mxu0 0.0
      %893 = vmatprep.subr.mxu0 0.0
      %894 = vmatpush1.msra.mxu0 0.0
      %895 = vmatprep.subr.mxu0 0.0
      %896 = vmatpush1.msra.mxu0 0.0
      %897 = vmatprep.subr.mxu0 0.0
      %898 = vmatpush1.msra.mxu0 0.0
      %899 = vmatprep.subr.mxu0 0.0
      %900 = vmatpush1.msra.mxu0 0.0
      %901 = vmatprep.subr.mxu0 0.0
      %902 = vmatpush1.msra.mxu0 %v871
      %903 = vmatprep.subr.mxu0 0.0
      %904 = vmatpush1.msra.mxu0 %v861
      %905 = vmatprep.subr.mxu0 0.0
      %906 = vmatpush2.msra.mxu0 0.0
      %907 = vmatprep.subr.mxu0 0.0
      %908 = vmatpush2.msra.mxu0 0.0
      %909 = vmatprep.subr.mxu0 0.0
      %910 = vmatpush2.msra.mxu0 0.0
      %911 = vmatprep.subr.mxu0 0.0
      %912 = vmatpush2.msra.mxu0 0.0
      %913 = vmatprep.subr.mxu0 0.0
      %914 = vmatpush2.msra.mxu0 0.0
      %915 = vmatprep.subr.mxu0 0.0
      %916 = vmatpush2.msra.mxu0 0.0
      %917 = vmatprep.subr.mxu0 0.0
      %918 = vmatpush2.msra.mxu0 0.0
      %919 = vmatprep.subr.mxu0 0.0
      %920 = vmatpush2.msra.mxu0 0.0
      %921 = vmatprep.subr.mxu0 0.0
      %922 = vmatpush2.msra.mxu0 0.0
      %923 = vmatprep.subr.mxu0 0.0
      %924 = vmatpush2.msra.mxu0 0.0
      %925 = vmatprep.subr.mxu0 0.0
      %926 = vmatpush2.msra.mxu0 0.0
      %927 = vmatprep.subr.mxu0 0.0
      %928 = vmatpush2.msra.mxu0 0.0
      %929 = vmatprep.subr.mxu0 0.0
      %930 = vmatpush2.msra.mxu0 0.0
      %931 = vmatprep.subr.mxu0 0.0
      %932 = vmatpush2.msra.mxu0 0.0
      %933 = vmatprep.subr.mxu0 0.0
      %934 = vmatpush2.msra.mxu0 0.0
      %935 = vmatprep.subr.mxu0 0.0
      %936 = vmatpush2.msra.mxu0 0.0
      %937 = vmatprep.mubr.f32.mxu0 0.0
      %938 = vmatmul.mubr.f32.gmra.mxu0 %v866
      %v939 = vpop.f32.mrf.mxu0
      %v940 = vadd.f32 0.0, %v939
      %v941 = vpop.f32.mrf.mxu0
      %942 = vmatprep.mubr.f32.mxu0 0.0
      %943 = vmatmul.mubr.f32.gmra.mxu0 %v869
      %v944 = vpop.f32.mrf.mxu0
      %v945 = vadd.f32 0.0, %v944
      %v946 = vpop.f32.mrf.mxu0
      %947 = vdwg.mxu0
      %v949 = vsel %vm546, %v940, 0
      %v952 = vsel %vm546, %v945, 0
      %954 = vmatprep.subr.mxu0 0.0
      %955 = vmatpush1.msra.mxu0 0.0
      %956 = vmatprep.subr.mxu0 0.0
      %957 = vmatpush1.msra.mxu0 0.0
      %958 = vmatprep.subr.mxu0 0.0
      %959 = vmatpush1.msra.mxu0 0.0
      %960 = vmatprep.subr.mxu0 0.0
      %961 = vmatpush1.msra.mxu0 0.0
      %962 = vmatprep.subr.mxu0 0.0
      %963 = vmatpush1.msra.mxu0 0.0
      %964 = vmatprep.subr.mxu0 0.0
      %965 = vmatpush1.msra.mxu0 0.0
      %966 = vmatprep.subr.mxu0 0.0
      %967 = vmatpush1.msra.mxu0 0.0
      %968 = vmatprep.subr.mxu0 0.0
      %969 = vmatpush1.msra.mxu0 0.0
      %970 = vmatprep.subr.mxu0 0.0
      %971 = vmatpush1.msra.mxu0 0.0
      %972 = vmatprep.subr.mxu0 0.0
      %973 = vmatpush1.msra.mxu0 0.0
      %974 = vmatprep.subr.mxu0 0.0
      %975 = vmatpush1.msra.mxu0 0.0
      %976 = vmatprep.subr.mxu0 0.0
      %977 = vmatpush1.msra.mxu0 0.0
      %978 = vmatprep.subr.mxu0 0.0
      %979 = vmatpush1.msra.mxu0 0.0
      %980 = vmatprep.subr.mxu0 0.0
      %981 = vmatpush1.msra.mxu0 0.0
      %982 = vmatprep.subr.mxu0 0.0
      %983 = vmatpush1.msra.mxu0 0.0
      %984 = vmatprep.subr.mxu0 0.0
      %985 = vmatpush1.msra.mxu0 %v537
      %986 = vmatprep.subr.mxu0 0.0
      %987 = vmatpush2.msra.mxu0 0.0
      %988 = vmatprep.subr.mxu0 0.0
      %989 = vmatpush2.msra.mxu0 0.0
      %990 = vmatprep.subr.mxu0 0.0
      %991 = vmatpush2.msra.mxu0 0.0
      %992 = vmatprep.subr.mxu0 0.0
      %993 = vmatpush2.msra.mxu0 0.0
      %994 = vmatprep.subr.mxu0 0.0
      %995 = vmatpush2.msra.mxu0 0.0
      %996 = vmatprep.subr.mxu0 0.0
      %997 = vmatpush2.msra.mxu0 0.0
      %998 = vmatprep.subr.mxu0 0.0
      %999 = vmatpush2.msra.mxu0 0.0
      %1000 = vmatprep.subr.mxu0 0.0
      %1001 = vmatpush2.msra.mxu0 0.0
      %1002 = vmatprep.subr.mxu0 0.0
      %1003 = vmatpush2.msra.mxu0 0.0
      %1004 = vmatprep.subr.mxu0 0.0
      %1005 = vmatpush2.msra.mxu0 0.0
      %1006 = vmatprep.subr.mxu0 0.0
      %1007 = vmatpush2.msra.mxu0 0.0
      %1008 = vmatprep.subr.mxu0 0.0
      %1009 = vmatpush2.msra.mxu0 0.0
      %1010 = vmatprep.subr.mxu0 0.0
      %1011 = vmatpush2.msra.mxu0 0.0
      %1012 = vmatprep.subr.mxu0 0.0
      %1013 = vmatpush2.msra.mxu0 0.0
      %1014 = vmatprep.subr.mxu0 0.0
      %1015 = vmatpush2.msra.mxu0 0.0
      %1016 = vmatprep.subr.mxu0 0.0
      %1017 = vmatpush2.msra.mxu0 0.0
      %1018 = vmatprep.mubr.f32.mxu0 0.0
      %1019 = vmatmul.mubr.f32.gmra.mxu0 %v949
      %v1020 = vpop.f32.mrf.mxu0
      %v1021 = vadd.f32 0.0, %v1020
      %v1022 = vpop.f32.mrf.mxu0
      %1023 = vmatprep.mubr.f32.mxu0 0.0
      %1024 = vmatmul.mubr.f32.gmra.mxu0 %v952
      %v1025 = vpop.f32.mrf.mxu0
      %v1026 = vadd.f32 0.0, %v1025
      %v1027 = vpop.f32.mrf.mxu0
      %1028 = vdwg.mxu0
      %v1030 = vsel %vm546, %v737, 0
      %v1033 = vsel %vm546, %v742, 0
      %1035 = vmatprep.subr.mxu0 0.0
      %1036 = vmatpush1.msra.mxu0 0.0
      %1037 = vmatprep.subr.mxu0 0.0
      %1038 = vmatpush1.msra.mxu0 0.0
      %1039 = vmatprep.subr.mxu0 0.0
      %1040 = vmatpush1.msra.mxu0 0.0
      %1041 = vmatprep.subr.mxu0 0.0
      %1042 = vmatpush1.msra.mxu0 0.0
      %1043 = vmatprep.subr.mxu0 0.0
      %1044 = vmatpush1.msra.mxu0 0.0
      %1045 = vmatprep.subr.mxu0 0.0
      %1046 = vmatpush1.msra.mxu0 0.0
      %1047 = vmatprep.subr.mxu0 0.0
      %1048 = vmatpush1.msra.mxu0 0.0
      %1049 = vmatprep.subr.mxu0 0.0
      %1050 = vmatpush1.msra.mxu0 0.0
      %1051 = vmatprep.subr.mxu0 0.0
      %1052 = vmatpush1.msra.mxu0 0.0
      %1053 = vmatprep.subr.mxu0 0.0
      %1054 = vmatpush1.msra.mxu0 0.0
      %1055 = vmatprep.subr.mxu0 0.0
      %1056 = vmatpush1.msra.mxu0 0.0
      %1057 = vmatprep.subr.mxu0 0.0
      %1058 = vmatpush1.msra.mxu0 0.0
      %1059 = vmatprep.subr.mxu0 0.0
      %1060 = vmatpush1.msra.mxu0 0.0
      %1061 = vmatprep.subr.mxu0 0.0
      %1062 = vmatpush1.msra.mxu0 0.0
      %1063 = vmatprep.subr.mxu0 0.0
      %1064 = vmatpush1.msra.mxu0 0.0
      %1065 = vmatprep.subr.mxu0 0.0
      %1066 = vmatpush1.msra.mxu0 %v536
      %1067 = vmatprep.subr.mxu0 0.0
      %1068 = vmatpush2.msra.mxu0 0.0
      %1069 = vmatprep.subr.mxu0 0.0
      %1070 = vmatpush2.msra.mxu0 0.0
      %1071 = vmatprep.subr.mxu0 0.0
      %1072 = vmatpush2.msra.mxu0 0.0
      %1073 = vmatprep.subr.mxu0 0.0
      %1074 = vmatpush2.msra.mxu0 0.0
      %1075 = vmatprep.subr.mxu0 0.0
      %1076 = vmatpush2.msra.mxu0 0.0
      %1077 = vmatprep.subr.mxu0 0.0
      %1078 = vmatpush2.msra.mxu0 0.0
      %1079 = vmatprep.subr.mxu0 0.0
      %1080 = vmatpush2.msra.mxu0 0.0
      %1081 = vmatprep.subr.mxu0 0.0
      %1082 = vmatpush2.msra.mxu0 0.0
      %1083 = vmatprep.subr.mxu0 0.0
      %1084 = vmatpush2.msra.mxu0 0.0
      %1085 = vmatprep.subr.mxu0 0.0
      %1086 = vmatpush2.msra.mxu0 0.0
      %1087 = vmatprep.subr.mxu0 0.0
      %1088 = vmatpush2.msra.mxu0 0.0
      %1089 = vmatprep.subr.mxu0 0.0
      %1090 = vmatpush2.msra.mxu0 0.0
      %1091 = vmatprep.subr.mxu0 0.0
      %1092 = vmatpush2.msra.mxu0 0.0
      %1093 = vmatprep.subr.mxu0 0.0
      %1094 = vmatpush2.msra.mxu0 0.0
      %1095 = vmatprep.subr.mxu0 0.0
      %1096 = vmatpush2.msra.mxu0 0.0
      %1097 = vmatprep.subr.mxu0 0.0
      %1098 = vmatpush2.msra.mxu0 0.0
      %1099 = vmatprep.mubr.f32.mxu0 0.0
      %1100 = vmatmul.mubr.f32.gmra.mxu0 %v1030
      %v1101 = vpop.f32.mrf.mxu0
      %v1102 = vadd.f32 %v1021, %v1101
      %v1103 = vpop.f32.mrf.mxu0
      %1104 = vmatprep.mubr.f32.mxu0 0.0
      %1105 = vmatmul.mubr.f32.gmra.mxu0 %v1033
      %v1106 = vpop.f32.mrf.mxu0
      %v1107 = vadd.f32 %v1026, %v1106
      %v1108 = vpop.f32.mrf.mxu0
      %1109 = vdwg.mxu0
      %1110 = vrot.lane.b32.xlu0 %v528, 112
      %v1111 = vpop.permute.xlu0 %1110
      %1112 = vrot.lane.b32.xlu0 %v533, 112
      %v1113 = vpop.permute.xlu0 %1112
      %1114 = vrot.lane.b32.xlu0 %v528, 80
      %v1115 = vpop.permute.xlu0 %1114
      %1116 = vrot.lane.b32.xlu0 %v533, 80
      %v1117 = vpop.permute.xlu0 %1116
      %v1118 = vsel %vm546, %v1111, 0
      %v1120 = vsel %vm546, %v1113, 0
      %v1122 = vsel %vm546, %v1115, 0
      %v1124 = vsel %vm546, %v1117, 0
      %1126 = vmatprep.subr.mxu0 0.0
      %1127 = vmatpush1.xpose.msra.mxu0 0.0
      %1128 = vmatprep.subr.mxu0 0.0
      %1129 = vmatpush1.xpose.msra.mxu0 0.0
      %1130 = vmatprep.subr.mxu0 0.0
      %1131 = vmatpush1.xpose.msra.mxu0 0.0
      %1132 = vmatprep.subr.mxu0 0.0
      %1133 = vmatpush1.xpose.msra.mxu0 0.0
      %1134 = vmatprep.subr.mxu0 0.0
      %1135 = vmatpush1.xpose.msra.mxu0 0.0
      %1136 = vmatprep.subr.mxu0 0.0
      %1137 = vmatpush1.xpose.msra.mxu0 0.0
      %1138 = vmatprep.subr.mxu0 0.0
      %1139 = vmatpush1.xpose.msra.mxu0 0.0
      %1140 = vmatprep.subr.mxu0 0.0
      %1141 = vmatpush1.xpose.msra.mxu0 0.0
      %1142 = vmatprep.subr.mxu0 0.0
      %1143 = vmatpush1.xpose.msra.mxu0 0.0
      %1144 = vmatprep.subr.mxu0 0.0
      %1145 = vmatpush1.xpose.msra.mxu0 0.0
      %1146 = vmatprep.subr.mxu0 0.0
      %1147 = vmatpush1.xpose.msra.mxu0 0.0
      %1148 = vmatprep.subr.mxu0 0.0
      %1149 = vmatpush1.xpose.msra.mxu0 0.0
      %1150 = vmatprep.subr.mxu0 0.0
      %1151 = vmatpush1.xpose.msra.mxu0 0.0
      %1152 = vmatprep.subr.mxu0 0.0
      %1153 = vmatpush1.xpose.msra.mxu0 0.0
      %1154 = vmatprep.subr.mxu0 0.0
      %1155 = vmatpush1.xpose.msra.mxu0 %v1124
      %1156 = vmatprep.subr.mxu0 0.0
      %1157 = vmatpush1.xpose.msra.mxu0 %v1122
      %1158 = vmatprep.subr.mxu0 0.0
      %1159 = vmatpush2.xpose.msra.mxu0 0.0
      %1160 = vmatprep.subr.mxu0 0.0
      %1161 = vmatpush2.xpose.msra.mxu0 0.0
      %1162 = vmatprep.subr.mxu0 0.0
      %1163 = vmatpush2.xpose.msra.mxu0 0.0
      %1164 = vmatprep.subr.mxu0 0.0
      %1165 = vmatpush2.xpose.msra.mxu0 0.0
      %1166 = vmatprep.subr.mxu0 0.0
      %1167 = vmatpush2.xpose.msra.mxu0 0.0
      %1168 = vmatprep.subr.mxu0 0.0
      %1169 = vmatpush2.xpose.msra.mxu0 0.0
      %1170 = vmatprep.subr.mxu0 0.0
      %1171 = vmatpush2.xpose.msra.mxu0 0.0
      %1172 = vmatprep.subr.mxu0 0.0
      %1173 = vmatpush2.xpose.msra.mxu0 0.0
      %1174 = vmatprep.subr.mxu0 0.0
      %1175 = vmatpush2.xpose.msra.mxu0 0.0
      %1176 = vmatprep.subr.mxu0 0.0
      %1177 = vmatpush2.xpose.msra.mxu0 0.0
      %1178 = vmatprep.subr.mxu0 0.0
      %1179 = vmatpush2.xpose.msra.mxu0 0.0
      %1180 = vmatprep.subr.mxu0 0.0
      %1181 = vmatpush2.xpose.msra.mxu0 0.0
      %1182 = vmatprep.subr.mxu0 0.0
      %1183 = vmatpush2.xpose.msra.mxu0 0.0
      %1184 = vmatprep.subr.mxu0 0.0
      %1185 = vmatpush2.xpose.msra.mxu0 0.0
      %1186 = vmatprep.subr.mxu0 0.0
      %1187 = vmatpush2.xpose.msra.mxu0 0.0
      %1188 = vmatprep.subr.mxu0 0.0
      %1189 = vmatpush2.xpose.msra.mxu0 0.0
      %1190 = vmatprep.mubr.f32.mxu0 0.0
      %1191 = vmatmul.mubr.f32.gmra.mxu0 %v1118
      %v1192 = vpop.f32.mrf.mxu0
      %v1193 = vadd.f32 0.0, %v1192
      %v1194 = vpop.f32.mrf.mxu0
      %1195 = vmatprep.mubr.f32.mxu0 0.0
      %1196 = vmatmul.mubr.f32.gmra.mxu0 %v1120
      %v1197 = vpop.f32.mrf.mxu0
      %v1198 = vadd.f32 0.0, %v1197
      %v1199 = vpop.f32.mrf.mxu0
      %1200 = vdwg.mxu0
      %v1201 = vmul.f32 %v1193, 0.35355338
      %v1202 = vmul.f32 %v1198, 0.35355338
      %v1203 = vsel %vm632, %v1201, -inf
      %1204 = vmax.xlane.f32.xlu0 %v1203
      %v1205 = vpop.xlane.xlu0 %1204
      %v1206 = vsel %vm636, %v1202, -inf
      %1207 = vmax.xlane.f32.xlu0 %v1206
      %v1208 = vpop.xlane.xlu0 %1207
      %v1209 = vsub.f32 %v1201, %v1205
      %v1210 = vsub.f32 %v1202, %v1208
      %v1211 = vmul.f32 %v1209, 1.442695
      %v1212 = vpow.pop %v1211
      %v1213 = vmul.f32 %v1210, 1.442695
      %v1214 = vpow.pop %v1213
      %v1215 = vsel %vm632, %v1212, 0.0
      %1216 = vadd.xlane.f32.xlu0 %v1215
      %v1217 = vpop.xlane.xlu0 %1216
      %v1218 = vsel %vm636, %v1214, 0.0
      %1219 = vadd.xlane.f32.xlu0 %v1218
      %v1220 = vpop.xlane.xlu0 %1219
      %v1221 = vrcp.pop %v1217
      %v1222 = vrcp.pop %v1220
      %v1223 = vmul.f32 %v1212, %v1221
      %v1224 = vmul.f32 %v1214, %v1222
      %1225 = vrot.lane.b32.xlu0 %v528, 48
      %v1226 = vpop.permute.xlu0 %1225
      %1227 = vrot.lane.b32.xlu0 %v533, 48
      %v1228 = vpop.permute.xlu0 %1227
      %v1231 = vsel %vm632, %v1223, 0
      %v1234 = vsel %vm632, %v1224, 0
      %v1236 = vsel %vm667, %v1228, 0
      %1238 = vmatprep.subr.mxu0 0.0
      %1239 = vmatpush1.msra.mxu0 0.0
      %1240 = vmatprep.subr.mxu0 0.0
      %1241 = vmatpush1.msra.mxu0 0.0
      %1242 = vmatprep.subr.mxu0 0.0
      %1243 = vmatpush1.msra.mxu0 0.0
      %1244 = vmatprep.subr.mxu0 0.0
      %1245 = vmatpush1.msra.mxu0 0.0
      %1246 = vmatprep.subr.mxu0 0.0
      %1247 = vmatpush1.msra.mxu0 0.0
      %1248 = vmatprep.subr.mxu0 0.0
      %1249 = vmatpush1.msra.mxu0 0.0
      %1250 = vmatprep.subr.mxu0 0.0
      %1251 = vmatpush1.msra.mxu0 0.0
      %1252 = vmatprep.subr.mxu0 0.0
      %1253 = vmatpush1.msra.mxu0 0.0
      %1254 = vmatprep.subr.mxu0 0.0
      %1255 = vmatpush1.msra.mxu0 0.0
      %1256 = vmatprep.subr.mxu0 0.0
      %1257 = vmatpush1.msra.mxu0 0.0
      %1258 = vmatprep.subr.mxu0 0.0
      %1259 = vmatpush1.msra.mxu0 0.0
      %1260 = vmatprep.subr.mxu0 0.0
      %1261 = vmatpush1.msra.mxu0 0.0
      %1262 = vmatprep.subr.mxu0 0.0
      %1263 = vmatpush1.msra.mxu0 0.0
      %1264 = vmatprep.subr.mxu0 0.0
      %1265 = vmatpush1.msra.mxu0 0.0
      %1266 = vmatprep.subr.mxu0 0.0
      %1267 = vmatpush1.msra.mxu0 %v1236
      %1268 = vmatprep.subr.mxu0 0.0
      %1269 = vmatpush1.msra.mxu0 %v1226
      %1270 = vmatprep.subr.mxu0 0.0
      %1271 = vmatpush2.msra.mxu0 0.0
      %1272 = vmatprep.subr.mxu0 0.0
      %1273 = vmatpush2.msra.mxu0 0.0
      %1274 = vmatprep.subr.mxu0 0.0
      %1275 = vmatpush2.msra.mxu0 0.0
      %1276 = vmatprep.subr.mxu0 0.0
      %1277 = vmatpush2.msra.mxu0 0.0
      %1278 = vmatprep.subr.mxu0 0.0
      %1279 = vmatpush2.msra.mxu0 0.0
      %1280 = vmatprep.subr.mxu0 0.0
      %1281 = vmatpush2.msra.mxu0 0.0
      %1282 = vmatprep.subr.mxu0 0.0
      %1283 = vmatpush2.msra.mxu0 0.0
      %1284 = vmatprep.subr.mxu0 0.0
      %1285 = vmatpush2.msra.mxu0 0.0
      %1286 = vmatprep.subr.mxu0 0.0
      %1287 = vmatpush2.msra.mxu0 0.0
      %1288 = vmatprep.subr.mxu0 0.0
      %1289 = vmatpush2.msra.mxu0 0.0
      %1290 = vmatprep.subr.mxu0 0.0
      %1291 = vmatpush2.msra.mxu0 0.0
      %1292 = vmatprep.subr.mxu0 0.0
      %1293 = vmatpush2.msra.mxu0 0.0
      %1294 = vmatprep.subr.mxu0 0.0
      %1295 = vmatpush2.msra.mxu0 0.0
      %1296 = vmatprep.subr.mxu0 0.0
      %1297 = vmatpush2.msra.mxu0 0.0
      %1298 = vmatprep.subr.mxu0 0.0
      %1299 = vmatpush2.msra.mxu0 0.0
      %1300 = vmatprep.subr.mxu0 0.0
      %1301 = vmatpush2.msra.mxu0 0.0
      %1302 = vmatprep.mubr.f32.mxu0 0.0
      %1303 = vmatmul.mubr.f32.gmra.mxu0 %v1231
      %v1304 = vpop.f32.mrf.mxu0
      %v1305 = vadd.f32 0.0, %v1304
      %v1306 = vpop.f32.mrf.mxu0
      %1307 = vmatprep.mubr.f32.mxu0 0.0
      %1308 = vmatmul.mubr.f32.gmra.mxu0 %v1234
      %v1309 = vpop.f32.mrf.mxu0
      %v1310 = vadd.f32 0.0, %v1309
      %v1311 = vpop.f32.mrf.mxu0
      %1312 = vdwg.mxu0
      %v1314 = vsel %vm546, %v1305, 0
      %v1317 = vsel %vm546, %v1310, 0
      %1319 = vmatprep.subr.mxu0 0.0
      %1320 = vmatpush1.msra.mxu0 0.0
      %1321 = vmatprep.subr.mxu0 0.0
      %1322 = vmatpush1.msra.mxu0 0.0
      %1323 = vmatprep.subr.mxu0 0.0
      %1324 = vmatpush1.msra.mxu0 0.0
      %1325 = vmatprep.subr.mxu0 0.0
      %1326 = vmatpush1.msra.mxu0 0.0
      %1327 = vmatprep.subr.mxu0 0.0
      %1328 = vmatpush1.msra.mxu0 0.0
      %1329 = vmatprep.subr.mxu0 0.0
      %1330 = vmatpush1.msra.mxu0 0.0
      %1331 = vmatprep.subr.mxu0 0.0
      %1332 = vmatpush1.msra.mxu0 0.0
      %1333 = vmatprep.subr.mxu0 0.0
      %1334 = vmatpush1.msra.mxu0 0.0
      %1335 = vmatprep.subr.mxu0 0.0
      %1336 = vmatpush1.msra.mxu0 0.0
      %1337 = vmatprep.subr.mxu0 0.0
      %1338 = vmatpush1.msra.mxu0 0.0
      %1339 = vmatprep.subr.mxu0 0.0
      %1340 = vmatpush1.msra.mxu0 0.0
      %1341 = vmatprep.subr.mxu0 0.0
      %1342 = vmatpush1.msra.mxu0 0.0
      %1343 = vmatprep.subr.mxu0 0.0
      %1344 = vmatpush1.msra.mxu0 0.0
      %1345 = vmatprep.subr.mxu0 0.0
      %1346 = vmatpush1.msra.mxu0 0.0
      %1347 = vmatprep.subr.mxu0 0.0
      %1348 = vmatpush1.msra.mxu0 0.0
      %1349 = vmatprep.subr.mxu0 0.0
      %1350 = vmatpush1.msra.mxu0 %v538
      %1351 = vmatprep.subr.mxu0 0.0
      %1352 = vmatpush2.msra.mxu0 0.0
      %1353 = vmatprep.subr.mxu0 0.0
      %1354 = vmatpush2.msra.mxu0 0.0
      %1355 = vmatprep.subr.mxu0 0.0
      %1356 = vmatpush2.msra.mxu0 0.0
      %1357 = vmatprep.subr.mxu0 0.0
      %1358 = vmatpush2.msra.mxu0 0.0
      %1359 = vmatprep.subr.mxu0 0.0
      %1360 = vmatpush2.msra.mxu0 0.0
      %1361 = vmatprep.subr.mxu0 0.0
      %1362 = vmatpush2.msra.mxu0 0.0
      %1363 = vmatprep.subr.mxu0 0.0
      %1364 = vmatpush2.msra.mxu0 0.0
      %1365 = vmatprep.subr.mxu0 0.0
      %1366 = vmatpush2.msra.mxu0 0.0
      %1367 = vmatprep.subr.mxu0 0.0
      %1368 = vmatpush2.msra.mxu0 0.0
      %1369 = vmatprep.subr.mxu0 0.0
      %1370 = vmatpush2.msra.mxu0 0.0
      %1371 = vmatprep.subr.mxu0 0.0
      %1372 = vmatpush2.msra.mxu0 0.0
      %1373 = vmatprep.subr.mxu0 0.0
      %1374 = vmatpush2.msra.mxu0 0.0
      %1375 = vmatprep.subr.mxu0 0.0
      %1376 = vmatpush2.msra.mxu0 0.0
      %1377 = vmatprep.subr.mxu0 0.0
      %1378 = vmatpush2.msra.mxu0 0.0
      %1379 = vmatprep.subr.mxu0 0.0
      %1380 = vmatpush2.msra.mxu0 0.0
      %1381 = vmatprep.subr.mxu0 0.0
      %1382 = vmatpush2.msra.mxu0 0.0
      %1383 = vmatprep.mubr.f32.mxu0 0.0
      %1384 = vmatmul.mubr.f32.gmra.mxu0 %v1314
      %v1385 = vpop.f32.mrf.mxu0
      %v1386 = vadd.f32 0.0, %v1385
      %v1387 = vpop.f32.mrf.mxu0
      %1388 = vmatprep.mubr.f32.mxu0 0.0
      %1389 = vmatmul.mubr.f32.gmra.mxu0 %v1317
      %v1390 = vpop.f32.mrf.mxu0
      %v1391 = vadd.f32 0.0, %v1390
      %v1392 = vpop.f32.mrf.mxu0
      %1393 = vdwg.mxu0
      %v1394 = vadd.f32 %v1102, %v1386
      %v1395 = vadd.f32 %v1107, %v1391
      %1396 = vrot.lane.b32.xlu0 %v528, 104
      %v1397 = vpop.permute.xlu0 %1396
      %1398 = vrot.lane.b32.xlu0 %v533, 104
      %v1399 = vpop.permute.xlu0 %1398
      %1400 = vrot.lane.b32.xlu0 %v528, 72
      %v1401 = vpop.permute.xlu0 %1400
      %1402 = vrot.lane.b32.xlu0 %v533, 72
      %v1403 = vpop.permute.xlu0 %1402
      %v1404 = vsel %vm546, %v1397, 0
      %v1406 = vsel %vm546, %v1399, 0
      %v1408 = vsel %vm546, %v1401, 0
      %v1410 = vsel %vm546, %v1403, 0
      %1412 = vmatprep.subr.mxu0 0.0
      %1413 = vmatpush1.xpose.msra.mxu0 0.0
      %1414 = vmatprep.subr.mxu0 0.0
      %1415 = vmatpush1.xpose.msra.mxu0 0.0
      %1416 = vmatprep.subr.mxu0 0.0
      %1417 = vmatpush1.xpose.msra.mxu0 0.0
      %1418 = vmatprep.subr.mxu0 0.0
      %1419 = vmatpush1.xpose.msra.mxu0 0.0
      %1420 = vmatprep.subr.mxu0 0.0
      %1421 = vmatpush1.xpose.msra.mxu0 0.0
      %1422 = vmatprep.subr.mxu0 0.0
      %1423 = vmatpush1.xpose.msra.mxu0 0.0
      %1424 = vmatprep.subr.mxu0 0.0
      %1425 = vmatpush1.xpose.msra.mxu0 0.0
      %1426 = vmatprep.subr.mxu0 0.0
      %1427 = vmatpush1.xpose.msra.mxu0 0.0
      %1428 = vmatprep.subr.mxu0 0.0
      %1429 = vmatpush1.xpose.msra.mxu0 0.0
      %1430 = vmatprep.subr.mxu0 0.0
      %1431 = vmatpush1.xpose.msra.mxu0 0.0
      %1432 = vmatprep.subr.mxu0 0.0
      %1433 = vmatpush1.xpose.msra.mxu0 0.0
      %1434 = vmatprep.subr.mxu0 0.0
      %1435 = vmatpush1.xpose.msra.mxu0 0.0
      %1436 = vmatprep.subr.mxu0 0.0
      %1437 = vmatpush1.xpose.msra.mxu0 0.0
      %1438 = vmatprep.subr.mxu0 0.0
      %1439 = vmatpush1.xpose.msra.mxu0 0.0
      %1440 = vmatprep.subr.mxu0 0.0
      %1441 = vmatpush1.xpose.msra.mxu0 %v1410
      %1442 = vmatprep.subr.mxu0 0.0
      %1443 = vmatpush1.xpose.msra.mxu0 %v1408
      %1444 = vmatprep.subr.mxu0 0.0
      %1445 = vmatpush2.xpose.msra.mxu0 0.0
      %1446 = vmatprep.subr.mxu0 0.0
      %1447 = vmatpush2.xpose.msra.mxu0 0.0
      %1448 = vmatprep.subr.mxu0 0.0
      %1449 = vmatpush2.xpose.msra.mxu0 0.0
      %1450 = vmatprep.subr.mxu0 0.0
      %1451 = vmatpush2.xpose.msra.mxu0 0.0
      %1452 = vmatprep.subr.mxu0 0.0
      %1453 = vmatpush2.xpose.msra.mxu0 0.0
      %1454 = vmatprep.subr.mxu0 0.0
      %1455 = vmatpush2.xpose.msra.mxu0 0.0
      %1456 = vmatprep.subr.mxu0 0.0
      %1457 = vmatpush2.xpose.msra.mxu0 0.0
      %1458 = vmatprep.subr.mxu0 0.0
      %1459 = vmatpush2.xpose.msra.mxu0 0.0
      %1460 = vmatprep.subr.mxu0 0.0
      %1461 = vmatpush2.xpose.msra.mxu0 0.0
      %1462 = vmatprep.subr.mxu0 0.0
      %1463 = vmatpush2.xpose.msra.mxu0 0.0
      %1464 = vmatprep.subr.mxu0 0.0
      %1465 = vmatpush2.xpose.msra.mxu0 0.0
      %1466 = vmatprep.subr.mxu0 0.0
      %1467 = vmatpush2.xpose.msra.mxu0 0.0
      %1468 = vmatprep.subr.mxu0 0.0
      %1469 = vmatpush2.xpose.msra.mxu0 0.0
      %1470 = vmatprep.subr.mxu0 0.0
      %1471 = vmatpush2.xpose.msra.mxu0 0.0
      %1472 = vmatprep.subr.mxu0 0.0
      %1473 = vmatpush2.xpose.msra.mxu0 0.0
      %1474 = vmatprep.subr.mxu0 0.0
      %1475 = vmatpush2.xpose.msra.mxu0 0.0
      %1476 = vmatprep.mubr.f32.mxu0 0.0
      %1477 = vmatmul.mubr.f32.gmra.mxu0 %v1404
      %v1478 = vpop.f32.mrf.mxu0
      %v1479 = vadd.f32 0.0, %v1478
      %v1480 = vpop.f32.mrf.mxu0
      %1481 = vmatprep.mubr.f32.mxu0 0.0
      %1482 = vmatmul.mubr.f32.gmra.mxu0 %v1406
      %v1483 = vpop.f32.mrf.mxu0
      %v1484 = vadd.f32 0.0, %v1483
      %v1485 = vpop.f32.mrf.mxu0
      %1486 = vdwg.mxu0
      %v1487 = vmul.f32 %v1479, 0.35355338
      %v1488 = vmul.f32 %v1484, 0.35355338
      %v1489 = vsel %vm632, %v1487, -inf
      %1490 = vmax.xlane.f32.xlu0 %v1489
      %v1491 = vpop.xlane.xlu0 %1490
      %v1492 = vsel %vm636, %v1488, -inf
      %1493 = vmax.xlane.f32.xlu0 %v1492
      %v1494 = vpop.xlane.xlu0 %1493
      %v1495 = vsub.f32 %v1487, %v1491
      %v1496 = vsub.f32 %v1488, %v1494
      %v1497 = vmul.f32 %v1495, 1.442695
      %v1498 = vpow.pop %v1497
      %v1499 = vmul.f32 %v1496, 1.442695
      %v1500 = vpow.pop %v1499
      %v1501 = vsel %vm632, %v1498, 0.0
      %1502 = vadd.xlane.f32.xlu0 %v1501
      %v1503 = vpop.xlane.xlu0 %1502
      %v1504 = vsel %vm636, %v1500, 0.0
      %1505 = vadd.xlane.f32.xlu0 %v1504
      %v1506 = vpop.xlane.xlu0 %1505
      %v1507 = vrcp.pop %v1503
      %v1508 = vrcp.pop %v1506
      %v1509 = vmul.f32 %v1498, %v1507
      %v1510 = vmul.f32 %v1500, %v1508
      %1511 = vrot.lane.b32.xlu0 %v528, 40
      %v1512 = vpop.permute.xlu0 %1511
      %1513 = vrot.lane.b32.xlu0 %v533, 40
      %v1514 = vpop.permute.xlu0 %1513
      %v1517 = vsel %vm632, %v1509, 0
      %v1520 = vsel %vm632, %v1510, 0
      %v1522 = vsel %vm667, %v1514, 0
      %1524 = vmatprep.subr.mxu0 0.0
      %1525 = vmatpush1.msra.mxu0 0.0
      %1526 = vmatprep.subr.mxu0 0.0
      %1527 = vmatpush1.msra.mxu0 0.0
      %1528 = vmatprep.subr.mxu0 0.0
      %1529 = vmatpush1.msra.mxu0 0.0
      %1530 = vmatprep.subr.mxu0 0.0
      %1531 = vmatpush1.msra.mxu0 0.0
      %1532 = vmatprep.subr.mxu0 0.0
      %1533 = vmatpush1.msra.mxu0 0.0
      %1534 = vmatprep.subr.mxu0 0.0
      %1535 = vmatpush1.msra.mxu0 0.0
      %1536 = vmatprep.subr.mxu0 0.0
      %1537 = vmatpush1.msra.mxu0 0.0
      %1538 = vmatprep.subr.mxu0 0.0
      %1539 = vmatpush1.msra.mxu0 0.0
      %1540 = vmatprep.subr.mxu0 0.0
      %1541 = vmatpush1.msra.mxu0 0.0
      %1542 = vmatprep.subr.mxu0 0.0
      %1543 = vmatpush1.msra.mxu0 0.0
      %1544 = vmatprep.subr.mxu0 0.0
      %1545 = vmatpush1.msra.mxu0 0.0
      %1546 = vmatprep.subr.mxu0 0.0
      %1547 = vmatpush1.msra.mxu0 0.0
      %1548 = vmatprep.subr.mxu0 0.0
      %1549 = vmatpush1.msra.mxu0 0.0
      %1550 = vmatprep.subr.mxu0 0.0
      %1551 = vmatpush1.msra.mxu0 0.0
      %1552 = vmatprep.subr.mxu0 0.0
      %1553 = vmatpush1.msra.mxu0 %v1522
      %1554 = vmatprep.subr.mxu0 0.0
      %1555 = vmatpush1.msra.mxu0 %v1512
      %1556 = vmatprep.subr.mxu0 0.0
      %1557 = vmatpush2.msra.mxu0 0.0
      %1558 = vmatprep.subr.mxu0 0.0
      %1559 = vmatpush2.msra.mxu0 0.0
      %1560 = vmatprep.subr.mxu0 0.0
      %1561 = vmatpush2.msra.mxu0 0.0
      %1562 = vmatprep.subr.mxu0 0.0
      %1563 = vmatpush2.msra.mxu0 0.0
      %1564 = vmatprep.subr.mxu0 0.0
      %1565 = vmatpush2.msra.mxu0 0.0
      %1566 = vmatprep.subr.mxu0 0.0
      %1567 = vmatpush2.msra.mxu0 0.0
      %1568 = vmatprep.subr.mxu0 0.0
      %1569 = vmatpush2.msra.mxu0 0.0
      %1570 = vmatprep.subr.mxu0 0.0
      %1571 = vmatpush2.msra.mxu0 0.0
      %1572 = vmatprep.subr.mxu0 0.0
      %1573 = vmatpush2.msra.mxu0 0.0
      %1574 = vmatprep.subr.mxu0 0.0
      %1575 = vmatpush2.msra.mxu0 0.0
      %1576 = vmatprep.subr.mxu0 0.0
      %1577 = vmatpush2.msra.mxu0 0.0
      %1578 = vmatprep.subr.mxu0 0.0
      %1579 = vmatpush2.msra.mxu0 0.0
      %1580 = vmatprep.subr.mxu0 0.0
      %1581 = vmatpush2.msra.mxu0 0.0
      %1582 = vmatprep.subr.mxu0 0.0
      %1583 = vmatpush2.msra.mxu0 0.0
      %1584 = vmatprep.subr.mxu0 0.0
      %1585 = vmatpush2.msra.mxu0 0.0
      %1586 = vmatprep.subr.mxu0 0.0
      %1587 = vmatpush2.msra.mxu0 0.0
      %1588 = vmatprep.mubr.f32.mxu0 0.0
      %1589 = vmatmul.mubr.f32.gmra.mxu0 %v1517
      %v1590 = vpop.f32.mrf.mxu0
      %v1591 = vadd.f32 0.0, %v1590
      %v1592 = vpop.f32.mrf.mxu0
      %1593 = vmatprep.mubr.f32.mxu0 0.0
      %1594 = vmatmul.mubr.f32.gmra.mxu0 %v1520
      %v1595 = vpop.f32.mrf.mxu0
      %v1596 = vadd.f32 0.0, %v1595
      %v1597 = vpop.f32.mrf.mxu0
      %1598 = vdwg.mxu0
      %v1600 = vsel %vm546, %v1591, 0
      %v1603 = vsel %vm546, %v1596, 0
      %1605 = vmatprep.subr.mxu0 0.0
      %1606 = vmatpush1.msra.mxu0 0.0
      %1607 = vmatprep.subr.mxu0 0.0
      %1608 = vmatpush1.msra.mxu0 0.0
      %1609 = vmatprep.subr.mxu0 0.0
      %1610 = vmatpush1.msra.mxu0 0.0
      %1611 = vmatprep.subr.mxu0 0.0
      %1612 = vmatpush1.msra.mxu0 0.0
      %1613 = vmatprep.subr.mxu0 0.0
      %1614 = vmatpush1.msra.mxu0 0.0
      %1615 = vmatprep.subr.mxu0 0.0
      %1616 = vmatpush1.msra.mxu0 0.0
      %1617 = vmatprep.subr.mxu0 0.0
      %1618 = vmatpush1.msra.mxu0 0.0
      %1619 = vmatprep.subr.mxu0 0.0
      %1620 = vmatpush1.msra.mxu0 0.0
      %1621 = vmatprep.subr.mxu0 0.0
      %1622 = vmatpush1.msra.mxu0 0.0
      %1623 = vmatprep.subr.mxu0 0.0
      %1624 = vmatpush1.msra.mxu0 0.0
      %1625 = vmatprep.subr.mxu0 0.0
      %1626 = vmatpush1.msra.mxu0 0.0
      %1627 = vmatprep.subr.mxu0 0.0
      %1628 = vmatpush1.msra.mxu0 0.0
      %1629 = vmatprep.subr.mxu0 0.0
      %1630 = vmatpush1.msra.mxu0 0.0
      %1631 = vmatprep.subr.mxu0 0.0
      %1632 = vmatpush1.msra.mxu0 0.0
      %1633 = vmatprep.subr.mxu0 0.0
      %1634 = vmatpush1.msra.mxu0 0.0
      %1635 = vmatprep.subr.mxu0 0.0
      %1636 = vmatpush1.msra.mxu0 %v539
      %1637 = vmatprep.subr.mxu0 0.0
      %1638 = vmatpush2.msra.mxu0 0.0
      %1639 = vmatprep.subr.mxu0 0.0
      %1640 = vmatpush2.msra.mxu0 0.0
      %1641 = vmatprep.subr.mxu0 0.0
      %1642 = vmatpush2.msra.mxu0 0.0
      %1643 = vmatprep.subr.mxu0 0.0
      %1644 = vmatpush2.msra.mxu0 0.0
      %1645 = vmatprep.subr.mxu0 0.0
      %1646 = vmatpush2.msra.mxu0 0.0
      %1647 = vmatprep.subr.mxu0 0.0
      %1648 = vmatpush2.msra.mxu0 0.0
      %1649 = vmatprep.subr.mxu0 0.0
      %1650 = vmatpush2.msra.mxu0 0.0
      %1651 = vmatprep.subr.mxu0 0.0
      %1652 = vmatpush2.msra.mxu0 0.0
      %1653 = vmatprep.subr.mxu0 0.0
      %1654 = vmatpush2.msra.mxu0 0.0
      %1655 = vmatprep.subr.mxu0 0.0
      %1656 = vmatpush2.msra.mxu0 0.0
      %1657 = vmatprep.subr.mxu0 0.0
      %1658 = vmatpush2.msra.mxu0 0.0
      %1659 = vmatprep.subr.mxu0 0.0
      %1660 = vmatpush2.msra.mxu0 0.0
      %1661 = vmatprep.subr.mxu0 0.0
      %1662 = vmatpush2.msra.mxu0 0.0
      %1663 = vmatprep.subr.mxu0 0.0
      %1664 = vmatpush2.msra.mxu0 0.0
      %1665 = vmatprep.subr.mxu0 0.0
      %1666 = vmatpush2.msra.mxu0 0.0
      %1667 = vmatprep.subr.mxu0 0.0
      %1668 = vmatpush2.msra.mxu0 0.0
      %1669 = vmatprep.mubr.f32.mxu0 0.0
      %1670 = vmatmul.mubr.f32.gmra.mxu0 %v1600
      %v1671 = vpop.f32.mrf.mxu0
      %v1672 = vadd.f32 0.0, %v1671
      %v1673 = vpop.f32.mrf.mxu0
      %1674 = vmatprep.mubr.f32.mxu0 0.0
      %1675 = vmatmul.mubr.f32.gmra.mxu0 %v1603
      %v1676 = vpop.f32.mrf.mxu0
      %v1677 = vadd.f32 0.0, %v1676
      %v1678 = vpop.f32.mrf.mxu0
      %1679 = vdwg.mxu0
      %v1680 = vadd.f32 %v1394, %v1672
      %v1681 = vadd.f32 %v1395, %v1677
      %v1682 = vld [vmem:[%s4] sm:$0x1]
      %v1684 = vlaneseq
      %v1685 = vshrl.u32 %v1684, 7
      %v1686 = vsub.s32 0, %v1685
      %v1687 = vrot.slane %v1682, %v1686
      %v1689 = vadd.f32 %v1680, %v1687
      %v1690 = vadd.f32 %v1681, %v1687
      %v1691 = vadd.f32 %v441, %v1689
      %v1692 = vadd.f32 %v442, %v1690
      %v1693 = vld [vmem:[%s5] sm:$0x1]
      %v1694 = vld [vmem:[%s6] sm:$0x1]
      %v1695 = vsel %vm454, %v1691, 0.0
      %1696 = vadd.xlane.f32.xlu0 %v1695
      %v1697 = vpop.xlane.xlu0 %1696
      %vm1698 = vcmask 257024
      %v1699 = vsel %vm1698, %v1692, 0.0
      %1700 = vadd.xlane.f32.xlu0 %v1699
      %v1701 = vpop.xlane.xlu0 %1700
      %v1702 = vrcp.pop 32.0
      %v1703 = vmul.f32 %v1697, %v1702
      %v1704 = vmul.f32 %v1701, %v1702
      %v1705 = vsub.f32 %v1691, %v1703
      %v1706 = vsub.f32 %v1692, %v1704
      %v1707 = vmul.f32 %v1705, %v1705
      %v1708 = vmul.f32 %v1706, %v1706
      %v1709 = vsel %vm454, %v1707, 0.0
      %1710 = vadd.xlane.f32.xlu0 %v1709
      %v1711 = vpop.xlane.xlu0 %1710
      %v1712 = vsel %vm1698, %v1708, 0.0
      %1713 = vadd.xlane.f32.xlu0 %v1712
      %v1714 = vpop.xlane.xlu0 %1713
      %v1715 = vmul.f32 %v1711, %v1702
      %v1716 = vmul.f32 %v1714, %v1702
      %v1717 = vadd.f32 %v1715, 1e-12
      %v1718 = vadd.f32 %v1716, 1e-12
      %v1719 = vrsqrt.pop %v1717
      %v1720 = vrsqrt.pop %v1718
      %v1721 = vmul.f32 %v1705, %v1719
      %v1722 = vmul.f32 %v1706, %v1720
      %v1724 = vlaneseq
      %v1725 = vshrl.u32 %v1724, 7
      %v1726 = vsub.s32 0, %v1725
      %v1727 = vrot.slane %v1693, %v1726
      %v1729 = vmul.f32 %v1721, %v1727
      %v1730 = vmul.f32 %v1722, %v1727
      %v1732 = vlaneseq
      %v1733 = vshrl.u32 %v1732, 7
      %v1734 = vsub.s32 0, %v1733
      %v1735 = vrot.slane %v1694, %v1734
      %v1737 = vadd.f32 %v1729, %v1735
      %v1738 = vadd.f32 %v1730, %v1735
      %v1739 = vld [vmem:[%s7] sm:$0xff]
      %v1740 = vld [vmem:[%s7 + $0x8] sm:$0xff]
      %v1741 = vld [vmem:[%s7 + $0x10] sm:$0xff]
      %v1742 = vld [vmem:[%s7 + $0x18] sm:$0xff]
      %v1743 = vld [vmem:[%s8] sm:$0x1]
      %v1745 = vlaneseq
      %v1746 = vshrl.u32 %v1745, 7
      %v1747 = vsub.s32 0, %v1746
      %v1748 = vrot.slane %v1743, %v1747
      %v1751 = vsel %vm454, %v1737, 0
      %v1754 = vsel %vm454, %v1738, 0
      %1756 = vmatprep.subr.mxu0 0.0
      %1757 = vmatpush1.msra.mxu0 0.0
      %1758 = vmatprep.subr.mxu0 0.0
      %1759 = vmatpush1.msra.mxu0 0.0
      %1760 = vmatprep.subr.mxu0 0.0
      %1761 = vmatpush1.msra.mxu0 0.0
      %1762 = vmatprep.subr.mxu0 0.0
      %1763 = vmatpush1.msra.mxu0 0.0
      %1764 = vmatprep.subr.mxu0 0.0
      %1765 = vmatpush1.msra.mxu0 0.0
      %1766 = vmatprep.subr.mxu0 0.0
      %1767 = vmatpush1.msra.mxu0 0.0
      %1768 = vmatprep.subr.mxu0 0.0
      %1769 = vmatpush1.msra.mxu0 0.0
      %1770 = vmatprep.subr.mxu0 0.0
      %1771 = vmatpush1.msra.mxu0 0.0
      %1772 = vmatprep.subr.mxu0 0.0
      %1773 = vmatpush1.msra.mxu0 0.0
      %1774 = vmatprep.subr.mxu0 0.0
      %1775 = vmatpush1.msra.mxu0 0.0
      %1776 = vmatprep.subr.mxu0 0.0
      %1777 = vmatpush1.msra.mxu0 0.0
      %1778 = vmatprep.subr.mxu0 0.0
      %1779 = vmatpush1.msra.mxu0 0.0
      %1780 = vmatprep.subr.mxu0 0.0
      %1781 = vmatpush1.msra.mxu0 %v1742
      %1782 = vmatprep.subr.mxu0 0.0
      %1783 = vmatpush1.msra.mxu0 %v1741
      %1784 = vmatprep.subr.mxu0 0.0
      %1785 = vmatpush1.msra.mxu0 %v1740
      %1786 = vmatprep.subr.mxu0 0.0
      %1787 = vmatpush1.msra.mxu0 %v1739
      %1788 = vmatprep.subr.mxu0 0.0
      %1789 = vmatpush2.msra.mxu0 0.0
      %1790 = vmatprep.subr.mxu0 0.0
      %1791 = vmatpush2.msra.mxu0 0.0
      %1792 = vmatprep.subr.mxu0 0.0
      %1793 = vmatpush2.msra.mxu0 0.0
      %1794 = vmatprep.subr.mxu0 0.0
      %1795 = vmatpush2.msra.mxu0 0.0
      %1796 = vmatprep.subr.mxu0 0.0
      %1797 = vmatpush2.msra.mxu0 0.0
      %1798 = vmatprep.subr.mxu0 0.0
      %1799 = vmatpush2.msra.mxu0 0.0
      %1800 = vmatprep.subr.mxu0 0.0
      %1801 = vmatpush2.msra.mxu0 0.0
      %1802 = vmatprep.subr.mxu0 0.0
      %1803 = vmatpush2.msra.mxu0 0.0
      %1804 = vmatprep.subr.mxu0 0.0
      %1805 = vmatpush2.msra.mxu0 0.0
      %1806 = vmatprep.subr.mxu0 0.0
      %1807 = vmatpush2.msra.mxu0 0.0
      %1808 = vmatprep.subr.mxu0 0.0
      %1809 = vmatpush2.msra.mxu0 0.0
      %1810 = vmatprep.subr.mxu0 0.0
      %1811 = vmatpush2.msra.mxu0 0.0
      %1812 = vmatprep.subr.mxu0 0.0
      %1813 = vmatpush2.msra.mxu0 0.0
      %1814 = vmatprep.subr.mxu0 0.0
      %1815 = vmatpush2.msra.mxu0 0.0
      %1816 = vmatprep.subr.mxu0 0.0
      %1817 = vmatpush2.msra.mxu0 0.0
      %1818 = vmatprep.subr.mxu0 0.0
      %1819 = vmatpush2.msra.mxu0 0.0
      %1820 = vmatprep.mubr.f32.mxu0 0.0
      %1821 = vmatmul.mubr.f32.gmra.mxu0 %v1751
      %v1822 = vpop.f32.mrf.mxu0
      %v1823 = vadd.f32 %v1748, %v1822
      %v1824 = vpop.f32.mrf.mxu0
      %1825 = vmatprep.mubr.f32.mxu0 0.0
      %1826 = vmatmul.mubr.f32.gmra.mxu0 %v1754
      %v1827 = vpop.f32.mrf.mxu0
      %v1828 = vadd.f32 %v1748, %v1827
      %v1829 = vpop.f32.mrf.mxu0
      %1830 = vdwg.mxu0
      %v1831 = vmul.f32 %v1823, %v1823
      %v1832 = vmul.f32 %v1828, %v1828
      %v1833 = vmul.f32 %v1823, %v1831
      %v1834 = vmul.f32 %v1828, %v1832
      %v1835 = vmul.f32 %v1833, 0.044715
      %v1836 = vmul.f32 %v1834, 0.044715
      %v1837 = vadd.f32 %v1823, %v1835
      %v1838 = vadd.f32 %v1828, %v1836
      %v1839 = vmul.f32 %v1837, 0.7978846
      %v1840 = vmul.f32 %v1838, 0.7978846
      %v1841 = vtanh.pop %v1839
      %v1842 = vtanh.pop %v1840
      %v1843 = vadd.f32 %v1841, 1.0
      %v1844 = vadd.f32 %v1842, 1.0
      %v1845 = vmul.f32 %v1843, 0.5
      %v1846 = vmul.f32 %v1844, 0.5
      %v1847 = vmul.f32 %v1823, %v1845
      %v1848 = vmul.f32 %v1828, %v1846
      %v1849 = vld [vmem:[%s9] sm:$0xff]
      %v1850 = vld [vmem:[%s9 + $0x8] sm:$0xff]
      %v1851 = vld [vmem:[%s9 + $0x10] sm:$0xff]
      %v1852 = vld [vmem:[%s9 + $0x18] sm:$0xff]
      %v1853 = vld [vmem:[%s9 + $0x20] sm:$0xff]
      %v1854 = vld [vmem:[%s9 + $0x28] sm:$0xff]
      %v1855 = vld [vmem:[%s9 + $0x30] sm:$0xff]
      %v1856 = vld [vmem:[%s9 + $0x38] sm:$0xff]
      %v1857 = vld [vmem:[%s10] sm:$0x1]
      %v1859 = vlaneseq
      %v1860 = vshrl.u32 %v1859, 7
      %v1861 = vsub.s32 0, %v1860
      %v1862 = vrot.slane %v1857, %v1861
      %vm1864 = vcmask 523264
      %v1866 = vsel %vm1864, %v1847, 0
      %v1869 = vsel %vm1864, %v1848, 0
      %1871 = vmatprep.subr.mxu0 0.0
      %1872 = vmatpush1.msra.mxu0 0.0
      %1873 = vmatprep.subr.mxu0 0.0
      %1874 = vmatpush1.msra.mxu0 0.0
      %1875 = vmatprep.subr.mxu0 0.0
      %1876 = vmatpush1.msra.mxu0 0.0
      %1877 = vmatprep.subr.mxu0 0.0
      %1878 = vmatpush1.msra.mxu0 0.0
      %1879 = vmatprep.subr.mxu0 0.0
      %1880 = vmatpush1.msra.mxu0 0.0
      %1881 = vmatprep.subr.mxu0 0.0
      %1882 = vmatpush1.msra.mxu0 0.0
      %1883 = vmatprep.subr.mxu0 0.0
      %1884 = vmatpush1.msra.mxu0 0.0
      %1885 = vmatprep.subr.mxu0 0.0
      %1886 = vmatpush1.msra.mxu0 0.0
      %1887 = vmatprep.subr.mxu0 0.0
      %1888 = vmatpush1.msra.mxu0 %v1856
      %1889 = vmatprep.subr.mxu0 0.0
      %1890 = vmatpush1.msra.mxu0 %v1855
      %1891 = vmatprep.subr.mxu0 0.0
      %1892 = vmatpush1.msra.mxu0 %v1854
      %1893 = vmatprep.subr.mxu0 0.0
      %1894 = vmatpush1.msra.mxu0 %v1853
      %1895 = vmatprep.subr.mxu0 0.0
      %1896 = vmatpush1.msra.mxu0 %v1852
      %1897 = vmatprep.subr.mxu0 0.0
      %1898 = vmatpush1.msra.mxu0 %v1851
      %1899 = vmatprep.subr.mxu0 0.0
      %1900 = vmatpush1.msra.mxu0 %v1850
      %1901 = vmatprep.subr.mxu0 0.0
      %1902 = vmatpush1.msra.mxu0 %v1849
      %1903 = vmatprep.subr.mxu0 0.0
      %1904 = vmatpush2.msra.mxu0 0.0
      %1905 = vmatprep.subr.mxu0 0.0
      %1906 = vmatpush2.msra.mxu0 0.0
      %1907 = vmatprep.subr.mxu0 0.0
      %1908 = vmatpush2.msra.mxu0 0.0
      %1909 = vmatprep.subr.mxu0 0.0
      %1910 = vmatpush2.msra.mxu0 0.0
      %1911 = vmatprep.subr.mxu0 0.0
      %1912 = vmatpush2.msra.mxu0 0.0
      %1913 = vmatprep.subr.mxu0 0.0
      %1914 = vmatpush2.msra.mxu0 0.0
      %1915 = vmatprep.subr.mxu0 0.0
      %1916 = vmatpush2.msra.mxu0 0.0
      %1917 = vmatprep.subr.mxu0 0.0
      %1918 = vmatpush2.msra.mxu0 0.0
      %1919 = vmatprep.subr.mxu0 0.0
      %1920 = vmatpush2.msra.mxu0 0.0
      %1921 = vmatprep.subr.mxu0 0.0
      %1922 = vmatpush2.msra.mxu0 0.0
      %1923 = vmatprep.subr.mxu0 0.0
      %1924 = vmatpush2.msra.mxu0 0.0
      %1925 = vmatprep.subr.mxu0 0.0
      %1926 = vmatpush2.msra.mxu0 0.0
      %1927 = vmatprep.subr.mxu0 0.0
      %1928 = vmatpush2.msra.mxu0 0.0
      %1929 = vmatprep.subr.mxu0 0.0
      %1930 = vmatpush2.msra.mxu0 0.0
      %1931 = vmatprep.subr.mxu0 0.0
      %1932 = vmatpush2.msra.mxu0 0.0
      %1933 = vmatprep.subr.mxu0 0.0
      %1934 = vmatpush2.msra.mxu0 0.0
      %1935 = vmatprep.mubr.f32.mxu0 0.0
      %1936 = vmatmul.mubr.f32.gmra.mxu0 %v1866
      %v1937 = vpop.f32.mrf.mxu0
      %v1938 = vadd.f32 %v1862, %v1937
      %v1939 = vpop.f32.mrf.mxu0
      %1940 = vmatprep.mubr.f32.mxu0 0.0
      %1941 = vmatmul.mubr.f32.gmra.mxu0 %v1869
      %v1942 = vpop.f32.mrf.mxu0
      %v1943 = vadd.f32 %v1862, %v1942
      %v1944 = vpop.f32.mrf.mxu0
      %1945 = vdwg.mxu0
      %v1946 = vadd.f32 %v1737, %v1938
      %v1947 = vadd.f32 %v1738, %v1943
      %v1948 = vld [vmem:[%s11] sm:$0x1]
      %v1949 = vld [vmem:[%s12] sm:$0x1]
      %v1950 = vsel %vm454, %v1946, 0.0
      %1951 = vadd.xlane.f32.xlu0 %v1950
      %v1952 = vpop.xlane.xlu0 %1951
      %v1953 = vsel %vm1698, %v1947, 0.0
      %1954 = vadd.xlane.f32.xlu0 %v1953
      %v1955 = vpop.xlane.xlu0 %1954
      %v1956 = vmul.f32 %v1952, %v1702
      %v1957 = vmul.f32 %v1955, %v1702
      %v1958 = vsub.f32 %v1946, %v1956
      %v1959 = vsub.f32 %v1947, %v1957
      %v1960 = vmul.f32 %v1958, %v1958
      %v1961 = vmul.f32 %v1959, %v1959
      %v1962 = vsel %vm454, %v1960, 0.0
      %1963 = vadd.xlane.f32.xlu0 %v1962
      %v1964 = vpop.xlane.xlu0 %1963
      %v1965 = vsel %vm1698, %v1961, 0.0
      %1966 = vadd.xlane.f32.xlu0 %v1965
      %v1967 = vpop.xlane.xlu0 %1966
      %v1968 = vmul.f32 %v1964, %v1702
      %v1969 = vmul.f32 %v1967, %v1702
      %v1970 = vadd.f32 %v1968, 1e-12
      %v1971 = vadd.f32 %v1969, 1e-12
      %v1972 = vrsqrt.pop %v1970
      %v1973 = vrsqrt.pop %v1971
      %v1974 = vmul.f32 %v1958, %v1972
      %v1975 = vmul.f32 %v1959, %v1973
      %v1977 = vlaneseq
      %v1978 = vshrl.u32 %v1977, 7
      %v1979 = vsub.s32 0, %v1978
      %v1980 = vrot.slane %v1948, %v1979
      %v1982 = vmul.f32 %v1974, %v1980
      %v1983 = vmul.f32 %v1975, %v1980
      %v1985 = vlaneseq
      %v1986 = vshrl.u32 %v1985, 7
      %v1987 = vsub.s32 0, %v1986
      %v1988 = vrot.slane %v1949, %v1987
      %v1990 = vadd.f32 %v1982, %v1988
      %v1991 = vadd.f32 %v1983, %v1988
      %1992 = vst.msk [vmem:[%s440] sm:$0xff] %vm454, %v1990
      %1993 = vst.msk [vmem:[%s440 + $0x8] sm:$0xf] %vm1698, %v1991
      %p1994 = scmp.lt.s32.totalorder %s24, 1
      %s1995 = scalar_select %p1994, %s24, 1
      %s1996 = smul.addr %s1995, 2
      %s1997 = smul.addr %s1996, 8
      %s1998 = scalar_lea.vmem %s13, %s1997
      // Predicated region
      $region73: #{rgat_absa_forward.8} parent=71 // pred_check
        %p1999 = pneg %p320
      $region74: #{rgat_absa_forward.8} parent=71 // pred_check_branch
        %2001 = sbr.rel (%p1999) target = $region76
      $region75: #{rgat_absa_forward.8} parent=71 // pred_region
        _
      $region76: #{rgat_absa_forward.8} parent=71 // pred_fallthru
        _
    $region72: #{rgat_absa_forward.8} parent=5 // pred_fallthru
      _
    %p2002 = scmp.le.s32.totalorder 2, %s19
    // Predicated region
    $region77: #{rgat_absa_forward.8} parent=5 // pred_check
      %p2003 = pneg %p2002
    $region78: #{rgat_absa_forward.8} parent=5 // pred_check_branch
      %2005 = sbr.rel (%p2003) target = $region80
    $region79: #{rgat_absa_forward.8} parent=5 // pred_region
      %s2006 = ssub.s32 %s19, 2
      // Predicated region
      $region81: #{rgat_absa_forward.8} parent=79 // pred_check
        %p2007 = pneg %p326
      $region82: #{rgat_absa_forward.8} parent=79 // pred_check_branch
        %2009 = sbr.rel (%p2007) target = $region84
      $region83: #{rgat_absa_forward.8} parent=79 // pred_region
        %p2010 = scmp.lt.s32.totalorder %s25, 1
        %s2011 = scalar_select %p2010, %s25, 1
        %s2012 = smul.addr %s2011, 2
        %s2013 = smul.addr %s2012, 8
        %s2014 = scalar_lea.vmem %s13, %s2013
      $region84: #{rgat_absa_forward.8} parent=79 // pred_fallthru
        _
    $region80: #{rgat_absa_forward.8} parent=5 // pred_fallthru
      _
  $region6: #{rgat_absa_forward.8} parent=0 // loop_footer
    %s23 = sadd.s32 1, %s19
  $region7: #{rgat_absa_forward.8} parent=0 // loop_footer_branch
    %18 = sbr.rel target = $region3
  $region8: #{rgat_absa_forward.8} parent=0 // loop_exit
    _

// kernel: rgat_absa_forward.13
$region0: #{rgat_absa_forward.13}
  #allocation0 [shape = 'u32[]', space=smem, size = 0x4, offset = 0x4, fixed_abs, tag = 'smem constant byte address 0x4 - core index']
  #allocation1 [shape = 'u32[144,128]{1,0:T(1,128)}', space=vmem, size = 0x12000, scoped, tag = 'internal scratch']
  %s0 = inlined_call_operand.vmem [shape: f32[2,8,32], index: 0, kind: input, shape index: {}]
  %s1 = inlined_call_operand.vmem [shape: f32[2,8,32], index: 1, kind: input, shape index: {}]
  %s2 = inlined_call_operand.vmem [shape: f32[2,8,1], index: 2, kind: input, shape index: {}]
  %s3 = inlined_call_operand.vmem [shape: f32[2,1,32], index: 3, kind: input, shape index: {}]
  %s4 = inlined_call_operand.vmem [shape: f32[32,32], index: 4, kind: input, shape index: {}]
  %s5 = inlined_call_operand.vmem [shape: f32[32,32], index: 5, kind: input, shape index: {}]
  %s6 = inlined_call_operand.vmem [shape: f32[1,32], index: 6, kind: input, shape index: {}]
  %s7 = inlined_call_operand.vmem [shape: f32[32,3], index: 7, kind: input, shape index: {}]
  %s8 = inlined_call_operand.vmem [shape: f32[32,3], index: 8, kind: input, shape index: {}]
  %s9 = inlined_call_operand.vmem [shape: f32[1,3], index: 9, kind: input, shape index: {}]
  %s10 = inlined_call_operand.hbm [shape: f32[2,1,3], index: 10, kind: output, shape index: {0}]
  %s11 = inlined_call_operand.hbm [shape: f32[2,1,64], index: 11, kind: output, shape index: {1}]
  %12 = xla_tuple %s10, %s11
  %s13 = sld [smem:[#allocation0]]
  $region81: #{rgat_absa_forward.13} parent=0
    _
  %s15 = ssub.s32 1, %s13
  %s16 = scalar_select 0, %s15, %s13
  $region1: #{rgat_absa_forward.13} parent=0
    #allocation2 [shape = 'u8[1024]{0}', space=vmem, size = 0x400, scoped, tag = 'output window, operand 0']
    #allocation3 [shape = 's32[2]{0}', space=sflag, size = 0x8, scoped, tag = 'scoped memory for rgat_absa_forward.13']
    #allocation4 [shape = 'u8[1024]{0}', space=vmem, size = 0x400, scoped, tag = 'output window, operand 1']
    #allocation5 [shape = 's32[2]{0}', space=sflag, size = 0x8, scoped, tag = 'scoped memory for rgat_absa_forward.13']
    %17 = vsyncpa [#allocation3], 0
    %s18 = scalar_lea.sflag [#allocation3], 1
    %19 = vsyncpa %s18, 0
    %20 = vsyncpa [#allocation5], 0
    %s21 = scalar_lea.sflag [#allocation5], 1
    %22 = vsyncpa %s21, 0
    loop: start=0, step=1, limit=4
    $region2: #{rgat_absa_forward.13} parent=1 // loop_pre_header
      _
    $region3: #{rgat_absa_forward.13} parent=1 // loop_header
      %s24 = sphi 0, %s28
      %p25 = scmp.ge.s32.totalorder %s24, 4
      %s34 = sphi 0, %s36
      %s37 = sphi 0, %s34
      %s38 = sphi 0, %s37
      %s54 = sphi 0, %s38
      %s60 = sphi 0, %s62
      %s63 = sphi 0, %s60
      %s64 = sphi 0, %s63
      %s80 = sphi 0, %s64
      %s86 = sphi 0, %s88
      %s89 = sphi 0, %s86
      %s90 = sphi 0, %s89
      %s106 = sphi 0, %s90
      %s112 = sphi 0, %s114
      %s115 = sphi 0, %s112
      %s116 = sphi 0, %s115
      %s132 = sphi 0, %s116
      %s136 = sphi 0, %s136
      %s138 = sphi 0, %s136
      %s139 = sphi 0, %s138
      %s153 = sphi 0, %s139
      %s157 = sphi 0, %s157
      %s159 = sphi 0, %s157
      %s160 = sphi 0, %s159
      %s174 = sphi 0, %s160
      %s178 = sphi 0, %s178
      %s180 = sphi 0, %s178
      %s181 = sphi 0, %s180
      %s195 = sphi 0, %s181
      %s199 = sphi 0, %s199
      %s201 = sphi 0, %s199
      %s202 = sphi 0, %s201
      %s216 = sphi 0, %s202
      %s220 = sphi 0, %s220
      %s222 = sphi 0, %s220
      %s223 = sphi 0, %s222
      %s237 = sphi 0, %s223
      %s241 = sphi 0, %s241
      %s243 = sphi 0, %s241
      %s244 = sphi 0, %s243
      %s258 = sphi 0, %s244
      %s264 = sphi 0, %s266
      %s267 = sphi 0, %s264
      %s268 = sphi 0, %s267
      %s284 = sphi 0, %s268
      %s290 = sphi 0, %s292
      %s293 = sphi 0, %s290
      %s294 = sphi 0, %s293
      %s310 = sphi 0, %s294
    $region4: #{rgat_absa_forward.13} parent=1 // loop_header_branch
      %27 = sbr.rel (%p25) target = $region8
    $region5: #{rgat_absa_forward.13} parent=1 // loop_body
      %s29 = ssub.s32 %s24, 1
      %s30 = ssub.s32 %s24, 2
      %s31 = sadd.s32 %s24, 1
      %s32 = ssub.s32 %s24, %s31
      %p33 = scmp.eq.s32.totalorder %s32, 0
      %s35 = sadd.s32 %s34, 1
      %s36 = scalar_select %p33, %s34, %s35
      %p39 = pneg %p33
      %p40 = scmp.eq.s32.totalorder %s24, 1
      %p41 = por %p39, %p40
      %p42 = scmp.ne.s32.totalorder %s34, %s37
      %p43 = scmp.eq.s32.totalorder %s24, 0
      %p44 = por %p42, %p43
      %p45 = scmp.ne.s32.totalorder %s34, %s37
      %p46 = scmp.eq.s32.totalorder %s29, 1
      %p47 = por %p45, %p46
      %p48 = scmp.ne.s32.totalorder %s37, %s38
      %p49 = scmp.eq.s32.totalorder %s29, 0
      %p50 = por %p48, %p49
      %p51 = scmp.ne.s32.totalorder %s37, %s38
      %p52 = scmp.eq.s32.totalorder %s30, 1
      %p53 = por %p51, %p52
      %p55 = scmp.ne.s32.totalorder %s38, %s54
      %p56 = scmp.eq.s32.totalorder %s30, 0
      %p57 = por %p55, %p56
      %s58 = ssub.s32 %s24, %s31
      %p59 = scmp.eq.s32.totalorder %s58, 0
      %s61 = sadd.s32 %s60, 1
      %s62 = scalar_select %p59, %s60, %s61
      %p65 = pneg %p59
      %p66 = scmp.eq.s32.totalorder %s24, 1
      %p67 = por %p65, %p66
      %p68 = scmp.ne.s32.totalorder %s60, %s63
      %p69 = scmp.eq.s32.totalorder %s24, 0
      %p70 = por %p68, %p69
      %p71 = scmp.ne.s32.totalorder %s60, %s63
      %p72 = scmp.eq.s32.totalorder %s29, 1
      %p73 = por %p71, %p72
      %p74 = scmp.ne.s32.totalorder %s63, %s64
      %p75 = scmp.eq.s32.totalorder %s29, 0
      %p76 = por %p74, %p75
      %p77 = scmp.ne.s32.totalorder %s63, %s64
      %p78 = scmp.eq.s32.totalorder %s30, 1
      %p79 = por %p77, %p78
      %p81 = scmp.ne.s32.totalorder %s64, %s80
      %p82 = scmp.eq.s32.totalorder %s30, 0
      %p83 = por %p81, %p82
      %s84 = ssub.s32 %s24, %s31
      %p85 = scmp.eq.s32.totalorder %s84, 0
      %s87 = sadd.s32 %s86, 1
      %s88 = scalar_select %p85, %s86, %s87
      %p91 = pneg %p85
      %p92 = scmp.eq.s32.totalorder %s24, 1
      %p93 = por %p91, %p92
      %p94 = scmp.ne.s32.totalorder %s86, %s89
      %p95 = scmp.eq.s32.totalorder %s24, 0
      %p96 = por %p94, %p95
      %p97 = scmp.ne.s32.totalorder %s86, %s89
      %p98 = scmp.eq.s32.totalorder %s29, 1
      %p99 = por %p97, %p98
      %p100 = scmp.ne.s32.totalorder %s89, %s90
      %p101 = scmp.eq.s32.totalorder %s29, 0
      %p102 = por %p100, %p101
      %p103 = scmp.ne.s32.totalorder %s89, %s90
      %p104 = scmp.eq.s32.totalorder %s30, 1
      %p105 = por %p103, %p104
      %p107 = scmp.ne.s32.totalorder %s90, %s106
      %p108 = scmp.eq.s32.totalorder %s30, 0
      %p109 = por %p107, %p108
      %s110 = ssub.s32 %s24, %s31
      %p111 = scmp.eq.s32.totalorder %s110, 0
      %s113 = sadd.s32 %s112, 1
      %s114 = scalar_select %p111, %s112, %s113
      %p117 = pneg %p111
      %p118 = scmp.eq.s32.totalorder %s24, 1
      %p119 = por %p117, %p118
      %p120 = scmp.ne.s32.totalorder %s112, %s115
      %p121 = scmp.eq.s32.totalorder %s24, 0
      %p122 = por %p120, %p121
      %p123 = scmp.ne.s32.totalorder %s112, %s115
      %p124 = scmp.eq.s32.totalorder %s29, 1
      %p125 = por %p123, %p124
      %p126 = scmp.ne.s32.totalorder %s115, %s116
      %p127 = scmp.eq.s32.totalorder %s29, 0
      %p128 = por %p126, %p127
      %p129 = scmp.ne.s32.totalorder %s115, %s116
      %p130 = scmp.eq.s32.totalorder %s30, 1
      %p131 = por %p129, %p130
      %p133 = scmp.ne.s32.totalorder %s116, %s132
      %p134 = scmp.eq.s32.totalorder %s30, 0
      %p135 = por %p133, %p134
      %s137 = sadd.s32 %s136, 1
      %p140 = scmp.eq.s32.totalorder %s24, 1
      %p141 = scmp.ne.s32.totalorder %s136, %s138
      %p142 = scmp.eq.s32.totalorder %s24, 0
      %p143 = por %p141, %p142
      %p144 = scmp.ne.s32.totalorder %s136, %s138
      %p145 = scmp.eq.s32.totalorder %s29, 1
      %p146 = por %p144, %p145
      %p147 = scmp.ne.s32.totalorder %s138, %s139
      %p148 = scmp.eq.s32.totalorder %s29, 0
      %p149 = por %p147, %p148
      %p150 = scmp.ne.s32.totalorder %s138, %s139
      %p151 = scmp.eq.s32.totalorder %s30, 1
      %p152 = por %p150, %p151
      %p154 = scmp.ne.s32.totalorder %s139, %s153
      %p155 = scmp.eq.s32.totalorder %s30, 0
      %p156 = por %p154, %p155
      %s158 = sadd.s32 %s157, 1
      %p161 = scmp.eq.s32.totalorder %s24, 1
      %p162 = scmp.ne.s32.totalorder %s157, %s159
      %p163 = scmp.eq.s32.totalorder %s24, 0
      %p164 = por %p162, %p163
      %p165 = scmp.ne.s32.totalorder %s157, %s159
      %p166 = scmp.eq.s32.totalorder %s29, 1
      %p167 = por %p165, %p166
      %p168 = scmp.ne.s32.totalorder %s159, %s160
      %p169 = scmp.eq.s32.totalorder %s29, 0
      %p170 = por %p168, %p169
      %p171 = scmp.ne.s32.totalorder %s159, %s160
      %p172 = scmp.eq.s32.totalorder %s30, 1
      %p173 = por %p171, %p172
      %p175 = scmp.ne.s32.totalorder %s160, %s174
      %p176 = scmp.eq.s32.totalorder %s30, 0
      %p177 = por %p175, %p176
      %s179 = sadd.s32 %s178, 1
      %p182 = scmp.eq.s32.totalorder %s24, 1
      %p183 = scmp.ne.s32.totalorder %s178, %s180
      %p184 = scmp.eq.s32.totalorder %s24, 0
      %p185 = por %p183, %p184
      %p186 = scmp.ne.s32.totalorder %s178, %s180
      %p187 = scmp.eq.s32.totalorder %s29, 1
      %p188 = por %p186, %p187
      %p189 = scmp.ne.s32.totalorder %s180, %s181
      %p190 = scmp.eq.s32.totalorder %s29, 0
      %p191 = por %p189, %p190
      %p192 = scmp.ne.s32.totalorder %s180, %s181
      %p193 = scmp.eq.s32.totalorder %s30, 1
      %p194 = por %p192, %p193
      %p196 = scmp.ne.s32.totalorder %s181, %s195
      %p197 = scmp.eq.s32.totalorder %s30, 0
      %p198 = por %p196, %p197
      %s200 = sadd.s32 %s199, 1
      %p203 = scmp.eq.s32.totalorder %s24, 1
      %p204 = scmp.ne.s32.totalorder %s199, %s201
      %p205 = scmp.eq.s32.totalorder %s24, 0
      %p206 = por %p204, %p205
      %p207 = scmp.ne.s32.totalorder %s199, %s201
      %p208 = scmp.eq.s32.totalorder %s29, 1
      %p209 = por %p207, %p208
      %p210 = scmp.ne.s32.totalorder %s201, %s202
      %p211 = scmp.eq.s32.totalorder %s29, 0
      %p212 = por %p210, %p211
      %p213 = scmp.ne.s32.totalorder %s201, %s202
      %p214 = scmp.eq.s32.totalorder %s30, 1
      %p215 = por %p213, %p214
      %p217 = scmp.ne.s32.totalorder %s202, %s216
      %p218 = scmp.eq.s32.totalorder %s30, 0
      %p219 = por %p217, %p218
      %s221 = sadd.s32 %s220, 1
      %p224 = scmp.eq.s32.totalorder %s24, 1
      %p225 = scmp.ne.s32.totalorder %s220, %s222
      %p226 = scmp.eq.s32.totalorder %s24, 0
      %p227 = por %p225, %p226
      %p228 = scmp.ne.s32.totalorder %s220, %s222
      %p229 = scmp.eq.s32.totalorder %s29, 1
      %p230 = por %p228, %p229
      %p231 = scmp.ne.s32.totalorder %s222, %s223
      %p232 = scmp.eq.s32.totalorder %s29, 0
      %p233 = por %p231, %p232
      %p234 = scmp.ne.s32.totalorder %s222, %s223
      %p235 = scmp.eq.s32.totalorder %s30, 1
      %p236 = por %p234, %p235
      %p238 = scmp.ne.s32.totalorder %s223, %s237
      %p239 = scmp.eq.s32.totalorder %s30, 0
      %p240 = por %p238, %p239
      %s242 = sadd.s32 %s241, 1
      %p245 = scmp.eq.s32.totalorder %s24, 1
      %p246 = scmp.ne.s32.totalorder %s241, %s243
      %p247 = scmp.eq.s32.totalorder %s24, 0
      %p248 = por %p246, %p247
      %p249 = scmp.ne.s32.totalorder %s241, %s243
      %p250 = scmp.eq.s32.totalorder %s29, 1
      %p251 = por %p249, %p250
      %p252 = scmp.ne.s32.totalorder %s243, %s244
      %p253 = scmp.eq.s32.totalorder %s29, 0
      %p254 = por %p252, %p253
      %p255 = scmp.ne.s32.totalorder %s243, %s244
      %p256 = scmp.eq.s32.totalorder %s30, 1
      %p257 = por %p255, %p256
      %p259 = scmp.ne.s32.totalorder %s244, %s258
      %p260 = scmp.eq.s32.totalorder %s30, 0
      %p261 = por %p259, %p260
      %s262 = ssub.s32 %s24, %s31
      %p263 = scmp.eq.s32.totalorder %s262, 0
      %s265 = sadd.s32 %s264, 1
      %s266 = scalar_select %p263, %s264, %s265
      %p269 = pneg %p263
      %p270 = scmp.eq.s32.totalorder %s24, 1
      %p271 = por %p269, %p270
      %p272 = scmp.ne.s32.totalorder %s264, %s267
      %p273 = scmp.eq.s32.totalorder %s24, 0
      %p274 = por %p272, %p273
      %p275 = scmp.ne.s32.totalorder %s264, %s267
      %p276 = scmp.eq.s32.totalorder %s29, 1
      %p277 = por %p275, %p276
      %p278 = scmp.ne.s32.totalorder %s267, %s268
      %p279 = scmp.eq.s32.totalorder %s29, 0
      %p280 = por %p278, %p279
      %p281 = scmp.ne.s32.totalorder %s267, %s268
      %p282 = scmp.eq.s32.totalorder %s30, 1
      %p283 = por %p281, %p282
      %p285 = scmp.ne.s32.totalorder %s268, %s284
      %p286 = scmp.eq.s32.totalorder %s30, 0
      %p287 = por %p285, %p286
      %s288 = ssub.s32 %s24, %s31
      %p289 = scmp.eq.s32.totalorder %s288, 0
      %s291 = sadd.s32 %s290, 1
      %s292 = scalar_select %p289, %s290, %s291
      %p295 = pneg %p289
      %p296 = scmp.eq.s32.totalorder %s24, 1
      %p297 = por %p295, %p296
      %p298 = scmp.ne.s32.totalorder %s290, %s293
      %p299 = scmp.eq.s32.totalorder %s24, 0
      %p300 = por %p298, %p299
      %p301 = scmp.ne.s32.totalorder %s290, %s293
      %p302 = scmp.eq.s32.totalorder %s29, 1
      %p303 = por %p301, %p302
      %p304 = scmp.ne.s32.totalorder %s293, %s294
      %p305 = scmp.eq.s32.totalorder %s29, 0
      %p306 = por %p304, %p305
      %p307 = scmp.ne.s32.totalorder %s293, %s294
      %p308 = scmp.eq.s32.totalorder %s30, 1
      %p309 = por %p307, %p308
      %p311 = scmp.ne.s32.totalorder %s294, %s310
      %p312 = scmp.eq.s32.totalorder %s30, 0
      %p313 = por %p311, %p312
      %p314 = scmp.le.s32.totalorder 1, %s24
      %p315 = scmp.lt.s32.totalorder %s24, 3
      %p316 = pnand %p314, %p315
      %p317 = pneg %p316
      // Predicated region
      $region9: #{rgat_absa_forward.13} parent=5 // pred_check
        _
      $region10: #{rgat_absa_forward.13} parent=5 // pred_check_branch
        %319 = sbr.rel (%p316) target = $region12
      $region11: #{rgat_absa_forward.13} parent=5 // pred_region
        %s320 = ssub.s32 %s24, 1
        // Predicated region
        $region13: #{rgat_absa_forward.13} parent=11 // pred_check
          %p321 = pneg %p149
        $region14: #{rgat_absa_forward.13} parent=11 // pred_check_branch
          %323 = sbr.rel (%p321) target = $region16
        $region15: #{rgat_absa_forward.13} parent=11 // pred_region
          _
        $region16: #{rgat_absa_forward.13} parent=11 // pred_fallthru
          _
        // Predicated region
        $region17: #{rgat_absa_forward.13} parent=11 // pred_check
          %p324 = pneg %p170
        $region18: #{rgat_absa_forward.13} parent=11 // pred_check_branch
          %326 = sbr.rel (%p324) target = $region20
        $region19: #{rgat_absa_forward.13} parent=11 // pred_region
          _
        $region20: #{rgat_absa_forward.13} parent=11 // pred_fallthru
          _
        // Predicated region
        $region21: #{rgat_absa_forward.13} parent=11 // pred_check
          %p327 = pneg %p191
        $region22: #{rgat_absa_forward.13} parent=11 // pred_check_branch
          %329 = sbr.rel (%p327) target = $region24
        $region23: #{rgat_absa_forward.13} parent=11 // pred_region
          _
        $region24: #{rgat_absa_forward.13} parent=11 // pred_fallthru
          _
        // Predicated region
        $region25: #{rgat_absa_forward.13} parent=11 // pred_check
          %p330 = pneg %p212
        $region26: #{rgat_absa_forward.13} parent=11 // pred_check_branch
          %332 = sbr.rel (%p330) target = $region28
        $region27: #{rgat_absa_forward.13} parent=11 // pred_region
          _
        $region28: #{rgat_absa_forward.13} parent=11 // pred_fallthru
          _
        // Predicated region
        $region29: #{rgat_absa_forward.13} parent=11 // pred_check
          %p333 = pneg %p233
        $region30: #{rgat_absa_forward.13} parent=11 // pred_check_branch
          %335 = sbr.rel (%p333) target = $region32
        $region31: #{rgat_absa_forward.13} parent=11 // pred_region
          _
        $region32: #{rgat_absa_forward.13} parent=11 // pred_fallthru
          _
        // Predicated region
        $region33: #{rgat_absa_forward.13} parent=11 // pred_check
          %p336 = pneg %p254
        $region34: #{rgat_absa_forward.13} parent=11 // pred_check_branch
          %338 = sbr.rel (%p336) target = $region36
        $region35: #{rgat_absa_forward.13} parent=11 // pred_region
          _
        $region36: #{rgat_absa_forward.13} parent=11 // pred_fallthru
          _
      $region12: #{rgat_absa_forward.13} parent=5 // pred_fallthru
        _
      %p339 = scmp.lt.s32.totalorder %s24, 2
      // Predicated region
      $region37: #{rgat_absa_forward.13} parent=5 // pred_check
        %p340 = pneg %p339
      $region38: #{rgat_absa_forward.13} parent=5 // pred_check_branch
        %342 = sbr.rel (%p340) target = $region40
      $region39: #{rgat_absa_forward.13} parent=5 // pred_region
        // Predicated region
        $region41: #{rgat_absa_forward.13} parent=39 // pred_check
          %p343 = pneg %p44
        $region42: #{rgat_absa_forward.13} parent=39 // pred_check_branch
          %345 = sbr.rel (%p343) target = $region44
        $region43: #{rgat_absa_forward.13} parent=39 // pred_region
          %p346 = scmp.lt.s32.totalorder %s24, 1
          %s347 = scalar_select %p346, %s24, 1
          %s348 = smul.addr %s347, 8
          %s349 = scalar_lea.vmem %s0, %s348
        $region44: #{rgat_absa_forward.13} parent=39 // pred_fallthru
          _
        // Predicated region
        $region45: #{rgat_absa_forward.13} parent=39 // pred_check
          %p350 = pneg %p70
        $region46: #{rgat_absa_forward.13} parent=39 // pred_check_branch
          %352 = sbr.rel (%p350) target = $region48
        $region47: #{rgat_absa_forward.13} parent=39 // pred_region
          %p353 = scmp.lt.s32.totalorder %s24, 1
          %s354 = scalar_select %p353, %s24, 1
          %s355 = smul.addr %s354, 8
          %s356 = scalar_lea.vmem %s1, %s355
        $region48: #{rgat_absa_forward.13} parent=39 // pred_fallthru
          _
        // Predicated region
        $region49: #{rgat_absa_forward.13} parent=39 // pred_check
          %p357 = pneg %p96
        $region50: #{rgat_absa_forward.13} parent=39 // pred_check_branch
          %359 = sbr.rel (%p357) target = $region52
        $region51: #{rgat_absa_forward.13} parent=39 // pred_region
          %p360 = scmp.lt.s32.totalorder %s24, 1
          %s361 = scalar_select %p360, %s24, 1
          %s362 = smul.addr %s361, 8
          %s363 = scalar_lea.vmem %s2, %s362
        $region52: #{rgat_absa_forward.13} parent=39 // pred_fallthru
          _
        // Predicated region
        $region53: #{rgat_absa_forward.13} parent=39 // pred_check
          %p364 = pneg %p122
        $region54: #{rgat_absa_forward.13} parent=39 // pred_check_branch
          %366 = sbr.rel (%p364) target = $region56
        $region55: #{rgat_absa_forward.13} parent=39 // pred_region
          %p367 = scmp.lt.s32.totalorder %s24, 1
          %s368 = scalar_select %p367, %s24, 1
          %s369 = scalar_lea.vmem %s3, %s368
        $region56: #{rgat_absa_forward.13} parent=39 // pred_fallthru
          _
      $region40: #{rgat_absa_forward.13} parent=5 // pred_fallthru
        _
      %p370 = scmp.le.s32.totalorder 1, %s24
      %p371 = scmp.lt.s32.totalorder %s24, 3
      %p372 = pnand %p370, %p371
      %p373 = pneg %p372
      // Predicated region
      $region57: #{rgat_absa_forward.13} parent=5 // pred_check
        _
      $region58: #{rgat_absa_forward.13} parent=5 // pred_check_branch
        %375 = sbr.rel (%p372) target = $region60
      $region59: #{rgat_absa_forward.13} parent=5 // pred_region
        %s376 = ssub.s32 %s24, 1
        %p377 = scmp.lt.s32.totalorder %s29, 1
        %s378 = scalar_select %p377, %s29, 1
        %s379 = smul.addr %s378, 8
        %s380 = scalar_lea.vmem %s0, %s379
        %p381 = pneg %p50
        %p382 = pneg %p47
        %p383 = scmp.lt.s32.totalorder %s29, 1
        %s384 = scalar_select %p383, %s29, 1
        %s385 = smul.addr %s384, 8
        %s386 = scalar_lea.vmem %s1, %s385
        %p387 = pneg %p76
        %p388 = pneg %p73
        %p389 = scmp.lt.s32.totalorder %s29, 1
        %s390 = scalar_select %p389, %s29, 1
        %s391 = smul.addr %s390, 8
        %s392 = scalar_lea.vmem %s2, %s391
        %p393 = pneg %p102
        %p394 = pneg %p99
        %p395 = scmp.lt.s32.totalorder %s29, 1
        %s396 = scalar_select %p395, %s29, 1
        %s397 = scalar_lea.vmem %s3, %s396
        %p398 = pneg %p128
        %p399 = pneg %p125
        %p400 = pneg %p149
        %p401 = pneg %p146
        %p402 = pneg %p170
        %p403 = pneg %p167
        %p404 = pneg %p191
        %p405 = pneg %p188
        %p406 = pneg %p212
        %p407 = pneg %p209
        %p408 = pneg %p233
        %p409 = pneg %p230
        %p410 = pneg %p254
        %p411 = pneg %p251
        %p412 = pneg %p280
        %p413 = pneg %p277
        %s414 = sand.u32 %s267, 1
        %s415 = scalar_lea.sflag [#allocation3], %s414
        %s416 = sand.u32 %s267, 1
        %s417 = scalar_lea.vmem [#allocation2], %s416
        %p418 = pneg %p306
        %p419 = pneg %p303
        %s420 = sand.u32 %s293, 1
        %s421 = scalar_lea.sflag [#allocation5], %s420
        %s422 = sand.u32 %s293, 1
        %s423 = scalar_lea.vmem [#allocation4], %s422
        %p424 = scmp.lt.s32.totalorder %s29, 1
        %s425 = scalar_select %p424, %s29, 1
        %s426 = smul.addr %s425, 8
        %s427 = scalar_lea.vmem %s0, %s426
        %p428 = scmp.lt.s32.totalorder %s29, 1
        %s429 = scalar_select %p428, %s29, 1
        %s430 = smul.addr %s429, 8
        %s431 = scalar_lea.vmem %s1, %s430
        %p432 = scmp.lt.s32.totalorder %s29, 1
        %s433 = scalar_select %p432, %s29, 1
        %s434 = smul.addr %s433, 8
        %s435 = scalar_lea.vmem %s2, %s434
        %p436 = scmp.lt.s32.totalorder %s29, 1
        %s437 = scalar_select %p436, %s29, 1
        %s438 = scalar_lea.vmem %s3, %s437
        %v439 = vld [vmem:[%s427] sm:$0xff]
        %v440 = vld [vmem:[%s431] sm:$0xff]
        %v441 = vld [vmem:[%s435] sm:$0xff]
        %vm442 = vcmask 7168
        %v443 = vsel %vm442, %v441, 0.0
        %v444 = vrot.slane %v443, 4
        %v445 = vadd.f32 %v443, %v444
        %v446 = vrot.slane %v445, 2
        %v447 = vadd.f32 %v445, %v446
        %v448 = vrot.slane %v447, 1
        %v449 = vadd.f32 %v447, %v448
        %v450 = vrcp.pop %v449
        %v451 = vmul.f32 1.0, %v450
        %453 = vset.pattern.permute.xlu0 0
        %454 = vperm.xlu0 %453, %v441
        %v455 = vpop.permute.xlu0 %454
        %v457 = vmul.f32 %v439, %v455
        %vm458 = vcmask 261120
        %v459 = vsel %vm458, %v457, 0.0
        %v460 = vrot.slane %v459, 4
        %v461 = vadd.f32 %v459, %v460
        %v462 = vrot.slane %v461, 2
        %v463 = vadd.f32 %v461, %v462
        %v464 = vrot.slane %v463, 1
        %v465 = vadd.f32 %v463, %v464
        %467 = vset.pattern.permute.xlu0 0
        %468 = vperm.xlu0 %467, %v451
        %v469 = vpop.permute.xlu0 %468
        %v471 = vmul.f32 %v465, %v469
        %v472 = vmul.f32 %v440, %v455
        %v473 = vsel %vm458, %v472, 0.0
        %v474 = vrot.slane %v473, 4
        %v475 = vadd.f32 %v473, %v474
        %v476 = vrot.slane %v475, 2
        %v477 = vadd.f32 %v475, %v476
        %v478 = vrot.slane %v477, 1
        %v479 = vadd.f32 %v477, %v478
        %v480 = vmul.f32 %v479, %v469
        %v481 = vld [vmem:[%s4] sm:$0xff]
        %v482 = vld [vmem:[%s4 + $0x8] sm:$0xff]
        %v483 = vld [vmem:[%s4 + $0x10] sm:$0xff]
        %v484 = vld [vmem:[%s4 + $0x18] sm:$0xff]
        %v485 = vld [vmem:[%s5] sm:$0xff]
        %v486 = vld [vmem:[%s5 + $0x8] sm:$0xff]
        %v487 = vld [vmem:[%s5 + $0x10] sm:$0xff]
        %v488 = vld [vmem:[%s5 + $0x18] sm:$0xff]
        %v490 = vsel %vm458, %v480, 0
        %492 = vmatprep.subr.mxu0 0.0
        %493 = vmatpush1.msra.mxu0 0.0
        %494 = vmatprep.subr.mxu0 0.0
        %495 = vmatpush1.msra.mxu0 0.0
        %496 = vmatprep.subr.mxu0 0.0
        %497 = vmatpush1.msra.mxu0 0.0
        %498 = vmatprep.subr.mxu0 0.0
        %499 = vmatpush1.msra.mxu0 0.0
        %500 = vmatprep.subr.mxu0 0.0
        %501 = vmatpush1.msra.mxu0 0.0
        %502 = vmatprep.subr.mxu0 0.0
        %503 = vmatpush1.msra.mxu0 0.0
        %504 = vmatprep.subr.mxu0 0.0
        %505 = vmatpush1.msra.mxu0 0.0
        %506 = vmatprep.subr.mxu0 0.0
        %507 = vmatpush1.msra.mxu0 0.0
        %508 = vmatprep.subr.mxu0 0.0
        %509 = vmatpush1.msra.mxu0 0.0
        %510 = vmatprep.subr.mxu0 0.0
        %511 = vmatpush1.msra.mxu0 0.0
        %512 = vmatprep.subr.mxu0 0.0
        %513 = vmatpush1.msra.mxu0 0.0
        %514 = vmatprep.subr.mxu0 0.0
        %515 = vmatpush1.msra.mxu0 0.0
        %516 = vmatprep.subr.mxu0 0.0
        %517 = vmatpush1.msra.mxu0 %v488
        %518 = vmatprep.subr.mxu0 0.0
        %519 = vmatpush1.msra.mxu0 %v487
        %520 = vmatprep.subr.mxu0 0.0
        %521 = vmatpush1.msra.mxu0 %v486
        %522 = vmatprep.subr.mxu0 0.0
        %523 = vmatpush1.msra.mxu0 %v485
        %524 = vmatprep.subr.mxu0 0.0
        %525 = vmatpush2.msra.mxu0 0.0
        %526 = vmatprep.subr.mxu0 0.0
        %527 = vmatpush2.msra.mxu0 0.0
        %528 = vmatprep.subr.mxu0 0.0
        %529 = vmatpush2.msra.mxu0 0.0
        %530 = vmatprep.subr.mxu0 0.0
        %531 = vmatpush2.msra.mxu0 0.0
        %532 = vmatprep.subr.mxu0 0.0
        %533 = vmatpush2.msra.mxu0 0.0
        %534 = vmatprep.subr.mxu0 0.0
        %535 = vmatpush2.msra.mxu0 0.0
        %536 = vmatprep.subr.mxu0 0.0
        %537 = vmatpush2.msra.mxu0 0.0
        %538 = vmatprep.subr.mxu0 0.0
        %539 = vmatpush2.msra.mxu0 0.0
        %540 = vmatprep.subr.mxu0 0.0
        %541 = vmatpush2.msra.mxu0 0.0
        %542 = vmatprep.subr.mxu0 0.0
        %543 = vmatpush2.msra.mxu0 0.0
        %544 = vmatprep.subr.mxu0 0.0
        %545 = vmatpush2.msra.mxu0 0.0
        %546 = vmatprep.subr.mxu0 0.0
        %547 = vmatpush2.msra.mxu0 0.0
        %548 = vmatprep.subr.mxu0 0.0
        %549 = vmatpush2.msra.mxu0 0.0
        %550 = vmatprep.subr.mxu0 0.0
        %551 = vmatpush2.msra.mxu0 0.0
        %552 = vmatprep.subr.mxu0 0.0
        %553 = vmatpush2.msra.mxu0 0.0
        %554 = vmatprep.subr.mxu0 0.0
        %555 = vmatpush2.msra.mxu0 0.0
        %556 = vmatprep.mubr.f32.mxu0 0.0
        %557 = vmatmul.mubr.f32.gmra.mxu0 %v490
        %v558 = vpop.f32.mrf.mxu0
        %v559 = vadd.f32 0.0, %v558
        %v560 = vpop.f32.mrf.mxu0
        %561 = vdwg.mxu0
        %v563 = vsel %vm458, %v471, 0
        %565 = vmatprep.subr.mxu0 0.0
        %566 = vmatpush1.msra.mxu0 0.0
        %567 = vmatprep.subr.mxu0 0.0
        %568 = vmatpush1.msra.mxu0 0.0
        %569 = vmatprep.subr.mxu0 0.0
        %570 = vmatpush1.msra.mxu0 0.0
        %571 = vmatprep.subr.mxu0 0.0
        %572 = vmatpush1.msra.mxu0 0.0
        %573 = vmatprep.subr.mxu0 0.0
        %574 = vmatpush1.msra.mxu0 0.0
        %575 = vmatprep.subr.mxu0 0.0
        %576 = vmatpush1.msra.mxu0 0.0
        %577 = vmatprep.subr.mxu0 0.0
        %578 = vmatpush1.msra.mxu0 0.0
        %579 = vmatprep.subr.mxu0 0.0
        %580 = vmatpush1.msra.mxu0 0.0
        %581 = vmatprep.subr.mxu0 0.0
        %582 = vmatpush1.msra.mxu0 0.0
        %583 = vmatprep.subr.mxu0 0.0
        %584 = vmatpush1.msra.mxu0 0.0
        %585 = vmatprep.subr.mxu0 0.0
        %586 = vmatpush1.msra.mxu0 0.0
        %587 = vmatprep.subr.mxu0 0.0
        %588 = vmatpush1.msra.mxu0 0.0
        %589 = vmatprep.subr.mxu0 0.0
        %590 = vmatpush1.msra.mxu0 %v484
        %591 = vmatprep.subr.mxu0 0.0
        %592 = vmatpush1.msra.mxu0 %v483
        %593 = vmatprep.subr.mxu0 0.0
        %594 = vmatpush1.msra.mxu0 %v482
        %595 = vmatprep.subr.mxu0 0.0
        %596 = vmatpush1.msra.mxu0 %v481
        %597 = vmatprep.subr.mxu0 0.0
        %598 = vmatpush2.msra.mxu0 0.0
        %599 = vmatprep.subr.mxu0 0.0
        %600 = vmatpush2.msra.mxu0 0.0
        %601 = vmatprep.subr.mxu0 0.0
        %602 = vmatpush2.msra.mxu0 0.0
        %603 = vmatprep.subr.mxu0 0.0
        %604 = vmatpush2.msra.mxu0 0.0
        %605 = vmatprep.subr.mxu0 0.0
        %606 = vmatpush2.msra.mxu0 0.0
        %607 = vmatprep.subr.mxu0 0.0
        %608 = vmatpush2.msra.mxu0 0.0
        %609 = vmatprep.subr.mxu0 0.0
        %610 = vmatpush2.msra.mxu0 0.0
        %611 = vmatprep.subr.mxu0 0.0
        %612 = vmatpush2.msra.mxu0 0.0
        %613 = vmatprep.subr.mxu0 0.0
        %614 = vmatpush2.msra.mxu0 0.0
        %615 = vmatprep.subr.mxu0 0.0
        %616 = vmatpush2.msra.mxu0 0.0
        %617 = vmatprep.subr.mxu0 0.0
        %618 = vmatpush2.msra.mxu0 0.0
        %619 = vmatprep.subr.mxu0 0.0
        %620 = vmatpush2.msra.mxu0 0.0
        %621 = vmatprep.subr.mxu0 0.0
        %622 = vmatpush2.msra.mxu0 0.0
        %623 = vmatprep.subr.mxu0 0.0
        %624 = vmatpush2.msra.mxu0 0.0
        %625 = vmatprep.subr.mxu0 0.0
        %626 = vmatpush2.msra.mxu0 0.0
        %627 = vmatprep.subr.mxu0 0.0
        %628 = vmatpush2.msra.mxu0 0.0
        %629 = vmatprep.mubr.f32.mxu0 0.0
        %630 = vmatmul.mubr.f32.gmra.mxu0 %v563
        %v631 = vpop.f32.mrf.mxu0
        %v632 = vadd.f32 %v559, %v631
        %v633 = vpop.f32.mrf.mxu0
        %634 = vdwg.mxu0
        %v635 = vld [vmem:[%s6] sm:$0x1]
        %v636 = vadd.f32 %v632, %v635
        %v637 = vxor.u32 %v636, 2147483648
        %v638 = vmul.f32 %v637, 1.442695
        %v639 = vpow.pop %v638
        %v640 = vadd.f32 %v639, 1.0
        %v641 = vrcp.pop %v640
        %v642 = vmul.f32 1.0, %v641
        %v643 = vmul.f32 %v642, %v471
        %v644 = vsub.f32 1.0, %v642
        %v645 = vmul.f32 %v644, %v480
        %v646 = vadd.f32 %v643, %v645
        %v647 = vld [vmem:[%s438] sm:$0x1]
        %v648 = vld [vmem:[%s7] sm:$0xff]
        %v649 = vld [vmem:[%s7 + $0x8] sm:$0xff]
        %v650 = vld [vmem:[%s7 + $0x10] sm:$0xff]
        %v651 = vld [vmem:[%s7 + $0x18] sm:$0xff]
        %v652 = vld [vmem:[%s8] sm:$0xff]
        %v653 = vld [vmem:[%s8 + $0x8] sm:$0xff]
        %v654 = vld [vmem:[%s8 + $0x10] sm:$0xff]
        %v655 = vld [vmem:[%s8 + $0x18] sm:$0xff]
        %v657 = vsel %vm458, %v647, 0
        %659 = vmatprep.subr.mxu0 0.0
        %660 = vmatpush1.msra.mxu0 0.0
        %661 = vmatprep.subr.mxu0 0.0
        %662 = vmatpush1.msra.mxu0 0.0
        %663 = vmatprep.subr.mxu0 0.0
        %664 = vmatpush1.msra.mxu0 0.0
        %665 = vmatprep.subr.mxu0 0.0
        %666 = vmatpush1.msra.mxu0 0.0
        %667 = vmatprep.subr.mxu0 0.0
        %668 = vmatpush1.msra.mxu0 0.0
        %669 = vmatprep.subr.mxu0 0.0
        %670 = vmatpush1.msra.mxu0 0.0
        %671 = vmatprep.subr.mxu0 0.0
        %672 = vmatpush1.msra.mxu0 0.0
        %673 = vmatprep.subr.mxu0 0.0
        %674 = vmatpush1.msra.mxu0 0.0
        %675 = vmatprep.subr.mxu0 0.0
        %676 = vmatpush1.msra.mxu0 0.0
        %677 = vmatprep.subr.mxu0 0.0
        %678 = vmatpush1.msra.mxu0 0.0
        %679 = vmatprep.subr.mxu0 0.0
        %680 = vmatpush1.msra.mxu0 0.0
        %681 = vmatprep.subr.mxu0 0.0
        %682 = vmatpush1.msra.mxu0 0.0
        %683 = vmatprep.subr.mxu0 0.0
        %684 = vmatpush1.msra.mxu0 %v655
        %685 = vmatprep.subr.mxu0 0.0
        %686 = vmatpush1.msra.mxu0 %v654
        %687 = vmatprep.subr.mxu0 0.0
        %688 = vmatpush1.msra.mxu0 %v653
        %689 = vmatprep.subr.mxu0 0.0
        %690 = vmatpush1.msra.mxu0 %v652
        %691 = vmatprep.subr.mxu0 0.0
        %692 = vmatpush2.msra.mxu0 0.0
        %693 = vmatprep.subr.mxu0 0.0
        %694 = vmatpush2.msra.mxu0 0.0
        %695 = vmatprep.subr.mxu0 0.0
        %696 = vmatpush2.msra.mxu0 0.0
        %697 = vmatprep.subr.mxu0 0.0
        %698 = vmatpush2.msra.mxu0 0.0
        %699 = vmatprep.subr.mxu0 0.0
        %700 = vmatpush2.msra.mxu0 0.0
        %701 = vmatprep.subr.mxu0 0.0
        %702 = vmatpush2.msra.mxu0 0.0
        %703 = vmatprep.subr.mxu0 0.0
        %704 = vmatpush2.msra.mxu0 0.0
        %705 = vmatprep.subr.mxu0 0.0
        %706 = vmatpush2.msra.mxu0 0.0
        %707 = vmatprep.subr.mxu0 0.0
        %708 = vmatpush2.msra.mxu0 0.0
        %709 = vmatprep.subr.mxu0 0.0
        %710 = vmatpush2.msra.mxu0 0.0
        %711 = vmatprep.subr.mxu0 0.0
        %712 = vmatpush2.msra.mxu0 0.0
        %713 = vmatprep.subr.mxu0 0.0
        %714 = vmatpush2.msra.mxu0 0.0
        %715 = vmatprep.subr.mxu0 0.0
        %716 = vmatpush2.msra.mxu0 0.0
        %717 = vmatprep.subr.mxu0 0.0
        %718 = vmatpush2.msra.mxu0 0.0
        %719 = vmatprep.subr.mxu0 0.0
        %720 = vmatpush2.msra.mxu0 0.0
        %721 = vmatprep.subr.mxu0 0.0
        %722 = vmatpush2.msra.mxu0 0.0
        %723 = vmatprep.mubr.f32.mxu0 0.0
        %724 = vmatmul.mubr.f32.gmra.mxu0 %v657
        %v725 = vpop.f32.mrf.mxu0
        %v726 = vadd.f32 0.0, %v725
        %v727 = vpop.f32.mrf.mxu0
        %728 = vdwg.mxu0
        %v730 = vsel %vm458, %v646, 0
        %732 = vmatprep.subr.mxu0 0.0
        %733 = vmatpush1.msra.mxu0 0.0
        %734 = vmatprep.subr.mxu0 0.0
        %735 = vmatpush1.msra.mxu0 0.0
        %736 = vmatprep.subr.mxu0 0.0
        %737 = vmatpush1.msra.mxu0 0.0
        %738 = vmatprep.subr.mxu0 0.0
        %739 = vmatpush1.msra.mxu0 0.0
        %740 = vmatprep.subr.mxu0 0.0
        %741 = vmatpush1.msra.mxu0 0.0
        %742 = vmatprep.subr.mxu0 0.0
        %743 = vmatpush1.msra.mxu0 0.0
        %744 = vmatprep.subr.mxu0 0.0
        %745 = vmatpush1.msra.mxu0 0.0
        %746 = vmatprep.subr.mxu0 0.0
        %747 = vmatpush1.msra.mxu0 0.0
        %748 = vmatprep.subr.mxu0 0.0
        %749 = vmatpush1.msra.mxu0 0.0
        %750 = vmatprep.subr.mxu0 0.0
        %751 = vmatpush1.msra.mxu0 0.0
        %752 = vmatprep.subr.mxu0 0.0
        %753 = vmatpush1.msra.mxu0 0.0
        %754 = vmatprep.subr.mxu0 0.0
        %755 = vmatpush1.msra.mxu0 0.0
        %756 = vmatprep.subr.mxu0 0.0
        %757 = vmatpush1.msra.mxu0 %v651
        %758 = vmatprep.subr.mxu0 0.0
        %759 = vmatpush1.msra.mxu0 %v650
        %760 = vmatprep.subr.mxu0 0.0
        %761 = vmatpush1.msra.mxu0 %v649
        %762 = vmatprep.subr.mxu0 0.0
        %763 = vmatpush1.msra.mxu0 %v648
        %764 = vmatprep.subr.mxu0 0.0
        %765 = vmatpush2.msra.mxu0 0.0
        %766 = vmatprep.subr.mxu0 0.0
        %767 = vmatpush2.msra.mxu0 0.0
        %768 = vmatprep.subr.mxu0 0.0
        %769 = vmatpush2.msra.mxu0 0.0
        %770 = vmatprep.subr.mxu0 0.0
        %771 = vmatpush2.msra.mxu0 0.0
        %772 = vmatprep.subr.mxu0 0.0
        %773 = vmatpush2.msra.mxu0 0.0
        %774 = vmatprep.subr.mxu0 0.0
        %775 = vmatpush2.msra.mxu0 0.0
        %776 = vmatprep.subr.mxu0 0.0
        %777 = vmatpush2.msra.mxu0 0.0
        %778 = vmatprep.subr.mxu0 0.0
        %779 = vmatpush2.msra.mxu0 0.0
        %780 = vmatprep.subr.mxu0 0.0
        %781 = vmatpush2.msra.mxu0 0.0
        %782 = vmatprep.subr.mxu0 0.0
        %783 = vmatpush2.msra.mxu0 0.0
        %784 = vmatprep.subr.mxu0 0.0
        %785 = vmatpush2.msra.mxu0 0.0
        %786 = vmatprep.subr.mxu0 0.0
        %787 = vmatpush2.msra.mxu0 0.0
        %788 = vmatprep.subr.mxu0 0.0
        %789 = vmatpush2.msra.mxu0 0.0
        %790 = vmatprep.subr.mxu0 0.0
        %791 = vmatpush2.msra.mxu0 0.0
        %792 = vmatprep.subr.mxu0 0.0
        %793 = vmatpush2.msra.mxu0 0.0
        %794 = vmatprep.subr.mxu0 0.0
        %795 = vmatpush2.msra.mxu0 0.0
        %796 = vmatprep.mubr.f32.mxu0 0.0
        %797 = vmatmul.mubr.f32.gmra.mxu0 %v730
        %v798 = vpop.f32.mrf.mxu0
        %v799 = vadd.f32 %v726, %v798
        %v800 = vpop.f32.mrf.mxu0
        %801 = vdwg.mxu0
        %v802 = vld [vmem:[%s9] sm:$0x1]
        %v803 = vadd.f32 %v799, %v802
        %vm804 = vcmask 16384
        %805 = vst.msk [vmem:[%s417] sm:$0x1] %vm804, %v803
        %v806 = vlaneseq
        %v807 = vshrl.u32 %v806, 7
        %v808 = vsub.s32 0, %v807
        %v809 = vrot.slane %v647, %v808
        %810 = vrot.lane.b32.xlu0 %v809, 32
        %v811 = vpop.permute.xlu0 %810
        %v813 = vsel %vm458, %v646, %v811
        %vm814 = vcmask 516096
        %815 = vst.msk [vmem:[%s423] sm:$0x1] %vm814, %v813
        %s816 = sand.u32 %s267, 1
        %s817 = scalar_lea.sflag [#allocation3], %s816
        %s818 = sand.u32 %s267, 1
        %s819 = scalar_lea.vmem [#allocation2], %s818
        %s820 = sand.u32 %s293, 1
        %s821 = scalar_lea.sflag [#allocation5], %s820
        %s822 = sand.u32 %s293, 1
        %s823 = scalar_lea.vmem [#allocation4], %s822
        // Predicated region
        $region61: #{rgat_absa_forward.13} parent=59 // pred_check
          %p824 = pneg %p277
        $region62: #{rgat_absa_forward.13} parent=59 // pred_check_branch
          %826 = sbr.rel (%p824) target = $region64
        $region63: #{rgat_absa_forward.13} parent=59 // pred_region
          %s828 = ssub.s32 16, 16
          %829 = vsyncadd %s817, %s828
          %s830 = smul.addr %s29, 16
          %s831 = scalar_lea.hbm %s10, %s830
          %s833 = sshll.u32 %s819, 4
          %s834 = int_to_ptr.vmem [resolvable:$true] %s833
          %836 = dma.vmem_to_hbm [thread:$0]  %s834, 16, %s831, %s817
        $region64: #{rgat_absa_forward.13} parent=59 // pred_fallthru
          _
        // Predicated region
        $region65: #{rgat_absa_forward.13} parent=59 // pred_check
          %p837 = pneg %p303
        $region66: #{rgat_absa_forward.13} parent=59 // pred_check_branch
          %839 = sbr.rel (%p837) target = $region68
        $region67: #{rgat_absa_forward.13} parent=59 // pred_region
          %s841 = ssub.s32 16, 16
          %842 = vsyncadd %s821, %s841
          %s843 = smul.addr %s29, 16
          %s844 = scalar_lea.hbm %s11, %s843
          %s846 = sshll.u32 %s823, 4
          %s847 = int_to_ptr.vmem [resolvable:$true] %s846
          %849 = dma.vmem_to_hbm [thread:$0]  %s847, 16, %s844, %s821
        $region68: #{rgat_absa_forward.13} parent=59 // pred_fallthru
          _
      $region60: #{rgat_absa_forward.13} parent=5 // pred_fallthru
        _
      %p850 = scmp.le.s32.totalorder 2, %s24
      // Predicated region
      $region69: #{rgat_absa_forward.13} parent=5 // pred_check
        %p851 = pneg %p850
      $region70: #{rgat_absa_forward.13} parent=5 // pred_check_branch
        %853 = sbr.rel (%p851) target = $region72
      $region71: #{rgat_absa_forward.13} parent=5 // pred_region
        %s854 = ssub.s32 %s24, 2
        // Predicated region
        $region73: #{rgat_absa_forward.13} parent=71 // pred_check
          %p855 = pneg %p283
        $region74: #{rgat_absa_forward.13} parent=71 // pred_check_branch
          %857 = sbr.rel (%p855) target = $region76
        $region75: #{rgat_absa_forward.13} parent=71 // pred_region
          %s858 = sand.u32 %s268, 1
          %s859 = scalar_lea.sflag [#allocation3], %s858
          %s860 = sand.u32 %s268, 1
          %s861 = scalar_lea.vmem [#allocation2], %s860
          %862 = dma.done %s859, 16
        $region76: #{rgat_absa_forward.13} parent=71 // pred_fallthru
          _
        // Predicated region
        $region77: #{rgat_absa_forward.13} parent=71 // pred_check
          %p863 = pneg %p309
        $region78: #{rgat_absa_forward.13} parent=71 // pred_check_branch
          %865 = sbr.rel (%p863) target = $region80
        $region79: #{rgat_absa_forward.13} parent=71 // pred_region
          %s866 = sand.u32 %s294, 1
          %s867 = scalar_lea.sflag [#allocation5], %s866
          %s868 = sand.u32 %s294, 1
          %s869 = scalar_lea.vmem [#allocation4], %s868
          %870 = dma.done %s867, 16
        $region80: #{rgat_absa_forward.13} parent=71 // pred_fallthru
          _
      $region72: #{rgat_absa_forward.13} parent=5 // pred_fallthru
        _
    $region6: #{rgat_absa_forward.13} parent=1 // loop_footer
      %s28 = sadd.s32 1, %s24
    $region7: #{rgat_absa_forward.13} parent=1 // loop_footer_branch
      %23 = sbr.rel target = $region3
    $region8: #{rgat_absa_forward.13} parent=1 // loop_exit
      _
    %871 = vsyncpa [#allocation3], 1
    %s872 = scalar_lea.sflag [#allocation3], 1
    %873 = vsyncpa %s872, 1
    %874 = vsyncpa [#allocation5], 1
    %s875 = scalar_lea.sflag [#allocation5], 1
    %876 = vsyncpa %s875, 1

// kernel: rgat_absa_forward.11
$region0: #{rgat_absa_forward.11}
  #allocation0 [shape = 'u32[]', space=smem, size = 0x4, offset = 0x4, fixed_abs, tag = 'smem constant byte address 0x4 - core index']
  #allocation1 [shape = 'u32[144,128]{1,0:T(1,128)}', space=vmem, size = 0x12000, scoped, tag = 'internal scratch']
  %s0 = inlined_call_operand.vmem [shape: f32[2,8,32], index: 0, kind: input, shape index: {}]
  %s1 = inlined_call_operand.vmem [shape: f32[2,8,8], index: 1, kind: input, shape index: {}]
  %s2 = inlined_call_operand.vmem [shape: f32[2,8,8,16], index: 2, kind: input, shape index: {}]
  %s3 = inlined_call_operand.vmem [shape: f32[32,96], index: 3, kind: input, shape index: {}]
  %s4 = inlined_call_operand.vmem [shape: f32[1,96], index: 4, kind: input, shape index: {}]
  %s5 = inlined_call_operand.vmem [shape: f32[16,8], index: 5, kind: input, shape index: {}]
  %s6 = inlined_call_operand.vmem [shape: f32[1,8], index: 6, kind: input, shape index: {}]
  %s7 = inlined_call_operand.vmem [shape: f32[16,8], index: 7, kind: input, shape index: {}]
  %s8 = inlined_call_operand.vmem [shape: f32[1,8], index: 8, kind: input, shape index: {}]
  %s9 = inlined_call_operand.vmem [shape: f32[32,32], index: 9, kind: input, shape index: {}]
  %s10 = inlined_call_operand.vmem [shape: f32[1,32], index: 10, kind: input, shape index: {}]
  %s11 = inlined_call_operand.vmem [shape: f32[1,32], index: 11, kind: input, shape index: {}]
  %s12 = inlined_call_operand.vmem [shape: f32[1,32], index: 12, kind: input, shape index: {}]
  %s13 = inlined_call_operand.vmem [shape: f32[32,32], index: 13, kind: input, shape index: {}]
  %s14 = inlined_call_operand.vmem [shape: f32[1,32], index: 14, kind: input, shape index: {}]
  %s15 = inlined_call_operand.vmem [shape: f32[32,32], index: 15, kind: input, shape index: {}]
  %s16 = inlined_call_operand.vmem [shape: f32[1,32], index: 16, kind: input, shape index: {}]
  %s17 = inlined_call_operand.vmem [shape: f32[1,32], index: 17, kind: input, shape index: {}]
  %s18 = inlined_call_operand.vmem [shape: f32[1,32], index: 18, kind: input, shape index: {}]
  %s19 = inlined_call_operand.vmem [shape: f32[2,8,32], index: 19, kind: output, shape index: {}]
  %s20 = sld [smem:[#allocation0]]
  $region109: #{rgat_absa_forward.11} parent=0
    _
  %s22 = ssub.s32 1, %s20
  %s23 = scalar_select 0, %s22, %s20
  loop: start=0, step=1, limit=4
  $region2: #{rgat_absa_forward.11} parent=0 // loop_pre_header
    _
  $region3: #{rgat_absa_forward.11} parent=0 // loop_header
    %s25 = sphi 0, %s29
    %p26 = scmp.ge.s32.totalorder %s25, 4
    %s35 = sphi 0, %s37
    %s38 = sphi 0, %s35
    %s39 = sphi 0, %s38
    %s55 = sphi 0, %s39
    %s61 = sphi 0, %s63
    %s64 = sphi 0, %s61
    %s65 = sphi 0, %s64
    %s81 = sphi 0, %s65
    %s87 = sphi 0, %s89
    %s90 = sphi 0, %s87
    %s91 = sphi 0, %s90
    %s107 = sphi 0, %s91
    %s111 = sphi 0, %s111
    %s113 = sphi 0, %s111
    %s114 = sphi 0, %s113
    %s128 = sphi 0, %s114
    %s132 = sphi 0, %s132
    %s134 = sphi 0, %s132
    %s135 = sphi 0, %s134
    %s149 = sphi 0, %s135
    %s153 = sphi 0, %s153
    %s155 = sphi 0, %s153
    %s156 = sphi 0, %s155
    %s170 = sphi 0, %s156
    %s174 = sphi 0, %s174
    %s176 = sphi 0, %s174
    %s177 = sphi 0, %s176
    %s191 = sphi 0, %s177
    %s195 = sphi 0, %s195
    %s197 = sphi 0, %s195
    %s198 = sphi 0, %s197
    %s212 = sphi 0, %s198
    %s216 = sphi 0, %s216
    %s218 = sphi 0, %s216
    %s219 = sphi 0, %s218
    %s233 = sphi 0, %s219
    %s237 = sphi 0, %s237
    %s239 = sphi 0, %s237
    %s240 = sphi 0, %s239
    %s254 = sphi 0, %s240
    %s258 = sphi 0, %s258
    %s260 = sphi 0, %s258
    %s261 = sphi 0, %s260
    %s275 = sphi 0, %s261
    %s279 = sphi 0, %s279
    %s281 = sphi 0, %s279
    %s282 = sphi 0, %s281
    %s296 = sphi 0, %s282
    %s300 = sphi 0, %s300
    %s302 = sphi 0, %s300
    %s303 = sphi 0, %s302
    %s317 = sphi 0, %s303
    %s321 = sphi 0, %s321
    %s323 = sphi 0, %s321
    %s324 = sphi 0, %s323
    %s338 = sphi 0, %s324
    %s342 = sphi 0, %s342
    %s344 = sphi 0, %s342
    %s345 = sphi 0, %s344
    %s359 = sphi 0, %s345
    %s363 = sphi 0, %s363
    %s365 = sphi 0, %s363
    %s366 = sphi 0, %s365
    %s380 = sphi 0, %s366
    %s384 = sphi 0, %s384
    %s386 = sphi 0, %s384
    %s387 = sphi 0, %s386
    %s401 = sphi 0, %s387
    %s405 = sphi 0, %s405
    %s407 = sphi 0, %s405
    %s408 = sphi 0, %s407
    %s422 = sphi 0, %s408
    %s426 = sphi 0, %s426
    %s428 = sphi 0, %s426
    %s429 = sphi 0, %s428
    %s443 = sphi 0, %s429
    %s449 = sphi 0, %s451
    %s452 = sphi 0, %s449
    %s453 = sphi 0, %s452
    %s469 = sphi 0, %s453
  $region4: #{rgat_absa_forward.11} parent=0 // loop_header_branch
    %28 = sbr.rel (%p26) target = $region8
  $region5: #{rgat_absa_forward.11} parent=0 // loop_body
    %s30 = ssub.s32 %s25, 1
    %s31 = ssub.s32 %s25, 2
    %s32 = sadd.s32 %s25, 1
    %s33 = ssub.s32 %s25, %s32
    %p34 = scmp.eq.s32.totalorder %s33, 0
    %s36 = sadd.s32 %s35, 1
    %s37 = scalar_select %p34, %s35, %s36
    %p40 = pneg %p34
    %p41 = scmp.eq.s32.totalorder %s25, 1
    %p42 = por %p40, %p41
    %p43 = scmp.ne.s32.totalorder %s35, %s38
    %p44 = scmp.eq.s32.totalorder %s25, 0
    %p45 = por %p43, %p44
    %p46 = scmp.ne.s32.totalorder %s35, %s38
    %p47 = scmp.eq.s32.totalorder %s30, 1
    %p48 = por %p46, %p47
    %p49 = scmp.ne.s32.totalorder %s38, %s39
    %p50 = scmp.eq.s32.totalorder %s30, 0
    %p51 = por %p49, %p50
    %p52 = scmp.ne.s32.totalorder %s38, %s39
    %p53 = scmp.eq.s32.totalorder %s31, 1
    %p54 = por %p52, %p53
    %p56 = scmp.ne.s32.totalorder %s39, %s55
    %p57 = scmp.eq.s32.totalorder %s31, 0
    %p58 = por %p56, %p57
    %s59 = ssub.s32 %s25, %s32
    %p60 = scmp.eq.s32.totalorder %s59, 0
    %s62 = sadd.s32 %s61, 1
    %s63 = scalar_select %p60, %s61, %s62
    %p66 = pneg %p60
    %p67 = scmp.eq.s32.totalorder %s25, 1
    %p68 = por %p66, %p67
    %p69 = scmp.ne.s32.totalorder %s61, %s64
    %p70 = scmp.eq.s32.totalorder %s25, 0
    %p71 = por %p69, %p70
    %p72 = scmp.ne.s32.totalorder %s61, %s64
    %p73 = scmp.eq.s32.totalorder %s30, 1
    %p74 = por %p72, %p73
    %p75 = scmp.ne.s32.totalorder %s64, %s65
    %p76 = scmp.eq.s32.totalorder %s30, 0
    %p77 = por %p75, %p76
    %p78 = scmp.ne.s32.totalorder %s64, %s65
    %p79 = scmp.eq.s32.totalorder %s31, 1
    %p80 = por %p78, %p79
    %p82 = scmp.ne.s32.totalorder %s65, %s81
    %p83 = scmp.eq.s32.totalorder %s31, 0
    %p84 = por %p82, %p83
    %s85 = ssub.s32 %s25, %s32
    %p86 = scmp.eq.s32.totalorder %s85, 0
    %s88 = sadd.s32 %s87, 1
    %s89 = scalar_select %p86, %s87, %s88
    %p92 = pneg %p86
    %p93 = scmp.eq.s32.totalorder %s25, 1
    %p94 = por %p92, %p93
    %p95 = scmp.ne.s32.totalorder %s87, %s90
    %p96 = scmp.eq.s32.totalorder %s25, 0
    %p97 = por %p95, %p96
    %p98 = scmp.ne.s32.totalorder %s87, %s90
    %p99 = scmp.eq.s32.totalorder %s30, 1
    %p100 = por %p98, %p99
    %p101 = scmp.ne.s32.totalorder %s90, %s91
    %p102 = scmp.eq.s32.totalorder %s30, 0
    %p103 = por %p101, %p102
    %p104 = scmp.ne.s32.totalorder %s90, %s91
    %p105 = scmp.eq.s32.totalorder %s31, 1
    %p106 = por %p104, %p105
    %p108 = scmp.ne.s32.totalorder %s91, %s107
    %p109 = scmp.eq.s32.totalorder %s31, 0
    %p110 = por %p108, %p109
    %s112 = sadd.s32 %s111, 1
    %p115 = scmp.eq.s32.totalorder %s25, 1
    %p116 = scmp.ne.s32.totalorder %s111, %s113
    %p117 = scmp.eq.s32.totalorder %s25, 0
    %p118 = por %p116, %p117
    %p119 = scmp.ne.s32.totalorder %s111, %s113
    %p120 = scmp.eq.s32.totalorder %s30, 1
    %p121 = por %p119, %p120
    %p122 = scmp.ne.s32.totalorder %s113, %s114
    %p123 = scmp.eq.s32.totalorder %s30, 0
    %p124 = por %p122, %p123
    %p125 = scmp.ne.s32.totalorder %s113, %s114
    %p126 = scmp.eq.s32.totalorder %s31, 1
    %p127 = por %p125, %p126
    %p129 = scmp.ne.s32.totalorder %s114, %s128
    %p130 = scmp.eq.s32.totalorder %s31, 0
    %p131 = por %p129, %p130
    %s133 = sadd.s32 %s132, 1
    %p136 = scmp.eq.s32.totalorder %s25, 1
    %p137 = scmp.ne.s32.totalorder %s132, %s134
    %p138 = scmp.eq.s32.totalorder %s25, 0
    %p139 = por %p137, %p138
    %p140 = scmp.ne.s32.totalorder %s132, %s134
    %p141 = scmp.eq.s32.totalorder %s30, 1
    %p142 = por %p140, %p141
    %p143 = scmp.ne.s32.totalorder %s134, %s135
    %p144 = scmp.eq.s32.totalorder %s30, 0
    %p145 = por %p143, %p144
    %p146 = scmp.ne.s32.totalorder %s134, %s135
    %p147 = scmp.eq.s32.totalorder %s31, 1
    %p148 = por %p146, %p147
    %p150 = scmp.ne.s32.totalorder %s135, %s149
    %p151 = scmp.eq.s32.totalorder %s31, 0
    %p152 = por %p150, %p151
    %s154 = sadd.s32 %s153, 1
    %p157 = scmp.eq.s32.totalorder %s25, 1
    %p158 = scmp.ne.s32.totalorder %s153, %s155
    %p159 = scmp.eq.s32.totalorder %s25, 0
    %p160 = por %p158, %p159
    %p161 = scmp.ne.s32.totalorder %s153, %s155
    %p162 = scmp.eq.s32.totalorder %s30, 1
    %p163 = por %p161, %p162
    %p164 = scmp.ne.s32.totalorder %s155, %s156
    %p165 = scmp.eq.s32.totalorder %s30, 0
    %p166 = por %p164, %p165
    %p167 = scmp.ne.s32.totalorder %s155, %s156
    %p168 = scmp.eq.s32.totalorder %s31, 1
    %p169 = por %p167, %p168
    %p171 = scmp.ne.s32.totalorder %s156, %s170
    %p172 = scmp.eq.s32.totalorder %s31, 0
    %p173 = por %p171, %p172
    %s175 = sadd.s32 %s174, 1
    %p178 = scmp.eq.s32.totalorder %s25, 1
    %p179 = scmp.ne.s32.totalorder %s174, %s176
    %p180 = scmp.eq.s32.totalorder %s25, 0
    %p181 = por %p179, %p180
    %p182 = scmp.ne.s32.totalorder %s174, %s176
    %p183 = scmp.eq.s32.totalorder %s30, 1
    %p184 = por %p182, %p183
    %p185 = scmp.ne.s32.totalorder %s176, %s177
    %p186 = scmp.eq.s32.totalorder %s30, 0
    %p187 = por %p185, %p186
    %p188 = scmp.ne.s32.totalorder %s176, %s177
    %p189 = scmp.eq.s32.totalorder %s31, 1
    %p190 = por %p188, %p189
    %p192 = scmp.ne.s32.totalorder %s177, %s191
    %p193 = scmp.eq.s32.totalorder %s31, 0
    %p194 = por %p192, %p193
    %s196 = sadd.s32 %s195, 1
    %p199 = scmp.eq.s32.totalorder %s25, 1
    %p200 = scmp.ne.s32.totalorder %s195, %s197
    %p201 = scmp.eq.s32.totalorder %s25, 0
    %p202 = por %p200, %p201
    %p203 = scmp.ne.s32.totalorder %s195, %s197
    %p204 = scmp.eq.s32.totalorder %s30, 1
    %p205 = por %p203, %p204
    %p206 = scmp.ne.s32.totalorder %s197, %s198
    %p207 = scmp.eq.s32.totalorder %s30, 0
    %p208 = por %p206, %p207
    %p209 = scmp.ne.s32.totalorder %s197, %s198
    %p210 = scmp.eq.s32.totalorder %s31, 1
    %p211 = por %p209, %p210
    %p213 = scmp.ne.s32.totalorder %s198, %s212
    %p214 = scmp.eq.s32.totalorder %s31, 0
    %p215 = por %p213, %p214
    %s217 = sadd.s32 %s216, 1
    %p220 = scmp.eq.s32.totalorder %s25, 1
    %p221 = scmp.ne.s32.totalorder %s216, %s218
    %p222 = scmp.eq.s32.totalorder %s25, 0
    %p223 = por %p221, %p222
    %p224 = scmp.ne.s32.totalorder %s216, %s218
    %p225 = scmp.eq.s32.totalorder %s30, 1
    %p226 = por %p224, %p225
    %p227 = scmp.ne.s32.totalorder %s218, %s219
    %p228 = scmp.eq.s32.totalorder %s30, 0
    %p229 = por %p227, %p228
    %p230 = scmp.ne.s32.totalorder %s218, %s219
    %p231 = scmp.eq.s32.totalorder %s31, 1
    %p232 = por %p230, %p231
    %p234 = scmp.ne.s32.totalorder %s219, %s233
    %p235 = scmp.eq.s32.totalorder %s31, 0
    %p236 = por %p234, %p235
    %s238 = sadd.s32 %s237, 1
    %p241 = scmp.eq.s32.totalorder %s25, 1
    %p242 = scmp.ne.s32.totalorder %s237, %s239
    %p243 = scmp.eq.s32.totalorder %s25, 0
    %p244 = por %p242, %p243
    %p245 = scmp.ne.s32.totalorder %s237, %s239
    %p246 = scmp.eq.s32.totalorder %s30, 1
    %p247 = por %p245, %p246
    %p248 = scmp.ne.s32.totalorder %s239, %s240
    %p249 = scmp.eq.s32.totalorder %s30, 0
    %p250 = por %p248, %p249
    %p251 = scmp.ne.s32.totalorder %s239, %s240
    %p252 = scmp.eq.s32.totalorder %s31, 1
    %p253 = por %p251, %p252
    %p255 = scmp.ne.s32.totalorder %s240, %s254
    %p256 = scmp.eq.s32.totalorder %s31, 0
    %p257 = por %p255, %p256
    %s259 = sadd.s32 %s258, 1
    %p262 = scmp.eq.s32.totalorder %s25, 1
    %p263 = scmp.ne.s32.totalorder %s258, %s260
    %p264 = scmp.eq.s32.totalorder %s25, 0
    %p265 = por %p263, %p264
    %p266 = scmp.ne.s32.totalorder %s258, %s260
    %p267 = scmp.eq.s32.totalorder %s30, 1
    %p268 = por %p266, %p267
    %p269 = scmp.ne.s32.totalorder %s260, %s261
    %p270 = scmp.eq.s32.totalorder %s30, 0
    %p271 = por %p269, %p270
    %p272 = scmp.ne.s32.totalorder %s260, %s261
    %p273 = scmp.eq.s32.totalorder %s31, 1
    %p274 = por %p272, %p273
    %p276 = scmp.ne.s32.totalorder %s261, %s275
    %p277 = scmp.eq.s32.totalorder %s31, 0
    %p278 = por %p276, %p277
    %s280 = sadd.s32 %s279, 1
    %p283 = scmp.eq.s32.totalorder %s25, 1
    %p284 = scmp.ne.s32.totalorder %s279, %s281
    %p285 = scmp.eq.s32.totalorder %s25, 0
    %p286 = por %p284, %p285
    %p287 = scmp.ne.s32.totalorder %s279, %s281
    %p288 = scmp.eq.s32.totalorder %s30, 1
    %p289 = por %p287, %p288
    %p290 = scmp.ne.s32.totalorder %s281, %s282
    %p291 = scmp.eq.s32.totalorder %s30, 0
    %p292 = por %p290, %p291
    %p293 = scmp.ne.s32.totalorder %s281, %s282
    %p294 = scmp.eq.s32.totalorder %s31, 1
    %p295 = por %p293, %p294
    %p297 = scmp.ne.s32.totalorder %s282, %s296
    %p298 = scmp.eq.s32.totalorder %s31, 0
    %p299 = por %p297, %p298
    %s301 = sadd.s32 %s300, 1
    %p304 = scmp.eq.s32.totalorder %s25, 1
    %p305 = scmp.ne.s32.totalorder %s300, %s302
    %p306 = scmp.eq.s32.totalorder %s25, 0
    %p307 = por %p305, %p306
    %p308 = scmp.ne.s32.totalorder %s300, %s302
    %p309 = scmp.eq.s32.totalorder %s30, 1
    %p310 = por %p308, %p309
    %p311 = scmp.ne.s32.totalorder %s302, %s303
    %p312 = scmp.eq.s32.totalorder %s30, 0
    %p313 = por %p311, %p312
    %p314 = scmp.ne.s32.totalorder %s302, %s303
    %p315 = scmp.eq.s32.totalorder %s31, 1
    %p316 = por %p314, %p315
    %p318 = scmp.ne.s32.totalorder %s303, %s317
    %p319 = scmp.eq.s32.totalorder %s31, 0
    %p320 = por %p318, %p319
    %s322 = sadd.s32 %s321, 1
    %p325 = scmp.eq.s32.totalorder %s25, 1
    %p326 = scmp.ne.s32.totalorder %s321, %s323
    %p327 = scmp.eq.s32.totalorder %s25, 0
    %p328 = por %p326, %p327
    %p329 = scmp.ne.s32.totalorder %s321, %s323
    %p330 = scmp.eq.s32.totalorder %s30, 1
    %p331 = por %p329, %p330
    %p332 = scmp.ne.s32.totalorder %s323, %s324
    %p333 = scmp.eq.s32.totalorder %s30, 0
    %p334 = por %p332, %p333
    %p335 = scmp.ne.s32.totalorder %s323, %s324
    %p336 = scmp.eq.s32.totalorder %s31, 1
    %p337 = por %p335, %p336
    %p339 = scmp.ne.s32.totalorder %s324, %s338
    %p340 = scmp.eq.s32.totalorder %s31, 0
    %p341 = por %p339, %p340
    %s343 = sadd.s32 %s342, 1
    %p346 = scmp.eq.s32.totalorder %s25, 1
    %p347 = scmp.ne.s32.totalorder %s342, %s344
    %p348 = scmp.eq.s32.totalorder %s25, 0
    %p349 = por %p347, %p348
    %p350 = scmp.ne.s32.totalorder %s342, %s344
    %p351 = scmp.eq.s32.totalorder %s30, 1
    %p352 = por %p350, %p351
    %p353 = scmp.ne.s32.totalorder %s344, %s345
    %p354 = scmp.eq.s32.totalorder %s30, 0
    %p355 = por %p353, %p354
    %p356 = scmp.ne.s32.totalorder %s344, %s345
    %p357 = scmp.eq.s32.totalorder %s31, 1
    %p358 = por %p356, %p357
    %p360 = scmp.ne.s32.totalorder %s345, %s359
    %p361 = scmp.eq.s32.totalorder %s31, 0
    %p362 = por %p360, %p361
    %s364 = sadd.s32 %s363, 1
    %p367 = scmp.eq.s32.totalorder %s25, 1
    %p368 = scmp.ne.s32.totalorder %s363, %s365
    %p369 = scmp.eq.s32.totalorder %s25, 0
    %p370 = por %p368, %p369
    %p371 = scmp.ne.s32.totalorder %s363, %s365
    %p372 = scmp.eq.s32.totalorder %s30, 1
    %p373 = por %p371, %p372
    %p374 = scmp.ne.s32.totalorder %s365, %s366
    %p375 = scmp.eq.s32.totalorder %s30, 0
    %p376 = por %p374, %p375
    %p377 = scmp.ne.s32.totalorder %s365, %s366
    %p378 = scmp.eq.s32.totalorder %s31, 1
    %p379 = por %p377, %p378
    %p381 = scmp.ne.s32.totalorder %s366, %s380
    %p382 = scmp.eq.s32.totalorder %s31, 0
    %p383 = por %p381, %p382
    %s385 = sadd.s32 %s384, 1
    %p388 = scmp.eq.s32.totalorder %s25, 1
    %p389 = scmp.ne.s32.totalorder %s384, %s386
    %p390 = scmp.eq.s32.totalorder %s25, 0
    %p391 = por %p389, %p390
    %p392 = scmp.ne.s32.totalorder %s384, %s386
    %p393 = scmp.eq.s32.totalorder %s30, 1
    %p394 = por %p392, %p393
    %p395 = scmp.ne.s32.totalorder %s386, %s387
    %p396 = scmp.eq.s32.totalorder %s30, 0
    %p397 = por %p395, %p396
    %p398 = scmp.ne.s32.totalorder %s386, %s387
    %p399 = scmp.eq.s32.totalorder %s31, 1
    %p400 = por %p398, %p399
    %p402 = scmp.ne.s32.totalorder %s387, %s401
    %p403 = scmp.eq.s32.totalorder %s31, 0
    %p404 = por %p402, %p403
    %s406 = sadd.s32 %s405, 1
    %p409 = scmp.eq.s32.totalorder %s25, 1
    %p410 = scmp.ne.s32.totalorder %s405, %s407
    %p411 = scmp.eq.s32.totalorder %s25, 0
    %p412 = por %p410, %p411
    %p413 = scmp.ne.s32.totalorder %s405, %s407
    %p414 = scmp.eq.s32.totalorder %s30, 1
    %p415 = por %p413, %p414
    %p416 = scmp.ne.s32.totalorder %s407, %s408
    %p417 = scmp.eq.s32.totalorder %s30, 0
    %p418 = por %p416, %p417
    %p419 = scmp.ne.s32.totalorder %s407, %s408
    %p420 = scmp.eq.s32.totalorder %s31, 1
    %p421 = por %p419, %p420
    %p423 = scmp.ne.s32.totalorder %s408, %s422
    %p424 = scmp.eq.s32.totalorder %s31, 0
    %p425 = por %p423, %p424
    %s427 = sadd.s32 %s426, 1
    %p430 = scmp.eq.s32.totalorder %s25, 1
    %p431 = scmp.ne.s32.totalorder %s426, %s428
    %p432 = scmp.eq.s32.totalorder %s25, 0
    %p433 = por %p431, %p432
    %p434 = scmp.ne.s32.totalorder %s426, %s428
    %p435 = scmp.eq.s32.totalorder %s30, 1
    %p436 = por %p434, %p435
    %p437 = scmp.ne.s32.totalorder %s428, %s429
    %p438 = scmp.eq.s32.totalorder %s30, 0
    %p439 = por %p437, %p438
    %p440 = scmp.ne.s32.totalorder %s428, %s429
    %p441 = scmp.eq.s32.totalorder %s31, 1
    %p442 = por %p440, %p441
    %p444 = scmp.ne.s32.totalorder %s429, %s443
    %p445 = scmp.eq.s32.totalorder %s31, 0
    %p446 = por %p444, %p445
    %s447 = ssub.s32 %s25, %s32
    %p448 = scmp.eq.s32.totalorder %s447, 0
    %s450 = sadd.s32 %s449, 1
    %s451 = scalar_select %p448, %s449, %s450
    %p454 = pneg %p448
    %p455 = scmp.eq.s32.totalorder %s25, 1
    %p456 = por %p454, %p455
    %p457 = scmp.ne.s32.totalorder %s449, %s452
    %p458 = scmp.eq.s32.totalorder %s25, 0
    %p459 = por %p457, %p458
    %p460 = scmp.ne.s32.totalorder %s449, %s452
    %p461 = scmp.eq.s32.totalorder %s30, 1
    %p462 = por %p460, %p461
    %p463 = scmp.ne.s32.totalorder %s452, %s453
    %p464 = scmp.eq.s32.totalorder %s30, 0
    %p465 = por %p463, %p464
    %p466 = scmp.ne.s32.totalorder %s452, %s453
    %p467 = scmp.eq.s32.totalorder %s31, 1
    %p468 = por %p466, %p467
    %p470 = scmp.ne.s32.totalorder %s453, %s469
    %p471 = scmp.eq.s32.totalorder %s31, 0
    %p472 = por %p470, %p471
    %p473 = scmp.le.s32.totalorder 1, %s25
    %p474 = scmp.lt.s32.totalorder %s25, 3
    %p475 = pnand %p473, %p474
    %p476 = pneg %p475
    // Predicated region
    $region9: #{rgat_absa_forward.11} parent=5 // pred_check
      _
    $region10: #{rgat_absa_forward.11} parent=5 // pred_check_branch
      %478 = sbr.rel (%p475) target = $region12
    $region11: #{rgat_absa_forward.11} parent=5 // pred_region
      %s479 = ssub.s32 %s25, 1
      // Predicated region
      $region13: #{rgat_absa_forward.11} parent=11 // pred_check
        %p480 = pneg %p124
      $region14: #{rgat_absa_forward.11} parent=11 // pred_check_branch
        %482 = sbr.rel (%p480) target = $region16
      $region15: #{rgat_absa_forward.11} parent=11 // pred_region
        _
      $region16: #{rgat_absa_forward.11} parent=11 // pred_fallthru
        _
      // Predicated region
      $region17: #{rgat_absa_forward.11} parent=11 // pred_check
        %p483 = pneg %p145
      $region18: #{rgat_absa_forward.11} parent=11 // pred_check_branch
        %485 = sbr.rel (%p483) target = $region20
      $region19: #{rgat_absa_forward.11} parent=11 // pred_region
        _
      $region20: #{rgat_absa_forward.11} parent=11 // pred_fallthru
        _
      // Predicated region
      $region21: #{rgat_absa_forward.11} parent=11 // pred_check
        %p486 = pneg %p166
      $region22: #{rgat_absa_forward.11} parent=11 // pred_check_branch
        %488 = sbr.rel (%p486) target = $region24
      $region23: #{rgat_absa_forward.11} parent=11 // pred_region
        _
      $region24: #{rgat_absa_forward.11} parent=11 // pred_fallthru
        _
      // Predicated region
      $region25: #{rgat_absa_forward.11} parent=11 // pred_check
        %p489 = pneg %p187
      $region26: #{rgat_absa_forward.11} parent=11 // pred_check_branch
        %491 = sbr.rel (%p489) target = $region28
      $region27: #{rgat_absa_forward.11} parent=11 // pred_region
        _
      $region28: #{rgat_absa_forward.11} parent=11 // pred_fallthru
        _
      // Predicated region
      $region29: #{rgat_absa_forward.11} parent=11 // pred_check
        %p492 = pneg %p208
      $region30: #{rgat_absa_forward.11} parent=11 // pred_check_branch
        %494 = sbr.rel (%p492) target = $region32
      $region31: #{rgat_absa_forward.11} parent=11 // pred_region
        _
      $region32: #{rgat_absa_forward.11} parent=11 // pred_fallthru
        _
      // Predicated region
      $region33: #{rgat_absa_forward.11} parent=11 // pred_check
        %p495 = pneg %p229
      $region34: #{rgat_absa_forward.11} parent=11 // pred_check_branch
        %497 = sbr.rel (%p495) target = $region36
      $region35: #{rgat_absa_forward.11} parent=11 // pred_region
        _
      $region36: #{rgat_absa_forward.11} parent=11 // pred_fallthru
        _
      // Predicated region
      $region37: #{rgat_absa_forward.11} parent=11 // pred_check
        %p498 = pneg %p250
      $region38: #{rgat_absa_forward.11} parent=11 // pred_check_branch
        %500 = sbr.rel (%p498) target = $region40
      $region39: #{rgat_absa_forward.11} parent=11 // pred_region
        _
      $region40: #{rgat_absa_forward.11} parent=11 // pred_fallthru
        _
      // Predicated region
      $region41: #{rgat_absa_forward.11} parent=11 // pred_check
        %p501 = pneg %p271
      $region42: #{rgat_absa_forward.11} parent=11 // pred_check_branch
        %503 = sbr.rel (%p501) target = $region44
      $region43: #{rgat_absa_forward.11} parent=11 // pred_region
        _
      $region44: #{rgat_absa_forward.11} parent=11 // pred_fallthru
        _
      // Predicated region
      $region45: #{rgat_absa_forward.11} parent=11 // pred_check
        %p504 = pneg %p292
      $region46: #{rgat_absa_forward.11} parent=11 // pred_check_branch
        %506 = sbr.rel (%p504) target = $region48
      $region47: #{rgat_absa_forward.11} parent=11 // pred_region
        _
      $region48: #{rgat_absa_forward.11} parent=11 // pred_fallthru
        _
      // Predicated region
      $region49: #{rgat_absa_forward.11} parent=11 // pred_check
        %p507 = pneg %p313
      $region50: #{rgat_absa_forward.11} parent=11 // pred_check_branch
        %509 = sbr.rel (%p507) target = $region52
      $region51: #{rgat_absa_forward.11} parent=11 // pred_region
        _
      $region52: #{rgat_absa_forward.11} parent=11 // pred_fallthru
        _
      // Predicated region
      $region53: #{rgat_absa_forward.11} parent=11 // pred_check
        %p510 = pneg %p334
      $region54: #{rgat_absa_forward.11} parent=11 // pred_check_branch
        %512 = sbr.rel (%p510) target = $region56
      $region55: #{rgat_absa_forward.11} parent=11 // pred_region
        _
      $region56: #{rgat_absa_forward.11} parent=11 // pred_fallthru
        _
      // Predicated region
      $region57: #{rgat_absa_forward.11} parent=11 // pred_check
        %p513 = pneg %p355
      $region58: #{rgat_absa_forward.11} parent=11 // pred_check_branch
        %515 = sbr.rel (%p513) target = $region60
      $region59: #{rgat_absa_forward.11} parent=11 // pred_region
        _
      $region60: #{rgat_absa_forward.11} parent=11 // pred_fallthru
        _
      // Predicated region
      $region61: #{rgat_absa_forward.11} parent=11 // pred_check
        %p516 = pneg %p376
      $region62: #{rgat_absa_forward.11} parent=11 // pred_check_branch
        %518 = sbr.rel (%p516) target = $region64
      $region63: #{rgat_absa_forward.11} parent=11 // pred_region
        _
      $region64: #{rgat_absa_forward.11} parent=11 // pred_fallthru
        _
      // Predicated region
      $region65: #{rgat_absa_forward.11} parent=11 // pred_check
        %p519 = pneg %p397
      $region66: #{rgat_absa_forward.11} parent=11 // pred_check_branch
        %521 = sbr.rel (%p519) target = $region68
      $region67: #{rgat_absa_forward.11} parent=11 // pred_region
        _
      $region68: #{rgat_absa_forward.11} parent=11 // pred_fallthru
        _
      // Predicated region
      $region69: #{rgat_absa_forward.11} parent=11 // pred_check
        %p522 = pneg %p418
      $region70: #{rgat_absa_forward.11} parent=11 // pred_check_branch
        %524 = sbr.rel (%p522) target = $region72
      $region71: #{rgat_absa_forward.11} parent=11 // pred_region
        _
      $region72: #{rgat_absa_forward.11} parent=11 // pred_fallthru
        _
      // Predicated region
      $region73: #{rgat_absa_forward.11} parent=11 // pred_check
        %p525 = pneg %p439
      $region74: #{rgat_absa_forward.11} parent=11 // pred_check_branch
        %527 = sbr.rel (%p525) target = $region76
      $region75: #{rgat_absa_forward.11} parent=11 // pred_region
        _
      $region76: #{rgat_absa_forward.11} parent=11 // pred_fallthru
        _
    $region12: #{rgat_absa_forward.11} parent=5 // pred_fallthru
      _
    %p528 = scmp.lt.s32.totalorder %s25, 2
    // Predicated region
    $region77: #{rgat_absa_forward.11} parent=5 // pred_check
      %p529 = pneg %p528
    $region78: #{rgat_absa_forward.11} parent=5 // pred_check_branch
      %531 = sbr.rel (%p529) target = $region80
    $region79: #{rgat_absa_forward.11} parent=5 // pred_region
      // Predicated region
      $region81: #{rgat_absa_forward.11} parent=79 // pred_check
        %p532 = pneg %p45
      $region82: #{rgat_absa_forward.11} parent=79 // pred_check_branch
        %534 = sbr.rel (%p532) target = $region84
      $region83: #{rgat_absa_forward.11} parent=79 // pred_region
        %p535 = scmp.lt.s32.totalorder %s25, 1
        %s536 = scalar_select %p535, %s25, 1
        %s537 = smul.addr %s536, 8
        %s538 = scalar_lea.vmem %s0, %s537
      $region84: #{rgat_absa_forward.11} parent=79 // pred_fallthru
        _
      // Predicated region
      $region85: #{rgat_absa_forward.11} parent=79 // pred_check
        %p539 = pneg %p71
      $region86: #{rgat_absa_forward.11} parent=79 // pred_check_branch
        %541 = sbr.rel (%p539) target = $region88
      $region87: #{rgat_absa_forward.11} parent=79 // pred_region
        %p542 = scmp.lt.s32.totalorder %s25, 1
        %s543 = scalar_select %p542, %s25, 1
        %s544 = smul.addr %s543, 8
        %s545 = scalar_lea.vmem %s1, %s544
      $region88: #{rgat_absa_forward.11} parent=79 // pred_fallthru
        _
      // Predicated region
      $region89: #{rgat_absa_forward.11} parent=79 // pred_check
        %p546 = pneg %p97
      $region90: #{rgat_absa_forward.11} parent=79 // pred_check_branch
        %548 = sbr.rel (%p546) target = $region92
      $region91: #{rgat_absa_forward.11} parent=79 // pred_region
        %p549 = scmp.lt.s32.totalorder %s25, 1
        %s550 = scalar_select %p549, %s25, 1
        %s551 = smul.addr %s550, 8
        %s552 = smul.addr %s551, 8
        %s553 = scalar_lea.vmem %s2, %s552
      $region92: #{rgat_absa_forward.11} parent=79 // pred_fallthru
        _
    $region80: #{rgat_absa_forward.11} parent=5 // pred_fallthru
      _
    %p554 = scmp.le.s32.totalorder 1, %s25
    %p555 = scmp.lt.s32.totalorder %s25, 3
    %p556 = pnand %p554, %p555
    %p557 = pneg %p556
    // Predicated region
    $region93: #{rgat_absa_forward.11} parent=5 // pred_check
      _
    $region94: #{rgat_absa_forward.11} parent=5 // pred_check_branch
      %559 = sbr.rel (%p556) target = $region96
    $region95: #{rgat_absa_forward.11} parent=5 // pred_region
      %s560 = ssub.s32 %s25, 1
      %p561 = scmp.lt.s32.totalorder %s30, 1
      %s562 = scalar_select %p561, %s30, 1
      %s563 = smul.addr %s562, 8
      %s564 = scalar_lea.vmem %s0, %s563
      %p565 = pneg %p51
      %p566 = pneg %p48
      %p567 = scmp.lt.s32.totalorder %s30, 1
      %s568 = scalar_select %p567, %s30, 1
      %s569 = smul.addr %s568, 8
      %s570 = scalar_lea.vmem %s1, %s569
      %p571 = pneg %p77
      %p572 = pneg %p74
      %p573 = scmp.lt.s32.totalorder %s30, 1
      %s574 = scalar_select %p573, %s30, 1
      %s575 = smul.addr %s574, 8
      %s576 = smul.addr %s575, 8
      %s577 = scalar_lea.vmem %s2, %s576
      %p578 = pneg %p103
      %p579 = pneg %p100
      %p580 = pneg %p124
      %p581 = pneg %p121
      %p582 = pneg %p145
      %p583 = pneg %p142
      %p584 = pneg %p166
      %p585 = pneg %p163
      %p586 = pneg %p187
      %p587 = pneg %p184
      %p588 = pneg %p208
      %p589 = pneg %p205
      %p590 = pneg %p229
      %p591 = pneg %p226
      %p592 = pneg %p250
      %p593 = pneg %p247
      %p594 = pneg %p271
      %p595 = pneg %p268
      %p596 = pneg %p292
      %p597 = pneg %p289
      %p598 = pneg %p313
      %p599 = pneg %p310
      %p600 = pneg %p334
      %p601 = pneg %p331
      %p602 = pneg %p355
      %p603 = pneg %p352
      %p604 = pneg %p376
      %p605 = pneg %p373
      %p606 = pneg %p397
      %p607 = pneg %p394
      %p608 = pneg %p418
      %p609 = pneg %p415
      %p610 = pneg %p439
      %p611 = pneg %p436
      %p612 = pneg %p465
      %p613 = pneg %p462
      %p614 = scmp.lt.s32.totalorder %s30, 1
      %s615 = scalar_select %p614, %s30, 1
      %s616 = smul.addr %s615, 8
      %s617 = scalar_lea.vmem %s19, %s616
      %p618 = scmp.lt.s32.totalorder %s30, 1
      %s619 = scalar_select %p618, %s30, 1
      %s620 = smul.addr %s619, 8
      %s621 = scalar_lea.vmem %s0, %s620
      %p622 = scmp.lt.s32.totalorder %s30, 1
      %s623 = scalar_select %p622, %s30, 1
      %s624 = smul.addr %s623, 8
      %s625 = scalar_lea.vmem %s1, %s624
      %p626 = scmp.lt.s32.totalorder %s30, 1
      %s627 = scalar_select %p626, %s30, 1
      %s628 = smul.addr %s627, 8
      %s629 = smul.addr %s628, 8
      %s630 = scalar_lea.vmem %s2, %s629
      %p631 = scmp.lt.s32.totalorder %s30, 1
      %s632 = scalar_select %p631, %s30, 1
      %s633 = smul.addr %s632, 8
      %s634 = scalar_lea.vmem %s19, %s633
      %v635 = vld [vmem:[%s621] sm:$0xff]
      %v636 = vld [vmem:[%s630] sm:$0xff]
      %v637 = vld [vmem:[%s630 + $0x8] sm:$0xff]
      %v638 = vld [vmem:[%s630 + $0x10] sm:$0xff]
      %v639 = vld [vmem:[%s630 + $0x18] sm:$0xff]
      %v640 = vld [vmem:[%s630 + $0x20] sm:$0xff]
      %v641 = vld [vmem:[%s630 + $0x28] sm:$0xff]
      %v642 = vld [vmem:[%s630 + $0x30] sm:$0xff]
      %v643 = vld [vmem:[%s630 + $0x38] sm:$0xff]
      %v644 = vld [vmem:[%s625] sm:$0xff]
      %v645 = vld [vmem:[%s3] sm:$0xff]
      %v646 = vld [vmem:[%s3 + $0x8] sm:$0xff]
      %v647 = vld [vmem:[%s3 + $0x10] sm:$0xff]
      %v648 = vld [vmem:[%s3 + $0x18] sm:$0xff]
      %v649 = vld [vmem:[%s4] sm:$0x1]
      %v651 = vlaneseq
      %v652 = vshrl.u32 %v651, 7
      %v653 = vsub.s32 0, %v652
      %v654 = vrot.slane %v649, %v653
      %vm656 = vcmask 261120
      %v658 = vsel %vm656, %v635, 0
      %660 = vmatprep.subr.mxu0 0.0
      %661 = vmatpush1.msra.mxu0 0.0
      %662 = vmatprep.subr.mxu0 0.0
      %663 = vmatpush1.msra.mxu0 0.0
      %664 = vmatprep.subr.mxu0 0.0
      %665 = vmatpush1.msra.mxu0 0.0
      %666 = vmatprep.subr.mxu0 0.0
      %667 = vmatpush1.msra.mxu0 0.0
      %668 = vmatprep.subr.mxu0 0.0
      %669 = vmatpush1.msra.mxu0 0.0
      %670 = vmatprep.subr.mxu0 0.0
      %671 = vmatpush1.msra.mxu0 0.0
      %672 = vmatprep.subr.mxu0 0.0
      %673 = vmatpush1.msra.mxu0 0.0
      %674 = vmatprep.subr.mxu0 0.0
      %675 = vmatpush1.msra.mxu0 0.0
      %676 = vmatprep.subr.mxu0 0.0
      %677 = vmatpush1.msra.mxu0 0.0
      %678 = vmatprep.subr.mxu0 0.0
      %679 = vmatpush1.msra.mxu0 0.0
      %680 = vmatprep.subr.mxu0 0.0
      %681 = vmatpush1.msra.mxu0 0.0
      %682 = vmatprep.subr.mxu0 0.0
      %683 = vmatpush1.msra.mxu0 0.0
      %684 = vmatprep.subr.mxu0 0.0
      %685 = vmatpush1.msra.mxu0 %v648
      %686 = vmatprep.subr.mxu0 0.0
      %687 = vmatpush1.msra.mxu0 %v647
      %688 = vmatprep.subr.mxu0 0.0
      %689 = vmatpush1.msra.mxu0 %v646
      %690 = vmatprep.subr.mxu0 0.0
      %691 = vmatpush1.msra.mxu0 %v645
      %692 = vmatprep.subr.mxu0 0.0
      %693 = vmatpush2.msra.mxu0 0.0
      %694 = vmatprep.subr.mxu0 0.0
      %695 = vmatpush2.msra.mxu0 0.0
      %696 = vmatprep.subr.mxu0 0.0
      %697 = vmatpush2.msra.mxu0 0.0
      %698 = vmatprep.subr.mxu0 0.0
      %699 = vmatpush2.msra.mxu0 0.0
      %700 = vmatprep.subr.mxu0 0.0
      %701 = vmatpush2.msra.mxu0 0.0
      %702 = vmatprep.subr.mxu0 0.0
      %703 = vmatpush2.msra.mxu0 0.0
      %704 = vmatprep.subr.mxu0 0.0
      %705 = vmatpush2.msra.mxu0 0.0
      %706 = vmatprep.subr.mxu0 0.0
      %707 = vmatpush2.msra.mxu0 0.0
      %708 = vmatprep.subr.mxu0 0.0
      %709 = vmatpush2.msra.mxu0 0.0
      %710 = vmatprep.subr.mxu0 0.0
      %711 = vmatpush2.msra.mxu0 0.0
      %712 = vmatprep.subr.mxu0 0.0
      %713 = vmatpush2.msra.mxu0 0.0
      %714 = vmatprep.subr.mxu0 0.0
      %715 = vmatpush2.msra.mxu0 0.0
      %716 = vmatprep.subr.mxu0 0.0
      %717 = vmatpush2.msra.mxu0 0.0
      %718 = vmatprep.subr.mxu0 0.0
      %719 = vmatpush2.msra.mxu0 0.0
      %720 = vmatprep.subr.mxu0 0.0
      %721 = vmatpush2.msra.mxu0 0.0
      %722 = vmatprep.subr.mxu0 0.0
      %723 = vmatpush2.msra.mxu0 0.0
      %724 = vmatprep.mubr.f32.mxu0 0.0
      %725 = vmatmul.mubr.f32.gmra.mxu0 %v658
      %v726 = vpop.f32.mrf.mxu0
      %v727 = vadd.f32 %v654, %v726
      %v728 = vpop.f32.mrf.mxu0
      %729 = vdwg.mxu0
      %v730 = vld [vmem:[%s9] sm:$0xff]
      %v731 = vld [vmem:[%s9 + $0x8] sm:$0xff]
      %v732 = vld [vmem:[%s9 + $0x10] sm:$0xff]
      %v733 = vld [vmem:[%s9 + $0x18] sm:$0xff]
      %v734 = vld [vmem:[%s5] sm:$0xff]
      %v735 = vld [vmem:[%s5 + $0x8] sm:$0xff]
      %v736 = vld [vmem:[%s6] sm:$0x1]
      %v737 = vld [vmem:[%s7] sm:$0xff]
      %v738 = vld [vmem:[%s7 + $0x8] sm:$0xff]
      %v739 = vld [vmem:[%s8] sm:$0x1]
      %vm740 = vcmask 64512
      %v742 = vsel %vm740, %v727, 0
      %v745 = vsel %vm740, %v734, 0
      %v748 = vsel %vm740, %v735, 0
      %750 = vmatprep.subr.mxu0 0.0
      %751 = vmatpush1.xpose.msra.mxu0 0.0
      %752 = vmatprep.subr.mxu0 0.0
      %753 = vmatpush1.xpose.msra.mxu0 0.0
      %754 = vmatprep.subr.mxu0 0.0
      %755 = vmatpush1.xpose.msra.mxu0 0.0
      %756 = vmatprep.subr.mxu0 0.0
      %757 = vmatpush1.xpose.msra.mxu0 0.0
      %758 = vmatprep.subr.mxu0 0.0
      %759 = vmatpush1.xpose.msra.mxu0 0.0
      %760 = vmatprep.subr.mxu0 0.0
      %761 = vmatpush1.xpose.msra.mxu0 0.0
      %762 = vmatprep.subr.mxu0 0.0
      %763 = vmatpush1.xpose.msra.mxu0 0.0
      %764 = vmatprep.subr.mxu0 0.0
      %765 = vmatpush1.xpose.msra.mxu0 0.0
      %766 = vmatprep.subr.mxu0 0.0
      %767 = vmatpush1.xpose.msra.mxu0 0.0
      %768 = vmatprep.subr.mxu0 0.0
      %769 = vmatpush1.xpose.msra.mxu0 0.0
      %770 = vmatprep.subr.mxu0 0.0
      %771 = vmatpush1.xpose.msra.mxu0 0.0
      %772 = vmatprep.subr.mxu0 0.0
      %773 = vmatpush1.xpose.msra.mxu0 0.0
      %774 = vmatprep.subr.mxu0 0.0
      %775 = vmatpush1.xpose.msra.mxu0 0.0
      %776 = vmatprep.subr.mxu0 0.0
      %777 = vmatpush1.xpose.msra.mxu0 0.0
      %778 = vmatprep.subr.mxu0 0.0
      %779 = vmatpush1.xpose.msra.mxu0 %v748
      %780 = vmatprep.subr.mxu0 0.0
      %781 = vmatpush1.xpose.msra.mxu0 %v745
      %782 = vmatprep.subr.mxu0 0.0
      %783 = vmatpush2.xpose.msra.mxu0 0.0
      %784 = vmatprep.subr.mxu0 0.0
      %785 = vmatpush2.xpose.msra.mxu0 0.0
      %786 = vmatprep.subr.mxu0 0.0
      %787 = vmatpush2.xpose.msra.mxu0 0.0
      %788 = vmatprep.subr.mxu0 0.0
      %789 = vmatpush2.xpose.msra.mxu0 0.0
      %790 = vmatprep.subr.mxu0 0.0
      %791 = vmatpush2.xpose.msra.mxu0 0.0
      %792 = vmatprep.subr.mxu0 0.0
      %793 = vmatpush2.xpose.msra.mxu0 0.0
      %794 = vmatprep.subr.mxu0 0.0
      %795 = vmatpush2.xpose.msra.mxu0 0.0
      %796 = vmatprep.subr.mxu0 0.0
      %797 = vmatpush2.xpose.msra.mxu0 0.0
      %798 = vmatprep.subr.mxu0 0.0
      %799 = vmatpush2.xpose.msra.mxu0 0.0
      %800 = vmatprep.subr.mxu0 0.0
      %801 = vmatpush2.xpose.msra.mxu0 0.0
      %802 = vmatprep.subr.mxu0 0.0
      %803 = vmatpush2.xpose.msra.mxu0 0.0
      %804 = vmatprep.subr.mxu0 0.0
      %805 = vmatpush2.xpose.msra.mxu0 0.0
      %806 = vmatprep.subr.mxu0 0.0
      %807 = vmatpush2.xpose.msra.mxu0 0.0
      %808 = vmatprep.subr.mxu0 0.0
      %809 = vmatpush2.xpose.msra.mxu0 0.0
      %810 = vmatprep.subr.mxu0 0.0
      %811 = vmatpush2.xpose.msra.mxu0 0.0
      %812 = vmatprep.subr.mxu0 0.0
      %813 = vmatpush2.xpose.msra.mxu0 0.0
      %814 = vmatprep.mubr.f32.mxu0 0.0
      %815 = vmatmul.mubr.f32.gmra.mxu0 %v742
      %v816 = vpop.f32.mrf.mxu0
      %v817 = vadd.f32 0.0, %v816
      %v818 = vpop.f32.mrf.mxu0
      %819 = vdwg.mxu0
      %v821 = vcombine.high %v817, %v817
      %v823 = vunpack.c.l.s4 1966171168
      %v824 = vunpack.c.0.s8 %v823
      %v825 = vlaneseq
      %v826 = vshrl.u32 %v825, 7
      %v827 = vsub.s32 %v824, %v826
      %v828 = vrot.slane %v817, %v827
      %v830 = vunpack.c.l.s4 1966171168
      %v831 = vunpack.c.0.s8 %v830
      %v832 = vlaneseq
      %v833 = vshrl.u32 %v832, 7
      %v834 = vsub.s32 %v831, %v833
      %v835 = vrot.slane %v821, %v834
      %v836 = vcombine.high %v828, %v828
      %v837 = vcombine.high %v835, %v835
      %v839 = vunpack.c.l.s4 1966171168
      %v840 = vunpack.c.0.s8 %v839
      %v841 = vlaneseq
      %v842 = vshrl.u32 %v841, 7
      %v843 = vsub.s32 %v840, %v842
      %v844 = vrot.slane %v828, %v843
      %v846 = vunpack.c.l.s4 1966171168
      %v847 = vunpack.c.0.s8 %v846
      %v848 = vlaneseq
      %v849 = vshrl.u32 %v848, 7
      %v850 = vsub.s32 %v847, %v849
      %v851 = vrot.slane %v835, %v850
      %v853 = vunpack.c.l.s4 1966171168
      %v854 = vunpack.c.0.s8 %v853
      %v855 = vlaneseq
      %v856 = vshrl.u32 %v855, 7
      %v857 = vsub.s32 %v854, %v856
      %v858 = vrot.slane %v836, %v857
      %v860 = vunpack.c.l.s4 1966171168
      %v861 = vunpack.c.0.s8 %v860
      %v862 = vlaneseq
      %v863 = vshrl.u32 %v862, 7
      %v864 = vsub.s32 %v861, %v863
      %v865 = vrot.slane %v837, %v864
      %v866 = vcombine.high %v844, %v844
      %v867 = vcombine.high %v851, %v851
      %v868 = vcombine.high %v858, %v858
      %v869 = vcombine.high %v865, %v865
      %v870 = vlaneseq
      %v871 = vshrl.u32 %v870, 7
      %v872 = vsub.s32 0, %v871
      %v873 = vrot.slane %v844, %v872
      %v874 = vlaneseq
      %v875 = vshrl.u32 %v874, 7
      %v876 = vsub.s32 0, %v875
      %v877 = vrot.slane %v858, %v876
      %v878 = vlaneseq
      %v879 = vshrl.u32 %v878, 7
      %v880 = vsub.s32 0, %v879
      %v881 = vrot.slane %v866, %v880
      %v882 = vlaneseq
      %v883 = vshrl.u32 %v882, 7
      %v884 = vsub.s32 0, %v883
      %v885 = vrot.slane %v868, %v884
      %v886 = vlaneseq
      %v887 = vshrl.u32 %v886, 7
      %v888 = vsub.s32 0, %v887
      %v889 = vrot.slane %v851, %v888
      %v890 = vlaneseq
      %v891 = vshrl.u32 %v890, 7
      %v892 = vsub.s32 0, %v891
      %v893 = vrot.slane %v865, %v892
      %v894 = vlaneseq
      %v895 = vshrl.u32 %v894, 7
      %v896 = vsub.s32 0, %v895
      %v897 = vrot.slane %v867, %v896
      %v898 = vlaneseq
      %v899 = vshrl.u32 %v898, 7
      %v900 = vsub.s32 0, %v899
      %v901 = vrot.slane %v869, %v900
      %v910 = vmul.f32 %v873, %v636
      %v911 = vmul.f32 %v877, %v637
      %v912 = vmul.f32 %v881, %v638
      %v913 = vmul.f32 %v885, %v639
      %v914 = vmul.f32 %v889, %v640
      %v915 = vmul.f32 %v893, %v641
      %v916 = vmul.f32 %v897, %v642
      %v917 = vmul.f32 %v901, %v643
      %vm918 = vcmask 130048
      %v919 = vsel %vm918, %v910, 0.0
      %920 = vadd.xlane.f32.xlu0 %v919
      %v921 = vpop.xlane.xlu0 %920
      %v922 = vsel %vm918, %v911, 0.0
      %923 = vadd.xlane.f32.xlu0 %v922
      %v924 = vpop.xlane.xlu0 %923
      %v925 = vsel %vm918, %v912, 0.0
      %926 = vadd.xlane.f32.xlu0 %v925
      %v927 = vpop.xlane.xlu0 %926
      %v928 = vsel %vm918, %v913, 0.0
      %929 = vadd.xlane.f32.xlu0 %v928
      %v930 = vpop.xlane.xlu0 %929
      %v931 = vsel %vm918, %v914, 0.0
      %932 = vadd.xlane.f32.xlu0 %v931
      %v933 = vpop.xlane.xlu0 %932
      %v934 = vsel %vm918, %v915, 0.0
      %935 = vadd.xlane.f32.xlu0 %v934
      %v936 = vpop.xlane.xlu0 %935
      %v937 = vsel %vm918, %v916, 0.0
      %938 = vadd.xlane.f32.xlu0 %v937
      %v939 = vpop.xlane.xlu0 %938
      %v940 = vsel %vm918, %v917, 0.0
      %941 = vadd.xlane.f32.xlu0 %v940
      %v942 = vpop.xlane.xlu0 %941
      %v944 = vlaneseq
      %v945 = vshrl.u32 %v944, 7
      %v946 = vsub.s32 0, %v945
      %v947 = vrot.slane %v736, %v946
      %v949 = vmul.f32 %v727, %v947
      %v950 = vsel %vm740, %v949, 0.0
      %951 = vadd.xlane.f32.xlu0 %v950
      %v952 = vpop.xlane.xlu0 %951
      %953 = vrot.lane.b32.xlu0 %v727, 96
      %v954 = vpop.permute.xlu0 %953
      %v963 = vlaneseq
      %v964 = vand.u32 %v963, 127
      %v965 = vlaneseq
      %v966 = vshrl.u32 %v965, 7
      %v967 = vsub.s32 %v964, %v966
      %v968 = vrot.slane %v921, %v967
      %v969 = vlaneseq
      %v970 = vshrl.u32 %v969, 7
      %v971 = vsub.s32 %v964, %v970
      %v972 = vrot.slane %v924, %v971
      %v973 = vlaneseq
      %v974 = vshrl.u32 %v973, 7
      %v975 = vsub.s32 %v964, %v974
      %v976 = vrot.slane %v927, %v975
      %v977 = vlaneseq
      %v978 = vshrl.u32 %v977, 7
      %v979 = vsub.s32 %v964, %v978
      %v980 = vrot.slane %v930, %v979
      %v981 = vlaneseq
      %v982 = vshrl.u32 %v981, 7
      %v983 = vsub.s32 %v964, %v982
      %v984 = vrot.slane %v933, %v983
      %v985 = vlaneseq
      %v986 = vshrl.u32 %v985, 7
      %v987 = vsub.s32 %v964, %v986
      %v988 = vrot.slane %v936, %v987
      %v989 = vlaneseq
      %v990 = vshrl.u32 %v989, 7
      %v991 = vsub.s32 %v964, %v990
      %v992 = vrot.slane %v939, %v991
      %v993 = vlaneseq
      %v994 = vshrl.u32 %v993, 7
      %v995 = vsub.s32 %v964, %v994
      %v996 = vrot.slane %v942, %v995
      %vm997 = vcmask 1041409
      %v998 = vsel %vm997, %v972, %v968
      %vm999 = vcmask 1042434
      %v1000 = vsel %vm999, %v976, %v998
      %vm1001 = vcmask 1043459
      %v1002 = vsel %vm1001, %v980, %v1000
      %vm1003 = vcmask 1044484
      %v1004 = vsel %vm1003, %v984, %v1002
      %vm1005 = vcmask 1045509
      %v1006 = vsel %vm1005, %v988, %v1004
      %vm1007 = vcmask 1046534
      %v1008 = vsel %vm1007, %v992, %v1006
      %vm1009 = vcmask 1047559
      %v1010 = vsel %vm1009, %v996, %v1008
      %v1012 = vsel %vm740, %v954, 0
      %1014 = vmatprep.subr.mxu0 0.0
      %1015 = vmatpush1.xpose.msra.mxu0 0.0
      %1016 = vmatprep.subr.mxu0 0.0
      %1017 = vmatpush1.xpose.msra.mxu0 0.0
      %1018 = vmatprep.subr.mxu0 0.0
      %1019 = vmatpush1.xpose.msra.mxu0 0.0
      %1020 = vmatprep.subr.mxu0 0.0
      %1021 = vmatpush1.xpose.msra.mxu0 0.0
      %1022 = vmatprep.subr.mxu0 0.0
      %1023 = vmatpush1.xpose.msra.mxu0 0.0
      %1024 = vmatprep.subr.mxu0 0.0
      %1025 = vmatpush1.xpose.msra.mxu0 0.0
      %1026 = vmatprep.subr.mxu0 0.0
      %1027 = vmatpush1.xpose.msra.mxu0 0.0
      %1028 = vmatprep.subr.mxu0 0.0
      %1029 = vmatpush1.xpose.msra.mxu0 0.0
      %1030 = vmatprep.subr.mxu0 0.0
      %1031 = vmatpush1.xpose.msra.mxu0 0.0
      %1032 = vmatprep.subr.mxu0 0.0
      %1033 = vmatpush1.xpose.msra.mxu0 0.0
      %1034 = vmatprep.subr.mxu0 0.0
      %1035 = vmatpush1.xpose.msra.mxu0 0.0
      %1036 = vmatprep.subr.mxu0 0.0
      %1037 = vmatpush1.xpose.msra.mxu0 0.0
      %1038 = vmatprep.subr.mxu0 0.0
      %1039 = vmatpush1.xpose.msra.mxu0 0.0
      %1040 = vmatprep.subr.mxu0 0.0
      %1041 = vmatpush1.xpose.msra.mxu0 0.0
      %1042 = vmatprep.subr.mxu0 0.0
      %1043 = vmatpush1.xpose.msra.mxu0 0.0
      %1044 = vmatprep.subr.mxu0 0.0
      %1045 = vmatpush1.xpose.msra.mxu0 %v1012
      %1046 = vmatprep.subr.mxu0 0.0
      %1047 = vmatpush2.xpose.msra.mxu0 0.0
      %1048 = vmatprep.subr.mxu0 0.0
      %1049 = vmatpush2.xpose.msra.mxu0 0.0
      %1050 = vmatprep.subr.mxu0 0.0
      %1051 = vmatpush2.xpose.msra.mxu0 0.0
      %1052 = vmatprep.subr.mxu0 0.0
      %1053 = vmatpush2.xpose.msra.mxu0 0.0
      %1054 = vmatprep.subr.mxu0 0.0
      %1055 = vmatpush2.xpose.msra.mxu0 0.0
      %1056 = vmatprep.subr.mxu0 0.0
      %1057 = vmatpush2.xpose.msra.mxu0 0.0
      %1058 = vmatprep.subr.mxu0 0.0
      %1059 = vmatpush2.xpose.msra.mxu0 0.0
      %1060 = vmatprep.subr.mxu0 0.0
      %1061 = vmatpush2.xpose.msra.mxu0 0.0
      %1062 = vmatprep.subr.mxu0 0.0
      %1063 = vmatpush2.xpose.msra.mxu0 0.0
      %1064 = vmatprep.subr.mxu0 0.0
      %1065 = vmatpush2.xpose.msra.mxu0 0.0
      %1066 = vmatprep.subr.mxu0 0.0
      %1067 = vmatpush2.xpose.msra.mxu0 0.0
      %1068 = vmatprep.subr.mxu0 0.0
      %1069 = vmatpush2.xpose.msra.mxu0 0.0
      %1070 = vmatprep.subr.mxu0 0.0
      %1071 = vmatpush2.xpose.msra.mxu0 0.0
      %1072 = vmatprep.subr.mxu0 0.0
      %1073 = vmatpush2.xpose.msra.mxu0 0.0
      %1074 = vmatprep.subr.mxu0 0.0
      %1075 = vmatpush2.xpose.msra.mxu0 0.0
      %1076 = vmatprep.subr.mxu0 0.0
      %1077 = vmatpush2.xpose.msra.mxu0 0.0
      %1078 = vmatprep.mubr.f32.mxu0 0.0
      %1079 = vmatmul.mubr.f32.gmra.mxu0 %v742
      %v1080 = vpop.f32.mrf.mxu0
      %v1081 = vadd.f32 %v1010, %v1080
      %v1082 = vpop.f32.mrf.mxu0
      %1083 = vdwg.mxu0
      %v1084 = vadd.f32 %v1081, %v952
      %v1085 = vmul.f32 %v1084, 0.35355338
      %v1086 = vadd.f32 %v1085, %v644
      %v1087 = vsel %vm740, %v1086, -inf
      %1088 = vmax.xlane.f32.xlu0 %v1087
      %v1089 = vpop.xlane.xlu0 %1088
      %v1090 = vsub.f32 %v1086, %v1089
      %v1091 = vmul.f32 %v1090, 1.442695
      %v1092 = vpow.pop %v1091
      %v1093 = vsel %vm740, %v1092, 0.0
      %1094 = vadd.xlane.f32.xlu0 %v1093
      %v1095 = vpop.xlane.xlu0 %1094
      %v1096 = vrcp.pop %v1095
      %v1097 = vmul.f32 %v1092, %v1096
      %v1098 = vlaneseq
      %v1099 = vshrl.u32 %v1098, 7
      %v1100 = vsub.s32 0, %v1099
      %v1101 = vrot.slane %v1097, %v1100
      %1103 = vbcast.lane.b32.xlu0 %v1101, 256
      %v1104 = vpop.permute.xlu0 %1103
      %v1105 = vlaneseq
      %v1106 = vshrl.u32 %v1105, 7
      %v1107 = vsub.s32 1, %v1106
      %v1108 = vrot.slane %v1097, %v1107
      %1110 = vbcast.lane.b32.xlu0 %v1108, 256
      %v1111 = vpop.permute.xlu0 %1110
      %v1112 = vlaneseq
      %v1113 = vshrl.u32 %v1112, 7
      %v1114 = vsub.s32 2, %v1113
      %v1115 = vrot.slane %v1097, %v1114
      %1117 = vbcast.lane.b32.xlu0 %v1115, 256
      %v1118 = vpop.permute.xlu0 %1117
      %v1119 = vlaneseq
      %v1120 = vshrl.u32 %v1119, 7
      %v1121 = vsub.s32 3, %v1120
      %v1122 = vrot.slane %v1097, %v1121
      %1124 = vbcast.lane.b32.xlu0 %v1122, 256
      %v1125 = vpop.permute.xlu0 %1124
      %v1126 = vlaneseq
      %v1127 = vshrl.u32 %v1126, 7
      %v1128 = vsub.s32 4, %v1127
      %v1129 = vrot.slane %v1097, %v1128
      %1131 = vbcast.lane.b32.xlu0 %v1129, 256
      %v1132 = vpop.permute.xlu0 %1131
      %v1133 = vlaneseq
      %v1134 = vshrl.u32 %v1133, 7
      %v1135 = vsub.s32 5, %v1134
      %v1136 = vrot.slane %v1097, %v1135
      %1138 = vbcast.lane.b32.xlu0 %v1136, 256
      %v1139 = vpop.permute.xlu0 %1138
      %v1140 = vlaneseq
      %v1141 = vshrl.u32 %v1140, 7
      %v1142 = vsub.s32 6, %v1141
      %v1143 = vrot.slane %v1097, %v1142
      %1145 = vbcast.lane.b32.xlu0 %v1143, 256
      %v1146 = vpop.permute.xlu0 %1145
      %v1147 = vlaneseq
      %v1148 = vshrl.u32 %v1147, 7
      %v1149 = vsub.s32 7, %v1148
      %v1150 = vrot.slane %v1097, %v1149
      %1152 = vbcast.lane.b32.xlu0 %v1150, 256
      %v1153 = vpop.permute.xlu0 %1152
      %v1154 = vmul.f32 %v1104, %v636
      %v1155 = vmul.f32 %v1111, %v637
      %v1156 = vmul.f32 %v1118, %v638
      %v1157 = vmul.f32 %v1125, %v639
      %v1158 = vmul.f32 %v1132, %v640
      %v1159 = vmul.f32 %v1139, %v641
      %v1160 = vmul.f32 %v1146, %v642
      %v1161 = vmul.f32 %v1153, %v643
      %v1162 = vsel %vm918, %v1154, 0.0
      %v1163 = vrot.slane %v1162, 4
      %v1164 = vadd.f32 %v1162, %v1163
      %v1165 = vrot.slane %v1164, 2
      %v1166 = vadd.f32 %v1164, %v1165
      %v1167 = vrot.slane %v1166, 1
      %v1168 = vadd.f32 %v1166, %v1167
      %v1169 = vsel %vm918, %v1155, 0.0
      %v1170 = vrot.slane %v1169, 4
      %v1171 = vadd.f32 %v1169, %v1170
      %v1172 = vrot.slane %v1171, 2
      %v1173 = vadd.f32 %v1171, %v1172
      %v1174 = vrot.slane %v1173, 1
      %v1175 = vadd.f32 %v1173, %v1174
      %v1176 = vsel %vm918, %v1156, 0.0
      %v1177 = vrot.slane %v1176, 4
      %v1178 = vadd.f32 %v1176, %v1177
      %v1179 = vrot.slane %v1178, 2
      %v1180 = vadd.f32 %v1178, %v1179
      %v1181 = vrot.slane %v1180, 1
      %v1182 = vadd.f32 %v1180, %v1181
      %v1183 = vsel %vm918, %v1157, 0.0
      %v1184 = vrot.slane %v1183, 4
      %v1185 = vadd.f32 %v1183, %v1184
      %v1186 = vrot.slane %v1185, 2
      %v1187 = vadd.f32 %v1185, %v1186
      %v1188 = vrot.slane %v1187, 1
      %v1189 = vadd.f32 %v1187, %v1188
      %v1190 = vsel %vm918, %v1158, 0.0
      %v1191 = vrot.slane %v1190, 4
      %v1192 = vadd.f32 %v1190, %v1191
      %v1193 = vrot.slane %v1192, 2
      %v1194 = vadd.f32 %v1192, %v1193
      %v1195 = vrot.slane %v1194, 1
      %v1196 = vadd.f32 %v1194, %v1195
      %v1197 = vsel %vm918, %v1159, 0.0
      %v1198 = vrot.slane %v1197, 4
      %v1199 = vadd.f32 %v1197, %v1198
      %v1200 = vrot.slane %v1199, 2
      %v1201 = vadd.f32 %v1199, %v1200
      %v1202 = vrot.slane %v1201, 1
      %v1203 = vadd.f32 %v1201, %v1202
      %v1204 = vsel %vm918, %v1160, 0.0
      %v1205 = vrot.slane %v1204, 4
      %v1206 = vadd.f32 %v1204, %v1205
      %v1207 = vrot.slane %v1206, 2
      %v1208 = vadd.f32 %v1206, %v1207
      %v1209 = vrot.slane %v1208, 1
      %v1210 = vadd.f32 %v1208, %v1209
      %v1211 = vsel %vm918, %v1161, 0.0
      %v1212 = vrot.slane %v1211, 4
      %v1213 = vadd.f32 %v1211, %v1212
      %v1214 = vrot.slane %v1213, 2
      %v1215 = vadd.f32 %v1213, %v1214
      %v1216 = vrot.slane %v1215, 1
      %v1217 = vadd.f32 %v1215, %v1216
      %v1226 = vsel %vm997, %v1175, %v1168
      %v1227 = vsel %vm999, %v1182, %v1226
      %v1228 = vsel %vm1001, %v1189, %v1227
      %v1229 = vsel %vm1003, %v1196, %v1228
      %v1230 = vsel %vm1005, %v1203, %v1229
      %v1231 = vsel %vm1007, %v1210, %v1230
      %v1232 = vsel %vm1009, %v1217, %v1231
      %v1233 = vsel %vm918, %v1232, 0
      %1235 = vmatprep.subr.mxu0 0.0
      %1236 = vmatpush1.msra.mxu0 0.0
      %1237 = vmatprep.subr.mxu0 0.0
      %1238 = vmatpush1.msra.mxu0 0.0
      %1239 = vmatprep.subr.mxu0 0.0
      %1240 = vmatpush1.msra.mxu0 0.0
      %1241 = vmatprep.subr.mxu0 0.0
      %1242 = vmatpush1.msra.mxu0 0.0
      %1243 = vmatprep.subr.mxu0 0.0
      %1244 = vmatpush1.msra.mxu0 0.0
      %1245 = vmatprep.subr.mxu0 0.0
      %1246 = vmatpush1.msra.mxu0 0.0
      %1247 = vmatprep.subr.mxu0 0.0
      %1248 = vmatpush1.msra.mxu0 0.0
      %1249 = vmatprep.subr.mxu0 0.0
      %1250 = vmatpush1.msra.mxu0 0.0
      %1251 = vmatprep.subr.mxu0 0.0
      %1252 = vmatpush1.msra.mxu0 0.0
      %1253 = vmatprep.subr.mxu0 0.0
      %1254 = vmatpush1.msra.mxu0 0.0
      %1255 = vmatprep.subr.mxu0 0.0
      %1256 = vmatpush1.msra.mxu0 0.0
      %1257 = vmatprep.subr.mxu0 0.0
      %1258 = vmatpush1.msra.mxu0 0.0
      %1259 = vmatprep.subr.mxu0 0.0
      %1260 = vmatpush1.msra.mxu0 0.0
      %1261 = vmatprep.subr.mxu0 0.0
      %1262 = vmatpush1.msra.mxu0 0.0
      %1263 = vmatprep.subr.mxu0 0.0
      %1264 = vmatpush1.msra.mxu0 %v738
      %1265 = vmatprep.subr.mxu0 0.0
      %1266 = vmatpush1.msra.mxu0 %v737
      %1267 = vmatprep.subr.mxu0 0.0
      %1268 = vmatpush2.msra.mxu0 0.0
      %1269 = vmatprep.subr.mxu0 0.0
      %1270 = vmatpush2.msra.mxu0 0.0
      %1271 = vmatprep.subr.mxu0 0.0
      %1272 = vmatpush2.msra.mxu0 0.0
      %1273 = vmatprep.subr.mxu0 0.0
      %1274 = vmatpush2.msra.mxu0 0.0
      %1275 = vmatprep.subr.mxu0 0.0
      %1276 = vmatpush2.msra.mxu0 0.0
      %1277 = vmatprep.subr.mxu0 0.0
      %1278 = vmatpush2.msra.mxu0 0.0
      %1279 = vmatprep.subr.mxu0 0.0
      %1280 = vmatpush2.msra.mxu0 0.0
      %1281 = vmatprep.subr.mxu0 0.0
      %1282 = vmatpush2.msra.mxu0 0.0
      %1283 = vmatprep.subr.mxu0 0.0
      %1284 = vmatpush2.msra.mxu0 0.0
      %1285 = vmatprep.subr.mxu0 0.0
      %1286 = vmatpush2.msra.mxu0 0.0
      %1287 = vmatprep.subr.mxu0 0.0
      %1288 = vmatpush2.msra.mxu0 0.0
      %1289 = vmatprep.subr.mxu0 0.0
      %1290 = vmatpush2.msra.mxu0 0.0
      %1291 = vmatprep.subr.mxu0 0.0
      %1292 = vmatpush2.msra.mxu0 0.0
      %1293 = vmatprep.subr.mxu0 0.0
      %1294 = vmatpush2.msra.mxu0 0.0
      %1295 = vmatprep.subr.mxu0 0.0
      %1296 = vmatpush2.msra.mxu0 0.0
      %1297 = vmatprep.subr.mxu0 0.0
      %1298 = vmatpush2.msra.mxu0 0.0
      %1299 = vmatprep.mubr.f32.mxu0 0.0
      %1300 = vmatmul.mubr.f32.gmra.mxu0 %v1233
      %v1301 = vpop.f32.mrf.mxu0
      %v1302 = vadd.f32 0.0, %v1301
      %v1303 = vpop.f32.mrf.mxu0
      %1304 = vdwg.mxu0
      %1305 = vrot.lane.b32.xlu0 %v727, 64
      %v1306 = vpop.permute.xlu0 %1305
      %v1309 = vsel %vm740, %v1097, 0
      %1311 = vmatprep.subr.mxu0 0.0
      %1312 = vmatpush1.msra.mxu0 0.0
      %1313 = vmatprep.subr.mxu0 0.0
      %1314 = vmatpush1.msra.mxu0 0.0
      %1315 = vmatprep.subr.mxu0 0.0
      %1316 = vmatpush1.msra.mxu0 0.0
      %1317 = vmatprep.subr.mxu0 0.0
      %1318 = vmatpush1.msra.mxu0 0.0
      %1319 = vmatprep.subr.mxu0 0.0
      %1320 = vmatpush1.msra.mxu0 0.0
      %1321 = vmatprep.subr.mxu0 0.0
      %1322 = vmatpush1.msra.mxu0 0.0
      %1323 = vmatprep.subr.mxu0 0.0
      %1324 = vmatpush1.msra.mxu0 0.0
      %1325 = vmatprep.subr.mxu0 0.0
      %1326 = vmatpush1.msra.mxu0 0.0
      %1327 = vmatprep.subr.mxu0 0.0
      %1328 = vmatpush1.msra.mxu0 0.0
      %1329 = vmatprep.subr.mxu0 0.0
      %1330 = vmatpush1.msra.mxu0 0.0
      %1331 = vmatprep.subr.mxu0 0.0
      %1332 = vmatpush1.msra.mxu0 0.0
      %1333 = vmatprep.subr.mxu0 0.0
      %1334 = vmatpush1.msra.mxu0 0.0
      %1335 = vmatprep.subr.mxu0 0.0
      %1336 = vmatpush1.msra.mxu0 0.0
      %1337 = vmatprep.subr.mxu0 0.0
      %1338 = vmatpush1.msra.mxu0 0.0
      %1339 = vmatprep.subr.mxu0 0.0
      %1340 = vmatpush1.msra.mxu0 0.0
      %1341 = vmatprep.subr.mxu0 0.0
      %1342 = vmatpush1.msra.mxu0 %v1306
      %1343 = vmatprep.subr.mxu0 0.0
      %1344 = vmatpush2.msra.mxu0 0.0
      %1345 = vmatprep.subr.mxu0 0.0
      %1346 = vmatpush2.msra.mxu0 0.0
      %1347 = vmatprep.subr.mxu0 0.0
      %1348 = vmatpush2.msra.mxu0 0.0
      %1349 = vmatprep.subr.mxu0 0.0
      %1350 = vmatpush2.msra.mxu0 0.0
      %1351 = vmatprep.subr.mxu0 0.0
      %1352 = vmatpush2.msra.mxu0 0.0
      %1353 = vmatprep.subr.mxu0 0.0
      %1354 = vmatpush2.msra.mxu0 0.0
      %1355 = vmatprep.subr.mxu0 0.0
      %1356 = vmatpush2.msra.mxu0 0.0
      %1357 = vmatprep.subr.mxu0 0.0
      %1358 = vmatpush2.msra.mxu0 0.0
      %1359 = vmatprep.subr.mxu0 0.0
      %1360 = vmatpush2.msra.mxu0 0.0
      %1361 = vmatprep.subr.mxu0 0.0
      %1362 = vmatpush2.msra.mxu0 0.0
      %1363 = vmatprep.subr.mxu0 0.0
      %1364 = vmatpush2.msra.mxu0 0.0
      %1365 = vmatprep.subr.mxu0 0.0
      %1366 = vmatpush2.msra.mxu0 0.0
      %1367 = vmatprep.subr.mxu0 0.0
      %1368 = vmatpush2.msra.mxu0 0.0
      %1369 = vmatprep.subr.mxu0 0.0
      %1370 = vmatpush2.msra.mxu0 0.0
      %1371 = vmatprep.subr.mxu0 0.0
      %1372 = vmatpush2.msra.mxu0 0.0
      %1373 = vmatprep.subr.mxu0 0.0
      %1374 = vmatpush2.msra.mxu0 0.0
      %1375 = vmatprep.mubr.f32.mxu0 0.0
      %1376 = vmatmul.mubr.f32.gmra.mxu0 %v1309
      %v1377 = vpop.f32.mrf.mxu0
      %v1378 = vadd.f32 %v1302, %v1377
      %v1379 = vpop.f32.mrf.mxu0
      %1380 = vdwg.mxu0
      %v1382 = vlaneseq
      %v1383 = vshrl.u32 %v1382, 7
      %v1384 = vsub.s32 0, %v1383
      %v1385 = vrot.slane %v739, %v1384
      %v1387 = vadd.f32 %v1378, %v1385
      %1388 = vrot.lane.b32.xlu0 %v727, 120
      %v1389 = vpop.permute.xlu0 %1388
      %v1390 = vsel %vm740, %v1389, 0
      %1392 = vmatprep.subr.mxu0 0.0
      %1393 = vmatpush1.xpose.msra.mxu0 0.0
      %1394 = vmatprep.subr.mxu0 0.0
      %1395 = vmatpush1.xpose.msra.mxu0 0.0
      %1396 = vmatprep.subr.mxu0 0.0
      %1397 = vmatpush1.xpose.msra.mxu0 0.0
      %1398 = vmatprep.subr.mxu0 0.0
      %1399 = vmatpush1.xpose.msra.mxu0 0.0
      %1400 = vmatprep.subr.mxu0 0.0
      %1401 = vmatpush1.xpose.msra.mxu0 0.0
      %1402 = vmatprep.subr.mxu0 0.0
      %1403 = vmatpush1.xpose.msra.mxu0 0.0
      %1404 = vmatprep.subr.mxu0 0.0
      %1405 = vmatpush1.xpose.msra.mxu0 0.0
      %1406 = vmatprep.subr.mxu0 0.0
      %1407 = vmatpush1.xpose.msra.mxu0 0.0
      %1408 = vmatprep.subr.mxu0 0.0
      %1409 = vmatpush1.xpose.msra.mxu0 0.0
      %1410 = vmatprep.subr.mxu0 0.0
      %1411 = vmatpush1.xpose.msra.mxu0 0.0
      %1412 = vmatprep.subr.mxu0 0.0
      %1413 = vmatpush1.xpose.msra.mxu0 0.0
      %1414 = vmatprep.subr.mxu0 0.0
      %1415 = vmatpush1.xpose.msra.mxu0 0.0
      %1416 = vmatprep.subr.mxu0 0.0
      %1417 = vmatpush1.xpose.msra.mxu0 0.0
      %1418 = vmatprep.subr.mxu0 0.0
      %1419 = vmatpush1.xpose.msra.mxu0 0.0
      %1420 = vmatprep.subr.mxu0 0.0
      %1421 = vmatpush1.xpose.msra.mxu0 %v748
      %1422 = vmatprep.subr.mxu0 0.0
      %1423 = vmatpush1.xpose.msra.mxu0 %v745
      %1424 = vmatprep.subr.mxu0 0.0
      %1425 = vmatpush2.xpose.msra.mxu0 0.0
      %1426 = vmatprep.subr.mxu0 0.0
      %1427 = vmatpush2.xpose.msra.mxu0 0.0
      %1428 = vmatprep.subr.mxu0 0.0
      %1429 = vmatpush2.xpose.msra.mxu0 0.0
      %1430 = vmatprep.subr.mxu0 0.0
      %1431 = vmatpush2.xpose.msra.mxu0 0.0
      %1432 = vmatprep.subr.mxu0 0.0
      %1433 = vmatpush2.xpose.msra.mxu0 0.0
      %1434 = vmatprep.subr.mxu0 0.0
      %1435 = vmatpush2.xpose.msra.mxu0 0.0
      %1436 = vmatprep.subr.mxu0 0.0
      %1437 = vmatpush2.xpose.msra.mxu0 0.0
      %1438 = vmatprep.subr.mxu0 0.0
      %1439 = vmatpush2.xpose.msra.mxu0 0.0
      %1440 = vmatprep.subr.mxu0 0.0
      %1441 = vmatpush2.xpose.msra.mxu0 0.0
      %1442 = vmatprep.subr.mxu0 0.0
      %1443 = vmatpush2.xpose.msra.mxu0 0.0
      %1444 = vmatprep.subr.mxu0 0.0
      %1445 = vmatpush2.xpose.msra.mxu0 0.0
      %1446 = vmatprep.subr.mxu0 0.0
      %1447 = vmatpush2.xpose.msra.mxu0 0.0
      %1448 = vmatprep.subr.mxu0 0.0
      %1449 = vmatpush2.xpose.msra.mxu0 0.0
      %1450 = vmatprep.subr.mxu0 0.0
      %1451 = vmatpush2.xpose.msra.mxu0 0.0
      %1452 = vmatprep.subr.mxu0 0.0
      %1453 = vmatpush2.xpose.msra.mxu0 0.0
      %1454 = vmatprep.subr.mxu0 0.0
      %1455 = vmatpush2.xpose.msra.mxu0 0.0
      %1456 = vmatprep.mubr.f32.mxu0 0.0
      %1457 = vmatmul.mubr.f32.gmra.mxu0 %v1390
      %v1458 = vpop.f32.mrf.mxu0
      %v1459 = vadd.f32 0.0, %v1458
      %v1460 = vpop.f32.mrf.mxu0
      %1461 = vdwg.mxu0
      %v1463 = vcombine.high %v1459, %v1459
      %v1465 = vunpack.c.l.s4 1966171168
      %v1466 = vunpack.c.0.s8 %v1465
      %v1467 = vlaneseq
      %v1468 = vshrl.u32 %v1467, 7
      %v1469 = vsub.s32 %v1466, %v1468
      %v1470 = vrot.slane %v1459, %v1469
      %v1472 = vunpack.c.l.s4 1966171168
      %v1473 = vunpack.c.0.s8 %v1472
      %v1474 = vlaneseq
      %v1475 = vshrl.u32 %v1474, 7
      %v1476 = vsub.s32 %v1473, %v1475
      %v1477 = vrot.slane %v1463, %v1476
      %v1478 = vcombine.high %v1470, %v1470
      %v1479 = vcombine.high %v1477, %v1477
      %v1481 = vunpack.c.l.s4 1966171168
      %v1482 = vunpack.c.0.s8 %v1481
      %v1483 = vlaneseq
      %v1484 = vshrl.u32 %v1483, 7
      %v1485 = vsub.s32 %v1482, %v1484
      %v1486 = vrot.slane %v1470, %v1485
      %v1488 = vunpack.c.l.s4 1966171168
      %v1489 = vunpack.c.0.s8 %v1488
      %v1490 = vlaneseq
      %v1491 = vshrl.u32 %v1490, 7
      %v1492 = vsub.s32 %v1489, %v1491
      %v1493 = vrot.slane %v1477, %v1492
      %v1495 = vunpack.c.l.s4 1966171168
      %v1496 = vunpack.c.0.s8 %v1495
      %v1497 = vlaneseq
      %v1498 = vshrl.u32 %v1497, 7
      %v1499 = vsub.s32 %v1496, %v1498
      %v1500 = vrot.slane %v1478, %v1499
      %v1502 = vunpack.c.l.s4 1966171168
      %v1503 = vunpack.c.0.s8 %v1502
      %v1504 = vlaneseq
      %v1505 = vshrl.u32 %v1504, 7
      %v1506 = vsub.s32 %v1503, %v1505
      %v1507 = vrot.slane %v1479, %v1506
      %v1508 = vcombine.high %v1486, %v1486
      %v1509 = vcombine.high %v1493, %v1493
      %v1510 = vcombine.high %v1500, %v1500
      %v1511 = vcombine.high %v1507, %v1507
      %v1512 = vlaneseq
      %v1513 = vshrl.u32 %v1512, 7
      %v1514 = vsub.s32 0, %v1513
      %v1515 = vrot.slane %v1486, %v1514
      %v1516 = vlaneseq
      %v1517 = vshrl.u32 %v1516, 7
      %v1518 = vsub.s32 0, %v1517
      %v1519 = vrot.slane %v1500, %v1518
      %v1520 = vlaneseq
      %v1521 = vshrl.u32 %v1520, 7
      %v1522 = vsub.s32 0, %v1521
      %v1523 = vrot.slane %v1508, %v1522
      %v1524 = vlaneseq
      %v1525 = vshrl.u32 %v1524, 7
      %v1526 = vsub.s32 0, %v1525
      %v1527 = vrot.slane %v1510, %v1526
      %v1528 = vlaneseq
      %v1529 = vshrl.u32 %v1528, 7
      %v1530 = vsub.s32 0, %v1529
      %v1531 = vrot.slane %v1493, %v1530
      %v1532 = vlaneseq
      %v1533 = vshrl.u32 %v1532, 7
      %v1534 = vsub.s32 0, %v1533
      %v1535 = vrot.slane %v1507, %v1534
      %v1536 = vlaneseq
      %v1537 = vshrl.u32 %v1536, 7
      %v1538 = vsub.s32 0, %v1537
      %v1539 = vrot.slane %v1509, %v1538
      %v1540 = vlaneseq
      %v1541 = vshrl.u32 %v1540, 7
      %v1542 = vsub.s32 0, %v1541
      %v1543 = vrot.slane %v1511, %v1542
      %v1552 = vmul.f32 %v1515, %v636
      %v1553 = vmul.f32 %v1519, %v637
      %v1554 = vmul.f32 %v1523, %v638
      %v1555 = vmul.f32 %v1527, %v639
      %v1556 = vmul.f32 %v1531, %v640
      %v1557 = vmul.f32 %v1535, %v641
      %v1558 = vmul.f32 %v1539, %v642
      %v1559 = vmul.f32 %v1543, %v643
      %v1560 = vsel %vm918, %v1552, 0.0
      %1561 = vadd.xlane.f32.xlu0 %v1560
      %v1562 = vpop.xlane.xlu0 %1561
      %v1563 = vsel %vm918, %v1553, 0.0
      %1564 = vadd.xlane.f32.xlu0 %v1563
      %v1565 = vpop.xlane.xlu0 %1564
      %v1566 = vsel %vm918, %v1554, 0.0
      %1567 = vadd.xlane.f32.xlu0 %v1566
      %v1568 = vpop.xlane.xlu0 %1567
      %v1569 = vsel %vm918, %v1555, 0.0
      %1570 = vadd.xlane.f32.xlu0 %v1569
      %v1571 = vpop.xlane.xlu0 %1570
      %v1572 = vsel %vm918, %v1556, 0.0
      %1573 = vadd.xlane.f32.xlu0 %v1572
      %v1574 = vpop.xlane.xlu0 %1573
      %v1575 = vsel %vm918, %v1557, 0.0
      %1576 = vadd.xlane.f32.xlu0 %v1575
      %v1577 = vpop.xlane.xlu0 %1576
      %v1578 = vsel %vm918, %v1558, 0.0
      %1579 = vadd.xlane.f32.xlu0 %v1578
      %v1580 = vpop.xlane.xlu0 %1579
      %v1581 = vsel %vm918, %v1559, 0.0
      %1582 = vadd.xlane.f32.xlu0 %v1581
      %v1583 = vpop.xlane.xlu0 %1582
      %1584 = vrot.lane.b32.xlu0 %v947, 8
      %v1585 = vpop.permute.xlu0 %1584
      %v1587 = vmul.f32 %v727, %v1585
      %1589 = vrot.lane.b32.xlu0 %v1587, 120
      %v1590 = vpop.permute.xlu0 %1589
      %v1592 = vsel %vm740, %v1590, 0.0
      %1593 = vadd.xlane.f32.xlu0 %v1592
      %v1594 = vpop.xlane.xlu0 %1593
      %1595 = vrot.lane.b32.xlu0 %v727, 88
      %v1596 = vpop.permute.xlu0 %1595
      %v1605 = vlaneseq
      %v1606 = vshrl.u32 %v1605, 7
      %v1607 = vsub.s32 %v964, %v1606
      %v1608 = vrot.slane %v1562, %v1607
      %v1609 = vlaneseq
      %v1610 = vshrl.u32 %v1609, 7
      %v1611 = vsub.s32 %v964, %v1610
      %v1612 = vrot.slane %v1565, %v1611
      %v1613 = vlaneseq
      %v1614 = vshrl.u32 %v1613, 7
      %v1615 = vsub.s32 %v964, %v1614
      %v1616 = vrot.slane %v1568, %v1615
      %v1617 = vlaneseq
      %v1618 = vshrl.u32 %v1617, 7
      %v1619 = vsub.s32 %v964, %v1618
      %v1620 = vrot.slane %v1571, %v1619
      %v1621 = vlaneseq
      %v1622 = vshrl.u32 %v1621, 7
      %v1623 = vsub.s32 %v964, %v1622
      %v1624 = vrot.slane %v1574, %v1623
      %v1625 = vlaneseq
      %v1626 = vshrl.u32 %v1625, 7
      %v1627 = vsub.s32 %v964, %v1626
      %v1628 = vrot.slane %v1577, %v1627
      %v1629 = vlaneseq
      %v1630 = vshrl.u32 %v1629, 7
      %v1631 = vsub.s32 %v964, %v1630
      %v1632 = vrot.slane %v1580, %v1631
      %v1633 = vlaneseq
      %v1634 = vshrl.u32 %v1633, 7
      %v1635 = vsub.s32 %v964, %v1634
      %v1636 = vrot.slane %v1583, %v1635
      %v1637 = vsel %vm997, %v1612, %v1608
      %v1638 = vsel %vm999, %v1616, %v1637
      %v1639 = vsel %vm1001, %v1620, %v1638
      %v1640 = vsel %vm1003, %v1624, %v1639
      %v1641 = vsel %vm1005, %v1628, %v1640
      %v1642 = vsel %vm1007, %v1632, %v1641
      %v1643 = vsel %vm1009, %v1636, %v1642
      %v1645 = vsel %vm740, %v1596, 0
      %1647 = vmatprep.subr.mxu0 0.0
      %1648 = vmatpush1.xpose.msra.mxu0 0.0
      %1649 = vmatprep.subr.mxu0 0.0
      %1650 = vmatpush1.xpose.msra.mxu0 0.0
      %1651 = vmatprep.subr.mxu0 0.0
      %1652 = vmatpush1.xpose.msra.mxu0 0.0
      %1653 = vmatprep.subr.mxu0 0.0
      %1654 = vmatpush1.xpose.msra.mxu0 0.0
      %1655 = vmatprep.subr.mxu0 0.0
      %1656 = vmatpush1.xpose.msra.mxu0 0.0
      %1657 = vmatprep.subr.mxu0 0.0
      %1658 = vmatpush1.xpose.msra.mxu0 0.0
      %1659 = vmatprep.subr.mxu0 0.0
      %1660 = vmatpush1.xpose.msra.mxu0 0.0
      %1661 = vmatprep.subr.mxu0 0.0
      %1662 = vmatpush1.xpose.msra.mxu0 0.0
      %1663 = vmatprep.subr.mxu0 0.0
      %1664 = vmatpush1.xpose.msra.mxu0 0.0
      %1665 = vmatprep.subr.mxu0 0.0
      %1666 = vmatpush1.xpose.msra.mxu0 0.0
      %1667 = vmatprep.subr.mxu0 0.0
      %1668 = vmatpush1.xpose.msra.mxu0 0.0
      %1669 = vmatprep.subr.mxu0 0.0
      %1670 = vmatpush1.xpose.msra.mxu0 0.0
      %1671 = vmatprep.subr.mxu0 0.0
      %1672 = vmatpush1.xpose.msra.mxu0 0.0
      %1673 = vmatprep.subr.mxu0 0.0
      %1674 = vmatpush1.xpose.msra.mxu0 0.0
      %1675 = vmatprep.subr.mxu0 0.0
      %1676 = vmatpush1.xpose.msra.mxu0 0.0
      %1677 = vmatprep.subr.mxu0 0.0
      %1678 = vmatpush1.xpose.msra.mxu0 %v1645
      %1679 = vmatprep.subr.mxu0 0.0
      %1680 = vmatpush2.xpose.msra.mxu0 0.0
      %1681 = vmatprep.subr.mxu0 0.0
      %1682 = vmatpush2.xpose.msra.mxu0 0.0
      %1683 = vmatprep.subr.mxu0 0.0
      %1684 = vmatpush2.xpose.msra.mxu0 0.0
      %1685 = vmatprep.subr.mxu0 0.0
      %1686 = vmatpush2.xpose.msra.mxu0 0.0
      %1687 = vmatprep.subr.mxu0 0.0
      %1688 = vmatpush2.xpose.msra.mxu0 0.0
      %1689 = vmatprep.subr.mxu0 0.0
      %1690 = vmatpush2.xpose.msra.mxu0 0.0
      %1691 = vmatprep.subr.mxu0 0.0
      %1692 = vmatpush2.xpose.msra.mxu0 0.0
      %1693 = vmatprep.subr.mxu0 0.0
      %1694 = vmatpush2.xpose.msra.mxu0 0.0
      %1695 = vmatprep.subr.mxu0 0.0
      %1696 = vmatpush2.xpose.msra.mxu0 0.0
      %1697 = vmatprep.subr.mxu0 0.0
      %1698 = vmatpush2.xpose.msra.mxu0 0.0
      %1699 = vmatprep.subr.mxu0 0.0
      %1700 = vmatpush2.xpose.msra.mxu0 0.0
      %1701 = vmatprep.subr.mxu0 0.0
      %1702 = vmatpush2.xpose.msra.mxu0 0.0
      %1703 = vmatprep.subr.mxu0 0.0
      %1704 = vmatpush2.xpose.msra.mxu0 0.0
      %1705 = vmatprep.subr.mxu0 0.0
      %1706 = vmatpush2.xpose.msra.mxu0 0.0
      %1707 = vmatprep.subr.mxu0 0.0
      %1708 = vmatpush2.xpose.msra.mxu0 0.0
      %1709 = vmatprep.subr.mxu0 0.0
      %1710 = vmatpush2.xpose.msra.mxu0 0.0
      %1711 = vmatprep.mubr.f32.mxu0 0.0
      %1712 = vmatmul.mubr.f32.gmra.mxu0 %v1390
      %v1713 = vpop.f32.mrf.mxu0
      %v1714 = vadd.f32 %v1643, %v1713
      %v1715 = vpop.f32.mrf.mxu0
      %1716 = vdwg.mxu0
      %v1717 = vadd.f32 %v1714, %v1594
      %v1718 = vmul.f32 %v1717, 0.35355338
      %v1719 = vadd.f32 %v1718, %v644
      %v1720 = vsel %vm740, %v1719, -inf
      %1721 = vmax.xlane.f32.xlu0 %v1720
      %v1722 = vpop.xlane.xlu0 %1721
      %v1723 = vsub.f32 %v1719, %v1722
      %v1724 = vmul.f32 %v1723, 1.442695
      %v1725 = vpow.pop %v1724
      %v1726 = vsel %vm740, %v1725, 0.0
      %1727 = vadd.xlane.f32.xlu0 %v1726
      %v1728 = vpop.xlane.xlu0 %1727
      %v1729 = vrcp.pop %v1728
      %v1730 = vmul.f32 %v1725, %v1729
      %v1731 = vlaneseq
      %v1732 = vshrl.u32 %v1731, 7
      %v1733 = vsub.s32 0, %v1732
      %v1734 = vrot.slane %v1730, %v1733
      %1736 = vbcast.lane.b32.xlu0 %v1734, 256
      %v1737 = vpop.permute.xlu0 %1736
      %v1738 = vlaneseq
      %v1739 = vshrl.u32 %v1738, 7
      %v1740 = vsub.s32 1, %v1739
      %v1741 = vrot.slane %v1730, %v1740
      %1743 = vbcast.lane.b32.xlu0 %v1741, 256
      %v1744 = vpop.permute.xlu0 %1743
      %v1745 = vlaneseq
      %v1746 = vshrl.u32 %v1745, 7
      %v1747 = vsub.s32 2, %v1746
      %v1748 = vrot.slane %v1730, %v1747
      %1750 = vbcast.lane.b32.xlu0 %v1748, 256
      %v1751 = vpop.permute.xlu0 %1750
      %v1752 = vlaneseq
      %v1753 = vshrl.u32 %v1752, 7
      %v1754 = vsub.s32 3, %v1753
      %v1755 = vrot.slane %v1730, %v1754
      %1757 = vbcast.lane.b32.xlu0 %v1755, 256
      %v1758 = vpop.permute.xlu0 %1757
      %v1759 = vlaneseq
      %v1760 = vshrl.u32 %v1759, 7
      %v1761 = vsub.s32 4, %v1760
      %v1762 = vrot.slane %v1730, %v1761
      %1764 = vbcast.lane.b32.xlu0 %v1762, 256
      %v1765 = vpop.permute.xlu0 %1764
      %v1766 = vlaneseq
      %v1767 = vshrl.u32 %v1766, 7
      %v1768 = vsub.s32 5, %v1767
      %v1769 = vrot.slane %v1730, %v1768
      %1771 = vbcast.lane.b32.xlu0 %v1769, 256
      %v1772 = vpop.permute.xlu0 %1771
      %v1773 = vlaneseq
      %v1774 = vshrl.u32 %v1773, 7
      %v1775 = vsub.s32 6, %v1774
      %v1776 = vrot.slane %v1730, %v1775
      %1778 = vbcast.lane.b32.xlu0 %v1776, 256
      %v1779 = vpop.permute.xlu0 %1778
      %v1780 = vlaneseq
      %v1781 = vshrl.u32 %v1780, 7
      %v1782 = vsub.s32 7, %v1781
      %v1783 = vrot.slane %v1730, %v1782
      %1785 = vbcast.lane.b32.xlu0 %v1783, 256
      %v1786 = vpop.permute.xlu0 %1785
      %v1787 = vmul.f32 %v1737, %v636
      %v1788 = vmul.f32 %v1744, %v637
      %v1789 = vmul.f32 %v1751, %v638
      %v1790 = vmul.f32 %v1758, %v639
      %v1791 = vmul.f32 %v1765, %v640
      %v1792 = vmul.f32 %v1772, %v641
      %v1793 = vmul.f32 %v1779, %v642
      %v1794 = vmul.f32 %v1786, %v643
      %v1795 = vsel %vm918, %v1787, 0.0
      %v1796 = vrot.slane %v1795, 4
      %v1797 = vadd.f32 %v1795, %v1796
      %v1798 = vrot.slane %v1797, 2
      %v1799 = vadd.f32 %v1797, %v1798
      %v1800 = vrot.slane %v1799, 1
      %v1801 = vadd.f32 %v1799, %v1800
      %v1802 = vsel %vm918, %v1788, 0.0
      %v1803 = vrot.slane %v1802, 4
      %v1804 = vadd.f32 %v1802, %v1803
      %v1805 = vrot.slane %v1804, 2
      %v1806 = vadd.f32 %v1804, %v1805
      %v1807 = vrot.slane %v1806, 1
      %v1808 = vadd.f32 %v1806, %v1807
      %v1809 = vsel %vm918, %v1789, 0.0
      %v1810 = vrot.slane %v1809, 4
      %v1811 = vadd.f32 %v1809, %v1810
      %v1812 = vrot.slane %v1811, 2
      %v1813 = vadd.f32 %v1811, %v1812
      %v1814 = vrot.slane %v1813, 1
      %v1815 = vadd.f32 %v1813, %v1814
      %v1816 = vsel %vm918, %v1790, 0.0
      %v1817 = vrot.slane %v1816, 4
      %v1818 = vadd.f32 %v1816, %v1817
      %v1819 = vrot.slane %v1818, 2
      %v1820 = vadd.f32 %v1818, %v1819
      %v1821 = vrot.slane %v1820, 1
      %v1822 = vadd.f32 %v1820, %v1821
      %v1823 = vsel %vm918, %v1791, 0.0
      %v1824 = vrot.slane %v1823, 4
      %v1825 = vadd.f32 %v1823, %v1824
      %v1826 = vrot.slane %v1825, 2
      %v1827 = vadd.f32 %v1825, %v1826
      %v1828 = vrot.slane %v1827, 1
      %v1829 = vadd.f32 %v1827, %v1828
      %v1830 = vsel %vm918, %v1792, 0.0
      %v1831 = vrot.slane %v1830, 4
      %v1832 = vadd.f32 %v1830, %v1831
      %v1833 = vrot.slane %v1832, 2
      %v1834 = vadd.f32 %v1832, %v1833
      %v1835 = vrot.slane %v1834, 1
      %v1836 = vadd.f32 %v1834, %v1835
      %v1837 = vsel %vm918, %v1793, 0.0
      %v1838 = vrot.slane %v1837, 4
      %v1839 = vadd.f32 %v1837, %v1838
      %v1840 = vrot.slane %v1839, 2
      %v1841 = vadd.f32 %v1839, %v1840
      %v1842 = vrot.slane %v1841, 1
      %v1843 = vadd.f32 %v1841, %v1842
      %v1844 = vsel %vm918, %v1794, 0.0
      %v1845 = vrot.slane %v1844, 4
      %v1846 = vadd.f32 %v1844, %v1845
      %v1847 = vrot.slane %v1846, 2
      %v1848 = vadd.f32 %v1846, %v1847
      %v1849 = vrot.slane %v1848, 1
      %v1850 = vadd.f32 %v1848, %v1849
      %v1859 = vsel %vm997, %v1808, %v1801
      %v1860 = vsel %vm999, %v1815, %v1859
      %v1861 = vsel %vm1001, %v1822, %v1860
      %v1862 = vsel %vm1003, %v1829, %v1861
      %v1863 = vsel %vm1005, %v1836, %v1862
      %v1864 = vsel %vm1007, %v1843, %v1863
      %v1865 = vsel %vm1009, %v1850, %v1864
      %v1866 = vsel %vm918, %v1865, 0
      %1868 = vmatprep.subr.mxu0 0.0
      %1869 = vmatpush1.msra.mxu0 0.0
      %1870 = vmatprep.subr.mxu0 0.0
      %1871 = vmatpush1.msra.mxu0 0.0
      %1872 = vmatprep.subr.mxu0 0.0
      %1873 = vmatpush1.msra.mxu0 0.0
      %1874 = vmatprep.subr.mxu0 0.0
      %1875 = vmatpush1.msra.mxu0 0.0
      %1876 = vmatprep.subr.mxu0 0.0
      %1877 = vmatpush1.msra.mxu0 0.0
      %1878 = vmatprep.subr.mxu0 0.0
      %1879 = vmatpush1.msra.mxu0 0.0
      %1880 = vmatprep.subr.mxu0 0.0
      %1881 = vmatpush1.msra.mxu0 0.0
      %1882 = vmatprep.subr.mxu0 0.0
      %1883 = vmatpush1.msra.mxu0 0.0
      %1884 = vmatprep.subr.mxu0 0.0
      %1885 = vmatpush1.msra.mxu0 0.0
      %1886 = vmatprep.subr.mxu0 0.0
      %1887 = vmatpush1.msra.mxu0 0.0
      %1888 = vmatprep.subr.mxu0 0.0
      %1889 = vmatpush1.msra.mxu0 0.0
      %1890 = vmatprep.subr.mxu0 0.0
      %1891 = vmatpush1.msra.mxu0 0.0
      %1892 = vmatprep.subr.mxu0 0.0
      %1893 = vmatpush1.msra.mxu0 0.0
      %1894 = vmatprep.subr.mxu0 0.0
      %1895 = vmatpush1.msra.mxu0 0.0
      %1896 = vmatprep.subr.mxu0 0.0
      %1897 = vmatpush1.msra.mxu0 %v738
      %1898 = vmatprep.subr.mxu0 0.0
      %1899 = vmatpush1.msra.mxu0 %v737
      %1900 = vmatprep.subr.mxu0 0.0
      %1901 = vmatpush2.msra.mxu0 0.0
      %1902 = vmatprep.subr.mxu0 0.0
      %1903 = vmatpush2.msra.mxu0 0.0
      %1904 = vmatprep.subr.mxu0 0.0
      %1905 = vmatpush2.msra.mxu0 0.0
      %1906 = vmatprep.subr.mxu0 0.0
      %1907 = vmatpush2.msra.mxu0 0.0
      %1908 = vmatprep.subr.mxu0 0.0
      %1909 = vmatpush2.msra.mxu0 0.0
      %1910 = vmatprep.subr.mxu0 0.0
      %1911 = vmatpush2.msra.mxu0 0.0
      %1912 = vmatprep.subr.mxu0 0.0
      %1913 = vmatpush2.msra.mxu0 0.0
      %1914 = vmatprep.subr.mxu0 0.0
      %1915 = vmatpush2.msra.mxu0 0.0
      %1916 = vmatprep.subr.mxu0 0.0
      %1917 = vmatpush2.msra.mxu0 0.0
      %1918 = vmatprep.subr.mxu0 0.0
      %1919 = vmatpush2.msra.mxu0 0.0
      %1920 = vmatprep.subr.mxu0 0.0
      %1921 = vmatpush2.msra.mxu0 0.0
      %1922 = vmatprep.subr.mxu0 0.0
      %1923 = vmatpush2.msra.mxu0 0.0
      %1924 = vmatprep.subr.mxu0 0.0
      %1925 = vmatpush2.msra.mxu0 0.0
      %1926 = vmatprep.subr.mxu0 0.0
      %1927 = vmatpush2.msra.mxu0 0.0
      %1928 = vmatprep.subr.mxu0 0.0
      %1929 = vmatpush2.msra.mxu0 0.0
      %1930 = vmatprep.subr.mxu0 0.0
      %1931 = vmatpush2.msra.mxu0 0.0
      %1932 = vmatprep.mubr.f32.mxu0 0.0
      %1933 = vmatmul.mubr.f32.gmra.mxu0 %v1866
      %v1934 = vpop.f32.mrf.mxu0
      %v1935 = vadd.f32 0.0, %v1934
      %v1936 = vpop.f32.mrf.mxu0
      %1937 = vdwg.mxu0
      %1938 = vrot.lane.b32.xlu0 %v727, 56
      %v1939 = vpop.permute.xlu0 %1938
      %v1942 = vsel %vm740, %v1730, 0
      %1944 = vmatprep.subr.mxu0 0.0
      %1945 = vmatpush1.msra.mxu0 0.0
      %1946 = vmatprep.subr.mxu0 0.0
      %1947 = vmatpush1.msra.mxu0 0.0
      %1948 = vmatprep.subr.mxu0 0.0
      %1949 = vmatpush1.msra.mxu0 0.0
      %1950 = vmatprep.subr.mxu0 0.0
      %1951 = vmatpush1.msra.mxu0 0.0
      %1952 = vmatprep.subr.mxu0 0.0
      %1953 = vmatpush1.msra.mxu0 0.0
      %1954 = vmatprep.subr.mxu0 0.0
      %1955 = vmatpush1.msra.mxu0 0.0
      %1956 = vmatprep.subr.mxu0 0.0
      %1957 = vmatpush1.msra.mxu0 0.0
      %1958 = vmatprep.subr.mxu0 0.0
      %1959 = vmatpush1.msra.mxu0 0.0
      %1960 = vmatprep.subr.mxu0 0.0
      %1961 = vmatpush1.msra.mxu0 0.0
      %1962 = vmatprep.subr.mxu0 0.0
      %1963 = vmatpush1.msra.mxu0 0.0
      %1964 = vmatprep.subr.mxu0 0.0
      %1965 = vmatpush1.msra.mxu0 0.0
      %1966 = vmatprep.subr.mxu0 0.0
      %1967 = vmatpush1.msra.mxu0 0.0
      %1968 = vmatprep.subr.mxu0 0.0
      %1969 = vmatpush1.msra.mxu0 0.0
      %1970 = vmatprep.subr.mxu0 0.0
      %1971 = vmatpush1.msra.mxu0 0.0
      %1972 = vmatprep.subr.mxu0 0.0
      %1973 = vmatpush1.msra.mxu0 0.0
      %1974 = vmatprep.subr.mxu0 0.0
      %1975 = vmatpush1.msra.mxu0 %v1939
      %1976 = vmatprep.subr.mxu0 0.0
      %1977 = vmatpush2.msra.mxu0 0.0
      %1978 = vmatprep.subr.mxu0 0.0
      %1979 = vmatpush2.msra.mxu0 0.0
      %1980 = vmatprep.subr.mxu0 0.0
      %1981 = vmatpush2.msra.mxu0 0.0
      %1982 = vmatprep.subr.mxu0 0.0
      %1983 = vmatpush2.msra.mxu0 0.0
      %1984 = vmatprep.subr.mxu0 0.0
      %1985 = vmatpush2.msra.mxu0 0.0
      %1986 = vmatprep.subr.mxu0 0.0
      %1987 = vmatpush2.msra.mxu0 0.0
      %1988 = vmatprep.subr.mxu0 0.0
      %1989 = vmatpush2.msra.mxu0 0.0
      %1990 = vmatprep.subr.mxu0 0.0
      %1991 = vmatpush2.msra.mxu0 0.0
      %1992 = vmatprep.subr.mxu0 0.0
      %1993 = vmatpush2.msra.mxu0 0.0
      %1994 = vmatprep.subr.mxu0 0.0
      %1995 = vmatpush2.msra.mxu0 0.0
      %1996 = vmatprep.subr.mxu0 0.0
      %1997 = vmatpush2.msra.mxu0 0.0
      %1998 = vmatprep.subr.mxu0 0.0
      %1999 = vmatpush2.msra.mxu0 0.0
      %2000 = vmatprep.subr.mxu0 0.0
      %2001 = vmatpush2.msra.mxu0 0.0
      %2002 = vmatprep.subr.mxu0 0.0
      %2003 = vmatpush2.msra.mxu0 0.0
      %2004 = vmatprep.subr.mxu0 0.0
      %2005 = vmatpush2.msra.mxu0 0.0
      %2006 = vmatprep.subr.mxu0 0.0
      %2007 = vmatpush2.msra.mxu0 0.0
      %2008 = vmatprep.mubr.f32.mxu0 0.0
      %2009 = vmatmul.mubr.f32.gmra.mxu0 %v1942
      %v2010 = vpop.f32.mrf.mxu0
      %v2011 = vadd.f32 %v1935, %v2010
      %v2012 = vpop.f32.mrf.mxu0
      %2013 = vdwg.mxu0
      %v2014 = vadd.f32 %v2011, %v1385
      %v2016 = vsel %vm740, %v2014, 0
      %2018 = vmatprep.subr.mxu0 0.0
      %2019 = vmatpush1.msra.mxu0 0.0
      %2020 = vmatprep.subr.mxu0 0.0
      %2021 = vmatpush1.msra.mxu0 0.0
      %2022 = vmatprep.subr.mxu0 0.0
      %2023 = vmatpush1.msra.mxu0 0.0
      %2024 = vmatprep.subr.mxu0 0.0
      %2025 = vmatpush1.msra.mxu0 0.0
      %2026 = vmatprep.subr.mxu0 0.0
      %2027 = vmatpush1.msra.mxu0 0.0
      %2028 = vmatprep.subr.mxu0 0.0
      %2029 = vmatpush1.msra.mxu0 0.0
      %2030 = vmatprep.subr.mxu0 0.0
      %2031 = vmatpush1.msra.mxu0 0.0
      %2032 = vmatprep.subr.mxu0 0.0
      %2033 = vmatpush1.msra.mxu0 0.0
      %2034 = vmatprep.subr.mxu0 0.0
      %2035 = vmatpush1.msra.mxu0 0.0
      %2036 = vmatprep.subr.mxu0 0.0
      %2037 = vmatpush1.msra.mxu0 0.0
      %2038 = vmatprep.subr.mxu0 0.0
      %2039 = vmatpush1.msra.mxu0 0.0
      %2040 = vmatprep.subr.mxu0 0.0
      %2041 = vmatpush1.msra.mxu0 0.0
      %2042 = vmatprep.subr.mxu0 0.0
      %2043 = vmatpush1.msra.mxu0 0.0
      %2044 = vmatprep.subr.mxu0 0.0
      %2045 = vmatpush1.msra.mxu0 0.0
      %2046 = vmatprep.subr.mxu0 0.0
      %2047 = vmatpush1.msra.mxu0 0.0
      %2048 = vmatprep.subr.mxu0 0.0
      %2049 = vmatpush1.msra.mxu0 %v731
      %2050 = vmatprep.subr.mxu0 0.0
      %2051 = vmatpush2.msra.mxu0 0.0
      %2052 = vmatprep.subr.mxu0 0.0
      %2053 = vmatpush2.msra.mxu0 0.0
      %2054 = vmatprep.subr.mxu0 0.0
      %2055 = vmatpush2.msra.mxu0 0.0
      %2056 = vmatprep.subr.mxu0 0.0
      %2057 = vmatpush2.msra.mxu0 0.0
      %2058 = vmatprep.subr.mxu0 0.0
      %2059 = vmatpush2.msra.mxu0 0.0
      %2060 = vmatprep.subr.mxu0 0.0
      %2061 = vmatpush2.msra.mxu0 0.0
      %2062 = vmatprep.subr.mxu0 0.0
      %2063 = vmatpush2.msra.mxu0 0.0
      %2064 = vmatprep.subr.mxu0 0.0
      %2065 = vmatpush2.msra.mxu0 0.0
      %2066 = vmatprep.subr.mxu0 0.0
      %2067 = vmatpush2.msra.mxu0 0.0
      %2068 = vmatprep.subr.mxu0 0.0
      %2069 = vmatpush2.msra.mxu0 0.0
      %2070 = vmatprep.subr.mxu0 0.0
      %2071 = vmatpush2.msra.mxu0 0.0
      %2072 = vmatprep.subr.mxu0 0.0
      %2073 = vmatpush2.msra.mxu0 0.0
      %2074 = vmatprep.subr.mxu0 0.0
      %2075 = vmatpush2.msra.mxu0 0.0
      %2076 = vmatprep.subr.mxu0 0.0
      %2077 = vmatpush2.msra.mxu0 0.0
      %2078 = vmatprep.subr.mxu0 0.0
      %2079 = vmatpush2.msra.mxu0 0.0
      %2080 = vmatprep.subr.mxu0 0.0
      %2081 = vmatpush2.msra.mxu0 0.0
      %2082 = vmatprep.mubr.f32.mxu0 0.0
      %2083 = vmatmul.mubr.f32.gmra.mxu0 %v2016
      %v2084 = vpop.f32.mrf.mxu0
      %v2085 = vadd.f32 0.0, %v2084
      %v2086 = vpop.f32.mrf.mxu0
      %2087 = vdwg.mxu0
      %v2089 = vsel %vm740, %v1387, 0
      %2091 = vmatprep.subr.mxu0 0.0
      %2092 = vmatpush1.msra.mxu0 0.0
      %2093 = vmatprep.subr.mxu0 0.0
      %2094 = vmatpush1.msra.mxu0 0.0
      %2095 = vmatprep.subr.mxu0 0.0
      %2096 = vmatpush1.msra.mxu0 0.0
      %2097 = vmatprep.subr.mxu0 0.0
      %2098 = vmatpush1.msra.mxu0 0.0
      %2099 = vmatprep.subr.mxu0 0.0
      %2100 = vmatpush1.msra.mxu0 0.0
      %2101 = vmatprep.subr.mxu0 0.0
      %2102 = vmatpush1.msra.mxu0 0.0
      %2103 = vmatprep.subr.mxu0 0.0
      %2104 = vmatpush1.msra.mxu0 0.0
      %2105 = vmatprep.subr.mxu0 0.0
      %2106 = vmatpush1.msra.mxu0 0.0
      %2107 = vmatprep.subr.mxu0 0.0
      %2108 = vmatpush1.msra.mxu0 0.0
      %2109 = vmatprep.subr.mxu0 0.0
      %2110 = vmatpush1.msra.mxu0 0.0
      %2111 = vmatprep.subr.mxu0 0.0
      %2112 = vmatpush1.msra.mxu0 0.0
      %2113 = vmatprep.subr.mxu0 0.0
      %2114 = vmatpush1.msra.mxu0 0.0
      %2115 = vmatprep.subr.mxu0 0.0
      %2116 = vmatpush1.msra.mxu0 0.0
      %2117 = vmatprep.subr.mxu0 0.0
      %2118 = vmatpush1.msra.mxu0 0.0
      %2119 = vmatprep.subr.mxu0 0.0
      %2120 = vmatpush1.msra.mxu0 0.0
      %2121 = vmatprep.subr.mxu0 0.0
      %2122 = vmatpush1.msra.mxu0 %v730
      %2123 = vmatprep.subr.mxu0 0.0
      %2124 = vmatpush2.msra.mxu0 0.0
      %2125 = vmatprep.subr.mxu0 0.0
      %2126 = vmatpush2.msra.mxu0 0.0
      %2127 = vmatprep.subr.mxu0 0.0
      %2128 = vmatpush2.msra.mxu0 0.0
      %2129 = vmatprep.subr.mxu0 0.0
      %2130 = vmatpush2.msra.mxu0 0.0
      %2131 = vmatprep.subr.mxu0 0.0
      %2132 = vmatpush2.msra.mxu0 0.0
      %2133 = vmatprep.subr.mxu0 0.0
      %2134 = vmatpush2.msra.mxu0 0.0
      %2135 = vmatprep.subr.mxu0 0.0
      %2136 = vmatpush2.msra.mxu0 0.0
      %2137 = vmatprep.subr.mxu0 0.0
      %2138 = vmatpush2.msra.mxu0 0.0
      %2139 = vmatprep.subr.mxu0 0.0
      %2140 = vmatpush2.msra.mxu0 0.0
      %2141 = vmatprep.subr.mxu0 0.0
      %2142 = vmatpush2.msra.mxu0 0.0
      %2143 = vmatprep.subr.mxu0 0.0
      %2144 = vmatpush2.msra.mxu0 0.0
      %2145 = vmatprep.subr.mxu0 0.0
      %2146 = vmatpush2.msra.mxu0 0.0
      %2147 = vmatprep.subr.mxu0 0.0
      %2148 = vmatpush2.msra.mxu0 0.0
      %2149 = vmatprep.subr.mxu0 0.0
      %2150 = vmatpush2.msra.mxu0 0.0
      %2151 = vmatprep.subr.mxu0 0.0
      %2152 = vmatpush2.msra.mxu0 0.0
      %2153 = vmatprep.subr.mxu0 0.0
      %2154 = vmatpush2.msra.mxu0 0.0
      %2155 = vmatprep.mubr.f32.mxu0 0.0
      %2156 = vmatmul.mubr.f32.gmra.mxu0 %v2089
      %v2157 = vpop.f32.mrf.mxu0
      %v2158 = vadd.f32 %v2085, %v2157
      %v2159 = vpop.f32.mrf.mxu0
      %2160 = vdwg.mxu0
      %2161 = vrot.lane.b32.xlu0 %v727, 112
      %v2162 = vpop.permute.xlu0 %2161
      %v2163 = vsel %vm740, %v2162, 0
      %2165 = vmatprep.subr.mxu0 0.0
      %2166 = vmatpush1.xpose.msra.mxu0 0.0
      %2167 = vmatprep.subr.mxu0 0.0
      %2168 = vmatpush1.xpose.msra.mxu0 0.0
      %2169 = vmatprep.subr.mxu0 0.0
      %2170 = vmatpush1.xpose.msra.mxu0 0.0
      %2171 = vmatprep.subr.mxu0 0.0
      %2172 = vmatpush1.xpose.msra.mxu0 0.0
      %2173 = vmatprep.subr.mxu0 0.0
      %2174 = vmatpush1.xpose.msra.mxu0 0.0
      %2175 = vmatprep.subr.mxu0 0.0
      %2176 = vmatpush1.xpose.msra.mxu0 0.0
      %2177 = vmatprep.subr.mxu0 0.0
      %2178 = vmatpush1.xpose.msra.mxu0 0.0
      %2179 = vmatprep.subr.mxu0 0.0
      %2180 = vmatpush1.xpose.msra.mxu0 0.0
      %2181 = vmatprep.subr.mxu0 0.0
      %2182 = vmatpush1.xpose.msra.mxu0 0.0
      %2183 = vmatprep.subr.mxu0 0.0
      %2184 = vmatpush1.xpose.msra.mxu0 0.0
      %2185 = vmatprep.subr.mxu0 0.0
      %2186 = vmatpush1.xpose.msra.mxu0 0.0
      %2187 = vmatprep.subr.mxu0 0.0
      %2188 = vmatpush1.xpose.msra.mxu0 0.0
      %2189 = vmatprep.subr.mxu0 0.0
      %2190 = vmatpush1.xpose.msra.mxu0 0.0
      %2191 = vmatprep.subr.mxu0 0.0
      %2192 = vmatpush1.xpose.msra.mxu0 0.0
      %2193 = vmatprep.subr.mxu0 0.0
      %2194 = vmatpush1.xpose.msra.mxu0 %v748
      %2195 = vmatprep.subr.mxu0 0.0
      %2196 = vmatpush1.xpose.msra.mxu0 %v745
      %2197 = vmatprep.subr.mxu0 0.0
      %2198 = vmatpush2.xpose.msra.mxu0 0.0
      %2199 = vmatprep.subr.mxu0 0.0
      %2200 = vmatpush2.xpose.msra.mxu0 0.0
      %2201 = vmatprep.subr.mxu0 0.0
      %2202 = vmatpush2.xpose.msra.mxu0 0.0
      %2203 = vmatprep.subr.mxu0 0.0
      %2204 = vmatpush2.xpose.msra.mxu0 0.0
      %2205 = vmatprep.subr.mxu0 0.0
      %2206 = vmatpush2.xpose.msra.mxu0 0.0
      %2207 = vmatprep.subr.mxu0 0.0
      %2208 = vmatpush2.xpose.msra.mxu0 0.0
      %2209 = vmatprep.subr.mxu0 0.0
      %2210 = vmatpush2.xpose.msra.mxu0 0.0
      %2211 = vmatprep.subr.mxu0 0.0
      %2212 = vmatpush2.xpose.msra.mxu0 0.0
      %2213 = vmatprep.subr.mxu0 0.0
      %2214 = vmatpush2.xpose.msra.mxu0 0.0
      %2215 = vmatprep.subr.mxu0 0.0
      %2216 = vmatpush2.xpose.msra.mxu0 0.0
      %2217 = vmatprep.subr.mxu0 0.0
      %2218 = vmatpush2.xpose.msra.mxu0 0.0
      %2219 = vmatprep.subr.mxu0 0.0
      %2220 = vmatpush2.xpose.msra.mxu0 0.0
      %2221 = vmatprep.subr.mxu0 0.0
      %2222 = vmatpush2.xpose.msra.mxu0 0.0
      %2223 = vmatprep.subr.mxu0 0.0
      %2224 = vmatpush2.xpose.msra.mxu0 0.0
      %2225 = vmatprep.subr.mxu0 0.0
      %2226 = vmatpush2.xpose.msra.mxu0 0.0
      %2227 = vmatprep.subr.mxu0 0.0
      %2228 = vmatpush2.xpose.msra.mxu0 0.0
      %2229 = vmatprep.mubr.f32.mxu0 0.0
      %2230 = vmatmul.mubr.f32.gmra.mxu0 %v2163
      %v2231 = vpop.f32.mrf.mxu0
      %v2232 = vadd.f32 0.0, %v2231
      %v2233 = vpop.f32.mrf.mxu0
      %2234 = vdwg.mxu0
      %v2236 = vcombine.high %v2232, %v2232
      %v2238 = vunpack.c.l.s4 1966171168
      %v2239 = vunpack.c.0.s8 %v2238
      %v2240 = vlaneseq
      %v2241 = vshrl.u32 %v2240, 7
      %v2242 = vsub.s32 %v2239, %v2241
      %v2243 = vrot.slane %v2232, %v2242
      %v2245 = vunpack.c.l.s4 1966171168
      %v2246 = vunpack.c.0.s8 %v2245
      %v2247 = vlaneseq
      %v2248 = vshrl.u32 %v2247, 7
      %v2249 = vsub.s32 %v2246, %v2248
      %v2250 = vrot.slane %v2236, %v2249
      %v2251 = vcombine.high %v2243, %v2243
      %v2252 = vcombine.high %v2250, %v2250
      %v2254 = vunpack.c.l.s4 1966171168
      %v2255 = vunpack.c.0.s8 %v2254
      %v2256 = vlaneseq
      %v2257 = vshrl.u32 %v2256, 7
      %v2258 = vsub.s32 %v2255, %v2257
      %v2259 = vrot.slane %v2243, %v2258
      %v2261 = vunpack.c.l.s4 1966171168
      %v2262 = vunpack.c.0.s8 %v2261
      %v2263 = vlaneseq
      %v2264 = vshrl.u32 %v2263, 7
      %v2265 = vsub.s32 %v2262, %v2264
      %v2266 = vrot.slane %v2250, %v2265
      %v2268 = vunpack.c.l.s4 1966171168
      %v2269 = vunpack.c.0.s8 %v2268
      %v2270 = vlaneseq
      %v2271 = vshrl.u32 %v2270, 7
      %v2272 = vsub.s32 %v2269, %v2271
      %v2273 = vrot.slane %v2251, %v2272
      %v2275 = vunpack.c.l.s4 1966171168
      %v2276 = vunpack.c.0.s8 %v2275
      %v2277 = vlaneseq
      %v2278 = vshrl.u32 %v2277, 7
      %v2279 = vsub.s32 %v2276, %v2278
      %v2280 = vrot.slane %v2252, %v2279
      %v2281 = vcombine.high %v2259, %v2259
      %v2282 = vcombine.high %v2266, %v2266
      %v2283 = vcombine.high %v2273, %v2273
      %v2284 = vcombine.high %v2280, %v2280
      %v2285 = vlaneseq
      %v2286 = vshrl.u32 %v2285, 7
      %v2287 = vsub.s32 0, %v2286
      %v2288 = vrot.slane %v2259, %v2287
      %v2289 = vlaneseq
      %v2290 = vshrl.u32 %v2289, 7
      %v2291 = vsub.s32 0, %v2290
      %v2292 = vrot.slane %v2273, %v2291
      %v2293 = vlaneseq
      %v2294 = vshrl.u32 %v2293, 7
      %v2295 = vsub.s32 0, %v2294
      %v2296 = vrot.slane %v2281, %v2295
      %v2297 = vlaneseq
      %v2298 = vshrl.u32 %v2297, 7
      %v2299 = vsub.s32 0, %v2298
      %v2300 = vrot.slane %v2283, %v2299
      %v2301 = vlaneseq
      %v2302 = vshrl.u32 %v2301, 7
      %v2303 = vsub.s32 0, %v2302
      %v2304 = vrot.slane %v2266, %v2303
      %v2305 = vlaneseq
      %v2306 = vshrl.u32 %v2305, 7
      %v2307 = vsub.s32 0, %v2306
      %v2308 = vrot.slane %v2280, %v2307
      %v2309 = vlaneseq
      %v2310 = vshrl.u32 %v2309, 7
      %v2311 = vsub.s32 0, %v2310
      %v2312 = vrot.slane %v2282, %v2311
      %v2313 = vlaneseq
      %v2314 = vshrl.u32 %v2313, 7
      %v2315 = vsub.s32 0, %v2314
      %v2316 = vrot.slane %v2284, %v2315
      %v2325 = vmul.f32 %v2288, %v636
      %v2326 = vmul.f32 %v2292, %v637
      %v2327 = vmul.f32 %v2296, %v638
      %v2328 = vmul.f32 %v2300, %v639
      %v2329 = vmul.f32 %v2304, %v640
      %v2330 = vmul.f32 %v2308, %v641
      %v2331 = vmul.f32 %v2312, %v642
      %v2332 = vmul.f32 %v2316, %v643
      %v2333 = vsel %vm918, %v2325, 0.0
      %2334 = vadd.xlane.f32.xlu0 %v2333
      %v2335 = vpop.xlane.xlu0 %2334
      %v2336 = vsel %vm918, %v2326, 0.0
      %2337 = vadd.xlane.f32.xlu0 %v2336
      %v2338 = vpop.xlane.xlu0 %2337
      %v2339 = vsel %vm918, %v2327, 0.0
      %2340 = vadd.xlane.f32.xlu0 %v2339
      %v2341 = vpop.xlane.xlu0 %2340
      %v2342 = vsel %vm918, %v2328, 0.0
      %2343 = vadd.xlane.f32.xlu0 %v2342
      %v2344 = vpop.xlane.xlu0 %2343
      %v2345 = vsel %vm918, %v2329, 0.0
      %2346 = vadd.xlane.f32.xlu0 %v2345
      %v2347 = vpop.xlane.xlu0 %2346
      %v2348 = vsel %vm918, %v2330, 0.0
      %2349 = vadd.xlane.f32.xlu0 %v2348
      %v2350 = vpop.xlane.xlu0 %2349
      %v2351 = vsel %vm918, %v2331, 0.0
      %2352 = vadd.xlane.f32.xlu0 %v2351
      %v2353 = vpop.xlane.xlu0 %2352
      %v2354 = vsel %vm918, %v2332, 0.0
      %2355 = vadd.xlane.f32.xlu0 %v2354
      %v2356 = vpop.xlane.xlu0 %2355
      %2357 = vrot.lane.b32.xlu0 %v947, 16
      %v2358 = vpop.permute.xlu0 %2357
      %v2360 = vmul.f32 %v727, %v2358
      %2362 = vrot.lane.b32.xlu0 %v2360, 112
      %v2363 = vpop.permute.xlu0 %2362
      %v2365 = vsel %vm740, %v2363, 0.0
      %2366 = vadd.xlane.f32.xlu0 %v2365
      %v2367 = vpop.xlane.xlu0 %2366
      %2368 = vrot.lane.b32.xlu0 %v727, 80
      %v2369 = vpop.permute.xlu0 %2368
      %v2378 = vlaneseq
      %v2379 = vshrl.u32 %v2378, 7
      %v2380 = vsub.s32 %v964, %v2379
      %v2381 = vrot.slane %v2335, %v2380
      %v2382 = vlaneseq
      %v2383 = vshrl.u32 %v2382, 7
      %v2384 = vsub.s32 %v964, %v2383
      %v2385 = vrot.slane %v2338, %v2384
      %v2386 = vlaneseq
      %v2387 = vshrl.u32 %v2386, 7
      %v2388 = vsub.s32 %v964, %v2387
      %v2389 = vrot.slane %v2341, %v2388
      %v2390 = vlaneseq
      %v2391 = vshrl.u32 %v2390, 7
      %v2392 = vsub.s32 %v964, %v2391
      %v2393 = vrot.slane %v2344, %v2392
      %v2394 = vlaneseq
      %v2395 = vshrl.u32 %v2394, 7
      %v2396 = vsub.s32 %v964, %v2395
      %v2397 = vrot.slane %v2347, %v2396
      %v2398 = vlaneseq
      %v2399 = vshrl.u32 %v2398, 7
      %v2400 = vsub.s32 %v964, %v2399
      %v2401 = vrot.slane %v2350, %v2400
      %v2402 = vlaneseq
      %v2403 = vshrl.u32 %v2402, 7
      %v2404 = vsub.s32 %v964, %v2403
      %v2405 = vrot.slane %v2353, %v2404
      %v2406 = vlaneseq
      %v2407 = vshrl.u32 %v2406, 7
      %v2408 = vsub.s32 %v964, %v2407
      %v2409 = vrot.slane %v2356, %v2408
      %v2410 = vsel %vm997, %v2385, %v2381
      %v2411 = vsel %vm999, %v2389, %v2410
      %v2412 = vsel %vm1001, %v2393, %v2411
      %v2413 = vsel %vm1003, %v2397, %v2412
      %v2414 = vsel %vm1005, %v2401, %v2413
      %v2415 = vsel %vm1007, %v2405, %v2414
      %v2416 = vsel %vm1009, %v2409, %v2415
      %v2418 = vsel %vm740, %v2369, 0
      %2420 = vmatprep.subr.mxu0 0.0
      %2421 = vmatpush1.xpose.msra.mxu0 0.0
      %2422 = vmatprep.subr.mxu0 0.0
      %2423 = vmatpush1.xpose.msra.mxu0 0.0
      %2424 = vmatprep.subr.mxu0 0.0
      %2425 = vmatpush1.xpose.msra.mxu0 0.0
      %2426 = vmatprep.subr.mxu0 0.0
      %2427 = vmatpush1.xpose.msra.mxu0 0.0
      %2428 = vmatprep.subr.mxu0 0.0
      %2429 = vmatpush1.xpose.msra.mxu0 0.0
      %2430 = vmatprep.subr.mxu0 0.0
      %2431 = vmatpush1.xpose.msra.mxu0 0.0
      %2432 = vmatprep.subr.mxu0 0.0
      %2433 = vmatpush1.xpose.msra.mxu0 0.0
      %2434 = vmatprep.subr.mxu0 0.0
      %2435 = vmatpush1.xpose.msra.mxu0 0.0
      %2436 = vmatprep.subr.mxu0 0.0
      %2437 = vmatpush1.xpose.msra.mxu0 0.0
      %2438 = vmatprep.subr.mxu0 0.0
      %2439 = vmatpush1.xpose.msra.mxu0 0.0
      %2440 = vmatprep.subr.mxu0 0.0
      %2441 = vmatpush1.xpose.msra.mxu0 0.0
      %2442 = vmatprep.subr.mxu0 0.0
      %2443 = vmatpush1.xpose.msra.mxu0 0.0
      %2444 = vmatprep.subr.mxu0 0.0
      %2445 = vmatpush1.xpose.msra.mxu0 0.0
      %2446 = vmatprep.subr.mxu0 0.0
      %2447 = vmatpush1.xpose.msra.mxu0 0.0
      %2448 = vmatprep.subr.mxu0 0.0
      %2449 = vmatpush1.xpose.msra.mxu0 0.0
      %2450 = vmatprep.subr.mxu0 0.0
      %2451 = vmatpush1.xpose.msra.mxu0 %v2418
      %2452 = vmatprep.subr.mxu0 0.0
      %2453 = vmatpush2.xpose.msra.mxu0 0.0
      %2454 = vmatprep.subr.mxu0 0.0
      %2455 = vmatpush2.xpose.msra.mxu0 0.0
      %2456 = vmatprep.subr.mxu0 0.0
      %2457 = vmatpush2.xpose.msra.mxu0 0.0
      %2458 = vmatprep.subr.mxu0 0.0
      %2459 = vmatpush2.xpose.msra.mxu0 0.0
      %2460 = vmatprep.subr.mxu0 0.0
      %2461 = vmatpush2.xpose.msra.mxu0 0.0
      %2462 = vmatprep.subr.mxu0 0.0
      %2463 = vmatpush2.xpose.msra.mxu0 0.0
      %2464 = vmatprep.subr.mxu0 0.0
      %2465 = vmatpush2.xpose.msra.mxu0 0.0
      %2466 = vmatprep.subr.mxu0 0.0
      %2467 = vmatpush2.xpose.msra.mxu0 0.0
      %2468 = vmatprep.subr.mxu0 0.0
      %2469 = vmatpush2.xpose.msra.mxu0 0.0
      %2470 = vmatprep.subr.mxu0 0.0
      %2471 = vmatpush2.xpose.msra.mxu0 0.0
      %2472 = vmatprep.subr.mxu0 0.0
      %2473 = vmatpush2.xpose.msra.mxu0 0.0
      %2474 = vmatprep.subr.mxu0 0.0
      %2475 = vmatpush2.xpose.msra.mxu0 0.0
      %2476 = vmatprep.subr.mxu0 0.0
      %2477 = vmatpush2.xpose.msra.mxu0 0.0
      %2478 = vmatprep.subr.mxu0 0.0
      %2479 = vmatpush2.xpose.msra.mxu0 0.0
      %2480 = vmatprep.subr.mxu0 0.0
      %2481 = vmatpush2.xpose.msra.mxu0 0.0
      %2482 = vmatprep.subr.mxu0 0.0
      %2483 = vmatpush2.xpose.msra.mxu0 0.0
      %2484 = vmatprep.mubr.f32.mxu0 0.0
      %2485 = vmatmul.mubr.f32.gmra.mxu0 %v2163
      %v2486 = vpop.f32.mrf.mxu0
      %v2487 = vadd.f32 %v2416, %v2486
      %v2488 = vpop.f32.mrf.mxu0
      %2489 = vdwg.mxu0
      %v2490 = vadd.f32 %v2487, %v2367
      %v2491 = vmul.f32 %v2490, 0.35355338
      %v2492 = vadd.f32 %v2491, %v644
      %v2493 = vsel %vm740, %v2492, -inf
      %2494 = vmax.xlane.f32.xlu0 %v2493
      %v2495 = vpop.xlane.xlu0 %2494
      %v2496 = vsub.f32 %v2492, %v2495
      %v2497 = vmul.f32 %v2496, 1.442695
      %v2498 = vpow.pop %v2497
      %v2499 = vsel %vm740, %v2498, 0.0
      %2500 = vadd.xlane.f32.xlu0 %v2499
      %v2501 = vpop.xlane.xlu0 %2500
      %v2502 = vrcp.pop %v2501
      %v2503 = vmul.f32 %v2498, %v2502
      %v2504 = vlaneseq
      %v2505 = vshrl.u32 %v2504, 7
      %v2506 = vsub.s32 0, %v2505
      %v2507 = vrot.slane %v2503, %v2506
      %2509 = vbcast.lane.b32.xlu0 %v2507, 256
      %v2510 = vpop.permute.xlu0 %2509
      %v2511 = vlaneseq
      %v2512 = vshrl.u32 %v2511, 7
      %v2513 = vsub.s32 1, %v2512
      %v2514 = vrot.slane %v2503, %v2513
      %2516 = vbcast.lane.b32.xlu0 %v2514, 256
      %v2517 = vpop.permute.xlu0 %2516
      %v2518 = vlaneseq
      %v2519 = vshrl.u32 %v2518, 7
      %v2520 = vsub.s32 2, %v2519
      %v2521 = vrot.slane %v2503, %v2520
      %2523 = vbcast.lane.b32.xlu0 %v2521, 256
      %v2524 = vpop.permute.xlu0 %2523
      %v2525 = vlaneseq
      %v2526 = vshrl.u32 %v2525, 7
      %v2527 = vsub.s32 3, %v2526
      %v2528 = vrot.slane %v2503, %v2527
      %2530 = vbcast.lane.b32.xlu0 %v2528, 256
      %v2531 = vpop.permute.xlu0 %2530
      %v2532 = vlaneseq
      %v2533 = vshrl.u32 %v2532, 7
      %v2534 = vsub.s32 4, %v2533
      %v2535 = vrot.slane %v2503, %v2534
      %2537 = vbcast.lane.b32.xlu0 %v2535, 256
      %v2538 = vpop.permute.xlu0 %2537
      %v2539 = vlaneseq
      %v2540 = vshrl.u32 %v2539, 7
      %v2541 = vsub.s32 5, %v2540
      %v2542 = vrot.slane %v2503, %v2541
      %2544 = vbcast.lane.b32.xlu0 %v2542, 256
      %v2545 = vpop.permute.xlu0 %2544
      %v2546 = vlaneseq
      %v2547 = vshrl.u32 %v2546, 7
      %v2548 = vsub.s32 6, %v2547
      %v2549 = vrot.slane %v2503, %v2548
      %2551 = vbcast.lane.b32.xlu0 %v2549, 256
      %v2552 = vpop.permute.xlu0 %2551
      %v2553 = vlaneseq
      %v2554 = vshrl.u32 %v2553, 7
      %v2555 = vsub.s32 7, %v2554
      %v2556 = vrot.slane %v2503, %v2555
      %2558 = vbcast.lane.b32.xlu0 %v2556, 256
      %v2559 = vpop.permute.xlu0 %2558
      %v2560 = vmul.f32 %v2510, %v636
      %v2561 = vmul.f32 %v2517, %v637
      %v2562 = vmul.f32 %v2524, %v638
      %v2563 = vmul.f32 %v2531, %v639
      %v2564 = vmul.f32 %v2538, %v640
      %v2565 = vmul.f32 %v2545, %v641
      %v2566 = vmul.f32 %v2552, %v642
      %v2567 = vmul.f32 %v2559, %v643
      %v2568 = vsel %vm918, %v2560, 0.0
      %v2569 = vrot.slane %v2568, 4
      %v2570 = vadd.f32 %v2568, %v2569
      %v2571 = vrot.slane %v2570, 2
      %v2572 = vadd.f32 %v2570, %v2571
      %v2573 = vrot.slane %v2572, 1
      %v2574 = vadd.f32 %v2572, %v2573
      %v2575 = vsel %vm918, %v2561, 0.0
      %v2576 = vrot.slane %v2575, 4
      %v2577 = vadd.f32 %v2575, %v2576
      %v2578 = vrot.slane %v2577, 2
      %v2579 = vadd.f32 %v2577, %v2578
      %v2580 = vrot.slane %v2579, 1
      %v2581 = vadd.f32 %v2579, %v2580
      %v2582 = vsel %vm918, %v2562, 0.0
      %v2583 = vrot.slane %v2582, 4
      %v2584 = vadd.f32 %v2582, %v2583
      %v2585 = vrot.slane %v2584, 2
      %v2586 = vadd.f32 %v2584, %v2585
      %v2587 = vrot.slane %v2586, 1
      %v2588 = vadd.f32 %v2586, %v2587
      %v2589 = vsel %vm918, %v2563, 0.0
      %v2590 = vrot.slane %v2589, 4
      %v2591 = vadd.f32 %v2589, %v2590
      %v2592 = vrot.slane %v2591, 2
      %v2593 = vadd.f32 %v2591, %v2592
      %v2594 = vrot.slane %v2593, 1
      %v2595 = vadd.f32 %v2593, %v2594
      %v2596 = vsel %vm918, %v2564, 0.0
      %v2597 = vrot.slane %v2596, 4
      %v2598 = vadd.f32 %v2596, %v2597
      %v2599 = vrot.slane %v2598, 2
      %v2600 = vadd.f32 %v2598, %v2599
      %v2601 = vrot.slane %v2600, 1
      %v2602 = vadd.f32 %v2600, %v2601
      %v2603 = vsel %vm918, %v2565, 0.0
      %v2604 = vrot.slane %v2603, 4
      %v2605 = vadd.f32 %v2603, %v2604
      %v2606 = vrot.slane %v2605, 2
      %v2607 = vadd.f32 %v2605, %v2606
      %v2608 = vrot.slane %v2607, 1
      %v2609 = vadd.f32 %v2607, %v2608
      %v2610 = vsel %vm918, %v2566, 0.0
      %v2611 = vrot.slane %v2610, 4
      %v2612 = vadd.f32 %v2610, %v2611
      %v2613 = vrot.slane %v2612, 2
      %v2614 = vadd.f32 %v2612, %v2613
      %v2615 = vrot.slane %v2614, 1
      %v2616 = vadd.f32 %v2614, %v2615
      %v2617 = vsel %vm918, %v2567, 0.0
      %v2618 = vrot.slane %v2617, 4
      %v2619 = vadd.f32 %v2617, %v2618
      %v2620 = vrot.slane %v2619, 2
      %v2621 = vadd.f32 %v2619, %v2620
      %v2622 = vrot.slane %v2621, 1
      %v2623 = vadd.f32 %v2621, %v2622
      %v2632 = vsel %vm997, %v2581, %v2574
      %v2633 = vsel %vm999, %v2588, %v2632
      %v2634 = vsel %vm1001, %v2595, %v2633
      %v2635 = vsel %vm1003, %v2602, %v2634
      %v2636 = vsel %vm1005, %v2609, %v2635
      %v2637 = vsel %vm1007, %v2616, %v2636
      %v2638 = vsel %vm1009, %v2623, %v2637
      %v2639 = vsel %vm918, %v2638, 0
      %2641 = vmatprep.subr.mxu0 0.0
      %2642 = vmatpush1.msra.mxu0 0.0
      %2643 = vmatprep.subr.mxu0 0.0
      %2644 = vmatpush1.msra.mxu0 0.0
      %2645 = vmatprep.subr.mxu0 0.0
      %2646 = vmatpush1.msra.mxu0 0.0
      %2647 = vmatprep.subr.mxu0 0.0
      %2648 = vmatpush1.msra.mxu0 0.0
      %2649 = vmatprep.subr.mxu0 0.0
      %2650 = vmatpush1.msra.mxu0 0.0
      %2651 = vmatprep.subr.mxu0 0.0
      %2652 = vmatpush1.msra.mxu0 0.0
      %2653 = vmatprep.subr.mxu0 0.0
      %2654 = vmatpush1.msra.mxu0 0.0
      %2655 = vmatprep.subr.mxu0 0.0
      %2656 = vmatpush1.msra.mxu0 0.0
      %2657 = vmatprep.subr.mxu0 0.0
      %2658 = vmatpush1.msra.mxu0 0.0
      %2659 = vmatprep.subr.mxu0 0.0
      %2660 = vmatpush1.msra.mxu0 0.0
      %2661 = vmatprep.subr.mxu0 0.0
      %2662 = vmatpush1.msra.mxu0 0.0
      %2663 = vmatprep.subr.mxu0 0.0
      %2664 = vmatpush1.msra.mxu0 0.0
      %2665 = vmatprep.subr.mxu0 0.0
      %2666 = vmatpush1.msra.mxu0 0.0
      %2667 = vmatprep.subr.mxu0 0.0
      %2668 = vmatpush1.msra.mxu0 0.0
      %2669 = vmatprep.subr.mxu0 0.0
      %2670 = vmatpush1.msra.mxu0 %v738
      %2671 = vmatprep.subr.mxu0 0.0
      %2672 = vmatpush1.msra.mxu0 %v737
      %2673 = vmatprep.subr.mxu0 0.0
      %2674 = vmatpush2.msra.mxu0 0.0
      %2675 = vmatprep.subr.mxu0 0.0
      %2676 = vmatpush2.msra.mxu0 0.0
      %2677 = vmatprep.subr.mxu0 0.0
      %2678 = vmatpush2.msra.mxu0 0.0
      %2679 = vmatprep.subr.mxu0 0.0
      %2680 = vmatpush2.msra.mxu0 0.0
      %2681 = vmatprep.subr.mxu0 0.0
      %2682 = vmatpush2.msra.mxu0 0.0
      %2683 = vmatprep.subr.mxu0 0.0
      %2684 = vmatpush2.msra.mxu0 0.0
      %2685 = vmatprep.subr.mxu0 0.0
      %2686 = vmatpush2.msra.mxu0 0.0
      %2687 = vmatprep.subr.mxu0 0.0
      %2688 = vmatpush2.msra.mxu0 0.0
      %2689 = vmatprep.subr.mxu0 0.0
      %2690 = vmatpush2.msra.mxu0 0.0
      %2691 = vmatprep.subr.mxu0 0.0
      %2692 = vmatpush2.msra.mxu0 0.0
      %2693 = vmatprep.subr.mxu0 0.0
      %2694 = vmatpush2.msra.mxu0 0.0
      %2695 = vmatprep.subr.mxu0 0.0
      %2696 = vmatpush2.msra.mxu0 0.0
      %2697 = vmatprep.subr.mxu0 0.0
      %2698 = vmatpush2.msra.mxu0 0.0
      %2699 = vmatprep.subr.mxu0 0.0
      %2700 = vmatpush2.msra.mxu0 0.0
      %2701 = vmatprep.subr.mxu0 0.0
      %2702 = vmatpush2.msra.mxu0 0.0
      %2703 = vmatprep.subr.mxu0 0.0
      %2704 = vmatpush2.msra.mxu0 0.0
      %2705 = vmatprep.mubr.f32.mxu0 0.0
      %2706 = vmatmul.mubr.f32.gmra.mxu0 %v2639
      %v2707 = vpop.f32.mrf.mxu0
      %v2708 = vadd.f32 0.0, %v2707
      %v2709 = vpop.f32.mrf.mxu0
      %2710 = vdwg.mxu0
      %2711 = vrot.lane.b32.xlu0 %v727, 48
      %v2712 = vpop.permute.xlu0 %2711
      %v2715 = vsel %vm740, %v2503, 0
      %2717 = vmatprep.subr.mxu0 0.0
      %2718 = vmatpush1.msra.mxu0 0.0
      %2719 = vmatprep.subr.mxu0 0.0
      %2720 = vmatpush1.msra.mxu0 0.0
      %2721 = vmatprep.subr.mxu0 0.0
      %2722 = vmatpush1.msra.mxu0 0.0
      %2723 = vmatprep.subr.mxu0 0.0
      %2724 = vmatpush1.msra.mxu0 0.0
      %2725 = vmatprep.subr.mxu0 0.0
      %2726 = vmatpush1.msra.mxu0 0.0
      %2727 = vmatprep.subr.mxu0 0.0
      %2728 = vmatpush1.msra.mxu0 0.0
      %2729 = vmatprep.subr.mxu0 0.0
      %2730 = vmatpush1.msra.mxu0 0.0
      %2731 = vmatprep.subr.mxu0 0.0
      %2732 = vmatpush1.msra.mxu0 0.0
      %2733 = vmatprep.subr.mxu0 0.0
      %2734 = vmatpush1.msra.mxu0 0.0
      %2735 = vmatprep.subr.mxu0 0.0
      %2736 = vmatpush1.msra.mxu0 0.0
      %2737 = vmatprep.subr.mxu0 0.0
      %2738 = vmatpush1.msra.mxu0 0.0
      %2739 = vmatprep.subr.mxu0 0.0
      %2740 = vmatpush1.msra.mxu0 0.0
      %2741 = vmatprep.subr.mxu0 0.0
      %2742 = vmatpush1.msra.mxu0 0.0
      %2743 = vmatprep.subr.mxu0 0.0
      %2744 = vmatpush1.msra.mxu0 0.0
      %2745 = vmatprep.subr.mxu0 0.0
      %2746 = vmatpush1.msra.mxu0 0.0
      %2747 = vmatprep.subr.mxu0 0.0
      %2748 = vmatpush1.msra.mxu0 %v2712
      %2749 = vmatprep.subr.mxu0 0.0
      %2750 = vmatpush2.msra.mxu0 0.0
      %2751 = vmatprep.subr.mxu0 0.0
      %2752 = vmatpush2.msra.mxu0 0.0
      %2753 = vmatprep.subr.mxu0 0.0
      %2754 = vmatpush2.msra.mxu0 0.0
      %2755 = vmatprep.subr.mxu0 0.0
      %2756 = vmatpush2.msra.mxu0 0.0
      %2757 = vmatprep.subr.mxu0 0.0
      %2758 = vmatpush2.msra.mxu0 0.0
      %2759 = vmatprep.subr.mxu0 0.0
      %2760 = vmatpush2.msra.mxu0 0.0
      %2761 = vmatprep.subr.mxu0 0.0
      %2762 = vmatpush2.msra.mxu0 0.0
      %2763 = vmatprep.subr.mxu0 0.0
      %2764 = vmatpush2.msra.mxu0 0.0
      %2765 = vmatprep.subr.mxu0 0.0
      %2766 = vmatpush2.msra.mxu0 0.0
      %2767 = vmatprep.subr.mxu0 0.0
      %2768 = vmatpush2.msra.mxu0 0.0
      %2769 = vmatprep.subr.mxu0 0.0
      %2770 = vmatpush2.msra.mxu0 0.0
      %2771 = vmatprep.subr.mxu0 0.0
      %2772 = vmatpush2.msra.mxu0 0.0
      %2773 = vmatprep.subr.mxu0 0.0
      %2774 = vmatpush2.msra.mxu0 0.0
      %2775 = vmatprep.subr.mxu0 0.0
      %2776 = vmatpush2.msra.mxu0 0.0
      %2777 = vmatprep.subr.mxu0 0.0
      %2778 = vmatpush2.msra.mxu0 0.0
      %2779 = vmatprep.subr.mxu0 0.0
      %2780 = vmatpush2.msra.mxu0 0.0
      %2781 = vmatprep.mubr.f32.mxu0 0.0
      %2782 = vmatmul.mubr.f32.gmra.mxu0 %v2715
      %v2783 = vpop.f32.mrf.mxu0
      %v2784 = vadd.f32 %v2708, %v2783
      %v2785 = vpop.f32.mrf.mxu0
      %2786 = vdwg.mxu0
      %v2787 = vadd.f32 %v2784, %v1385
      %v2789 = vsel %vm740, %v2787, 0
      %2791 = vmatprep.subr.mxu0 0.0
      %2792 = vmatpush1.msra.mxu0 0.0
      %2793 = vmatprep.subr.mxu0 0.0
      %2794 = vmatpush1.msra.mxu0 0.0
      %2795 = vmatprep.subr.mxu0 0.0
      %2796 = vmatpush1.msra.mxu0 0.0
      %2797 = vmatprep.subr.mxu0 0.0
      %2798 = vmatpush1.msra.mxu0 0.0
      %2799 = vmatprep.subr.mxu0 0.0
      %2800 = vmatpush1.msra.mxu0 0.0
      %2801 = vmatprep.subr.mxu0 0.0
      %2802 = vmatpush1.msra.mxu0 0.0
      %2803 = vmatprep.subr.mxu0 0.0
      %2804 = vmatpush1.msra.mxu0 0.0
      %2805 = vmatprep.subr.mxu0 0.0
      %2806 = vmatpush1.msra.mxu0 0.0
      %2807 = vmatprep.subr.mxu0 0.0
      %2808 = vmatpush1.msra.mxu0 0.0
      %2809 = vmatprep.subr.mxu0 0.0
      %2810 = vmatpush1.msra.mxu0 0.0
      %2811 = vmatprep.subr.mxu0 0.0
      %2812 = vmatpush1.msra.mxu0 0.0
      %2813 = vmatprep.subr.mxu0 0.0
      %2814 = vmatpush1.msra.mxu0 0.0
      %2815 = vmatprep.subr.mxu0 0.0
      %2816 = vmatpush1.msra.mxu0 0.0
      %2817 = vmatprep.subr.mxu0 0.0
      %2818 = vmatpush1.msra.mxu0 0.0
      %2819 = vmatprep.subr.mxu0 0.0
      %2820 = vmatpush1.msra.mxu0 0.0
      %2821 = vmatprep.subr.mxu0 0.0
      %2822 = vmatpush1.msra.mxu0 %v732
      %2823 = vmatprep.subr.mxu0 0.0
      %2824 = vmatpush2.msra.mxu0 0.0
      %2825 = vmatprep.subr.mxu0 0.0
      %2826 = vmatpush2.msra.mxu0 0.0
      %2827 = vmatprep.subr.mxu0 0.0
      %2828 = vmatpush2.msra.mxu0 0.0
      %2829 = vmatprep.subr.mxu0 0.0
      %2830 = vmatpush2.msra.mxu0 0.0
      %2831 = vmatprep.subr.mxu0 0.0
      %2832 = vmatpush2.msra.mxu0 0.0
      %2833 = vmatprep.subr.mxu0 0.0
      %2834 = vmatpush2.msra.mxu0 0.0
      %2835 = vmatprep.subr.mxu0 0.0
      %2836 = vmatpush2.msra.mxu0 0.0
      %2837 = vmatprep.subr.mxu0 0.0
      %2838 = vmatpush2.msra.mxu0 0.0
      %2839 = vmatprep.subr.mxu0 0.0
      %2840 = vmatpush2.msra.mxu0 0.0
      %2841 = vmatprep.subr.mxu0 0.0
      %2842 = vmatpush2.msra.mxu0 0.0
      %2843 = vmatprep.subr.mxu0 0.0
      %2844 = vmatpush2.msra.mxu0 0.0
      %2845 = vmatprep.subr.mxu0 0.0
      %2846 = vmatpush2.msra.mxu0 0.0
      %2847 = vmatprep.subr.mxu0 0.0
      %2848 = vmatpush2.msra.mxu0 0.0
      %2849 = vmatprep.subr.mxu0 0.0
      %2850 = vmatpush2.msra.mxu0 0.0
      %2851 = vmatprep.subr.mxu0 0.0
      %2852 = vmatpush2.msra.mxu0 0.0
      %2853 = vmatprep.subr.mxu0 0.0
      %2854 = vmatpush2.msra.mxu0 0.0
      %2855 = vmatprep.mubr.f32.mxu0 0.0
      %2856 = vmatmul.mubr.f32.gmra.mxu0 %v2789
      %v2857 = vpop.f32.mrf.mxu0
      %v2858 = vadd.f32 0.0, %v2857
      %v2859 = vpop.f32.mrf.mxu0
      %2860 = vdwg.mxu0
      %v2861 = vadd.f32 %v2158, %v2858
      %2862 = vrot.lane.b32.xlu0 %v727, 104
      %v2863 = vpop.permute.xlu0 %2862
      %v2864 = vsel %vm740, %v2863, 0
      %2866 = vmatprep.subr.mxu0 0.0
      %2867 = vmatpush1.xpose.msra.mxu0 0.0
      %2868 = vmatprep.subr.mxu0 0.0
      %2869 = vmatpush1.xpose.msra.mxu0 0.0
      %2870 = vmatprep.subr.mxu0 0.0
      %2871 = vmatpush1.xpose.msra.mxu0 0.0
      %2872 = vmatprep.subr.mxu0 0.0
      %2873 = vmatpush1.xpose.msra.mxu0 0.0
      %2874 = vmatprep.subr.mxu0 0.0
      %2875 = vmatpush1.xpose.msra.mxu0 0.0
      %2876 = vmatprep.subr.mxu0 0.0
      %2877 = vmatpush1.xpose.msra.mxu0 0.0
      %2878 = vmatprep.subr.mxu0 0.0
      %2879 = vmatpush1.xpose.msra.mxu0 0.0
      %2880 = vmatprep.subr.mxu0 0.0
      %2881 = vmatpush1.xpose.msra.mxu0 0.0
      %2882 = vmatprep.subr.mxu0 0.0
      %2883 = vmatpush1.xpose.msra.mxu0 0.0
      %2884 = vmatprep.subr.mxu0 0.0
      %2885 = vmatpush1.xpose.msra.mxu0 0.0
      %2886 = vmatprep.subr.mxu0 0.0
      %2887 = vmatpush1.xpose.msra.mxu0 0.0
      %2888 = vmatprep.subr.mxu0 0.0
      %2889 = vmatpush1.xpose.msra.mxu0 0.0
      %2890 = vmatprep.subr.mxu0 0.0
      %2891 = vmatpush1.xpose.msra.mxu0 0.0
      %2892 = vmatprep.subr.mxu0 0.0
      %2893 = vmatpush1.xpose.msra.mxu0 0.0
      %2894 = vmatprep.subr.mxu0 0.0
      %2895 = vmatpush1.xpose.msra.mxu0 %v748
      %2896 = vmatprep.subr.mxu0 0.0
      %2897 = vmatpush1.xpose.msra.mxu0 %v745
      %2898 = vmatprep.subr.mxu0 0.0
      %2899 = vmatpush2.xpose.msra.mxu0 0.0
      %2900 = vmatprep.subr.mxu0 0.0
      %2901 = vmatpush2.xpose.msra.mxu0 0.0
      %2902 = vmatprep.subr.mxu0 0.0
      %2903 = vmatpush2.xpose.msra.mxu0 0.0
      %2904 = vmatprep.subr.mxu0 0.0
      %2905 = vmatpush2.xpose.msra.mxu0 0.0
      %2906 = vmatprep.subr.mxu0 0.0
      %2907 = vmatpush2.xpose.msra.mxu0 0.0
      %2908 = vmatprep.subr.mxu0 0.0
      %2909 = vmatpush2.xpose.msra.mxu0 0.0
      %2910 = vmatprep.subr.mxu0 0.0
      %2911 = vmatpush2.xpose.msra.mxu0 0.0
      %2912 = vmatprep.subr.mxu0 0.0
      %2913 = vmatpush2.xpose.msra.mxu0 0.0
      %2914 = vmatprep.subr.mxu0 0.0
      %2915 = vmatpush2.xpose.msra.mxu0 0.0
      %2916 = vmatprep.subr.mxu0 0.0
      %2917 = vmatpush2.xpose.msra.mxu0 0.0
      %2918 = vmatprep.subr.mxu0 0.0
      %2919 = vmatpush2.xpose.msra.mxu0 0.0
      %2920 = vmatprep.subr.mxu0 0.0
      %2921 = vmatpush2.xpose.msra.mxu0 0.0
      %2922 = vmatprep.subr.mxu0 0.0
      %2923 = vmatpush2.xpose.msra.mxu0 0.0
      %2924 = vmatprep.subr.mxu0 0.0
      %2925 = vmatpush2.xpose.msra.mxu0 0.0
      %2926 = vmatprep.subr.mxu0 0.0
      %2927 = vmatpush2.xpose.msra.mxu0 0.0
      %2928 = vmatprep.subr.mxu0 0.0
      %2929 = vmatpush2.xpose.msra.mxu0 0.0
      %2930 = vmatprep.mubr.f32.mxu0 0.0
      %2931 = vmatmul.mubr.f32.gmra.mxu0 %v2864
      %v2932 = vpop.f32.mrf.mxu0
      %v2933 = vadd.f32 0.0, %v2932
      %v2934 = vpop.f32.mrf.mxu0
      %2935 = vdwg.mxu0
      %v2937 = vcombine.high %v2933, %v2933
      %v2939 = vunpack.c.l.s4 1966171168
      %v2940 = vunpack.c.0.s8 %v2939
      %v2941 = vlaneseq
      %v2942 = vshrl.u32 %v2941, 7
      %v2943 = vsub.s32 %v2940, %v2942
      %v2944 = vrot.slane %v2933, %v2943
      %v2946 = vunpack.c.l.s4 1966171168
      %v2947 = vunpack.c.0.s8 %v2946
      %v2948 = vlaneseq
      %v2949 = vshrl.u32 %v2948, 7
      %v2950 = vsub.s32 %v2947, %v2949
      %v2951 = vrot.slane %v2937, %v2950
      %v2952 = vcombine.high %v2944, %v2944
      %v2953 = vcombine.high %v2951, %v2951
      %v2955 = vunpack.c.l.s4 1966171168
      %v2956 = vunpack.c.0.s8 %v2955
      %v2957 = vlaneseq
      %v2958 = vshrl.u32 %v2957, 7
      %v2959 = vsub.s32 %v2956, %v2958
      %v2960 = vrot.slane %v2944, %v2959
      %v2962 = vunpack.c.l.s4 1966171168
      %v2963 = vunpack.c.0.s8 %v2962
      %v2964 = vlaneseq
      %v2965 = vshrl.u32 %v2964, 7
      %v2966 = vsub.s32 %v2963, %v2965
      %v2967 = vrot.slane %v2951, %v2966
      %v2969 = vunpack.c.l.s4 1966171168
      %v2970 = vunpack.c.0.s8 %v2969
      %v2971 = vlaneseq
      %v2972 = vshrl.u32 %v2971, 7
      %v2973 = vsub.s32 %v2970, %v2972
      %v2974 = vrot.slane %v2952, %v2973
      %v2976 = vunpack.c.l.s4 1966171168
      %v2977 = vunpack.c.0.s8 %v2976
      %v2978 = vlaneseq
      %v2979 = vshrl.u32 %v2978, 7
      %v2980 = vsub.s32 %v2977, %v2979
      %v2981 = vrot.slane %v2953, %v2980
      %v2982 = vcombine.high %v2960, %v2960
      %v2983 = vcombine.high %v2967, %v2967
      %v2984 = vcombine.high %v2974, %v2974
      %v2985 = vcombine.high %v2981, %v2981
      %v2986 = vlaneseq
      %v2987 = vshrl.u32 %v2986, 7
      %v2988 = vsub.s32 0, %v2987
      %v2989 = vrot.slane %v2960, %v2988
      %v2990 = vlaneseq
      %v2991 = vshrl.u32 %v2990, 7
      %v2992 = vsub.s32 0, %v2991
      %v2993 = vrot.slane %v2974, %v2992
      %v2994 = vlaneseq
      %v2995 = vshrl.u32 %v2994, 7
      %v2996 = vsub.s32 0, %v2995
      %v2997 = vrot.slane %v2982, %v2996
      %v2998 = vlaneseq
      %v2999 = vshrl.u32 %v2998, 7
      %v3000 = vsub.s32 0, %v2999
      %v3001 = vrot.slane %v2984, %v3000
      %v3002 = vlaneseq
      %v3003 = vshrl.u32 %v3002, 7
      %v3004 = vsub.s32 0, %v3003
      %v3005 = vrot.slane %v2967, %v3004
      %v3006 = vlaneseq
      %v3007 = vshrl.u32 %v3006, 7
      %v3008 = vsub.s32 0, %v3007
      %v3009 = vrot.slane %v2981, %v3008
      %v3010 = vlaneseq
      %v3011 = vshrl.u32 %v3010, 7
      %v3012 = vsub.s32 0, %v3011
      %v3013 = vrot.slane %v2983, %v3012
      %v3014 = vlaneseq
      %v3015 = vshrl.u32 %v3014, 7
      %v3016 = vsub.s32 0, %v3015
      %v3017 = vrot.slane %v2985, %v3016
      %v3026 = vmul.f32 %v2989, %v636
      %v3027 = vmul.f32 %v2993, %v637
      %v3028 = vmul.f32 %v2997, %v638
      %v3029 = vmul.f32 %v3001, %v639
      %v3030 = vmul.f32 %v3005, %v640
      %v3031 = vmul.f32 %v3009, %v641
      %v3032 = vmul.f32 %v3013, %v642
      %v3033 = vmul.f32 %v3017, %v643
      %v3034 = vsel %vm918, %v3026, 0.0
      %3035 = vadd.xlane.f32.xlu0 %v3034
      %v3036 = vpop.xlane.xlu0 %3035
      %v3037 = vsel %vm918, %v3027, 0.0
      %3038 = vadd.xlane.f32.xlu0 %v3037
      %v3039 = vpop.xlane.xlu0 %3038
      %v3040 = vsel %vm918, %v3028, 0.0
      %3041 = vadd.xlane.f32.xlu0 %v3040
      %v3042 = vpop.xlane.xlu0 %3041
      %v3043 = vsel %vm918, %v3029, 0.0
      %3044 = vadd.xlane.f32.xlu0 %v3043
      %v3045 = vpop.xlane.xlu0 %3044
      %v3046 = vsel %vm918, %v3030, 0.0
      %3047 = vadd.xlane.f32.xlu0 %v3046
      %v3048 = vpop.xlane.xlu0 %3047
      %v3049 = vsel %vm918, %v3031, 0.0
      %3050 = vadd.xlane.f32.xlu0 %v3049
      %v3051 = vpop.xlane.xlu0 %3050
      %v3052 = vsel %vm918, %v3032, 0.0
      %3053 = vadd.xlane.f32.xlu0 %v3052
      %v3054 = vpop.xlane.xlu0 %3053
      %v3055 = vsel %vm918, %v3033, 0.0
      %3056 = vadd.xlane.f32.xlu0 %v3055
      %v3057 = vpop.xlane.xlu0 %3056
      %3058 = vrot.lane.b32.xlu0 %v947, 24
      %v3059 = vpop.permute.xlu0 %3058
      %v3061 = vmul.f32 %v727, %v3059
      %3063 = vrot.lane.b32.xlu0 %v3061, 104
      %v3064 = vpop.permute.xlu0 %3063
      %v3066 = vsel %vm740, %v3064, 0.0
      %3067 = vadd.xlane.f32.xlu0 %v3066
      %v3068 = vpop.xlane.xlu0 %3067
      %3069 = vrot.lane.b32.xlu0 %v727, 72
      %v3070 = vpop.permute.xlu0 %3069
      %v3079 = vlaneseq
      %v3080 = vshrl.u32 %v3079, 7
      %v3081 = vsub.s32 %v964, %v3080
      %v3082 = vrot.slane %v3036, %v3081
      %v3083 = vlaneseq
      %v3084 = vshrl.u32 %v3083, 7
      %v3085 = vsub.s32 %v964, %v3084
      %v3086 = vrot.slane %v3039, %v3085
      %v3087 = vlaneseq
      %v3088 = vshrl.u32 %v3087, 7
      %v3089 = vsub.s32 %v964, %v3088
      %v3090 = vrot.slane %v3042, %v3089
      %v3091 = vlaneseq
      %v3092 = vshrl.u32 %v3091, 7
      %v3093 = vsub.s32 %v964, %v3092
      %v3094 = vrot.slane %v3045, %v3093
      %v3095 = vlaneseq
      %v3096 = vshrl.u32 %v3095, 7
      %v3097 = vsub.s32 %v964, %v3096
      %v3098 = vrot.slane %v3048, %v3097
      %v3099 = vlaneseq
      %v3100 = vshrl.u32 %v3099, 7
      %v3101 = vsub.s32 %v964, %v3100
      %v3102 = vrot.slane %v3051, %v3101
      %v3103 = vlaneseq
      %v3104 = vshrl.u32 %v3103, 7
      %v3105 = vsub.s32 %v964, %v3104
      %v3106 = vrot.slane %v3054, %v3105
      %v3107 = vlaneseq
      %v3108 = vshrl.u32 %v3107, 7
      %v3109 = vsub.s32 %v964, %v3108
      %v3110 = vrot.slane %v3057, %v3109
      %v3111 = vsel %vm997, %v3086, %v3082
      %v3112 = vsel %vm999, %v3090, %v3111
      %v3113 = vsel %vm1001, %v3094, %v3112
      %v3114 = vsel %vm1003, %v3098, %v3113
      %v3115 = vsel %vm1005, %v3102, %v3114
      %v3116 = vsel %vm1007, %v3106, %v3115
      %v3117 = vsel %vm1009, %v3110, %v3116
      %v3119 = vsel %vm740, %v3070, 0
      %3121 = vmatprep.subr.mxu0 0.0
      %3122 = vmatpush1.xpose.msra.mxu0 0.0
      %3123 = vmatprep.subr.mxu0 0.0
      %3124 = vmatpush1.xpose.msra.mxu0 0.0
      %3125 = vmatprep.subr.mxu0 0.0
      %3126 = vmatpush1.xpose.msra.mxu0 0.0
      %3127 = vmatprep.subr.mxu0 0.0
      %3128 = vmatpush1.xpose.msra.mxu0 0.0
      %3129 = vmatprep.subr.mxu0 0.0
      %3130 = vmatpush1.xpose.msra.mxu0 0.0
      %3131 = vmatprep.subr.mxu0 0.0
      %3132 = vmatpush1.xpose.msra.mxu0 0.0
      %3133 = vmatprep.subr.mxu0 0.0
      %3134 = vmatpush1.xpose.msra.mxu0 0.0
      %3135 = vmatprep.subr.mxu0 0.0
      %3136 = vmatpush1.xpose.msra.mxu0 0.0
      %3137 = vmatprep.subr.mxu0 0.0
      %3138 = vmatpush1.xpose.msra.mxu0 0.0
      %3139 = vmatprep.subr.mxu0 0.0
      %3140 = vmatpush1.xpose.msra.mxu0 0.0
      %3141 = vmatprep.subr.mxu0 0.0
      %3142 = vmatpush1.xpose.msra.mxu0 0.0
      %3143 = vmatprep.subr.mxu0 0.0
      %3144 = vmatpush1.xpose.msra.mxu0 0.0
      %3145 = vmatprep.subr.mxu0 0.0
      %3146 = vmatpush1.xpose.msra.mxu0 0.0
      %3147 = vmatprep.subr.mxu0 0.0
      %3148 = vmatpush1.xpose.msra.mxu0 0.0
      %3149 = vmatprep.subr.mxu0 0.0
      %3150 = vmatpush1.xpose.msra.mxu0 0.0
      %3151 = vmatprep.subr.mxu0 0.0
      %3152 = vmatpush1.xpose.msra.mxu0 %v3119
      %3153 = vmatprep.subr.mxu0 0.0
      %3154 = vmatpush2.xpose.msra.mxu0 0.0
      %3155 = vmatprep.subr.mxu0 0.0
      %3156 = vmatpush2.xpose.msra.mxu0 0.0
      %3157 = vmatprep.subr.mxu0 0.0
      %3158 = vmatpush2.xpose.msra.mxu0 0.0
      %3159 = vmatprep.subr.mxu0 0.0
      %3160 = vmatpush2.xpose.msra.mxu0 0.0
      %3161 = vmatprep.subr.mxu0 0.0
      %3162 = vmatpush2.xpose.msra.mxu0 0.0
      %3163 = vmatprep.subr.mxu0 0.0
      %3164 = vmatpush2.xpose.msra.mxu0 0.0
      %3165 = vmatprep.subr.mxu0 0.0
      %3166 = vmatpush2.xpose.msra.mxu0 0.0
      %3167 = vmatprep.subr.mxu0 0.0
      %3168 = vmatpush2.xpose.msra.mxu0 0.0
      %3169 = vmatprep.subr.mxu0 0.0
      %3170 = vmatpush2.xpose.msra.mxu0 0.0
      %3171 = vmatprep.subr.mxu0 0.0
      %3172 = vmatpush2.xpose.msra.mxu0 0.0
      %3173 = vmatprep.subr.mxu0 0.0
      %3174 = vmatpush2.xpose.msra.mxu0 0.0
      %3175 = vmatprep.subr.mxu0 0.0
      %3176 = vmatpush2.xpose.msra.mxu0 0.0
      %3177 = vmatprep.subr.mxu0 0.0
      %3178 = vmatpush2.xpose.msra.mxu0 0.0
      %3179 = vmatprep.subr.mxu0 0.0
      %3180 = vmatpush2.xpose.msra.mxu0 0.0
      %3181 = vmatprep.subr.mxu0 0.0
      %3182 = vmatpush2.xpose.msra.mxu0 0.0
      %3183 = vmatprep.subr.mxu0 0.0
      %3184 = vmatpush2.xpose.msra.mxu0 0.0
      %3185 = vmatprep.mubr.f32.mxu0 0.0
      %3186 = vmatmul.mubr.f32.gmra.mxu0 %v2864
      %v3187 = vpop.f32.mrf.mxu0
      %v3188 = vadd.f32 %v3117, %v3187
      %v3189 = vpop.f32.mrf.mxu0
      %3190 = vdwg.mxu0
      %v3191 = vadd.f32 %v3188, %v3068
      %v3192 = vmul.f32 %v3191, 0.35355338
      %v3193 = vadd.f32 %v3192, %v644
      %v3194 = vsel %vm740, %v3193, -inf
      %3195 = vmax.xlane.f32.xlu0 %v3194
      %v3196 = vpop.xlane.xlu0 %3195
      %v3197 = vsub.f32 %v3193, %v3196
      %v3198 = vmul.f32 %v3197, 1.442695
      %v3199 = vpow.pop %v3198
      %v3200 = vsel %vm740, %v3199, 0.0
      %3201 = vadd.xlane.f32.xlu0 %v3200
      %v3202 = vpop.xlane.xlu0 %3201
      %v3203 = vrcp.pop %v3202
      %v3204 = vmul.f32 %v3199, %v3203
      %v3205 = vlaneseq
      %v3206 = vshrl.u32 %v3205, 7
      %v3207 = vsub.s32 0, %v3206
      %v3208 = vrot.slane %v3204, %v3207
      %3210 = vbcast.lane.b32.xlu0 %v3208, 256
      %v3211 = vpop.permute.xlu0 %3210
      %v3212 = vlaneseq
      %v3213 = vshrl.u32 %v3212, 7
      %v3214 = vsub.s32 1, %v3213
      %v3215 = vrot.slane %v3204, %v3214
      %3217 = vbcast.lane.b32.xlu0 %v3215, 256
      %v3218 = vpop.permute.xlu0 %3217
      %v3219 = vlaneseq
      %v3220 = vshrl.u32 %v3219, 7
      %v3221 = vsub.s32 2, %v3220
      %v3222 = vrot.slane %v3204, %v3221
      %3224 = vbcast.lane.b32.xlu0 %v3222, 256
      %v3225 = vpop.permute.xlu0 %3224
      %v3226 = vlaneseq
      %v3227 = vshrl.u32 %v3226, 7
      %v3228 = vsub.s32 3, %v3227
      %v3229 = vrot.slane %v3204, %v3228
      %3231 = vbcast.lane.b32.xlu0 %v3229, 256
      %v3232 = vpop.permute.xlu0 %3231
      %v3233 = vlaneseq
      %v3234 = vshrl.u32 %v3233, 7
      %v3235 = vsub.s32 4, %v3234
      %v3236 = vrot.slane %v3204, %v3235
      %3238 = vbcast.lane.b32.xlu0 %v3236, 256
      %v3239 = vpop.permute.xlu0 %3238
      %v3240 = vlaneseq
      %v3241 = vshrl.u32 %v3240, 7
      %v3242 = vsub.s32 5, %v3241
      %v3243 = vrot.slane %v3204, %v3242
      %3245 = vbcast.lane.b32.xlu0 %v3243, 256
      %v3246 = vpop.permute.xlu0 %3245
      %v3247 = vlaneseq
      %v3248 = vshrl.u32 %v3247, 7
      %v3249 = vsub.s32 6, %v3248
      %v3250 = vrot.slane %v3204, %v3249
      %3252 = vbcast.lane.b32.xlu0 %v3250, 256
      %v3253 = vpop.permute.xlu0 %3252
      %v3254 = vlaneseq
      %v3255 = vshrl.u32 %v3254, 7
      %v3256 = vsub.s32 7, %v3255
      %v3257 = vrot.slane %v3204, %v3256
      %3259 = vbcast.lane.b32.xlu0 %v3257, 256
      %v3260 = vpop.permute.xlu0 %3259
      %v3261 = vmul.f32 %v3211, %v636
      %v3262 = vmul.f32 %v3218, %v637
      %v3263 = vmul.f32 %v3225, %v638
      %v3264 = vmul.f32 %v3232, %v639
      %v3265 = vmul.f32 %v3239, %v640
      %v3266 = vmul.f32 %v3246, %v641
      %v3267 = vmul.f32 %v3253, %v642
      %v3268 = vmul.f32 %v3260, %v643
      %v3269 = vsel %vm918, %v3261, 0.0
      %v3270 = vrot.slane %v3269, 4
      %v3271 = vadd.f32 %v3269, %v3270
      %v3272 = vrot.slane %v3271, 2
      %v3273 = vadd.f32 %v3271, %v3272
      %v3274 = vrot.slane %v3273, 1
      %v3275 = vadd.f32 %v3273, %v3274
      %v3276 = vsel %vm918, %v3262, 0.0
      %v3277 = vrot.slane %v3276, 4
      %v3278 = vadd.f32 %v3276, %v3277
      %v3279 = vrot.slane %v3278, 2
      %v3280 = vadd.f32 %v3278, %v3279
      %v3281 = vrot.slane %v3280, 1
      %v3282 = vadd.f32 %v3280, %v3281
      %v3283 = vsel %vm918, %v3263, 0.0
      %v3284 = vrot.slane %v3283, 4
      %v3285 = vadd.f32 %v3283, %v3284
      %v3286 = vrot.slane %v3285, 2
      %v3287 = vadd.f32 %v3285, %v3286
      %v3288 = vrot.slane %v3287, 1
      %v3289 = vadd.f32 %v3287, %v3288
      %v3290 = vsel %vm918, %v3264, 0.0
      %v3291 = vrot.slane %v3290, 4
      %v3292 = vadd.f32 %v3290, %v3291
      %v3293 = vrot.slane %v3292, 2
      %v3294 = vadd.f32 %v3292, %v3293
      %v3295 = vrot.slane %v3294, 1
      %v3296 = vadd.f32 %v3294, %v3295
      %v3297 = vsel %vm918, %v3265, 0.0
      %v3298 = vrot.slane %v3297, 4
      %v3299 = vadd.f32 %v3297, %v3298
      %v3300 = vrot.slane %v3299, 2
      %v3301 = vadd.f32 %v3299, %v3300
      %v3302 = vrot.slane %v3301, 1
      %v3303 = vadd.f32 %v3301, %v3302
      %v3304 = vsel %vm918, %v3266, 0.0
      %v3305 = vrot.slane %v3304, 4
      %v3306 = vadd.f32 %v3304, %v3305
      %v3307 = vrot.slane %v3306, 2
      %v3308 = vadd.f32 %v3306, %v3307
      %v3309 = vrot.slane %v3308, 1
      %v3310 = vadd.f32 %v3308, %v3309
      %v3311 = vsel %vm918, %v3267, 0.0
      %v3312 = vrot.slane %v3311, 4
      %v3313 = vadd.f32 %v3311, %v3312
      %v3314 = vrot.slane %v3313, 2
      %v3315 = vadd.f32 %v3313, %v3314
      %v3316 = vrot.slane %v3315, 1
      %v3317 = vadd.f32 %v3315, %v3316
      %v3318 = vsel %vm918, %v3268, 0.0
      %v3319 = vrot.slane %v3318, 4
      %v3320 = vadd.f32 %v3318, %v3319
      %v3321 = vrot.slane %v3320, 2
      %v3322 = vadd.f32 %v3320, %v3321
      %v3323 = vrot.slane %v3322, 1
      %v3324 = vadd.f32 %v3322, %v3323
      %v3333 = vsel %vm997, %v3282, %v3275
      %v3334 = vsel %vm999, %v3289, %v3333
      %v3335 = vsel %vm1001, %v3296, %v3334
      %v3336 = vsel %vm1003, %v3303, %v3335
      %v3337 = vsel %vm1005, %v3310, %v3336
      %v3338 = vsel %vm1007, %v3317, %v3337
      %v3339 = vsel %vm1009, %v3324, %v3338
      %v3340 = vsel %vm918, %v3339, 0
      %3342 = vmatprep.subr.mxu0 0.0
      %3343 = vmatpush1.msra.mxu0 0.0
      %3344 = vmatprep.subr.mxu0 0.0
      %3345 = vmatpush1.msra.mxu0 0.0
      %3346 = vmatprep.subr.mxu0 0.0
      %3347 = vmatpush1.msra.mxu0 0.0
      %3348 = vmatprep.subr.mxu0 0.0
      %3349 = vmatpush1.msra.mxu0 0.0
      %3350 = vmatprep.subr.mxu0 0.0
      %3351 = vmatpush1.msra.mxu0 0.0
      %3352 = vmatprep.subr.mxu0 0.0
      %3353 = vmatpush1.msra.mxu0 0.0
      %3354 = vmatprep.subr.mxu0 0.0
      %3355 = vmatpush1.msra.mxu0 0.0
      %3356 = vmatprep.subr.mxu0 0.0
      %3357 = vmatpush1.msra.mxu0 0.0
      %3358 = vmatprep.subr.mxu0 0.0
      %3359 = vmatpush1.msra.mxu0 0.0
      %3360 = vmatprep.subr.mxu0 0.0
      %3361 = vmatpush1.msra.mxu0 0.0
      %3362 = vmatprep.subr.mxu0 0.0
      %3363 = vmatpush1.msra.mxu0 0.0
      %3364 = vmatprep.subr.mxu0 0.0
      %3365 = vmatpush1.msra.mxu0 0.0
      %3366 = vmatprep.subr.mxu0 0.0
      %3367 = vmatpush1.msra.mxu0 0.0
      %3368 = vmatprep.subr.mxu0 0.0
      %3369 = vmatpush1.msra.mxu0 0.0
      %3370 = vmatprep.subr.mxu0 0.0
      %3371 = vmatpush1.msra.mxu0 %v738
      %3372 = vmatprep.subr.mxu0 0.0
      %3373 = vmatpush1.msra.mxu0 %v737
      %3374 = vmatprep.subr.mxu0 0.0
      %3375 = vmatpush2.msra.mxu0 0.0
      %3376 = vmatprep.subr.mxu0 0.0
      %3377 = vmatpush2.msra.mxu0 0.0
      %3378 = vmatprep.subr.mxu0 0.0
      %3379 = vmatpush2.msra.mxu0 0.0
      %3380 = vmatprep.subr.mxu0 0.0
      %3381 = vmatpush2.msra.mxu0 0.0
      %3382 = vmatprep.subr.mxu0 0.0
      %3383 = vmatpush2.msra.mxu0 0.0
      %3384 = vmatprep.subr.mxu0 0.0
      %3385 = vmatpush2.msra.mxu0 0.0
      %3386 = vmatprep.subr.mxu0 0.0
      %3387 = vmatpush2.msra.mxu0 0.0
      %3388 = vmatprep.subr.mxu0 0.0
      %3389 = vmatpush2.msra.mxu0 0.0
      %3390 = vmatprep.subr.mxu0 0.0
      %3391 = vmatpush2.msra.mxu0 0.0
      %3392 = vmatprep.subr.mxu0 0.0
      %3393 = vmatpush2.msra.mxu0 0.0
      %3394 = vmatprep.subr.mxu0 0.0
      %3395 = vmatpush2.msra.mxu0 0.0
      %3396 = vmatprep.subr.mxu0 0.0
      %3397 = vmatpush2.msra.mxu0 0.0
      %3398 = vmatprep.subr.mxu0 0.0
      %3399 = vmatpush2.msra.mxu0 0.0
      %3400 = vmatprep.subr.mxu0 0.0
      %3401 = vmatpush2.msra.mxu0 0.0
      %3402 = vmatprep.subr.mxu0 0.0
      %3403 = vmatpush2.msra.mxu0 0.0
      %3404 = vmatprep.subr.mxu0 0.0
      %3405 = vmatpush2.msra.mxu0 0.0
      %3406 = vmatprep.mubr.f32.mxu0 0.0
      %3407 = vmatmul.mubr.f32.gmra.mxu0 %v3340
      %v3408 = vpop.f32.mrf.mxu0
      %v3409 = vadd.f32 0.0, %v3408
      %v3410 = vpop.f32.mrf.mxu0
      %3411 = vdwg.mxu0
      %3412 = vrot.lane.b32.xlu0 %v727, 40
      %v3413 = vpop.permute.xlu0 %3412
      %v3416 = vsel %vm740, %v3204, 0
      %3418 = vmatprep.subr.mxu0 0.0
      %3419 = vmatpush1.msra.mxu0 0.0
      %3420 = vmatprep.subr.mxu0 0.0
      %3421 = vmatpush1.msra.mxu0 0.0
      %3422 = vmatprep.subr.mxu0 0.0
      %3423 = vmatpush1.msra.mxu0 0.0
      %3424 = vmatprep.subr.mxu0 0.0
      %3425 = vmatpush1.msra.mxu0 0.0
      %3426 = vmatprep.subr.mxu0 0.0
      %3427 = vmatpush1.msra.mxu0 0.0
      %3428 = vmatprep.subr.mxu0 0.0
      %3429 = vmatpush1.msra.mxu0 0.0
      %3430 = vmatprep.subr.mxu0 0.0
      %3431 = vmatpush1.msra.mxu0 0.0
      %3432 = vmatprep.subr.mxu0 0.0
      %3433 = vmatpush1.msra.mxu0 0.0
      %3434 = vmatprep.subr.mxu0 0.0
      %3435 = vmatpush1.msra.mxu0 0.0
      %3436 = vmatprep.subr.mxu0 0.0
      %3437 = vmatpush1.msra.mxu0 0.0
      %3438 = vmatprep.subr.mxu0 0.0
      %3439 = vmatpush1.msra.mxu0 0.0
      %3440 = vmatprep.subr.mxu0 0.0
      %3441 = vmatpush1.msra.mxu0 0.0
      %3442 = vmatprep.subr.mxu0 0.0
      %3443 = vmatpush1.msra.mxu0 0.0
      %3444 = vmatprep.subr.mxu0 0.0
      %3445 = vmatpush1.msra.mxu0 0.0
      %3446 = vmatprep.subr.mxu0 0.0
      %3447 = vmatpush1.msra.mxu0 0.0
      %3448 = vmatprep.subr.mxu0 0.0
      %3449 = vmatpush1.msra.mxu0 %v3413
      %3450 = vmatprep.subr.mxu0 0.0
      %3451 = vmatpush2.msra.mxu0 0.0
      %3452 = vmatprep.subr.mxu0 0.0
      %3453 = vmatpush2.msra.mxu0 0.0
      %3454 = vmatprep.subr.mxu0 0.0
      %3455 = vmatpush2.msra.mxu0 0.0
      %3456 = vmatprep.subr.mxu0 0.0
      %3457 = vmatpush2.msra.mxu0 0.0
      %3458 = vmatprep.subr.mxu0 0.0
      %3459 = vmatpush2.msra.mxu0 0.0
      %3460 = vmatprep.subr.mxu0 0.0
      %3461 = vmatpush2.msra.mxu0 0.0
      %3462 = vmatprep.subr.mxu0 0.0
      %3463 = vmatpush2.msra.mxu0 0.0
      %3464 = vmatprep.subr.mxu0 0.0
      %3465 = vmatpush2.msra.mxu0 0.0
      %3466 = vmatprep.subr.mxu0 0.0
      %3467 = vmatpush2.msra.mxu0 0.0
      %3468 = vmatprep.subr.mxu0 0.0
      %3469 = vmatpush2.msra.mxu0 0.0
      %3470 = vmatprep.subr.mxu0 0.0
      %3471 = vmatpush2.msra.mxu0 0.0
      %3472 = vmatprep.subr.mxu0 0.0
      %3473 = vmatpush2.msra.mxu0 0.0
      %3474 = vmatprep.subr.mxu0 0.0
      %3475 = vmatpush2.msra.mxu0 0.0
      %3476 = vmatprep.subr.mxu0 0.0
      %3477 = vmatpush2.msra.mxu0 0.0
      %3478 = vmatprep.subr.mxu0 0.0
      %3479 = vmatpush2.msra.mxu0 0.0
      %3480 = vmatprep.subr.mxu0 0.0
      %3481 = vmatpush2.msra.mxu0 0.0
      %3482 = vmatprep.mubr.f32.mxu0 0.0
      %3483 = vmatmul.mubr.f32.gmra.mxu0 %v3416
      %v3484 = vpop.f32.mrf.mxu0
      %v3485 = vadd.f32 %v3409, %v3484
      %v3486 = vpop.f32.mrf.mxu0
      %3487 = vdwg.mxu0
      %v3488 = vadd.f32 %v3485, %v1385
      %v3490 = vsel %vm740, %v3488, 0
      %3492 = vmatprep.subr.mxu0 0.0
      %3493 = vmatpush1.msra.mxu0 0.0
      %3494 = vmatprep.subr.mxu0 0.0
      %3495 = vmatpush1.msra.mxu0 0.0
      %3496 = vmatprep.subr.mxu0 0.0
      %3497 = vmatpush1.msra.mxu0 0.0
      %3498 = vmatprep.subr.mxu0 0.0
      %3499 = vmatpush1.msra.mxu0 0.0
      %3500 = vmatprep.subr.mxu0 0.0
      %3501 = vmatpush1.msra.mxu0 0.0
      %3502 = vmatprep.subr.mxu0 0.0
      %3503 = vmatpush1.msra.mxu0 0.0
      %3504 = vmatprep.subr.mxu0 0.0
      %3505 = vmatpush1.msra.mxu0 0.0
      %3506 = vmatprep.subr.mxu0 0.0
      %3507 = vmatpush1.msra.mxu0 0.0
      %3508 = vmatprep.subr.mxu0 0.0
      %3509 = vmatpush1.msra.mxu0 0.0
      %3510 = vmatprep.subr.mxu0 0.0
      %3511 = vmatpush1.msra.mxu0 0.0
      %3512 = vmatprep.subr.mxu0 0.0
      %3513 = vmatpush1.msra.mxu0 0.0
      %3514 = vmatprep.subr.mxu0 0.0
      %3515 = vmatpush1.msra.mxu0 0.0
      %3516 = vmatprep.subr.mxu0 0.0
      %3517 = vmatpush1.msra.mxu0 0.0
      %3518 = vmatprep.subr.mxu0 0.0
      %3519 = vmatpush1.msra.mxu0 0.0
      %3520 = vmatprep.subr.mxu0 0.0
      %3521 = vmatpush1.msra.mxu0 0.0
      %3522 = vmatprep.subr.mxu0 0.0
      %3523 = vmatpush1.msra.mxu0 %v733
      %3524 = vmatprep.subr.mxu0 0.0
      %3525 = vmatpush2.msra.mxu0 0.0
      %3526 = vmatprep.subr.mxu0 0.0
      %3527 = vmatpush2.msra.mxu0 0.0
      %3528 = vmatprep.subr.mxu0 0.0
      %3529 = vmatpush2.msra.mxu0 0.0
      %3530 = vmatprep.subr.mxu0 0.0
      %3531 = vmatpush2.msra.mxu0 0.0
      %3532 = vmatprep.subr.mxu0 0.0
      %3533 = vmatpush2.msra.mxu0 0.0
      %3534 = vmatprep.subr.mxu0 0.0
      %3535 = vmatpush2.msra.mxu0 0.0
      %3536 = vmatprep.subr.mxu0 0.0
      %3537 = vmatpush2.msra.mxu0 0.0
      %3538 = vmatprep.subr.mxu0 0.0
      %3539 = vmatpush2.msra.mxu0 0.0
      %3540 = vmatprep.subr.mxu0 0.0
      %3541 = vmatpush2.msra.mxu0 0.0
      %3542 = vmatprep.subr.mxu0 0.0
      %3543 = vmatpush2.msra.mxu0 0.0
      %3544 = vmatprep.subr.mxu0 0.0
      %3545 = vmatpush2.msra.mxu0 0.0
      %3546 = vmatprep.subr.mxu0 0.0
      %3547 = vmatpush2.msra.mxu0 0.0
      %3548 = vmatprep.subr.mxu0 0.0
      %3549 = vmatpush2.msra.mxu0 0.0
      %3550 = vmatprep.subr.mxu0 0.0
      %3551 = vmatpush2.msra.mxu0 0.0
      %3552 = vmatprep.subr.mxu0 0.0
      %3553 = vmatpush2.msra.mxu0 0.0
      %3554 = vmatprep.subr.mxu0 0.0
      %3555 = vmatpush2.msra.mxu0 0.0
      %3556 = vmatprep.mubr.f32.mxu0 0.0
      %3557 = vmatmul.mubr.f32.gmra.mxu0 %v3490
      %v3558 = vpop.f32.mrf.mxu0
      %v3559 = vadd.f32 0.0, %v3558
      %v3560 = vpop.f32.mrf.mxu0
      %3561 = vdwg.mxu0
      %v3562 = vadd.f32 %v2861, %v3559
      %v3563 = vld [vmem:[%s10] sm:$0x1]
      %v3565 = vlaneseq
      %v3566 = vshrl.u32 %v3565, 7
      %v3567 = vsub.s32 0, %v3566
      %v3568 = vrot.slane %v3563, %v3567
      %v3570 = vadd.f32 %v3562, %v3568
      %v3571 = vadd.f32 %v635, %v3570
      %v3572 = vld [vmem:[%s11] sm:$0x1]
      %v3573 = vld [vmem:[%s12] sm:$0x1]
      %v3574 = vsel %vm656, %v3571, 0.0
      %3575 = vadd.xlane.f32.xlu0 %v3574
      %v3576 = vpop.xlane.xlu0 %3575
      %v3577 = vrcp.pop 32.0
      %v3578 = vmul.f32 %v3576, %v3577
      %v3579 = vsub.f32 %v3571, %v3578
      %v3580 = vmul.f32 %v3579, %v3579
      %v3581 = vsel %vm656, %v3580, 0.0
      %3582 = vadd.xlane.f32.xlu0 %v3581
      %v3583 = vpop.xlane.xlu0 %3582
      %v3584 = vmul.f32 %v3583, %v3577
      %v3585 = vadd.f32 %v3584, 1e-12
      %v3586 = vrsqrt.pop %v3585
      %v3587 = vmul.f32 %v3579, %v3586
      %v3589 = vlaneseq
      %v3590 = vshrl.u32 %v3589, 7
      %v3591 = vsub.s32 0, %v3590
      %v3592 = vrot.slane %v3572, %v3591
      %v3594 = vmul.f32 %v3587, %v3592
      %v3596 = vlaneseq
      %v3597 = vshrl.u32 %v3596, 7
      %v3598 = vsub.s32 0, %v3597
      %v3599 = vrot.slane %v3573, %v3598
      %v3601 = vadd.f32 %v3594, %v3599
      %v3602 = vld [vmem:[%s13] sm:$0xff]
      %v3603 = vld [vmem:[%s13 + $0x8] sm:$0xff]
      %v3604 = vld [vmem:[%s13 + $0x10] sm:$0xff]
      %v3605 = vld [vmem:[%s13 + $0x18] sm:$0xff]
      %v3606 = vld [vmem:[%s14] sm:$0x1]
      %v3608 = vlaneseq
      %v3609 = vshrl.u32 %v3608, 7
      %v3610 = vsub.s32 0, %v3609
      %v3611 = vrot.slane %v3606, %v3610
      %v3614 = vsel %vm656, %v3601, 0
      %3616 = vmatprep.subr.mxu0 0.0
      %3617 = vmatpush1.msra.mxu0 0.0
      %3618 = vmatprep.subr.mxu0 0.0
      %3619 = vmatpush1.msra.mxu0 0.0
      %3620 = vmatprep.subr.mxu0 0.0
      %3621 = vmatpush1.msra.mxu0 0.0
      %3622 = vmatprep.subr.mxu0 0.0
      %3623 = vmatpush1.msra.mxu0 0.0
      %3624 = vmatprep.subr.mxu0 0.0
      %3625 = vmatpush1.msra.mxu0 0.0
      %3626 = vmatprep.subr.mxu0 0.0
      %3627 = vmatpush1.msra.mxu0 0.0
      %3628 = vmatprep.subr.mxu0 0.0
      %3629 = vmatpush1.msra.mxu0 0.0
      %3630 = vmatprep.subr.mxu0 0.0
      %3631 = vmatpush1.msra.mxu0 0.0
      %3632 = vmatprep.subr.mxu0 0.0
      %3633 = vmatpush1.msra.mxu0 0.0
      %3634 = vmatprep.subr.mxu0 0.0
      %3635 = vmatpush1.msra.mxu0 0.0
      %3636 = vmatprep.subr.mxu0 0.0
      %3637 = vmatpush1.msra.mxu0 0.0
      %3638 = vmatprep.subr.mxu0 0.0
      %3639 = vmatpush1.msra.mxu0 0.0
      %3640 = vmatprep.subr.mxu0 0.0
      %3641 = vmatpush1.msra.mxu0 %v3605
      %3642 = vmatprep.subr.mxu0 0.0
      %3643 = vmatpush1.msra.mxu0 %v3604
      %3644 = vmatprep.subr.mxu0 0.0
      %3645 = vmatpush1.msra.mxu0 %v3603
      %3646 = vmatprep.subr.mxu0 0.0
      %3647 = vmatpush1.msra.mxu0 %v3602
      %3648 = vmatprep.subr.mxu0 0.0
      %3649 = vmatpush2.msra.mxu0 0.0
      %3650 = vmatprep.subr.mxu0 0.0
      %3651 = vmatpush2.msra.mxu0 0.0
      %3652 = vmatprep.subr.mxu0 0.0
      %3653 = vmatpush2.msra.mxu0 0.0
      %3654 = vmatprep.subr.mxu0 0.0
      %3655 = vmatpush2.msra.mxu0 0.0
      %3656 = vmatprep.subr.mxu0 0.0
      %3657 = vmatpush2.msra.mxu0 0.0
      %3658 = vmatprep.subr.mxu0 0.0
      %3659 = vmatpush2.msra.mxu0 0.0
      %3660 = vmatprep.subr.mxu0 0.0
      %3661 = vmatpush2.msra.mxu0 0.0
      %3662 = vmatprep.subr.mxu0 0.0
      %3663 = vmatpush2.msra.mxu0 0.0
      %3664 = vmatprep.subr.mxu0 0.0
      %3665 = vmatpush2.msra.mxu0 0.0
      %3666 = vmatprep.subr.mxu0 0.0
      %3667 = vmatpush2.msra.mxu0 0.0
      %3668 = vmatprep.subr.mxu0 0.0
      %3669 = vmatpush2.msra.mxu0 0.0
      %3670 = vmatprep.subr.mxu0 0.0
      %3671 = vmatpush2.msra.mxu0 0.0
      %3672 = vmatprep.subr.mxu0 0.0
      %3673 = vmatpush2.msra.mxu0 0.0
      %3674 = vmatprep.subr.mxu0 0.0
      %3675 = vmatpush2.msra.mxu0 0.0
      %3676 = vmatprep.subr.mxu0 0.0
      %3677 = vmatpush2.msra.mxu0 0.0
      %3678 = vmatprep.subr.mxu0 0.0
      %3679 = vmatpush2.msra.mxu0 0.0
      %3680 = vmatprep.mubr.f32.mxu0 0.0
      %3681 = vmatmul.mubr.f32.gmra.mxu0 %v3614
      %v3682 = vpop.f32.mrf.mxu0
      %v3683 = vadd.f32 %v3611, %v3682
      %v3684 = vpop.f32.mrf.mxu0
      %3685 = vdwg.mxu0
      %v3686 = vmax.f32 %v3683, 0.0
      %v3687 = vld [vmem:[%s15] sm:$0xff]
      %v3688 = vld [vmem:[%s15 + $0x8] sm:$0xff]
      %v3689 = vld [vmem:[%s15 + $0x10] sm:$0xff]
      %v3690 = vld [vmem:[%s15 + $0x18] sm:$0xff]
      %v3691 = vld [vmem:[%s16] sm:$0x1]
      %v3693 = vlaneseq
      %v3694 = vshrl.u32 %v3693, 7
      %v3695 = vsub.s32 0, %v3694
      %v3696 = vrot.slane %v3691, %v3695
      %v3699 = vsel %vm656, %v3686, 0
      %3701 = vmatprep.subr.mxu0 0.0
      %3702 = vmatpush1.msra.mxu0 0.0
      %3703 = vmatprep.subr.mxu0 0.0
      %3704 = vmatpush1.msra.mxu0 0.0
      %3705 = vmatprep.subr.mxu0 0.0
      %3706 = vmatpush1.msra.mxu0 0.0
      %3707 = vmatprep.subr.mxu0 0.0
      %3708 = vmatpush1.msra.mxu0 0.0
      %3709 = vmatprep.subr.mxu0 0.0
      %3710 = vmatpush1.msra.mxu0 0.0
      %3711 = vmatprep.subr.mxu0 0.0
      %3712 = vmatpush1.msra.mxu0 0.0
      %3713 = vmatprep.subr.mxu0 0.0
      %3714 = vmatpush1.msra.mxu0 0.0
      %3715 = vmatprep.subr.mxu0 0.0
      %3716 = vmatpush1.msra.mxu0 0.0
      %3717 = vmatprep.subr.mxu0 0.0
      %3718 = vmatpush1.msra.mxu0 0.0
      %3719 = vmatprep.subr.mxu0 0.0
      %3720 = vmatpush1.msra.mxu0 0.0
      %3721 = vmatprep.subr.mxu0 0.0
      %3722 = vmatpush1.msra.mxu0 0.0
      %3723 = vmatprep.subr.mxu0 0.0
      %3724 = vmatpush1.msra.mxu0 0.0
      %3725 = vmatprep.subr.mxu0 0.0
      %3726 = vmatpush1.msra.mxu0 %v3690
      %3727 = vmatprep.subr.mxu0 0.0
      %3728 = vmatpush1.msra.mxu0 %v3689
      %3729 = vmatprep.subr.mxu0 0.0
      %3730 = vmatpush1.msra.mxu0 %v3688
      %3731 = vmatprep.subr.mxu0 0.0
      %3732 = vmatpush1.msra.mxu0 %v3687
      %3733 = vmatprep.subr.mxu0 0.0
      %3734 = vmatpush2.msra.mxu0 0.0
      %3735 = vmatprep.subr.mxu0 0.0
      %3736 = vmatpush2.msra.mxu0 0.0
      %3737 = vmatprep.subr.mxu0 0.0
      %3738 = vmatpush2.msra.mxu0 0.0
      %3739 = vmatprep.subr.mxu0 0.0
      %3740 = vmatpush2.msra.mxu0 0.0
      %3741 = vmatprep.subr.mxu0 0.0
      %3742 = vmatpush2.msra.mxu0 0.0
      %3743 = vmatprep.subr.mxu0 0.0
      %3744 = vmatpush2.msra.mxu0 0.0
      %3745 = vmatprep.subr.mxu0 0.0
      %3746 = vmatpush2.msra.mxu0 0.0
      %3747 = vmatprep.subr.mxu0 0.0
      %3748 = vmatpush2.msra.mxu0 0.0
      %3749 = vmatprep.subr.mxu0 0.0
      %3750 = vmatpush2.msra.mxu0 0.0
      %3751 = vmatprep.subr.mxu0 0.0
      %3752 = vmatpush2.msra.mxu0 0.0
      %3753 = vmatprep.subr.mxu0 0.0
      %3754 = vmatpush2.msra.mxu0 0.0
      %3755 = vmatprep.subr.mxu0 0.0
      %3756 = vmatpush2.msra.mxu0 0.0
      %3757 = vmatprep.subr.mxu0 0.0
      %3758 = vmatpush2.msra.mxu0 0.0
      %3759 = vmatprep.subr.mxu0 0.0
      %3760 = vmatpush2.msra.mxu0 0.0
      %3761 = vmatprep.subr.mxu0 0.0
      %3762 = vmatpush2.msra.mxu0 0.0
      %3763 = vmatprep.subr.mxu0 0.0
      %3764 = vmatpush2.msra.mxu0 0.0
      %3765 = vmatprep.mubr.f32.mxu0 0.0
      %3766 = vmatmul.mubr.f32.gmra.mxu0 %v3699
      %v3767 = vpop.f32.mrf.mxu0
      %v3768 = vadd.f32 %v3696, %v3767
      %v3769 = vpop.f32.mrf.mxu0
      %3770 = vdwg.mxu0
      %v3771 = vadd.f32 %v3601, %v3768
      %v3772 = vld [vmem:[%s17] sm:$0x1]
      %v3773 = vld [vmem:[%s18] sm:$0x1]
      %v3774 = vsel %vm656, %v3771, 0.0
      %3775 = vadd.xlane.f32.xlu0 %v3774
      %v3776 = vpop.xlane.xlu0 %3775
      %v3777 = vmul.f32 %v3776, %v3577
      %v3778 = vsub.f32 %v3771, %v3777
      %v3779 = vmul.f32 %v3778, %v3778
      %v3780 = vsel %vm656, %v3779, 0.0
      %3781 = vadd.xlane.f32.xlu0 %v3780
      %v3782 = vpop.xlane.xlu0 %3781
      %v3783 = vmul.f32 %v3782, %v3577
      %v3784 = vadd.f32 %v3783, 1e-12
      %v3785 = vrsqrt.pop %v3784
      %v3786 = vmul.f32 %v3778, %v3785
      %v3788 = vlaneseq
      %v3789 = vshrl.u32 %v3788, 7
      %v3790 = vsub.s32 0, %v3789
      %v3791 = vrot.slane %v3772, %v3790
      %v3793 = vmul.f32 %v3786, %v3791
      %v3795 = vlaneseq
      %v3796 = vshrl.u32 %v3795, 7
      %v3797 = vsub.s32 0, %v3796
      %v3798 = vrot.slane %v3773, %v3797
      %v3800 = vadd.f32 %v3793, %v3798
      %3801 = vst.msk [vmem:[%s634] sm:$0xff] %vm656, %v3800
      %p3802 = scmp.lt.s32.totalorder %s30, 1
      %s3803 = scalar_select %p3802, %s30, 1
      %s3804 = smul.addr %s3803, 8
      %s3805 = scalar_lea.vmem %s19, %s3804
      // Predicated region
      $region97: #{rgat_absa_forward.11} parent=95 // pred_check
        %p3806 = pneg %p462
      $region98: #{rgat_absa_forward.11} parent=95 // pred_check_branch
        %3808 = sbr.rel (%p3806) target = $region100
      $region99: #{rgat_absa_forward.11} parent=95 // pred_region
        _
      $region100: #{rgat_absa_forward.11} parent=95 // pred_fallthru
        _
    $region96: #{rgat_absa_forward.11} parent=5 // pred_fallthru
      _
    %p3809 = scmp.le.s32.totalorder 2, %s25
    // Predicated region
    $region101: #{rgat_absa_forward.11} parent=5 // pred_check
      %p3810 = pneg %p3809
    $region102: #{rgat_absa_forward.11} parent=5 // pred_check_branch
      %3812 = sbr.rel (%p3810) target = $region104
    $region103: #{rgat_absa_forward.11} parent=5 // pred_region
      %s3813 = ssub.s32 %s25, 2
      // Predicated region
      $region105: #{rgat_absa_forward.11} parent=103 // pred_check
        %p3814 = pneg %p468
      $region106: #{rgat_absa_forward.11} parent=103 // pred_check_branch
        %3816 = sbr.rel (%p3814) target = $region108
      $region107: #{rgat_absa_forward.11} parent=103 // pred_region
        %p3817 = scmp.lt.s32.totalorder %s31, 1
        %s3818 = scalar_select %p3817, %s31, 1
        %s3819 = smul.addr %s3818, 8
        %s3820 = scalar_lea.vmem %s19, %s3819
      $region108: #{rgat_absa_forward.11} parent=103 // pred_fallthru
        _
    $region104: #{rgat_absa_forward.11} parent=5 // pred_fallthru
      _
  $region6: #{rgat_absa_forward.11} parent=0 // loop_footer
    %s29 = sadd.s32 1, %s25
  $region7: #{rgat_absa_forward.11} parent=0 // loop_footer_branch
    %24 = sbr.rel target = $region3
  $region8: #{rgat_absa_forward.11} parent=0 // loop_exit
    _

</llo_original>
